<compile_context>
chip_gen: v7x
topology: tpu7x:2x2x1
jax: 0.10.0
libtpu: 0.0.40
codegen_flags: <defaults>
</compile_context>

<pallas_src>
import functools

import numpy as np
import jax
import jax.numpy as jnp
from jax.experimental import pallas as pl
from jax.experimental.pallas import tpu as pltpu


def _round_up(v, m):
    return -(-v // m) * m


def _batch_tile(n, max_b=8):
    """Pick a conv batch tile B (<= max_b) and the padded batch size."""
    if n >= max_b:
        return max_b, _round_up(n, max_b)
    return n, n


# ----------------------------------------------------------------------------
# Pallas kernels
# ----------------------------------------------------------------------------
def _conv_relu_pool_kernel(x_ref, w_ref, b_ref, s_ref, o_ref, im2col_ref,
                           *, h, w, kh, kw, batch):
    """Fused Conv2d(stride=1, pad=0) + bias + ReLU + MaxPool2d(2, 2).

    x_ref:      (B, Cin_p, h*w)        flattened NCHW inputs (channel padded)
    w_ref:      (Cout_p, kh*kw*Cin_p)  tap-major weight matrix
    b_ref:      (Cout_p, 1)            bias
    s_ref:      (Lp, Hp*Wp)            constant 0/1 pool-position gather matrix
    o_ref:      (B, Cout_p, Hp*Wp)     pooled output, channel-major flat order
    im2col_ref: (kh*kw*Cin_p, L)       VMEM scratch, reused across samples
    """
    ho, wo = h - kh + 1, w - kw + 1
    L = (ho - 1) * w + wo          # flat conv slab length
    Lp = L - 1 - w                 # flat 2x2-max slab length
    cin_p = x_ref.shape[1]

    for b in range(batch):
        # In-VMEM im2col: one contiguous (Cin_p, L) strip per conv tap.
        for i in range(kh):
            for j in range(kw):
                t = i * kw + j
                off = i * w + j
                im2col_ref[t * cin_p:(t + 1) * cin_p, :] = \
                    x_ref[b, :, off:off + L]

        # Single K = kh*kw*Cin_p matmul -> (Cout_p, L) conv slab.
        y = jnp.dot(w_ref[...], im2col_ref[...],
                    preferred_element_type=jnp.float32)
        y = jnp.maximum(y + b_ref[...], 0.0)          # bias + ReLU

        # 2x2/2 max pool on the flat slab: neighbours sit at +1 and +w.
        m1 = jnp.maximum(y[:, :L - 1], y[:, 1:])
        m2 = jnp.maximum(m1[:, :Lp], m1[:, w:w + Lp])

        # Compact the valid pooled positions (columns 2*hp*w + 2*wp) into
        # channel-major (Cout_p, Hp*Wp) with one exact selection matmul.
        o_ref[b] = jnp.dot(m2, s_ref[...], preferred_element_type=jnp.float32)


def _fc3_fused_kernel(x_ref, w1_ref, b1_ref, w2_ref, b2_ref, w3_ref, b3_ref,
                      o_ref):
    """Fused fc1(ReLU) + fc2(ReLU) + fc3 on one row-block of the batch."""
    h1 = jnp.dot(x_ref[...], w1_ref[...], preferred_element_type=jnp.float32)
    h1 = jnp.maximum(h1 + b1_ref[...], 0.0)
    h2 = jnp.dot(h1, w2_ref[...], preferred_element_type=jnp.float32)
    h2 = jnp.maximum(h2 + b2_ref[...], 0.0)
    o_ref[...] = (jnp.dot(h2, w3_ref[...], preferred_element_type=jnp.float32)
                  + b3_ref[...])


# ----------------------------------------------------------------------------
# Wrappers
# ----------------------------------------------------------------------------
def conv_relu_pool(x_flat, wts, bias, h, w):
    """Fused Conv2d + ReLU + MaxPool2d(2, 2) over a flattened NCHW batch.

    x_flat: (n, cin_p, h*w) f32, channels zero-padded to a multiple of 8.
    wts:    (cout, cin, kh, kw), bias: (cout,).
    Returns (n_pad, cout_p, hp*wp) f32 with cout_p = round_up(cout, 8); padded
    output channels are exactly zero, so the result feeds the next conv layer
    directly (whose weights are zero on padded input channels anyway).
    """
    n, cin_p, hw = x_flat.shape
    cout, cin, kh, kw = wts.shape
    assert hw == h * w and cin <= cin_p and cin_p % 8 == 0
    cout_p = _round_up(cout, 8)

    ho, wo = h - kh + 1, w - kw + 1
    hp, wp = ho // 2, wo // 2
    L = (ho - 1) * w + wo
    Lp = L - 1 - w
    P = hp * wp
    # Safety: every selected pooled column's 2x2 window stays inside one
    # sample's slab, so no wrap-around junk column is ever selected.
    assert 2 * (hp - 1) * w + 2 * (wp - 1) < Lp

    # Tap-major weight matrix: w_mat[o, (i*kw + j)*cin_p + c] = wts[o, c, i, j].
    w_mat = jnp.transpose(wts.astype(jnp.float32), (0, 2, 3, 1))
    w_mat = jnp.pad(w_mat,
                    ((0, cout_p - cout), (0, 0), (0, 0), (0, cin_p - cin)))
    w_mat = w_mat.reshape(cout_p, kh * kw * cin_p)
    b_mat = jnp.pad(bias.astype(jnp.float32),
                    (0, cout_p - cout)).reshape(cout_p, 1)

    # Constant 0/1 selection matrix (built at trace time): output column
    # hp_i*wp + wp_i copies slab column 2*hp_i*w + 2*wp_i.
    m_idx = np.arange(P)
    tgt = 2 * w * (m_idx // wp) + 2 * (m_idx % wp)
    sel = jnp.asarray((np.arange(Lp)[:, None] == tgt[None, :])
                      .astype(np.float32))

    bt, n_pad = _batch_tile(n)
    if n_pad != n:
        x_flat = jnp.pad(x_flat, ((0, n_pad - n), (0, 0), (0, 0)))

    kern = functools.partial(_conv_relu_pool_kernel,
                             h=h, w=w, kh=kh, kw=kw, batch=bt)
    return pl.pallas_call(
        kern,
        out_shape=jax.ShapeDtypeStruct((n_pad, cout_p, P), jnp.float32),
        grid=(n_pad // bt,),
        in_specs=[
            pl.BlockSpec((bt, cin_p, hw), lambda i: (i, 0, 0)),
            pl.BlockSpec((cout_p, kh * kw * cin_p), lambda i: (0, 0)),
            pl.BlockSpec((cout_p, 1), lambda i: (0, 0)),
            pl.BlockSpec((Lp, P), lambda i: (0, 0)),
        ],
        out_specs=pl.BlockSpec((bt, cout_p, P), lambda i: (i, 0, 0)),
        scratch_shapes=[pltpu.VMEM((kh * kw * cin_p, L), jnp.float32)],
        compiler_params=pltpu.CompilerParams(
            dimension_semantics=("parallel",)),
    )(x_flat, w_mat, b_mat, sel)


def _pad2d(a, rows, cols):
    r, c = a.shape
    return jnp.pad(a.astype(jnp.float32), ((0, rows - r), (0, cols - c)))


def fc_stack(x, w1, b1, w2, b2, w3, b3, n_valid):
    """Fused fc1+ReLU, fc2+ReLU, fc3.  x:(n, 400) -> (n_valid, 10) f32."""
    n, k = x.shape
    h1p = _round_up(w1.shape[1], 128)    # 120 -> 128
    h2p = _round_up(w2.shape[1], 128)    # 84  -> 128
    op = _round_up(w3.shape[1], 128)     # 10  -> 128

    # Row-block size: <=128 keeps the h1/h2 intermediates small enough for
    # v5e's single vector-store slot; still amortizes step cost on v6e/v7x.
    if n <= 128:
        tm = _round_up(n, 8)
        n_pad = tm
    else:
        tm = 128
        n_pad = _round_up(n, tm)

    xp = jnp.pad(x.astype(jnp.float32), ((0, n_pad - n), (0, 0)))  # K stays 400
    w1p, b1p = _pad2d(w1, k, h1p), _pad2d(b1.reshape(1, -1), 1, h1p)
    w2p, b2p = _pad2d(w2, h1p, h2p), _pad2d(b2.reshape(1, -1), 1, h2p)
    w3p, b3p = _pad2d(w3, h2p, op), _pad2d(b3.reshape(1, -1), 1, op)

    out = pl.pallas_call(
        _fc3_fused_kernel,
        out_shape=jax.ShapeDtypeStruct((n_pad, op), jnp.float32),
        grid=(n_pad // tm,),
        in_specs=[
            pl.BlockSpec((tm, k), lambda i: (i, 0)),
            pl.BlockSpec((k, h1p), lambda i: (0, 0)),
            pl.BlockSpec((1, h1p), lambda i: (0, 0)),
            pl.BlockSpec((h1p, h2p), lambda i: (0, 0)),
            pl.BlockSpec((1, h2p), lambda i: (0, 0)),
            pl.BlockSpec((h2p, op), lambda i: (0, 0)),
            pl.BlockSpec((1, op), lambda i: (0, 0)),
        ],
        out_specs=pl.BlockSpec((tm, op), lambda i: (i, 0)),
        compiler_params=pltpu.CompilerParams(
            dimension_semantics=("parallel",)),
    )(xp, w1p, b1p, w2p, b2p, w3p, b3p)
    return out[:n_valid, :w3.shape[1]]


# ----------------------------------------------------------------------------
# LeNet forward
# ----------------------------------------------------------------------------
def init_params(key):
    ks = jax.random.split(key, 10)
    s = 0.1
    return {
        "conv1_w": jax.random.normal(ks[0], (6, 3, 5, 5), jnp.float32) * s,
        "conv1_b": jax.random.normal(ks[1], (6,), jnp.float32) * s,
        "conv2_w": jax.random.normal(ks[2], (16, 6, 5, 5), jnp.float32) * s,
        "conv2_b": jax.random.normal(ks[3], (16,), jnp.float32) * s,
        "fc1_w": jax.random.normal(ks[4], (16 * 5 * 5, 120), jnp.float32) * s,
        "fc1_b": jax.random.normal(ks[5], (120,), jnp.float32) * s,
        "fc2_w": jax.random.normal(ks[6], (120, 84), jnp.float32) * s,
        "fc2_b": jax.random.normal(ks[7], (84,), jnp.float32) * s,
        "fc3_w": jax.random.normal(ks[8], (84, 10), jnp.float32) * s,
        "fc3_b": jax.random.normal(ks[9], (10,), jnp.float32) * s,
    }


def lenet_forward(params, x):
    # x: (N, 3, 32, 32) NCHW (PyTorch convention).
    n, cin, h, w = x.shape
    cin_p = _round_up(cin, 8)
    x_flat = jnp.pad(x.astype(jnp.float32).reshape(n, cin, h * w),
                     ((0, 0), (0, cin_p - cin), (0, 0)))

    # conv1 + ReLU + pool: (n, 3, 32, 32) -> (n1, 8, 14*14) (6 real channels).
    y1 = conv_relu_pool(x_flat, params["conv1_w"], params["conv1_b"], h, w)
    kh1, kw1 = params["conv1_w"].shape[2], params["conv1_w"].shape[3]
    h1, w1 = (h - kh1 + 1) // 2, (w - kw1 + 1) // 2

    # conv2 + ReLU + pool: direct hand-off, (n1, 8, 196) -> (n2, 16, 5*5).
    y2 = conv_relu_pool(y1, params["conv2_w"], params["conv2_b"], h1, w1)

    # Flatten in torch .view order (channel-major) and run the fused fc stack.
    cout2 = params["conv2_w"].shape[0]
    feats = y2[:, :cout2, :].reshape(y2.shape[0], -1)      # (n2, 400), free
    return fc_stack(feats, params["fc1_w"], params["fc1_b"],
                    params["fc2_w"], params["fc2_b"],
                    params["fc3_w"], params["fc3_b"], n)    # (N, 10)


if __name__ == "__main__":
    key = jax.random.PRNGKey(0)
    pkey, xkey = jax.random.split(key)
    params = init_params(pkey)
    # LeNet's fc1 (16*5*5 inputs) implies a 3x32x32 input image.
    x = jax.random.normal(xkey, (2, 3, 32, 32), jnp.float32)
    out = jax.jit(lenet_forward)(params, x)
    out = jax.block_until_ready(out)
    assert out.shape == (2, 10) and out.dtype == jnp.float32
    print("KERNEL_OK")
</pallas_src>

<mosaic_0001>
module attributes {stable_mosaic.version = 11 : i64} {
  func.func @_fc3_fused_kernel(%arg0: i32, %arg1: memref<8x400xf32, #tpu.memory_space<vmem>>, %arg2: memref<400x128xf32, #tpu.memory_space<vmem>>, %arg3: memref<1x128xf32, #tpu.memory_space<vmem>>, %arg4: memref<128x128xf32, #tpu.memory_space<vmem>>, %arg5: memref<1x128xf32, #tpu.memory_space<vmem>>, %arg6: memref<128x128xf32, #tpu.memory_space<vmem>>, %arg7: memref<1x128xf32, #tpu.memory_space<vmem>>, %arg8: memref<8x128xf32, #tpu.memory_space<vmem>>) attributes {dimension_semantics = [#tpu.dimension_semantics<parallel>], iteration_bounds = array<i64: 1>, scalar_prefetch = 0 : i64, scratch_operands = 0 : i64, tpu.core_type = #tpu.core_type<tc>, window_params = [{transform_indices = @transform_0, window_bounds = array<i64: 8, 400>}, {pipeline_mode = #tpu.pipeline_mode<synchronous>, transform_indices = @transform_1, window_bounds = array<i64: 400, 128>}, {pipeline_mode = #tpu.pipeline_mode<synchronous>, transform_indices = @transform_2, window_bounds = array<i64: 1, 128>}, {pipeline_mode = #tpu.pipeline_mode<synchronous>, transform_indices = @transform_3, window_bounds = array<i64: 128, 128>}, {pipeline_mode = #tpu.pipeline_mode<synchronous>, transform_indices = @transform_4, window_bounds = array<i64: 1, 128>}, {pipeline_mode = #tpu.pipeline_mode<synchronous>, transform_indices = @transform_5, window_bounds = array<i64: 128, 128>}, {pipeline_mode = #tpu.pipeline_mode<synchronous>, transform_indices = @transform_6, window_bounds = array<i64: 1, 128>}, {transform_indices = @transform_7, window_bounds = array<i64: 8, 128>}]} {
    %c0 = arith.constant 0 : index
    %c0_0 = arith.constant 0 : index
    %0 = vector.load %arg1[%c0, %c0_0] : memref<8x400xf32, #tpu.memory_space<vmem>>, vector<8x400xf32>
    %c0_1 = arith.constant 0 : index
    %c0_2 = arith.constant 0 : index
    %1 = vector.load %arg2[%c0_1, %c0_2] : memref<400x128xf32, #tpu.memory_space<vmem>>, vector<400x128xf32>
    %cst = arith.constant dense<0.000000e+00> : vector<8x128xf32>
    %2 = tpu.matmul %0, %1, %cst {dimension_numbers = #tpu.dot_dimension_numbers<[1], [0], [0], [1], [0, 0, 1, 1], [], []>} : vector<8x400xf32>, vector<400x128xf32>, vector<8x128xf32> -> vector<8x128xf32>
    %c0_3 = arith.constant 0 : index
    %c0_4 = arith.constant 0 : index
    %3 = vector.load %arg3[%c0_3, %c0_4] : memref<1x128xf32, #tpu.memory_space<vmem>>, vector<1x128xf32>
    %4 = vector.broadcast %3 : vector<1x128xf32> to vector<8x128xf32>
    %5 = arith.addf %2, %4 : vector<8x128xf32>
    %cst_5 = arith.constant 0.000000e+00 : f32
    %6 = vector.broadcast %cst_5 : f32 to vector<8x128xf32>
    %7 = arith.maximumf %5, %6 : vector<8x128xf32>
    %c0_6 = arith.constant 0 : index
    %c0_7 = arith.constant 0 : index
    %8 = vector.load %arg4[%c0_6, %c0_7] : memref<128x128xf32, #tpu.memory_space<vmem>>, vector<128x128xf32>
    %cst_8 = arith.constant dense<0.000000e+00> : vector<8x128xf32>
    %9 = tpu.matmul %7, %8, %cst_8 {dimension_numbers = #tpu.dot_dimension_numbers<[1], [0], [0], [1], [0, 0, 1, 1], [], []>} : vector<8x128xf32>, vector<128x128xf32>, vector<8x128xf32> -> vector<8x128xf32>
    %c0_9 = arith.constant 0 : index
    %c0_10 = arith.constant 0 : index
    %10 = vector.load %arg5[%c0_9, %c0_10] : memref<1x128xf32, #tpu.memory_space<vmem>>, vector<1x128xf32>
    %11 = vector.broadcast %10 : vector<1x128xf32> to vector<8x128xf32>
    %12 = arith.addf %9, %11 : vector<8x128xf32>
    %cst_11 = arith.constant 0.000000e+00 : f32
    %13 = vector.broadcast %cst_11 : f32 to vector<8x128xf32>
    %14 = arith.maximumf %12, %13 : vector<8x128xf32>
    %c0_12 = arith.constant 0 : index
    %c0_13 = arith.constant 0 : index
    %15 = vector.load %arg6[%c0_12, %c0_13] : memref<128x128xf32, #tpu.memory_space<vmem>>, vector<128x128xf32>
    %cst_14 = arith.constant dense<0.000000e+00> : vector<8x128xf32>
    %16 = tpu.matmul %14, %15, %cst_14 {dimension_numbers = #tpu.dot_dimension_numbers<[1], [0], [0], [1], [0, 0, 1, 1], [], []>} : vector<8x128xf32>, vector<128x128xf32>, vector<8x128xf32> -> vector<8x128xf32>
    %c0_15 = arith.constant 0 : index
    %c0_16 = arith.constant 0 : index
    %17 = vector.load %arg7[%c0_15, %c0_16] : memref<1x128xf32, #tpu.memory_space<vmem>>, vector<1x128xf32>
    %18 = vector.broadcast %17 : vector<1x128xf32> to vector<8x128xf32>
    %19 = arith.addf %16, %18 : vector<8x128xf32>
    %c0_17 = arith.constant 0 : index
    %c0_18 = arith.constant 0 : index
    %20 = vector.load %arg8[%c0_17, %c0_18] : memref<8x128xf32, #tpu.memory_space<vmem>>, vector<8x128xf32>
    tpu.vector_store %arg8[%c0_17, %c0_18], %19 {strides = array<i32>} : memref<8x128xf32, #tpu.memory_space<vmem>>, vector<8x128xf32>,
    return
  }
  func.func @transform_0(%arg0: i32) -> (i32, i32) {
    %c0_i32 = arith.constant 0 : i32
    %c0_i32_0 = arith.constant 0 : i32
    return %arg0, %c0_i32 : i32, i32
  }
  func.func @transform_1(%arg0: i32) -> (i32, i32) {
    %c0_i32 = arith.constant 0 : i32
    %c0_i32_0 = arith.constant 0 : i32
    %c0_i32_1 = arith.constant 0 : i32
    return %c0_i32, %c0_i32_0 : i32, i32
  }
  func.func @transform_2(%arg0: i32) -> (i32, i32) {
    %c0_i32 = arith.constant 0 : i32
    %c0_i32_0 = arith.constant 0 : i32
    %c0_i32_1 = arith.constant 0 : i32
    return %c0_i32, %c0_i32_0 : i32, i32
  }
  func.func @transform_3(%arg0: i32) -> (i32, i32) {
    %c0_i32 = arith.constant 0 : i32
    %c0_i32_0 = arith.constant 0 : i32
    %c0_i32_1 = arith.constant 0 : i32
    return %c0_i32, %c0_i32_0 : i32, i32
  }
  func.func @transform_4(%arg0: i32) -> (i32, i32) {
    %c0_i32 = arith.constant 0 : i32
    %c0_i32_0 = arith.constant 0 : i32
    %c0_i32_1 = arith.constant 0 : i32
    return %c0_i32, %c0_i32_0 : i32, i32
  }
  func.func @transform_5(%arg0: i32) -> (i32, i32) {
    %c0_i32 = arith.constant 0 : i32
    %c0_i32_0 = arith.constant 0 : i32
    %c0_i32_1 = arith.constant 0 : i32
    return %c0_i32, %c0_i32_0 : i32, i32
  }
  func.func @transform_6(%arg0: i32) -> (i32, i32) {
    %c0_i32 = arith.constant 0 : i32
    %c0_i32_0 = arith.constant 0 : i32
    %c0_i32_1 = arith.constant 0 : i32
    return %c0_i32, %c0_i32_0 : i32, i32
  }
  func.func @transform_7(%arg0: i32) -> (i32, i32) {
    %c0_i32 = arith.constant 0 : i32
    %c0_i32_0 = arith.constant 0 : i32
    return %arg0, %c0_i32 : i32, i32
  }
}

module attributes {stable_mosaic.version = 11 : i64} {
  func.func @_conv_relu_pool_kernel(%arg0: i32, %arg1: memref<2x8x1024xf32, #tpu.memory_space<vmem>>, %arg2: memref<8x200xf32, #tpu.memory_space<vmem>>, %arg3: memref<8x1xf32, #tpu.memory_space<vmem>>, %arg4: memref<859x196xf32, #tpu.memory_space<vmem>>, %arg5: memref<2x8x196xf32, #tpu.memory_space<vmem>>, %arg6: memref<200x892xf32, #tpu.memory_space<vmem>>) attributes {dimension_semantics = [#tpu.dimension_semantics<parallel>], iteration_bounds = array<i64: 1>, scalar_prefetch = 0 : i64, scratch_operands = 1 : i64, tpu.core_type = #tpu.core_type<tc>, window_params = [{transform_indices = @transform_0, window_bounds = array<i64: 2, 8, 1024>}, {pipeline_mode = #tpu.pipeline_mode<synchronous>, transform_indices = @transform_1, window_bounds = array<i64: 8, 200>}, {pipeline_mode = #tpu.pipeline_mode<synchronous>, transform_indices = @transform_2, window_bounds = array<i64: 8, 1>}, {pipeline_mode = #tpu.pipeline_mode<synchronous>, transform_indices = @transform_3, window_bounds = array<i64: 859, 196>}, {transform_indices = @transform_4, window_bounds = array<i64: 2, 8, 196>}]} {
    %c0 = arith.constant 0 : index
    %c0_0 = arith.constant 0 : index
    %c0_1 = arith.constant 0 : index
    %0 = vector.load %arg1[%c0, %c0_0, %c0_1] : memref<2x8x1024xf32, #tpu.memory_space<vmem>>, vector<1x8x892xf32>
    %1 = vector.shape_cast %0 : vector<1x8x892xf32> to vector<8x892xf32>
    %c0_2 = arith.constant 0 : index
    %c0_3 = arith.constant 0 : index
    %2 = vector.load %arg6[%c0_2, %c0_3] : memref<200x892xf32, #tpu.memory_space<vmem>>, vector<8x892xf32>
    tpu.vector_store %arg6[%c0_2, %c0_3], %1 {strides = array<i32>} : memref<200x892xf32, #tpu.memory_space<vmem>>, vector<8x892xf32>,
    %c0_4 = arith.constant 0 : index
    %c0_5 = arith.constant 0 : index
    %c1 = arith.constant 1 : index
    %3 = vector.load %arg1[%c0_4, %c0_5, %c1] : memref<2x8x1024xf32, #tpu.memory_space<vmem>>, vector<1x8x892xf32>
    %4 = vector.shape_cast %3 : vector<1x8x892xf32> to vector<8x892xf32>
    %c8 = arith.constant 8 : index
    %c0_6 = arith.constant 0 : index
    %5 = vector.load %arg6[%c8, %c0_6] : memref<200x892xf32, #tpu.memory_space<vmem>>, vector<8x892xf32>
    tpu.vector_store %arg6[%c8, %c0_6], %4 {strides = array<i32>} : memref<200x892xf32, #tpu.memory_space<vmem>>, vector<8x892xf32>,
    %c0_7 = arith.constant 0 : index
    %c0_8 = arith.constant 0 : index
    %c2 = arith.constant 2 : index
    %6 = vector.load %arg1[%c0_7, %c0_8, %c2] : memref<2x8x1024xf32, #tpu.memory_space<vmem>>, vector<1x8x892xf32>
    %7 = vector.shape_cast %6 : vector<1x8x892xf32> to vector<8x892xf32>
    %c16 = arith.constant 16 : index
    %c0_9 = arith.constant 0 : index
    %8 = vector.load %arg6[%c16, %c0_9] : memref<200x892xf32, #tpu.memory_space<vmem>>, vector<8x892xf32>
    tpu.vector_store %arg6[%c16, %c0_9], %7 {strides = array<i32>} : memref<200x892xf32, #tpu.memory_space<vmem>>, vector<8x892xf32>,
    %c0_10 = arith.constant 0 : index
    %c0_11 = arith.constant 0 : index
    %c3 = arith.constant 3 : index
    %9 = vector.load %arg1[%c0_10, %c0_11, %c3] : memref<2x8x1024xf32, #tpu.memory_space<vmem>>, vector<1x8x892xf32>
    %10 = vector.shape_cast %9 : vector<1x8x892xf32> to vector<8x892xf32>
    %c24 = arith.constant 24 : index
    %c0_12 = arith.constant 0 : index
    %11 = vector.load %arg6[%c24, %c0_12] : memref<200x892xf32, #tpu.memory_space<vmem>>, vector<8x892xf32>
    tpu.vector_store %arg6[%c24, %c0_12], %10 {strides = array<i32>} : memref<200x892xf32, #tpu.memory_space<vmem>>, vector<8x892xf32>,
    %c0_13 = arith.constant 0 : index
    %c0_14 = arith.constant 0 : index
    %c4 = arith.constant 4 : index
    %12 = vector.load %arg1[%c0_13, %c0_14, %c4] : memref<2x8x1024xf32, #tpu.memory_space<vmem>>, vector<1x8x892xf32>
    %13 = vector.shape_cast %12 : vector<1x8x892xf32> to vector<8x892xf32>
    %c32 = arith.constant 32 : index
    %c0_15 = arith.constant 0 : index
    %14 = vector.load %arg6[%c32, %c0_15] : memref<200x892xf32, #tpu.memory_space<vmem>>, vector<8x892xf32>
    tpu.vector_store %arg6[%c32, %c0_15], %13 {strides = array<i32>} : memref<200x892xf32, #tpu.memory_space<vmem>>, vector<8x892xf32>,
    %c0_16 = arith.constant 0 : index
    %c0_17 = arith.constant 0 : index
    %c32_18 = arith.constant 32 : index
    %15 = vector.load %arg1[%c0_16, %c0_17, %c32_18] : memref<2x8x1024xf32, #tpu.memory_space<vmem>>, vector<1x8x892xf32>
    %16 = vector.shape_cast %15 : vector<1x8x892xf32> to vector<8x892xf32>
    %c40 = arith.constant 40 : index
    %c0_19 = arith.constant 0 : index
    %17 = vector.load %arg6[%c40, %c0_19] : memref<200x892xf32, #tpu.memory_space<vmem>>, vector<8x892xf32>
    tpu.vector_store %arg6[%c40, %c0_19], %16 {strides = array<i32>} : memref<200x892xf32, #tpu.memory_space<vmem>>, vector<8x892xf32>,
    %c0_20 = arith.constant 0 : index
    %c0_21 = arith.constant 0 : index
    %c33 = arith.constant 33 : index
    %18 = vector.load %arg1[%c0_20, %c0_21, %c33] : memref<2x8x1024xf32, #tpu.memory_space<vmem>>, vector<1x8x892xf32>
    %19 = vector.shape_cast %18 : vector<1x8x892xf32> to vector<8x892xf32>
    %c48 = arith.constant 48 : index
    %c0_22 = arith.constant 0 : index
    %20 = vector.load %arg6[%c48, %c0_22] : memref<200x892xf32, #tpu.memory_space<vmem>>, vector<8x892xf32>
    tpu.vector_store %arg6[%c48, %c0_22], %19 {strides = array<i32>} : memref<200x892xf32, #tpu.memory_space<vmem>>, vector<8x892xf32>,
    %c0_23 = arith.constant 0 : index
    %c0_24 = arith.constant 0 : index
    %c34 = arith.constant 34 : index
    %21 = vector.load %arg1[%c0_23, %c0_24, %c34] : memref<2x8x1024xf32, #tpu.memory_space<vmem>>, vector<1x8x892xf32>
    %22 = vector.shape_cast %21 : vector<1x8x892xf32> to vector<8x892xf32>
    %c56 = arith.constant 56 : index
    %c0_25 = arith.constant 0 : index
    %23 = vector.load %arg6[%c56, %c0_25] : memref<200x892xf32, #tpu.memory_space<vmem>>, vector<8x892xf32>
    tpu.vector_store %arg6[%c56, %c0_25], %22 {strides = array<i32>} : memref<200x892xf32, #tpu.memory_space<vmem>>, vector<8x892xf32>,
    %c0_26 = arith.constant 0 : index
    %c0_27 = arith.constant 0 : index
    %c35 = arith.constant 35 : index
    %24 = vector.load %arg1[%c0_26, %c0_27, %c35] : memref<2x8x1024xf32, #tpu.memory_space<vmem>>, vector<1x8x892xf32>
    %25 = vector.shape_cast %24 : vector<1x8x892xf32> to vector<8x892xf32>
    %c64 = arith.constant 64 : index
    %c0_28 = arith.constant 0 : index
    %26 = vector.load %arg6[%c64, %c0_28] : memref<200x892xf32, #tpu.memory_space<vmem>>, vector<8x892xf32>
    tpu.vector_store %arg6[%c64, %c0_28], %25 {strides = array<i32>} : memref<200x892xf32, #tpu.memory_space<vmem>>, vector<8x892xf32>,
    %c0_29 = arith.constant 0 : index
    %c0_30 = arith.constant 0 : index
    %c36 = arith.constant 36 : index
    %27 = vector.load %arg1[%c0_29, %c0_30, %c36] : memref<2x8x1024xf32, #tpu.memory_space<vmem>>, vector<1x8x892xf32>
    %28 = vector.shape_cast %27 : vector<1x8x892xf32> to vector<8x892xf32>
    %c72 = arith.constant 72 : index
    %c0_31 = arith.constant 0 : index
    %29 = vector.load %arg6[%c72, %c0_31] : memref<200x892xf32, #tpu.memory_space<vmem>>, vector<8x892xf32>
    tpu.vector_store %arg6[%c72, %c0_31], %28 {strides = array<i32>} : memref<200x892xf32, #tpu.memory_space<vmem>>, vector<8x892xf32>,
    %c0_32 = arith.constant 0 : index
    %c0_33 = arith.constant 0 : index
    %c64_34 = arith.constant 64 : index
    %30 = vector.load %arg1[%c0_32, %c0_33, %c64_34] : memref<2x8x1024xf32, #tpu.memory_space<vmem>>, vector<1x8x892xf32>
    %31 = vector.shape_cast %30 : vector<1x8x892xf32> to vector<8x892xf32>
    %c80 = arith.constant 80 : index
    %c0_35 = arith.constant 0 : index
    %32 = vector.load %arg6[%c80, %c0_35] : memref<200x892xf32, #tpu.memory_space<vmem>>, vector<8x892xf32>
    tpu.vector_store %arg6[%c80, %c0_35], %31 {strides = array<i32>} : memref<200x892xf32, #tpu.memory_space<vmem>>, vector<8x892xf32>,
    %c0_36 = arith.constant 0 : index
    %c0_37 = arith.constant 0 : index
    %c65 = arith.constant 65 : index
    %33 = vector.load %arg1[%c0_36, %c0_37, %c65] : memref<2x8x1024xf32, #tpu.memory_space<vmem>>, vector<1x8x892xf32>
    %34 = vector.shape_cast %33 : vector<1x8x892xf32> to vector<8x892xf32>
    %c88 = arith.constant 88 : index
    %c0_38 = arith.constant 0 : index
    %35 = vector.load %arg6[%c88, %c0_38] : memref<200x892xf32, #tpu.memory_space<vmem>>, vector<8x892xf32>
    tpu.vector_store %arg6[%c88, %c0_38], %34 {strides = array<i32>} : memref<200x892xf32, #tpu.memory_space<vmem>>, vector<8x892xf32>,
    %c0_39 = arith.constant 0 : index
    %c0_40 = arith.constant 0 : index
    %c66 = arith.constant 66 : index
    %36 = vector.load %arg1[%c0_39, %c0_40, %c66] : memref<2x8x1024xf32, #tpu.memory_space<vmem>>, vector<1x8x892xf32>
    %37 = vector.shape_cast %36 : vector<1x8x892xf32> to vector<8x892xf32>
    %c96 = arith.constant 96 : index
    %c0_41 = arith.constant 0 : index
    %38 = vector.load %arg6[%c96, %c0_41] : memref<200x892xf32, #tpu.memory_space<vmem>>, vector<8x892xf32>
    tpu.vector_store %arg6[%c96, %c0_41], %37 {strides = array<i32>} : memref<200x892xf32, #tpu.memory_space<vmem>>, vector<8x892xf32>,
    %c0_42 = arith.constant 0 : index
    %c0_43 = arith.constant 0 : index
    %c67 = arith.constant 67 : index
    %39 = vector.load %arg1[%c0_42, %c0_43, %c67] : memref<2x8x1024xf32, #tpu.memory_space<vmem>>, vector<1x8x892xf32>
    %40 = vector.shape_cast %39 : vector<1x8x892xf32> to vector<8x892xf32>
    %c104 = arith.constant 104 : index
    %c0_44 = arith.constant 0 : index
    %41 = vector.load %arg6[%c104, %c0_44] : memref<200x892xf32, #tpu.memory_space<vmem>>, vector<8x892xf32>
    tpu.vector_store %arg6[%c104, %c0_44], %40 {strides = array<i32>} : memref<200x892xf32, #tpu.memory_space<vmem>>, vector<8x892xf32>,
    %c0_45 = arith.constant 0 : index
    %c0_46 = arith.constant 0 : index
    %c68 = arith.constant 68 : index
    %42 = vector.load %arg1[%c0_45, %c0_46, %c68] : memref<2x8x1024xf32, #tpu.memory_space<vmem>>, vector<1x8x892xf32>
    %43 = vector.shape_cast %42 : vector<1x8x892xf32> to vector<8x892xf32>
    %c112 = arith.constant 112 : index
    %c0_47 = arith.constant 0 : index
    %44 = vector.load %arg6[%c112, %c0_47] : memref<200x892xf32, #tpu.memory_space<vmem>>, vector<8x892xf32>
    tpu.vector_store %arg6[%c112, %c0_47], %43 {strides = array<i32>} : memref<200x892xf32, #tpu.memory_space<vmem>>, vector<8x892xf32>,
    %c0_48 = arith.constant 0 : index
    %c0_49 = arith.constant 0 : index
    %c96_50 = arith.constant 96 : index
    %45 = vector.load %arg1[%c0_48, %c0_49, %c96_50] : memref<2x8x1024xf32, #tpu.memory_space<vmem>>, vector<1x8x892xf32>
    %46 = vector.shape_cast %45 : vector<1x8x892xf32> to vector<8x892xf32>
    %c120 = arith.constant 120 : index
    %c0_51 = arith.constant 0 : index
    %47 = vector.load %arg6[%c120, %c0_51] : memref<200x892xf32, #tpu.memory_space<vmem>>, vector<8x892xf32>
    tpu.vector_store %arg6[%c120, %c0_51], %46 {strides = array<i32>} : memref<200x892xf32, #tpu.memory_space<vmem>>, vector<8x892xf32>,
    %c0_52 = arith.constant 0 : index
    %c0_53 = arith.constant 0 : index
    %c97 = arith.constant 97 : index
    %48 = vector.load %arg1[%c0_52, %c0_53, %c97] : memref<2x8x1024xf32, #tpu.memory_space<vmem>>, vector<1x8x892xf32>
    %49 = vector.shape_cast %48 : vector<1x8x892xf32> to vector<8x892xf32>
    %c128 = arith.constant 128 : index
    %c0_54 = arith.constant 0 : index
    %50 = vector.load %arg6[%c128, %c0_54] : memref<200x892xf32, #tpu.memory_space<vmem>>, vector<8x892xf32>
    tpu.vector_store %arg6[%c128, %c0_54], %49 {strides = array<i32>} : memref<200x892xf32, #tpu.memory_space<vmem>>, vector<8x892xf32>,
    %c0_55 = arith.constant 0 : index
    %c0_56 = arith.constant 0 : index
    %c98 = arith.constant 98 : index
    %51 = vector.load %arg1[%c0_55, %c0_56, %c98] : memref<2x8x1024xf32, #tpu.memory_space<vmem>>, vector<1x8x892xf32>
    %52 = vector.shape_cast %51 : vector<1x8x892xf32> to vector<8x892xf32>
    %c136 = arith.constant 136 : index
    %c0_57 = arith.constant 0 : index
    %53 = vector.load %arg6[%c136, %c0_57] : memref<200x892xf32, #tpu.memory_space<vmem>>, vector<8x892xf32>
    tpu.vector_store %arg6[%c136, %c0_57], %52 {strides = array<i32>} : memref<200x892xf32, #tpu.memory_space<vmem>>, vector<8x892xf32>,
    %c0_58 = arith.constant 0 : index
    %c0_59 = arith.constant 0 : index
    %c99 = arith.constant 99 : index
    %54 = vector.load %arg1[%c0_58, %c0_59, %c99] : memref<2x8x1024xf32, #tpu.memory_space<vmem>>, vector<1x8x892xf32>
    %55 = vector.shape_cast %54 : vector<1x8x892xf32> to vector<8x892xf32>
    %c144 = arith.constant 144 : index
    %c0_60 = arith.constant 0 : index
    %56 = vector.load %arg6[%c144, %c0_60] : memref<200x892xf32, #tpu.memory_space<vmem>>, vector<8x892xf32>
    tpu.vector_store %arg6[%c144, %c0_60], %55 {strides = array<i32>} : memref<200x892xf32, #tpu.memory_space<vmem>>, vector<8x892xf32>,
    %c0_61 = arith.constant 0 : index
    %c0_62 = arith.constant 0 : index
    %c100 = arith.constant 100 : index
    %57 = vector.load %arg1[%c0_61, %c0_62, %c100] : memref<2x8x1024xf32, #tpu.memory_space<vmem>>, vector<1x8x892xf32>
    %58 = vector.shape_cast %57 : vector<1x8x892xf32> to vector<8x892xf32>
    %c152 = arith.constant 152 : index
    %c0_63 = arith.constant 0 : index
    %59 = vector.load %arg6[%c152, %c0_63] : memref<200x892xf32, #tpu.memory_space<vmem>>, vector<8x892xf32>
    tpu.vector_store %arg6[%c152, %c0_63], %58 {strides = array<i32>} : memref<200x892xf32, #tpu.memory_space<vmem>>, vector<8x892xf32>,
    %c0_64 = arith.constant 0 : index
    %c0_65 = arith.constant 0 : index
    %c128_66 = arith.constant 128 : index
    %60 = vector.load %arg1[%c0_64, %c0_65, %c128_66] : memref<2x8x1024xf32, #tpu.memory_space<vmem>>, vector<1x8x892xf32>
    %61 = vector.shape_cast %60 : vector<1x8x892xf32> to vector<8x892xf32>
    %c160 = arith.constant 160 : index
    %c0_67 = arith.constant 0 : index
    %62 = vector.load %arg6[%c160, %c0_67] : memref<200x892xf32, #tpu.memory_space<vmem>>, vector<8x892xf32>
    tpu.vector_store %arg6[%c160, %c0_67], %61 {strides = array<i32>} : memref<200x892xf32, #tpu.memory_space<vmem>>, vector<8x892xf32>,
    %c0_68 = arith.constant 0 : index
    %c0_69 = arith.constant 0 : index
    %c129 = arith.constant 129 : index
    %63 = vector.load %arg1[%c0_68, %c0_69, %c129] : memref<2x8x1024xf32, #tpu.memory_space<vmem>>, vector<1x8x892xf32>
    %64 = vector.shape_cast %63 : vector<1x8x892xf32> to vector<8x892xf32>
    %c168 = arith.constant 168 : index
    %c0_70 = arith.constant 0 : index
    %65 = vector.load %arg6[%c168, %c0_70] : memref<200x892xf32, #tpu.memory_space<vmem>>, vector<8x892xf32>
    tpu.vector_store %arg6[%c168, %c0_70], %64 {strides = array<i32>} : memref<200x892xf32, #tpu.memory_space<vmem>>, vector<8x892xf32>,
    %c0_71 = arith.constant 0 : index
    %c0_72 = arith.constant 0 : index
    %c130 = arith.constant 130 : index
    %66 = vector.load %arg1[%c0_71, %c0_72, %c130] : memref<2x8x1024xf32, #tpu.memory_space<vmem>>, vector<1x8x892xf32>
    %67 = vector.shape_cast %66 : vector<1x8x892xf32> to vector<8x892xf32>
    %c176 = arith.constant 176 : index
    %c0_73 = arith.constant 0 : index
    %68 = vector.load %arg6[%c176, %c0_73] : memref<200x892xf32, #tpu.memory_space<vmem>>, vector<8x892xf32>
    tpu.vector_store %arg6[%c176, %c0_73], %67 {strides = array<i32>} : memref<200x892xf32, #tpu.memory_space<vmem>>, vector<8x892xf32>,
    %c0_74 = arith.constant 0 : index
    %c0_75 = arith.constant 0 : index
    %c131 = arith.constant 131 : index
    %69 = vector.load %arg1[%c0_74, %c0_75, %c131] : memref<2x8x1024xf32, #tpu.memory_space<vmem>>, vector<1x8x892xf32>
    %70 = vector.shape_cast %69 : vector<1x8x892xf32> to vector<8x892xf32>
    %c184 = arith.constant 184 : index
    %c0_76 = arith.constant 0 : index
    %71 = vector.load %arg6[%c184, %c0_76] : memref<200x892xf32, #tpu.memory_space<vmem>>, vector<8x892xf32>
    tpu.vector_store %arg6[%c184, %c0_76], %70 {strides = array<i32>} : memref<200x892xf32, #tpu.memory_space<vmem>>, vector<8x892xf32>,
    %c0_77 = arith.constant 0 : index
    %c0_78 = arith.constant 0 : index
    %c132 = arith.constant 132 : index
    %72 = vector.load %arg1[%c0_77, %c0_78, %c132] : memref<2x8x1024xf32, #tpu.memory_space<vmem>>, vector<1x8x892xf32>
    %73 = vector.shape_cast %72 : vector<1x8x892xf32> to vector<8x892xf32>
    %c192 = arith.constant 192 : index
    %c0_79 = arith.constant 0 : index
    %74 = vector.load %arg6[%c192, %c0_79] : memref<200x892xf32, #tpu.memory_space<vmem>>, vector<8x892xf32>
    tpu.vector_store %arg6[%c192, %c0_79], %73 {strides = array<i32>} : memref<200x892xf32, #tpu.memory_space<vmem>>, vector<8x892xf32>,
    %c0_80 = arith.constant 0 : index
    %c0_81 = arith.constant 0 : index
    %75 = vector.load %arg2[%c0_80, %c0_81] : memref<8x200xf32, #tpu.memory_space<vmem>>, vector<8x200xf32>
    %c0_82 = arith.constant 0 : index
    %c0_83 = arith.constant 0 : index
    %76 = vector.load %arg6[%c0_82, %c0_83] : memref<200x892xf32, #tpu.memory_space<vmem>>, vector<200x892xf32>
    %cst = arith.constant dense<0.000000e+00> : vector<8x892xf32>
    %77 = tpu.matmul %75, %76, %cst {dimension_numbers = #tpu.dot_dimension_numbers<[1], [0], [0], [1], [0, 0, 1, 1], [], []>} : vector<8x200xf32>, vector<200x892xf32>, vector<8x892xf32> -> vector<8x892xf32>
    %c0_84 = arith.constant 0 : index
    %c0_85 = arith.constant 0 : index
    %78 = vector.load %arg3[%c0_84, %c0_85] : memref<8x1xf32, #tpu.memory_space<vmem>>, vector<8x1xf32>
    %79 = vector.broadcast %78 : vector<8x1xf32> to vector<8x892xf32>
    %80 = arith.addf %77, %79 : vector<8x892xf32>
    %cst_86 = arith.constant 0.000000e+00 : f32
    %81 = vector.broadcast %cst_86 : f32 to vector<8x892xf32>
    %82 = arith.maximumf %80, %81 : vector<8x892xf32>
    %83 = vector.extract_strided_slice %82 {offsets = [0, 0], sizes = [8, 891], strides = [1, 1]} : vector<8x892xf32> to vector<8x891xf32>
    %84 = vector.extract_strided_slice %82 {offsets = [0, 1], sizes = [8, 891], strides = [1, 1]} : vector<8x892xf32> to vector<8x891xf32>
    %85 = arith.maximumf %83, %84 : vector<8x891xf32>
    %86 = vector.extract_strided_slice %85 {offsets = [0, 0], sizes = [8, 859], strides = [1, 1]} : vector<8x891xf32> to vector<8x859xf32>
    %87 = vector.extract_strided_slice %85 {offsets = [0, 32], sizes = [8, 859], strides = [1, 1]} : vector<8x891xf32> to vector<8x859xf32>
    %88 = arith.maximumf %86, %87 : vector<8x859xf32>
    %c0_87 = arith.constant 0 : index
    %c0_88 = arith.constant 0 : index
    %89 = vector.load %arg4[%c0_87, %c0_88] : memref<859x196xf32, #tpu.memory_space<vmem>>, vector<859x196xf32>
    %cst_89 = arith.constant dense<0.000000e+00> : vector<8x196xf32>
    %90 = tpu.matmul %88, %89, %cst_89 {dimension_numbers = #tpu.dot_dimension_numbers<[1], [0], [0], [1], [0, 0, 1, 1], [], []>} : vector<8x859xf32>, vector<859x196xf32>, vector<8x196xf32> -> vector<8x196xf32>
    %c0_90 = arith.constant 0 : index
    %c0_91 = arith.constant 0 : index
    %c0_92 = arith.constant 0 : index
    %91 = vector.load %arg5[%c0_90, %c0_91, %c0_92] : memref<2x8x196xf32, #tpu.memory_space<vmem>>, vector<1x8x196xf32>
    %92 = vector.shape_cast %91 : vector<1x8x196xf32> to vector<8x196xf32>
    %93 = vector.shape_cast %90 : vector<8x196xf32> to vector<1x8x196xf32>
    tpu.vector_store %arg5[%c0_90, %c0_91, %c0_92], %93 {strides = array<i32>} : memref<2x8x196xf32, #tpu.memory_space<vmem>>, vector<1x8x196xf32>,
    %c1_93 = arith.constant 1 : index
    %c0_94 = arith.constant 0 : index
    %c0_95 = arith.constant 0 : index
    %94 = vector.load %arg1[%c1_93, %c0_94, %c0_95] : memref<2x8x1024xf32, #tpu.memory_space<vmem>>, vector<1x8x892xf32>
    %95 = vector.shape_cast %94 : vector<1x8x892xf32> to vector<8x892xf32>
    %c0_96 = arith.constant 0 : index
    %c0_97 = arith.constant 0 : index
    %96 = vector.load %arg6[%c0_96, %c0_97] : memref<200x892xf32, #tpu.memory_space<vmem>>, vector<8x892xf32>
    tpu.vector_store %arg6[%c0_96, %c0_97], %95 {strides = array<i32>} : memref<200x892xf32, #tpu.memory_space<vmem>>, vector<8x892xf32>,
    %c1_98 = arith.constant 1 : index
    %c0_99 = arith.constant 0 : index
    %c1_100 = arith.constant 1 : index
    %97 = vector.load %arg1[%c1_98, %c0_99, %c1_100] : memref<2x8x1024xf32, #tpu.memory_space<vmem>>, vector<1x8x892xf32>
    %98 = vector.shape_cast %97 : vector<1x8x892xf32> to vector<8x892xf32>
    %c8_101 = arith.constant 8 : index
    %c0_102 = arith.constant 0 : index
    %99 = vector.load %arg6[%c8_101, %c0_102] : memref<200x892xf32, #tpu.memory_space<vmem>>, vector<8x892xf32>
    tpu.vector_store %arg6[%c8_101, %c0_102], %98 {strides = array<i32>} : memref<200x892xf32, #tpu.memory_space<vmem>>, vector<8x892xf32>,
    %c1_103 = arith.constant 1 : index
    %c0_104 = arith.constant 0 : index
    %c2_105 = arith.constant 2 : index
    %100 = vector.load %arg1[%c1_103, %c0_104, %c2_105] : memref<2x8x1024xf32, #tpu.memory_space<vmem>>, vector<1x8x892xf32>
    %101 = vector.shape_cast %100 : vector<1x8x892xf32> to vector<8x892xf32>
    %c16_106 = arith.constant 16 : index
    %c0_107 = arith.constant 0 : index
    %102 = vector.load %arg6[%c16_106, %c0_107] : memref<200x892xf32, #tpu.memory_space<vmem>>, vector<8x892xf32>
    tpu.vector_store %arg6[%c16_106, %c0_107], %101 {strides = array<i32>} : memref<200x892xf32, #tpu.memory_space<vmem>>, vector<8x892xf32>,
    %c1_108 = arith.constant 1 : index
    %c0_109 = arith.constant 0 : index
    %c3_110 = arith.constant 3 : index
    %103 = vector.load %arg1[%c1_108, %c0_109, %c3_110] : memref<2x8x1024xf32, #tpu.memory_space<vmem>>, vector<1x8x892xf32>
    %104 = vector.shape_cast %103 : vector<1x8x892xf32> to vector<8x892xf32>
    %c24_111 = arith.constant 24 : index
    %c0_112 = arith.constant 0 : index
    %105 = vector.load %arg6[%c24_111, %c0_112] : memref<200x892xf32, #tpu.memory_space<vmem>>, vector<8x892xf32>
    tpu.vector_store %arg6[%c24_111, %c0_112], %104 {strides = array<i32>} : memref<200x892xf32, #tpu.memory_space<vmem>>, vector<8x892xf32>,
    %c1_113 = arith.constant 1 : index
    %c0_114 = arith.constant 0 : index
    %c4_115 = arith.constant 4 : index
    %106 = vector.load %arg1[%c1_113, %c0_114, %c4_115] : memref<2x8x1024xf32, #tpu.memory_space<vmem>>, vector<1x8x892xf32>
    %107 = vector.shape_cast %106 : vector<1x8x892xf32> to vector<8x892xf32>
    %c32_116 = arith.constant 32 : index
    %c0_117 = arith.constant 0 : index
    %108 = vector.load %arg6[%c32_116, %c0_117] : memref<200x892xf32, #tpu.memory_space<vmem>>, vector<8x892xf32>
    tpu.vector_store %arg6[%c32_116, %c0_117], %107 {strides = array<i32>} : memref<200x892xf32, #tpu.memory_space<vmem>>, vector<8x892xf32>,
    %c1_118 = arith.constant 1 : index
    %c0_119 = arith.constant 0 : index
    %c32_120 = arith.constant 32 : index
    %109 = vector.load %arg1[%c1_118, %c0_119, %c32_120] : memref<2x8x1024xf32, #tpu.memory_space<vmem>>, vector<1x8x892xf32>
    %110 = vector.shape_cast %109 : vector<1x8x892xf32> to vector<8x892xf32>
    %c40_121 = arith.constant 40 : index
    %c0_122 = arith.constant 0 : index
    %111 = vector.load %arg6[%c40_121, %c0_122] : memref<200x892xf32, #tpu.memory_space<vmem>>, vector<8x892xf32>
    tpu.vector_store %arg6[%c40_121, %c0_122], %110 {strides = array<i32>} : memref<200x892xf32, #tpu.memory_space<vmem>>, vector<8x892xf32>,
    %c1_123 = arith.constant 1 : index
    %c0_124 = arith.constant 0 : index
    %c33_125 = arith.constant 33 : index
    %112 = vector.load %arg1[%c1_123, %c0_124, %c33_125] : memref<2x8x1024xf32, #tpu.memory_space<vmem>>, vector<1x8x892xf32>
    %113 = vector.shape_cast %112 : vector<1x8x892xf32> to vector<8x892xf32>
    %c48_126 = arith.constant 48 : index
    %c0_127 = arith.constant 0 : index
    %114 = vector.load %arg6[%c48_126, %c0_127] : memref<200x892xf32, #tpu.memory_space<vmem>>, vector<8x892xf32>
    tpu.vector_store %arg6[%c48_126, %c0_127], %113 {strides = array<i32>} : memref<200x892xf32, #tpu.memory_space<vmem>>, vector<8x892xf32>,
    %c1_128 = arith.constant 1 : index
    %c0_129 = arith.constant 0 : index
    %c34_130 = arith.constant 34 : index
    %115 = vector.load %arg1[%c1_128, %c0_129, %c34_130] : memref<2x8x1024xf32, #tpu.memory_space<vmem>>, vector<1x8x892xf32>
    %116 = vector.shape_cast %115 : vector<1x8x892xf32> to vector<8x892xf32>
    %c56_131 = arith.constant 56 : index
    %c0_132 = arith.constant 0 : index
    %117 = vector.load %arg6[%c56_131, %c0_132] : memref<200x892xf32, #tpu.memory_space<vmem>>, vector<8x892xf32>
    tpu.vector_store %arg6[%c56_131, %c0_132], %116 {strides = array<i32>} : memref<200x892xf32, #tpu.memory_space<vmem>>, vector<8x892xf32>,
    %c1_133 = arith.constant 1 : index
    %c0_134 = arith.constant 0 : index
    %c35_135 = arith.constant 35 : index
    %118 = vector.load %arg1[%c1_133, %c0_134, %c35_135] : memref<2x8x1024xf32, #tpu.memory_space<vmem>>, vector<1x8x892xf32>
    %119 = vector.shape_cast %118 : vector<1x8x892xf32> to vector<8x892xf32>
    %c64_136 = arith.constant 64 : index
    %c0_137 = arith.constant 0 : index
    %120 = vector.load %arg6[%c64_136, %c0_137] : memref<200x892xf32, #tpu.memory_space<vmem>>, vector<8x892xf32>
    tpu.vector_store %arg6[%c64_136, %c0_137], %119 {strides = array<i32>} : memref<200x892xf32, #tpu.memory_space<vmem>>, vector<8x892xf32>,
    %c1_138 = arith.constant 1 : index
    %c0_139 = arith.constant 0 : index
    %c36_140 = arith.constant 36 : index
    %121 = vector.load %arg1[%c1_138, %c0_139, %c36_140] : memref<2x8x1024xf32, #tpu.memory_space<vmem>>, vector<1x8x892xf32>
    %122 = vector.shape_cast %121 : vector<1x8x892xf32> to vector<8x892xf32>
    %c72_141 = arith.constant 72 : index
    %c0_142 = arith.constant 0 : index
    %123 = vector.load %arg6[%c72_141, %c0_142] : memref<200x892xf32, #tpu.memory_space<vmem>>, vector<8x892xf32>
    tpu.vector_store %arg6[%c72_141, %c0_142], %122 {strides = array<i32>} : memref<200x892xf32, #tpu.memory_space<vmem>>, vector<8x892xf32>,
    %c1_143 = arith.constant 1 : index
    %c0_144 = arith.constant 0 : index
    %c64_145 = arith.constant 64 : index
    %124 = vector.load %arg1[%c1_143, %c0_144, %c64_145] : memref<2x8x1024xf32, #tpu.memory_space<vmem>>, vector<1x8x892xf32>
    %125 = vector.shape_cast %124 : vector<1x8x892xf32> to vector<8x892xf32>
    %c80_146 = arith.constant 80 : index
    %c0_147 = arith.constant 0 : index
    %126 = vector.load %arg6[%c80_146, %c0_147] : memref<200x892xf32, #tpu.memory_space<vmem>>, vector<8x892xf32>
    tpu.vector_store %arg6[%c80_146, %c0_147], %125 {strides = array<i32>} : memref<200x892xf32, #tpu.memory_space<vmem>>, vector<8x892xf32>,
    %c1_148 = arith.constant 1 : index
    %c0_149 = arith.constant 0 : index
    %c65_150 = arith.constant 65 : index
    %127 = vector.load %arg1[%c1_148, %c0_149, %c65_150] : memref<2x8x1024xf32, #tpu.memory_space<vmem>>, vector<1x8x892xf32>
    %128 = vector.shape_cast %127 : vector<1x8x892xf32> to vector<8x892xf32>
    %c88_151 = arith.constant 88 : index
    %c0_152 = arith.constant 0 : index
    %129 = vector.load %arg6[%c88_151, %c0_152] : memref<200x892xf32, #tpu.memory_space<vmem>>, vector<8x892xf32>
    tpu.vector_store %arg6[%c88_151, %c0_152], %128 {strides = array<i32>} : memref<200x892xf32, #tpu.memory_space<vmem>>, vector<8x892xf32>,
    %c1_153 = arith.constant 1 : index
    %c0_154 = arith.constant 0 : index
    %c66_155 = arith.constant 66 : index
    %130 = vector.load %arg1[%c1_153, %c0_154, %c66_155] : memref<2x8x1024xf32, #tpu.memory_space<vmem>>, vector<1x8x892xf32>
    %131 = vector.shape_cast %130 : vector<1x8x892xf32> to vector<8x892xf32>
    %c96_156 = arith.constant 96 : index
    %c0_157 = arith.constant 0 : index
    %132 = vector.load %arg6[%c96_156, %c0_157] : memref<200x892xf32, #tpu.memory_space<vmem>>, vector<8x892xf32>
    tpu.vector_store %arg6[%c96_156, %c0_157], %131 {strides = array<i32>} : memref<200x892xf32, #tpu.memory_space<vmem>>, vector<8x892xf32>,
    %c1_158 = arith.constant 1 : index
    %c0_159 = arith.constant 0 : index
    %c67_160 = arith.constant 67 : index
    %133 = vector.load %arg1[%c1_158, %c0_159, %c67_160] : memref<2x8x1024xf32, #tpu.memory_space<vmem>>, vector<1x8x892xf32>
    %134 = vector.shape_cast %133 : vector<1x8x892xf32> to vector<8x892xf32>
    %c104_161 = arith.constant 104 : index
    %c0_162 = arith.constant 0 : index
    %135 = vector.load %arg6[%c104_161, %c0_162] : memref<200x892xf32, #tpu.memory_space<vmem>>, vector<8x892xf32>
    tpu.vector_store %arg6[%c104_161, %c0_162], %134 {strides = array<i32>} : memref<200x892xf32, #tpu.memory_space<vmem>>, vector<8x892xf32>,
    %c1_163 = arith.constant 1 : index
    %c0_164 = arith.constant 0 : index
    %c68_165 = arith.constant 68 : index
    %136 = vector.load %arg1[%c1_163, %c0_164, %c68_165] : memref<2x8x1024xf32, #tpu.memory_space<vmem>>, vector<1x8x892xf32>
    %137 = vector.shape_cast %136 : vector<1x8x892xf32> to vector<8x892xf32>
    %c112_166 = arith.constant 112 : index
    %c0_167 = arith.constant 0 : index
    %138 = vector.load %arg6[%c112_166, %c0_167] : memref<200x892xf32, #tpu.memory_space<vmem>>, vector<8x892xf32>
    tpu.vector_store %arg6[%c112_166, %c0_167], %137 {strides = array<i32>} : memref<200x892xf32, #tpu.memory_space<vmem>>, vector<8x892xf32>,
    %c1_168 = arith.constant 1 : index
    %c0_169 = arith.constant 0 : index
    %c96_170 = arith.constant 96 : index
    %139 = vector.load %arg1[%c1_168, %c0_169, %c96_170] : memref<2x8x1024xf32, #tpu.memory_space<vmem>>, vector<1x8x892xf32>
    %140 = vector.shape_cast %139 : vector<1x8x892xf32> to vector<8x892xf32>
    %c120_171 = arith.constant 120 : index
    %c0_172 = arith.constant 0 : index
    %141 = vector.load %arg6[%c120_171, %c0_172] : memref<200x892xf32, #tpu.memory_space<vmem>>, vector<8x892xf32>
    tpu.vector_store %arg6[%c120_171, %c0_172], %140 {strides = array<i32>} : memref<200x892xf32, #tpu.memory_space<vmem>>, vector<8x892xf32>,
    %c1_173 = arith.constant 1 : index
    %c0_174 = arith.constant 0 : index
    %c97_175 = arith.constant 97 : index
    %142 = vector.load %arg1[%c1_173, %c0_174, %c97_175] : memref<2x8x1024xf32, #tpu.memory_space<vmem>>, vector<1x8x892xf32>
    %143 = vector.shape_cast %142 : vector<1x8x892xf32> to vector<8x892xf32>
    %c128_176 = arith.constant 128 : index
    %c0_177 = arith.constant 0 : index
    %144 = vector.load %arg6[%c128_176, %c0_177] : memref<200x892xf32, #tpu.memory_space<vmem>>, vector<8x892xf32>
    tpu.vector_store %arg6[%c128_176, %c0_177], %143 {strides = array<i32>} : memref<200x892xf32, #tpu.memory_space<vmem>>, vector<8x892xf32>,
    %c1_178 = arith.constant 1 : index
    %c0_179 = arith.constant 0 : index
    %c98_180 = arith.constant 98 : index
    %145 = vector.load %arg1[%c1_178, %c0_179, %c98_180] : memref<2x8x1024xf32, #tpu.memory_space<vmem>>, vector<1x8x892xf32>
    %146 = vector.shape_cast %145 : vector<1x8x892xf32> to vector<8x892xf32>
    %c136_181 = arith.constant 136 : index
    %c0_182 = arith.constant 0 : index
    %147 = vector.load %arg6[%c136_181, %c0_182] : memref<200x892xf32, #tpu.memory_space<vmem>>, vector<8x892xf32>
    tpu.vector_store %arg6[%c136_181, %c0_182], %146 {strides = array<i32>} : memref<200x892xf32, #tpu.memory_space<vmem>>, vector<8x892xf32>,
    %c1_183 = arith.constant 1 : index
    %c0_184 = arith.constant 0 : index
    %c99_185 = arith.constant 99 : index
    %148 = vector.load %arg1[%c1_183, %c0_184, %c99_185] : memref<2x8x1024xf32, #tpu.memory_space<vmem>>, vector<1x8x892xf32>
    %149 = vector.shape_cast %148 : vector<1x8x892xf32> to vector<8x892xf32>
    %c144_186 = arith.constant 144 : index
    %c0_187 = arith.constant 0 : index
    %150 = vector.load %arg6[%c144_186, %c0_187] : memref<200x892xf32, #tpu.memory_space<vmem>>, vector<8x892xf32>
    tpu.vector_store %arg6[%c144_186, %c0_187], %149 {strides = array<i32>} : memref<200x892xf32, #tpu.memory_space<vmem>>, vector<8x892xf32>,
    %c1_188 = arith.constant 1 : index
    %c0_189 = arith.constant 0 : index
    %c100_190 = arith.constant 100 : index
    %151 = vector.load %arg1[%c1_188, %c0_189, %c100_190] : memref<2x8x1024xf32, #tpu.memory_space<vmem>>, vector<1x8x892xf32>
    %152 = vector.shape_cast %151 : vector<1x8x892xf32> to vector<8x892xf32>
    %c152_191 = arith.constant 152 : index
    %c0_192 = arith.constant 0 : index
    %153 = vector.load %arg6[%c152_191, %c0_192] : memref<200x892xf32, #tpu.memory_space<vmem>>, vector<8x892xf32>
    tpu.vector_store %arg6[%c152_191, %c0_192], %152 {strides = array<i32>} : memref<200x892xf32, #tpu.memory_space<vmem>>, vector<8x892xf32>,
    %c1_193 = arith.constant 1 : index
    %c0_194 = arith.constant 0 : index
    %c128_195 = arith.constant 128 : index
    %154 = vector.load %arg1[%c1_193, %c0_194, %c128_195] : memref<2x8x1024xf32, #tpu.memory_space<vmem>>, vector<1x8x892xf32>
    %155 = vector.shape_cast %154 : vector<1x8x892xf32> to vector<8x892xf32>
    %c160_196 = arith.constant 160 : index
    %c0_197 = arith.constant 0 : index
    %156 = vector.load %arg6[%c160_196, %c0_197] : memref<200x892xf32, #tpu.memory_space<vmem>>, vector<8x892xf32>
    tpu.vector_store %arg6[%c160_196, %c0_197], %155 {strides = array<i32>} : memref<200x892xf32, #tpu.memory_space<vmem>>, vector<8x892xf32>,
    %c1_198 = arith.constant 1 : index
    %c0_199 = arith.constant 0 : index
    %c129_200 = arith.constant 129 : index
    %157 = vector.load %arg1[%c1_198, %c0_199, %c129_200] : memref<2x8x1024xf32, #tpu.memory_space<vmem>>, vector<1x8x892xf32>
    %158 = vector.shape_cast %157 : vector<1x8x892xf32> to vector<8x892xf32>
    %c168_201 = arith.constant 168 : index
    %c0_202 = arith.constant 0 : index
    %159 = vector.load %arg6[%c168_201, %c0_202] : memref<200x892xf32, #tpu.memory_space<vmem>>, vector<8x892xf32>
    tpu.vector_store %arg6[%c168_201, %c0_202], %158 {strides = array<i32>} : memref<200x892xf32, #tpu.memory_space<vmem>>, vector<8x892xf32>,
    %c1_203 = arith.constant 1 : index
    %c0_204 = arith.constant 0 : index
    %c130_205 = arith.constant 130 : index
    %160 = vector.load %arg1[%c1_203, %c0_204, %c130_205] : memref<2x8x1024xf32, #tpu.memory_space<vmem>>, vector<1x8x892xf32>
    %161 = vector.shape_cast %160 : vector<1x8x892xf32> to vector<8x892xf32>
    %c176_206 = arith.constant 176 : index
    %c0_207 = arith.constant 0 : index
    %162 = vector.load %arg6[%c176_206, %c0_207] : memref<200x892xf32, #tpu.memory_space<vmem>>, vector<8x892xf32>
    tpu.vector_store %arg6[%c176_206, %c0_207], %161 {strides = array<i32>} : memref<200x892xf32, #tpu.memory_space<vmem>>, vector<8x892xf32>,
    %c1_208 = arith.constant 1 : index
    %c0_209 = arith.constant 0 : index
    %c131_210 = arith.constant 131 : index
    %163 = vector.load %arg1[%c1_208, %c0_209, %c131_210] : memref<2x8x1024xf32, #tpu.memory_space<vmem>>, vector<1x8x892xf32>
    %164 = vector.shape_cast %163 : vector<1x8x892xf32> to vector<8x892xf32>
    %c184_211 = arith.constant 184 : index
    %c0_212 = arith.constant 0 : index
    %165 = vector.load %arg6[%c184_211, %c0_212] : memref<200x892xf32, #tpu.memory_space<vmem>>, vector<8x892xf32>
    tpu.vector_store %arg6[%c184_211, %c0_212], %164 {strides = array<i32>} : memref<200x892xf32, #tpu.memory_space<vmem>>, vector<8x892xf32>,
    %c1_213 = arith.constant 1 : index
    %c0_214 = arith.constant 0 : index
    %c132_215 = arith.constant 132 : index
    %166 = vector.load %arg1[%c1_213, %c0_214, %c132_215] : memref<2x8x1024xf32, #tpu.memory_space<vmem>>, vector<1x8x892xf32>
    %167 = vector.shape_cast %166 : vector<1x8x892xf32> to vector<8x892xf32>
    %c192_216 = arith.constant 192 : index
    %c0_217 = arith.constant 0 : index
    %168 = vector.load %arg6[%c192_216, %c0_217] : memref<200x892xf32, #tpu.memory_space<vmem>>, vector<8x892xf32>
    tpu.vector_store %arg6[%c192_216, %c0_217], %167 {strides = array<i32>} : memref<200x892xf32, #tpu.memory_space<vmem>>, vector<8x892xf32>,
    %c0_218 = arith.constant 0 : index
    %c0_219 = arith.constant 0 : index
    %169 = vector.load %arg2[%c0_218, %c0_219] : memref<8x200xf32, #tpu.memory_space<vmem>>, vector<8x200xf32>
    %c0_220 = arith.constant 0 : index
    %c0_221 = arith.constant 0 : index
    %170 = vector.load %arg6[%c0_220, %c0_221] : memref<200x892xf32, #tpu.memory_space<vmem>>, vector<200x892xf32>
    %cst_222 = arith.constant dense<0.000000e+00> : vector<8x892xf32>
    %171 = tpu.matmul %169, %170, %cst_222 {dimension_numbers = #tpu.dot_dimension_numbers<[1], [0], [0], [1], [0, 0, 1, 1], [], []>} : vector<8x200xf32>, vector<200x892xf32>, vector<8x892xf32> -> vector<8x892xf32>
    %c0_223 = arith.constant 0 : index
    %c0_224 = arith.constant 0 : index
    %172 = vector.load %arg3[%c0_223, %c0_224] : memref<8x1xf32, #tpu.memory_space<vmem>>, vector<8x1xf32>
    %173 = vector.broadcast %172 : vector<8x1xf32> to vector<8x892xf32>
    %174 = arith.addf %171, %173 : vector<8x892xf32>
    %cst_225 = arith.constant 0.000000e+00 : f32
    %175 = vector.broadcast %cst_225 : f32 to vector<8x892xf32>
    %176 = arith.maximumf %174, %175 : vector<8x892xf32>
    %177 = vector.extract_strided_slice %176 {offsets = [0, 0], sizes = [8, 891], strides = [1, 1]} : vector<8x892xf32> to vector<8x891xf32>
    %178 = vector.extract_strided_slice %176 {offsets = [0, 1], sizes = [8, 891], strides = [1, 1]} : vector<8x892xf32> to vector<8x891xf32>
    %179 = arith.maximumf %177, %178 : vector<8x891xf32>
    %180 = vector.extract_strided_slice %179 {offsets = [0, 0], sizes = [8, 859], strides = [1, 1]} : vector<8x891xf32> to vector<8x859xf32>
    %181 = vector.extract_strided_slice %179 {offsets = [0, 32], sizes = [8, 859], strides = [1, 1]} : vector<8x891xf32> to vector<8x859xf32>
    %182 = arith.maximumf %180, %181 : vector<8x859xf32>
    %c0_226 = arith.constant 0 : index
    %c0_227 = arith.constant 0 : index
    %183 = vector.load %arg4[%c0_226, %c0_227] : memref<859x196xf32, #tpu.memory_space<vmem>>, vector<859x196xf32>
    %cst_228 = arith.constant dense<0.000000e+00> : vector<8x196xf32>
    %184 = tpu.matmul %182, %183, %cst_228 {dimension_numbers = #tpu.dot_dimension_numbers<[1], [0], [0], [1], [0, 0, 1, 1], [], []>} : vector<8x859xf32>, vector<859x196xf32>, vector<8x196xf32> -> vector<8x196xf32>
    %c1_229 = arith.constant 1 : index
    %c0_230 = arith.constant 0 : index
    %c0_231 = arith.constant 0 : index
    %185 = vector.load %arg5[%c1_229, %c0_230, %c0_231] : memref<2x8x196xf32, #tpu.memory_space<vmem>>, vector<1x8x196xf32>
    %186 = vector.shape_cast %185 : vector<1x8x196xf32> to vector<8x196xf32>
    %187 = vector.shape_cast %184 : vector<8x196xf32> to vector<1x8x196xf32>
    tpu.vector_store %arg5[%c1_229, %c0_230, %c0_231], %187 {strides = array<i32>} : memref<2x8x196xf32, #tpu.memory_space<vmem>>, vector<1x8x196xf32>,
    return
  }
  func.func @transform_0(%arg0: i32) -> (i32, i32, i32) {
    %c0_i32 = arith.constant 0 : i32
    %c0_i32_0 = arith.constant 0 : i32
    %c0_i32_1 = arith.constant 0 : i32
    return %arg0, %c0_i32, %c0_i32_0 : i32, i32, i32
  }
  func.func @transform_1(%arg0: i32) -> (i32, i32) {
    %c0_i32 = arith.constant 0 : i32
    %c0_i32_0 = arith.constant 0 : i32
    %c0_i32_1 = arith.constant 0 : i32
    return %c0_i32, %c0_i32_0 : i32, i32
  }
  func.func @transform_2(%arg0: i32) -> (i32, i32) {
    %c0_i32 = arith.constant 0 : i32
    %c0_i32_0 = arith.constant 0 : i32
    %c0_i32_1 = arith.constant 0 : i32
    return %c0_i32, %c0_i32_0 : i32, i32
  }
  func.func @transform_3(%arg0: i32) -> (i32, i32) {
    %c0_i32 = arith.constant 0 : i32
    %c0_i32_0 = arith.constant 0 : i32
    %c0_i32_1 = arith.constant 0 : i32
    return %c0_i32, %c0_i32_0 : i32, i32
  }
  func.func @transform_4(%arg0: i32) -> (i32, i32, i32) {
    %c0_i32 = arith.constant 0 : i32
    %c0_i32_0 = arith.constant 0 : i32
    %c0_i32_1 = arith.constant 0 : i32
    return %arg0, %c0_i32, %c0_i32_0 : i32, i32, i32
  }
}

module attributes {stable_mosaic.version = 11 : i64} {
  func.func @_conv_relu_pool_kernel(%arg0: i32, %arg1: memref<2x8x196xf32, #tpu.memory_space<vmem>>, %arg2: memref<16x200xf32, #tpu.memory_space<vmem>>, %arg3: memref<16x1xf32, #tpu.memory_space<vmem>>, %arg4: memref<121x25xf32, #tpu.memory_space<vmem>>, %arg5: memref<2x16x25xf32, #tpu.memory_space<vmem>>, %arg6: memref<200x136xf32, #tpu.memory_space<vmem>>) attributes {dimension_semantics = [#tpu.dimension_semantics<parallel>], iteration_bounds = array<i64: 1>, scalar_prefetch = 0 : i64, scratch_operands = 1 : i64, tpu.core_type = #tpu.core_type<tc>, window_params = [{transform_indices = @transform_0, window_bounds = array<i64: 2, 8, 196>}, {pipeline_mode = #tpu.pipeline_mode<synchronous>, transform_indices = @transform_1, window_bounds = array<i64: 16, 200>}, {pipeline_mode = #tpu.pipeline_mode<synchronous>, transform_indices = @transform_2, window_bounds = array<i64: 16, 1>}, {pipeline_mode = #tpu.pipeline_mode<synchronous>, transform_indices = @transform_3, window_bounds = array<i64: 121, 25>}, {transform_indices = @transform_4, window_bounds = array<i64: 2, 16, 25>}]} {
    %c0 = arith.constant 0 : index
    %c0_0 = arith.constant 0 : index
    %c0_1 = arith.constant 0 : index
    %0 = vector.load %arg1[%c0, %c0_0, %c0_1] : memref<2x8x196xf32, #tpu.memory_space<vmem>>, vector<1x8x136xf32>
    %1 = vector.shape_cast %0 : vector<1x8x136xf32> to vector<8x136xf32>
    %c0_2 = arith.constant 0 : index
    %c0_3 = arith.constant 0 : index
    %2 = vector.load %arg6[%c0_2, %c0_3] : memref<200x136xf32, #tpu.memory_space<vmem>>, vector<8x136xf32>
    tpu.vector_store %arg6[%c0_2, %c0_3], %1 {strides = array<i32>} : memref<200x136xf32, #tpu.memory_space<vmem>>, vector<8x136xf32>,
    %c0_4 = arith.constant 0 : index
    %c0_5 = arith.constant 0 : index
    %c1 = arith.constant 1 : index
    %3 = vector.load %arg1[%c0_4, %c0_5, %c1] : memref<2x8x196xf32, #tpu.memory_space<vmem>>, vector<1x8x136xf32>
    %4 = vector.shape_cast %3 : vector<1x8x136xf32> to vector<8x136xf32>
    %c8 = arith.constant 8 : index
    %c0_6 = arith.constant 0 : index
    %5 = vector.load %arg6[%c8, %c0_6] : memref<200x136xf32, #tpu.memory_space<vmem>>, vector<8x136xf32>
    tpu.vector_store %arg6[%c8, %c0_6], %4 {strides = array<i32>} : memref<200x136xf32, #tpu.memory_space<vmem>>, vector<8x136xf32>,
    %c0_7 = arith.constant 0 : index
    %c0_8 = arith.constant 0 : index
    %c2 = arith.constant 2 : index
    %6 = vector.load %arg1[%c0_7, %c0_8, %c2] : memref<2x8x196xf32, #tpu.memory_space<vmem>>, vector<1x8x136xf32>
    %7 = vector.shape_cast %6 : vector<1x8x136xf32> to vector<8x136xf32>
    %c16 = arith.constant 16 : index
    %c0_9 = arith.constant 0 : index
    %8 = vector.load %arg6[%c16, %c0_9] : memref<200x136xf32, #tpu.memory_space<vmem>>, vector<8x136xf32>
    tpu.vector_store %arg6[%c16, %c0_9], %7 {strides = array<i32>} : memref<200x136xf32, #tpu.memory_space<vmem>>, vector<8x136xf32>,
    %c0_10 = arith.constant 0 : index
    %c0_11 = arith.constant 0 : index
    %c3 = arith.constant 3 : index
    %9 = vector.load %arg1[%c0_10, %c0_11, %c3] : memref<2x8x196xf32, #tpu.memory_space<vmem>>, vector<1x8x136xf32>
    %10 = vector.shape_cast %9 : vector<1x8x136xf32> to vector<8x136xf32>
    %c24 = arith.constant 24 : index
    %c0_12 = arith.constant 0 : index
    %11 = vector.load %arg6[%c24, %c0_12] : memref<200x136xf32, #tpu.memory_space<vmem>>, vector<8x136xf32>
    tpu.vector_store %arg6[%c24, %c0_12], %10 {strides = array<i32>} : memref<200x136xf32, #tpu.memory_space<vmem>>, vector<8x136xf32>,
    %c0_13 = arith.constant 0 : index
    %c0_14 = arith.constant 0 : index
    %c4 = arith.constant 4 : index
    %12 = vector.load %arg1[%c0_13, %c0_14, %c4] : memref<2x8x196xf32, #tpu.memory_space<vmem>>, vector<1x8x136xf32>
    %13 = vector.shape_cast %12 : vector<1x8x136xf32> to vector<8x136xf32>
    %c32 = arith.constant 32 : index
    %c0_15 = arith.constant 0 : index
    %14 = vector.load %arg6[%c32, %c0_15] : memref<200x136xf32, #tpu.memory_space<vmem>>, vector<8x136xf32>
    tpu.vector_store %arg6[%c32, %c0_15], %13 {strides = array<i32>} : memref<200x136xf32, #tpu.memory_space<vmem>>, vector<8x136xf32>,
    %c0_16 = arith.constant 0 : index
    %c0_17 = arith.constant 0 : index
    %c14 = arith.constant 14 : index
    %15 = vector.load %arg1[%c0_16, %c0_17, %c14] : memref<2x8x196xf32, #tpu.memory_space<vmem>>, vector<1x8x136xf32>
    %16 = vector.shape_cast %15 : vector<1x8x136xf32> to vector<8x136xf32>
    %c40 = arith.constant 40 : index
    %c0_18 = arith.constant 0 : index
    %17 = vector.load %arg6[%c40, %c0_18] : memref<200x136xf32, #tpu.memory_space<vmem>>, vector<8x136xf32>
    tpu.vector_store %arg6[%c40, %c0_18], %16 {strides = array<i32>} : memref<200x136xf32, #tpu.memory_space<vmem>>, vector<8x136xf32>,
    %c0_19 = arith.constant 0 : index
    %c0_20 = arith.constant 0 : index
    %c15 = arith.constant 15 : index
    %18 = vector.load %arg1[%c0_19, %c0_20, %c15] : memref<2x8x196xf32, #tpu.memory_space<vmem>>, vector<1x8x136xf32>
    %19 = vector.shape_cast %18 : vector<1x8x136xf32> to vector<8x136xf32>
    %c48 = arith.constant 48 : index
    %c0_21 = arith.constant 0 : index
    %20 = vector.load %arg6[%c48, %c0_21] : memref<200x136xf32, #tpu.memory_space<vmem>>, vector<8x136xf32>
    tpu.vector_store %arg6[%c48, %c0_21], %19 {strides = array<i32>} : memref<200x136xf32, #tpu.memory_space<vmem>>, vector<8x136xf32>,
    %c0_22 = arith.constant 0 : index
    %c0_23 = arith.constant 0 : index
    %c16_24 = arith.constant 16 : index
    %21 = vector.load %arg1[%c0_22, %c0_23, %c16_24] : memref<2x8x196xf32, #tpu.memory_space<vmem>>, vector<1x8x136xf32>
    %22 = vector.shape_cast %21 : vector<1x8x136xf32> to vector<8x136xf32>
    %c56 = arith.constant 56 : index
    %c0_25 = arith.constant 0 : index
    %23 = vector.load %arg6[%c56, %c0_25] : memref<200x136xf32, #tpu.memory_space<vmem>>, vector<8x136xf32>
    tpu.vector_store %arg6[%c56, %c0_25], %22 {strides = array<i32>} : memref<200x136xf32, #tpu.memory_space<vmem>>, vector<8x136xf32>,
    %c0_26 = arith.constant 0 : index
    %c0_27 = arith.constant 0 : index
    %c17 = arith.constant 17 : index
    %24 = vector.load %arg1[%c0_26, %c0_27, %c17] : memref<2x8x196xf32, #tpu.memory_space<vmem>>, vector<1x8x136xf32>
    %25 = vector.shape_cast %24 : vector<1x8x136xf32> to vector<8x136xf32>
    %c64 = arith.constant 64 : index
    %c0_28 = arith.constant 0 : index
    %26 = vector.load %arg6[%c64, %c0_28] : memref<200x136xf32, #tpu.memory_space<vmem>>, vector<8x136xf32>
    tpu.vector_store %arg6[%c64, %c0_28], %25 {strides = array<i32>} : memref<200x136xf32, #tpu.memory_space<vmem>>, vector<8x136xf32>,
    %c0_29 = arith.constant 0 : index
    %c0_30 = arith.constant 0 : index
    %c18 = arith.constant 18 : index
    %27 = vector.load %arg1[%c0_29, %c0_30, %c18] : memref<2x8x196xf32, #tpu.memory_space<vmem>>, vector<1x8x136xf32>
    %28 = vector.shape_cast %27 : vector<1x8x136xf32> to vector<8x136xf32>
    %c72 = arith.constant 72 : index
    %c0_31 = arith.constant 0 : index
    %29 = vector.load %arg6[%c72, %c0_31] : memref<200x136xf32, #tpu.memory_space<vmem>>, vector<8x136xf32>
    tpu.vector_store %arg6[%c72, %c0_31], %28 {strides = array<i32>} : memref<200x136xf32, #tpu.memory_space<vmem>>, vector<8x136xf32>,
    %c0_32 = arith.constant 0 : index
    %c0_33 = arith.constant 0 : index
    %c28 = arith.constant 28 : index
    %30 = vector.load %arg1[%c0_32, %c0_33, %c28] : memref<2x8x196xf32, #tpu.memory_space<vmem>>, vector<1x8x136xf32>
    %31 = vector.shape_cast %30 : vector<1x8x136xf32> to vector<8x136xf32>
    %c80 = arith.constant 80 : index
    %c0_34 = arith.constant 0 : index
    %32 = vector.load %arg6[%c80, %c0_34] : memref<200x136xf32, #tpu.memory_space<vmem>>, vector<8x136xf32>
    tpu.vector_store %arg6[%c80, %c0_34], %31 {strides = array<i32>} : memref<200x136xf32, #tpu.memory_space<vmem>>, vector<8x136xf32>,
    %c0_35 = arith.constant 0 : index
    %c0_36 = arith.constant 0 : index
    %c29 = arith.constant 29 : index
    %33 = vector.load %arg1[%c0_35, %c0_36, %c29] : memref<2x8x196xf32, #tpu.memory_space<vmem>>, vector<1x8x136xf32>
    %34 = vector.shape_cast %33 : vector<1x8x136xf32> to vector<8x136xf32>
    %c88 = arith.constant 88 : index
    %c0_37 = arith.constant 0 : index
    %35 = vector.load %arg6[%c88, %c0_37] : memref<200x136xf32, #tpu.memory_space<vmem>>, vector<8x136xf32>
    tpu.vector_store %arg6[%c88, %c0_37], %34 {strides = array<i32>} : memref<200x136xf32, #tpu.memory_space<vmem>>, vector<8x136xf32>,
    %c0_38 = arith.constant 0 : index
    %c0_39 = arith.constant 0 : index
    %c30 = arith.constant 30 : index
    %36 = vector.load %arg1[%c0_38, %c0_39, %c30] : memref<2x8x196xf32, #tpu.memory_space<vmem>>, vector<1x8x136xf32>
    %37 = vector.shape_cast %36 : vector<1x8x136xf32> to vector<8x136xf32>
    %c96 = arith.constant 96 : index
    %c0_40 = arith.constant 0 : index
    %38 = vector.load %arg6[%c96, %c0_40] : memref<200x136xf32, #tpu.memory_space<vmem>>, vector<8x136xf32>
    tpu.vector_store %arg6[%c96, %c0_40], %37 {strides = array<i32>} : memref<200x136xf32, #tpu.memory_space<vmem>>, vector<8x136xf32>,
    %c0_41 = arith.constant 0 : index
    %c0_42 = arith.constant 0 : index
    %c31 = arith.constant 31 : index
    %39 = vector.load %arg1[%c0_41, %c0_42, %c31] : memref<2x8x196xf32, #tpu.memory_space<vmem>>, vector<1x8x136xf32>
    %40 = vector.shape_cast %39 : vector<1x8x136xf32> to vector<8x136xf32>
    %c104 = arith.constant 104 : index
    %c0_43 = arith.constant 0 : index
    %41 = vector.load %arg6[%c104, %c0_43] : memref<200x136xf32, #tpu.memory_space<vmem>>, vector<8x136xf32>
    tpu.vector_store %arg6[%c104, %c0_43], %40 {strides = array<i32>} : memref<200x136xf32, #tpu.memory_space<vmem>>, vector<8x136xf32>,
    %c0_44 = arith.constant 0 : index
    %c0_45 = arith.constant 0 : index
    %c32_46 = arith.constant 32 : index
    %42 = vector.load %arg1[%c0_44, %c0_45, %c32_46] : memref<2x8x196xf32, #tpu.memory_space<vmem>>, vector<1x8x136xf32>
    %43 = vector.shape_cast %42 : vector<1x8x136xf32> to vector<8x136xf32>
    %c112 = arith.constant 112 : index
    %c0_47 = arith.constant 0 : index
    %44 = vector.load %arg6[%c112, %c0_47] : memref<200x136xf32, #tpu.memory_space<vmem>>, vector<8x136xf32>
    tpu.vector_store %arg6[%c112, %c0_47], %43 {strides = array<i32>} : memref<200x136xf32, #tpu.memory_space<vmem>>, vector<8x136xf32>,
    %c0_48 = arith.constant 0 : index
    %c0_49 = arith.constant 0 : index
    %c42 = arith.constant 42 : index
    %45 = vector.load %arg1[%c0_48, %c0_49, %c42] : memref<2x8x196xf32, #tpu.memory_space<vmem>>, vector<1x8x136xf32>
    %46 = vector.shape_cast %45 : vector<1x8x136xf32> to vector<8x136xf32>
    %c120 = arith.constant 120 : index
    %c0_50 = arith.constant 0 : index
    %47 = vector.load %arg6[%c120, %c0_50] : memref<200x136xf32, #tpu.memory_space<vmem>>, vector<8x136xf32>
    tpu.vector_store %arg6[%c120, %c0_50], %46 {strides = array<i32>} : memref<200x136xf32, #tpu.memory_space<vmem>>, vector<8x136xf32>,
    %c0_51 = arith.constant 0 : index
    %c0_52 = arith.constant 0 : index
    %c43 = arith.constant 43 : index
    %48 = vector.load %arg1[%c0_51, %c0_52, %c43] : memref<2x8x196xf32, #tpu.memory_space<vmem>>, vector<1x8x136xf32>
    %49 = vector.shape_cast %48 : vector<1x8x136xf32> to vector<8x136xf32>
    %c128 = arith.constant 128 : index
    %c0_53 = arith.constant 0 : index
    %50 = vector.load %arg6[%c128, %c0_53] : memref<200x136xf32, #tpu.memory_space<vmem>>, vector<8x136xf32>
    tpu.vector_store %arg6[%c128, %c0_53], %49 {strides = array<i32>} : memref<200x136xf32, #tpu.memory_space<vmem>>, vector<8x136xf32>,
    %c0_54 = arith.constant 0 : index
    %c0_55 = arith.constant 0 : index
    %c44 = arith.constant 44 : index
    %51 = vector.load %arg1[%c0_54, %c0_55, %c44] : memref<2x8x196xf32, #tpu.memory_space<vmem>>, vector<1x8x136xf32>
    %52 = vector.shape_cast %51 : vector<1x8x136xf32> to vector<8x136xf32>
    %c136 = arith.constant 136 : index
    %c0_56 = arith.constant 0 : index
    %53 = vector.load %arg6[%c136, %c0_56] : memref<200x136xf32, #tpu.memory_space<vmem>>, vector<8x136xf32>
    tpu.vector_store %arg6[%c136, %c0_56], %52 {strides = array<i32>} : memref<200x136xf32, #tpu.memory_space<vmem>>, vector<8x136xf32>,
    %c0_57 = arith.constant 0 : index
    %c0_58 = arith.constant 0 : index
    %c45 = arith.constant 45 : index
    %54 = vector.load %arg1[%c0_57, %c0_58, %c45] : memref<2x8x196xf32, #tpu.memory_space<vmem>>, vector<1x8x136xf32>
    %55 = vector.shape_cast %54 : vector<1x8x136xf32> to vector<8x136xf32>
    %c144 = arith.constant 144 : index
    %c0_59 = arith.constant 0 : index
    %56 = vector.load %arg6[%c144, %c0_59] : memref<200x136xf32, #tpu.memory_space<vmem>>, vector<8x136xf32>
    tpu.vector_store %arg6[%c144, %c0_59], %55 {strides = array<i32>} : memref<200x136xf32, #tpu.memory_space<vmem>>, vector<8x136xf32>,
    %c0_60 = arith.constant 0 : index
    %c0_61 = arith.constant 0 : index
    %c46 = arith.constant 46 : index
    %57 = vector.load %arg1[%c0_60, %c0_61, %c46] : memref<2x8x196xf32, #tpu.memory_space<vmem>>, vector<1x8x136xf32>
    %58 = vector.shape_cast %57 : vector<1x8x136xf32> to vector<8x136xf32>
    %c152 = arith.constant 152 : index
    %c0_62 = arith.constant 0 : index
    %59 = vector.load %arg6[%c152, %c0_62] : memref<200x136xf32, #tpu.memory_space<vmem>>, vector<8x136xf32>
    tpu.vector_store %arg6[%c152, %c0_62], %58 {strides = array<i32>} : memref<200x136xf32, #tpu.memory_space<vmem>>, vector<8x136xf32>,
    %c0_63 = arith.constant 0 : index
    %c0_64 = arith.constant 0 : index
    %c56_65 = arith.constant 56 : index
    %60 = vector.load %arg1[%c0_63, %c0_64, %c56_65] : memref<2x8x196xf32, #tpu.memory_space<vmem>>, vector<1x8x136xf32>
    %61 = vector.shape_cast %60 : vector<1x8x136xf32> to vector<8x136xf32>
    %c160 = arith.constant 160 : index
    %c0_66 = arith.constant 0 : index
    %62 = vector.load %arg6[%c160, %c0_66] : memref<200x136xf32, #tpu.memory_space<vmem>>, vector<8x136xf32>
    tpu.vector_store %arg6[%c160, %c0_66], %61 {strides = array<i32>} : memref<200x136xf32, #tpu.memory_space<vmem>>, vector<8x136xf32>,
    %c0_67 = arith.constant 0 : index
    %c0_68 = arith.constant 0 : index
    %c57 = arith.constant 57 : index
    %63 = vector.load %arg1[%c0_67, %c0_68, %c57] : memref<2x8x196xf32, #tpu.memory_space<vmem>>, vector<1x8x136xf32>
    %64 = vector.shape_cast %63 : vector<1x8x136xf32> to vector<8x136xf32>
    %c168 = arith.constant 168 : index
    %c0_69 = arith.constant 0 : index
    %65 = vector.load %arg6[%c168, %c0_69] : memref<200x136xf32, #tpu.memory_space<vmem>>, vector<8x136xf32>
    tpu.vector_store %arg6[%c168, %c0_69], %64 {strides = array<i32>} : memref<200x136xf32, #tpu.memory_space<vmem>>, vector<8x136xf32>,
    %c0_70 = arith.constant 0 : index
    %c0_71 = arith.constant 0 : index
    %c58 = arith.constant 58 : index
    %66 = vector.load %arg1[%c0_70, %c0_71, %c58] : memref<2x8x196xf32, #tpu.memory_space<vmem>>, vector<1x8x136xf32>
    %67 = vector.shape_cast %66 : vector<1x8x136xf32> to vector<8x136xf32>
    %c176 = arith.constant 176 : index
    %c0_72 = arith.constant 0 : index
    %68 = vector.load %arg6[%c176, %c0_72] : memref<200x136xf32, #tpu.memory_space<vmem>>, vector<8x136xf32>
    tpu.vector_store %arg6[%c176, %c0_72], %67 {strides = array<i32>} : memref<200x136xf32, #tpu.memory_space<vmem>>, vector<8x136xf32>,
    %c0_73 = arith.constant 0 : index
    %c0_74 = arith.constant 0 : index
    %c59 = arith.constant 59 : index
    %69 = vector.load %arg1[%c0_73, %c0_74, %c59] : memref<2x8x196xf32, #tpu.memory_space<vmem>>, vector<1x8x136xf32>
    %70 = vector.shape_cast %69 : vector<1x8x136xf32> to vector<8x136xf32>
    %c184 = arith.constant 184 : index
    %c0_75 = arith.constant 0 : index
    %71 = vector.load %arg6[%c184, %c0_75] : memref<200x136xf32, #tpu.memory_space<vmem>>, vector<8x136xf32>
    tpu.vector_store %arg6[%c184, %c0_75], %70 {strides = array<i32>} : memref<200x136xf32, #tpu.memory_space<vmem>>, vector<8x136xf32>,
    %c0_76 = arith.constant 0 : index
    %c0_77 = arith.constant 0 : index
    %c60 = arith.constant 60 : index
    %72 = vector.load %arg1[%c0_76, %c0_77, %c60] : memref<2x8x196xf32, #tpu.memory_space<vmem>>, vector<1x8x136xf32>
    %73 = vector.shape_cast %72 : vector<1x8x136xf32> to vector<8x136xf32>
    %c192 = arith.constant 192 : index
    %c0_78 = arith.constant 0 : index
    %74 = vector.load %arg6[%c192, %c0_78] : memref<200x136xf32, #tpu.memory_space<vmem>>, vector<8x136xf32>
    tpu.vector_store %arg6[%c192, %c0_78], %73 {strides = array<i32>} : memref<200x136xf32, #tpu.memory_space<vmem>>, vector<8x136xf32>,
    %c0_79 = arith.constant 0 : index
    %c0_80 = arith.constant 0 : index
    %75 = vector.load %arg2[%c0_79, %c0_80] : memref<16x200xf32, #tpu.memory_space<vmem>>, vector<16x200xf32>
    %c0_81 = arith.constant 0 : index
    %c0_82 = arith.constant 0 : index
    %76 = vector.load %arg6[%c0_81, %c0_82] : memref<200x136xf32, #tpu.memory_space<vmem>>, vector<200x136xf32>
    %cst = arith.constant dense<0.000000e+00> : vector<16x136xf32>
    %77 = tpu.matmul %75, %76, %cst {dimension_numbers = #tpu.dot_dimension_numbers<[1], [0], [0], [1], [0, 0, 1, 1], [], []>} : vector<16x200xf32>, vector<200x136xf32>, vector<16x136xf32> -> vector<16x136xf32>
    %c0_83 = arith.constant 0 : index
    %c0_84 = arith.constant 0 : index
    %78 = vector.load %arg3[%c0_83, %c0_84] : memref<16x1xf32, #tpu.memory_space<vmem>>, vector<16x1xf32>
    %79 = vector.broadcast %78 : vector<16x1xf32> to vector<16x136xf32>
    %80 = arith.addf %77, %79 : vector<16x136xf32>
    %cst_85 = arith.constant 0.000000e+00 : f32
    %81 = vector.broadcast %cst_85 : f32 to vector<16x136xf32>
    %82 = arith.maximumf %80, %81 : vector<16x136xf32>
    %83 = vector.extract_strided_slice %82 {offsets = [0, 0], sizes = [16, 135], strides = [1, 1]} : vector<16x136xf32> to vector<16x135xf32>
    %84 = vector.extract_strided_slice %82 {offsets = [0, 1], sizes = [16, 135], strides = [1, 1]} : vector<16x136xf32> to vector<16x135xf32>
    %85 = arith.maximumf %83, %84 : vector<16x135xf32>
    %86 = vector.extract_strided_slice %85 {offsets = [0, 0], sizes = [16, 121], strides = [1, 1]} : vector<16x135xf32> to vector<16x121xf32>
    %87 = vector.extract_strided_slice %85 {offsets = [0, 14], sizes = [16, 121], strides = [1, 1]} : vector<16x135xf32> to vector<16x121xf32>
    %88 = arith.maximumf %86, %87 : vector<16x121xf32>
    %c0_86 = arith.constant 0 : index
    %c0_87 = arith.constant 0 : index
    %89 = vector.load %arg4[%c0_86, %c0_87] : memref<121x25xf32, #tpu.memory_space<vmem>>, vector<121x25xf32>
    %cst_88 = arith.constant dense<0.000000e+00> : vector<16x25xf32>
    %90 = tpu.matmul %88, %89, %cst_88 {dimension_numbers = #tpu.dot_dimension_numbers<[1], [0], [0], [1], [0, 0, 1, 1], [], []>} : vector<16x121xf32>, vector<121x25xf32>, vector<16x25xf32> -> vector<16x25xf32>
    %c0_89 = arith.constant 0 : index
    %c0_90 = arith.constant 0 : index
    %c0_91 = arith.constant 0 : index
    %91 = vector.load %arg5[%c0_89, %c0_90, %c0_91] : memref<2x16x25xf32, #tpu.memory_space<vmem>>, vector<1x16x25xf32>
    %92 = vector.shape_cast %91 : vector<1x16x25xf32> to vector<16x25xf32>
    %93 = vector.shape_cast %90 : vector<16x25xf32> to vector<1x16x25xf32>
    tpu.vector_store %arg5[%c0_89, %c0_90, %c0_91], %93 {strides = array<i32>} : memref<2x16x25xf32, #tpu.memory_space<vmem>>, vector<1x16x25xf32>,
    %c1_92 = arith.constant 1 : index
    %c0_93 = arith.constant 0 : index
    %c0_94 = arith.constant 0 : index
    %94 = vector.load %arg1[%c1_92, %c0_93, %c0_94] : memref<2x8x196xf32, #tpu.memory_space<vmem>>, vector<1x8x136xf32>
    %95 = vector.shape_cast %94 : vector<1x8x136xf32> to vector<8x136xf32>
    %c0_95 = arith.constant 0 : index
    %c0_96 = arith.constant 0 : index
    %96 = vector.load %arg6[%c0_95, %c0_96] : memref<200x136xf32, #tpu.memory_space<vmem>>, vector<8x136xf32>
    tpu.vector_store %arg6[%c0_95, %c0_96], %95 {strides = array<i32>} : memref<200x136xf32, #tpu.memory_space<vmem>>, vector<8x136xf32>,
    %c1_97 = arith.constant 1 : index
    %c0_98 = arith.constant 0 : index
    %c1_99 = arith.constant 1 : index
    %97 = vector.load %arg1[%c1_97, %c0_98, %c1_99] : memref<2x8x196xf32, #tpu.memory_space<vmem>>, vector<1x8x136xf32>
    %98 = vector.shape_cast %97 : vector<1x8x136xf32> to vector<8x136xf32>
    %c8_100 = arith.constant 8 : index
    %c0_101 = arith.constant 0 : index
    %99 = vector.load %arg6[%c8_100, %c0_101] : memref<200x136xf32, #tpu.memory_space<vmem>>, vector<8x136xf32>
    tpu.vector_store %arg6[%c8_100, %c0_101], %98 {strides = array<i32>} : memref<200x136xf32, #tpu.memory_space<vmem>>, vector<8x136xf32>,
    %c1_102 = arith.constant 1 : index
    %c0_103 = arith.constant 0 : index
    %c2_104 = arith.constant 2 : index
    %100 = vector.load %arg1[%c1_102, %c0_103, %c2_104] : memref<2x8x196xf32, #tpu.memory_space<vmem>>, vector<1x8x136xf32>
    %101 = vector.shape_cast %100 : vector<1x8x136xf32> to vector<8x136xf32>
    %c16_105 = arith.constant 16 : index
    %c0_106 = arith.constant 0 : index
    %102 = vector.load %arg6[%c16_105, %c0_106] : memref<200x136xf32, #tpu.memory_space<vmem>>, vector<8x136xf32>
    tpu.vector_store %arg6[%c16_105, %c0_106], %101 {strides = array<i32>} : memref<200x136xf32, #tpu.memory_space<vmem>>, vector<8x136xf32>,
    %c1_107 = arith.constant 1 : index
    %c0_108 = arith.constant 0 : index
    %c3_109 = arith.constant 3 : index
    %103 = vector.load %arg1[%c1_107, %c0_108, %c3_109] : memref<2x8x196xf32, #tpu.memory_space<vmem>>, vector<1x8x136xf32>
    %104 = vector.shape_cast %103 : vector<1x8x136xf32> to vector<8x136xf32>
    %c24_110 = arith.constant 24 : index
    %c0_111 = arith.constant 0 : index
    %105 = vector.load %arg6[%c24_110, %c0_111] : memref<200x136xf32, #tpu.memory_space<vmem>>, vector<8x136xf32>
    tpu.vector_store %arg6[%c24_110, %c0_111], %104 {strides = array<i32>} : memref<200x136xf32, #tpu.memory_space<vmem>>, vector<8x136xf32>,
    %c1_112 = arith.constant 1 : index
    %c0_113 = arith.constant 0 : index
    %c4_114 = arith.constant 4 : index
    %106 = vector.load %arg1[%c1_112, %c0_113, %c4_114] : memref<2x8x196xf32, #tpu.memory_space<vmem>>, vector<1x8x136xf32>
    %107 = vector.shape_cast %106 : vector<1x8x136xf32> to vector<8x136xf32>
    %c32_115 = arith.constant 32 : index
    %c0_116 = arith.constant 0 : index
    %108 = vector.load %arg6[%c32_115, %c0_116] : memref<200x136xf32, #tpu.memory_space<vmem>>, vector<8x136xf32>
    tpu.vector_store %arg6[%c32_115, %c0_116], %107 {strides = array<i32>} : memref<200x136xf32, #tpu.memory_space<vmem>>, vector<8x136xf32>,
    %c1_117 = arith.constant 1 : index
    %c0_118 = arith.constant 0 : index
    %c14_119 = arith.constant 14 : index
    %109 = vector.load %arg1[%c1_117, %c0_118, %c14_119] : memref<2x8x196xf32, #tpu.memory_space<vmem>>, vector<1x8x136xf32>
    %110 = vector.shape_cast %109 : vector<1x8x136xf32> to vector<8x136xf32>
    %c40_120 = arith.constant 40 : index
    %c0_121 = arith.constant 0 : index
    %111 = vector.load %arg6[%c40_120, %c0_121] : memref<200x136xf32, #tpu.memory_space<vmem>>, vector<8x136xf32>
    tpu.vector_store %arg6[%c40_120, %c0_121], %110 {strides = array<i32>} : memref<200x136xf32, #tpu.memory_space<vmem>>, vector<8x136xf32>,
    %c1_122 = arith.constant 1 : index
    %c0_123 = arith.constant 0 : index
    %c15_124 = arith.constant 15 : index
    %112 = vector.load %arg1[%c1_122, %c0_123, %c15_124] : memref<2x8x196xf32, #tpu.memory_space<vmem>>, vector<1x8x136xf32>
    %113 = vector.shape_cast %112 : vector<1x8x136xf32> to vector<8x136xf32>
    %c48_125 = arith.constant 48 : index
    %c0_126 = arith.constant 0 : index
    %114 = vector.load %arg6[%c48_125, %c0_126] : memref<200x136xf32, #tpu.memory_space<vmem>>, vector<8x136xf32>
    tpu.vector_store %arg6[%c48_125, %c0_126], %113 {strides = array<i32>} : memref<200x136xf32, #tpu.memory_space<vmem>>, vector<8x136xf32>,
    %c1_127 = arith.constant 1 : index
    %c0_128 = arith.constant 0 : index
    %c16_129 = arith.constant 16 : index
    %115 = vector.load %arg1[%c1_127, %c0_128, %c16_129] : memref<2x8x196xf32, #tpu.memory_space<vmem>>, vector<1x8x136xf32>
    %116 = vector.shape_cast %115 : vector<1x8x136xf32> to vector<8x136xf32>
    %c56_130 = arith.constant 56 : index
    %c0_131 = arith.constant 0 : index
    %117 = vector.load %arg6[%c56_130, %c0_131] : memref<200x136xf32, #tpu.memory_space<vmem>>, vector<8x136xf32>
    tpu.vector_store %arg6[%c56_130, %c0_131], %116 {strides = array<i32>} : memref<200x136xf32, #tpu.memory_space<vmem>>, vector<8x136xf32>,
    %c1_132 = arith.constant 1 : index
    %c0_133 = arith.constant 0 : index
    %c17_134 = arith.constant 17 : index
    %118 = vector.load %arg1[%c1_132, %c0_133, %c17_134] : memref<2x8x196xf32, #tpu.memory_space<vmem>>, vector<1x8x136xf32>
    %119 = vector.shape_cast %118 : vector<1x8x136xf32> to vector<8x136xf32>
    %c64_135 = arith.constant 64 : index
    %c0_136 = arith.constant 0 : index
    %120 = vector.load %arg6[%c64_135, %c0_136] : memref<200x136xf32, #tpu.memory_space<vmem>>, vector<8x136xf32>
    tpu.vector_store %arg6[%c64_135, %c0_136], %119 {strides = array<i32>} : memref<200x136xf32, #tpu.memory_space<vmem>>, vector<8x136xf32>,
    %c1_137 = arith.constant 1 : index
    %c0_138 = arith.constant 0 : index
    %c18_139 = arith.constant 18 : index
    %121 = vector.load %arg1[%c1_137, %c0_138, %c18_139] : memref<2x8x196xf32, #tpu.memory_space<vmem>>, vector<1x8x136xf32>
    %122 = vector.shape_cast %121 : vector<1x8x136xf32> to vector<8x136xf32>
    %c72_140 = arith.constant 72 : index
    %c0_141 = arith.constant 0 : index
    %123 = vector.load %arg6[%c72_140, %c0_141] : memref<200x136xf32, #tpu.memory_space<vmem>>, vector<8x136xf32>
    tpu.vector_store %arg6[%c72_140, %c0_141], %122 {strides = array<i32>} : memref<200x136xf32, #tpu.memory_space<vmem>>, vector<8x136xf32>,
    %c1_142 = arith.constant 1 : index
    %c0_143 = arith.constant 0 : index
    %c28_144 = arith.constant 28 : index
    %124 = vector.load %arg1[%c1_142, %c0_143, %c28_144] : memref<2x8x196xf32, #tpu.memory_space<vmem>>, vector<1x8x136xf32>
    %125 = vector.shape_cast %124 : vector<1x8x136xf32> to vector<8x136xf32>
    %c80_145 = arith.constant 80 : index
    %c0_146 = arith.constant 0 : index
    %126 = vector.load %arg6[%c80_145, %c0_146] : memref<200x136xf32, #tpu.memory_space<vmem>>, vector<8x136xf32>
    tpu.vector_store %arg6[%c80_145, %c0_146], %125 {strides = array<i32>} : memref<200x136xf32, #tpu.memory_space<vmem>>, vector<8x136xf32>,
    %c1_147 = arith.constant 1 : index
    %c0_148 = arith.constant 0 : index
    %c29_149 = arith.constant 29 : index
    %127 = vector.load %arg1[%c1_147, %c0_148, %c29_149] : memref<2x8x196xf32, #tpu.memory_space<vmem>>, vector<1x8x136xf32>
    %128 = vector.shape_cast %127 : vector<1x8x136xf32> to vector<8x136xf32>
    %c88_150 = arith.constant 88 : index
    %c0_151 = arith.constant 0 : index
    %129 = vector.load %arg6[%c88_150, %c0_151] : memref<200x136xf32, #tpu.memory_space<vmem>>, vector<8x136xf32>
    tpu.vector_store %arg6[%c88_150, %c0_151], %128 {strides = array<i32>} : memref<200x136xf32, #tpu.memory_space<vmem>>, vector<8x136xf32>,
    %c1_152 = arith.constant 1 : index
    %c0_153 = arith.constant 0 : index
    %c30_154 = arith.constant 30 : index
    %130 = vector.load %arg1[%c1_152, %c0_153, %c30_154] : memref<2x8x196xf32, #tpu.memory_space<vmem>>, vector<1x8x136xf32>
    %131 = vector.shape_cast %130 : vector<1x8x136xf32> to vector<8x136xf32>
    %c96_155 = arith.constant 96 : index
    %c0_156 = arith.constant 0 : index
    %132 = vector.load %arg6[%c96_155, %c0_156] : memref<200x136xf32, #tpu.memory_space<vmem>>, vector<8x136xf32>
    tpu.vector_store %arg6[%c96_155, %c0_156], %131 {strides = array<i32>} : memref<200x136xf32, #tpu.memory_space<vmem>>, vector<8x136xf32>,
    %c1_157 = arith.constant 1 : index
    %c0_158 = arith.constant 0 : index
    %c31_159 = arith.constant 31 : index
    %133 = vector.load %arg1[%c1_157, %c0_158, %c31_159] : memref<2x8x196xf32, #tpu.memory_space<vmem>>, vector<1x8x136xf32>
    %134 = vector.shape_cast %133 : vector<1x8x136xf32> to vector<8x136xf32>
    %c104_160 = arith.constant 104 : index
    %c0_161 = arith.constant 0 : index
    %135 = vector.load %arg6[%c104_160, %c0_161] : memref<200x136xf32, #tpu.memory_space<vmem>>, vector<8x136xf32>
    tpu.vector_store %arg6[%c104_160, %c0_161], %134 {strides = array<i32>} : memref<200x136xf32, #tpu.memory_space<vmem>>, vector<8x136xf32>,
    %c1_162 = arith.constant 1 : index
    %c0_163 = arith.constant 0 : index
    %c32_164 = arith.constant 32 : index
    %136 = vector.load %arg1[%c1_162, %c0_163, %c32_164] : memref<2x8x196xf32, #tpu.memory_space<vmem>>, vector<1x8x136xf32>
    %137 = vector.shape_cast %136 : vector<1x8x136xf32> to vector<8x136xf32>
    %c112_165 = arith.constant 112 : index
    %c0_166 = arith.constant 0 : index
    %138 = vector.load %arg6[%c112_165, %c0_166] : memref<200x136xf32, #tpu.memory_space<vmem>>, vector<8x136xf32>
    tpu.vector_store %arg6[%c112_165, %c0_166], %137 {strides = array<i32>} : memref<200x136xf32, #tpu.memory_space<vmem>>, vector<8x136xf32>,
    %c1_167 = arith.constant 1 : index
    %c0_168 = arith.constant 0 : index
    %c42_169 = arith.constant 42 : index
    %139 = vector.load %arg1[%c1_167, %c0_168, %c42_169] : memref<2x8x196xf32, #tpu.memory_space<vmem>>, vector<1x8x136xf32>
    %140 = vector.shape_cast %139 : vector<1x8x136xf32> to vector<8x136xf32>
    %c120_170 = arith.constant 120 : index
    %c0_171 = arith.constant 0 : index
    %141 = vector.load %arg6[%c120_170, %c0_171] : memref<200x136xf32, #tpu.memory_space<vmem>>, vector<8x136xf32>
    tpu.vector_store %arg6[%c120_170, %c0_171], %140 {strides = array<i32>} : memref<200x136xf32, #tpu.memory_space<vmem>>, vector<8x136xf32>,
    %c1_172 = arith.constant 1 : index
    %c0_173 = arith.constant 0 : index
    %c43_174 = arith.constant 43 : index
    %142 = vector.load %arg1[%c1_172, %c0_173, %c43_174] : memref<2x8x196xf32, #tpu.memory_space<vmem>>, vector<1x8x136xf32>
    %143 = vector.shape_cast %142 : vector<1x8x136xf32> to vector<8x136xf32>
    %c128_175 = arith.constant 128 : index
    %c0_176 = arith.constant 0 : index
    %144 = vector.load %arg6[%c128_175, %c0_176] : memref<200x136xf32, #tpu.memory_space<vmem>>, vector<8x136xf32>
    tpu.vector_store %arg6[%c128_175, %c0_176], %143 {strides = array<i32>} : memref<200x136xf32, #tpu.memory_space<vmem>>, vector<8x136xf32>,
    %c1_177 = arith.constant 1 : index
    %c0_178 = arith.constant 0 : index
    %c44_179 = arith.constant 44 : index
    %145 = vector.load %arg1[%c1_177, %c0_178, %c44_179] : memref<2x8x196xf32, #tpu.memory_space<vmem>>, vector<1x8x136xf32>
    %146 = vector.shape_cast %145 : vector<1x8x136xf32> to vector<8x136xf32>
    %c136_180 = arith.constant 136 : index
    %c0_181 = arith.constant 0 : index
    %147 = vector.load %arg6[%c136_180, %c0_181] : memref<200x136xf32, #tpu.memory_space<vmem>>, vector<8x136xf32>
    tpu.vector_store %arg6[%c136_180, %c0_181], %146 {strides = array<i32>} : memref<200x136xf32, #tpu.memory_space<vmem>>, vector<8x136xf32>,
    %c1_182 = arith.constant 1 : index
    %c0_183 = arith.constant 0 : index
    %c45_184 = arith.constant 45 : index
    %148 = vector.load %arg1[%c1_182, %c0_183, %c45_184] : memref<2x8x196xf32, #tpu.memory_space<vmem>>, vector<1x8x136xf32>
    %149 = vector.shape_cast %148 : vector<1x8x136xf32> to vector<8x136xf32>
    %c144_185 = arith.constant 144 : index
    %c0_186 = arith.constant 0 : index
    %150 = vector.load %arg6[%c144_185, %c0_186] : memref<200x136xf32, #tpu.memory_space<vmem>>, vector<8x136xf32>
    tpu.vector_store %arg6[%c144_185, %c0_186], %149 {strides = array<i32>} : memref<200x136xf32, #tpu.memory_space<vmem>>, vector<8x136xf32>,
    %c1_187 = arith.constant 1 : index
    %c0_188 = arith.constant 0 : index
    %c46_189 = arith.constant 46 : index
    %151 = vector.load %arg1[%c1_187, %c0_188, %c46_189] : memref<2x8x196xf32, #tpu.memory_space<vmem>>, vector<1x8x136xf32>
    %152 = vector.shape_cast %151 : vector<1x8x136xf32> to vector<8x136xf32>
    %c152_190 = arith.constant 152 : index
    %c0_191 = arith.constant 0 : index
    %153 = vector.load %arg6[%c152_190, %c0_191] : memref<200x136xf32, #tpu.memory_space<vmem>>, vector<8x136xf32>
    tpu.vector_store %arg6[%c152_190, %c0_191], %152 {strides = array<i32>} : memref<200x136xf32, #tpu.memory_space<vmem>>, vector<8x136xf32>,
    %c1_192 = arith.constant 1 : index
    %c0_193 = arith.constant 0 : index
    %c56_194 = arith.constant 56 : index
    %154 = vector.load %arg1[%c1_192, %c0_193, %c56_194] : memref<2x8x196xf32, #tpu.memory_space<vmem>>, vector<1x8x136xf32>
    %155 = vector.shape_cast %154 : vector<1x8x136xf32> to vector<8x136xf32>
    %c160_195 = arith.constant 160 : index
    %c0_196 = arith.constant 0 : index
    %156 = vector.load %arg6[%c160_195, %c0_196] : memref<200x136xf32, #tpu.memory_space<vmem>>, vector<8x136xf32>
    tpu.vector_store %arg6[%c160_195, %c0_196], %155 {strides = array<i32>} : memref<200x136xf32, #tpu.memory_space<vmem>>, vector<8x136xf32>,
    %c1_197 = arith.constant 1 : index
    %c0_198 = arith.constant 0 : index
    %c57_199 = arith.constant 57 : index
    %157 = vector.load %arg1[%c1_197, %c0_198, %c57_199] : memref<2x8x196xf32, #tpu.memory_space<vmem>>, vector<1x8x136xf32>
    %158 = vector.shape_cast %157 : vector<1x8x136xf32> to vector<8x136xf32>
    %c168_200 = arith.constant 168 : index
    %c0_201 = arith.constant 0 : index
    %159 = vector.load %arg6[%c168_200, %c0_201] : memref<200x136xf32, #tpu.memory_space<vmem>>, vector<8x136xf32>
    tpu.vector_store %arg6[%c168_200, %c0_201], %158 {strides = array<i32>} : memref<200x136xf32, #tpu.memory_space<vmem>>, vector<8x136xf32>,
    %c1_202 = arith.constant 1 : index
    %c0_203 = arith.constant 0 : index
    %c58_204 = arith.constant 58 : index
    %160 = vector.load %arg1[%c1_202, %c0_203, %c58_204] : memref<2x8x196xf32, #tpu.memory_space<vmem>>, vector<1x8x136xf32>
    %161 = vector.shape_cast %160 : vector<1x8x136xf32> to vector<8x136xf32>
    %c176_205 = arith.constant 176 : index
    %c0_206 = arith.constant 0 : index
    %162 = vector.load %arg6[%c176_205, %c0_206] : memref<200x136xf32, #tpu.memory_space<vmem>>, vector<8x136xf32>
    tpu.vector_store %arg6[%c176_205, %c0_206], %161 {strides = array<i32>} : memref<200x136xf32, #tpu.memory_space<vmem>>, vector<8x136xf32>,
    %c1_207 = arith.constant 1 : index
    %c0_208 = arith.constant 0 : index
    %c59_209 = arith.constant 59 : index
    %163 = vector.load %arg1[%c1_207, %c0_208, %c59_209] : memref<2x8x196xf32, #tpu.memory_space<vmem>>, vector<1x8x136xf32>
    %164 = vector.shape_cast %163 : vector<1x8x136xf32> to vector<8x136xf32>
    %c184_210 = arith.constant 184 : index
    %c0_211 = arith.constant 0 : index
    %165 = vector.load %arg6[%c184_210, %c0_211] : memref<200x136xf32, #tpu.memory_space<vmem>>, vector<8x136xf32>
    tpu.vector_store %arg6[%c184_210, %c0_211], %164 {strides = array<i32>} : memref<200x136xf32, #tpu.memory_space<vmem>>, vector<8x136xf32>,
    %c1_212 = arith.constant 1 : index
    %c0_213 = arith.constant 0 : index
    %c60_214 = arith.constant 60 : index
    %166 = vector.load %arg1[%c1_212, %c0_213, %c60_214] : memref<2x8x196xf32, #tpu.memory_space<vmem>>, vector<1x8x136xf32>
    %167 = vector.shape_cast %166 : vector<1x8x136xf32> to vector<8x136xf32>
    %c192_215 = arith.constant 192 : index
    %c0_216 = arith.constant 0 : index
    %168 = vector.load %arg6[%c192_215, %c0_216] : memref<200x136xf32, #tpu.memory_space<vmem>>, vector<8x136xf32>
    tpu.vector_store %arg6[%c192_215, %c0_216], %167 {strides = array<i32>} : memref<200x136xf32, #tpu.memory_space<vmem>>, vector<8x136xf32>,
    %c0_217 = arith.constant 0 : index
    %c0_218 = arith.constant 0 : index
    %169 = vector.load %arg2[%c0_217, %c0_218] : memref<16x200xf32, #tpu.memory_space<vmem>>, vector<16x200xf32>
    %c0_219 = arith.constant 0 : index
    %c0_220 = arith.constant 0 : index
    %170 = vector.load %arg6[%c0_219, %c0_220] : memref<200x136xf32, #tpu.memory_space<vmem>>, vector<200x136xf32>
    %cst_221 = arith.constant dense<0.000000e+00> : vector<16x136xf32>
    %171 = tpu.matmul %169, %170, %cst_221 {dimension_numbers = #tpu.dot_dimension_numbers<[1], [0], [0], [1], [0, 0, 1, 1], [], []>} : vector<16x200xf32>, vector<200x136xf32>, vector<16x136xf32> -> vector<16x136xf32>
    %c0_222 = arith.constant 0 : index
    %c0_223 = arith.constant 0 : index
    %172 = vector.load %arg3[%c0_222, %c0_223] : memref<16x1xf32, #tpu.memory_space<vmem>>, vector<16x1xf32>
    %173 = vector.broadcast %172 : vector<16x1xf32> to vector<16x136xf32>
    %174 = arith.addf %171, %173 : vector<16x136xf32>
    %cst_224 = arith.constant 0.000000e+00 : f32
    %175 = vector.broadcast %cst_224 : f32 to vector<16x136xf32>
    %176 = arith.maximumf %174, %175 : vector<16x136xf32>
    %177 = vector.extract_strided_slice %176 {offsets = [0, 0], sizes = [16, 135], strides = [1, 1]} : vector<16x136xf32> to vector<16x135xf32>
    %178 = vector.extract_strided_slice %176 {offsets = [0, 1], sizes = [16, 135], strides = [1, 1]} : vector<16x136xf32> to vector<16x135xf32>
    %179 = arith.maximumf %177, %178 : vector<16x135xf32>
    %180 = vector.extract_strided_slice %179 {offsets = [0, 0], sizes = [16, 121], strides = [1, 1]} : vector<16x135xf32> to vector<16x121xf32>
    %181 = vector.extract_strided_slice %179 {offsets = [0, 14], sizes = [16, 121], strides = [1, 1]} : vector<16x135xf32> to vector<16x121xf32>
    %182 = arith.maximumf %180, %181 : vector<16x121xf32>
    %c0_225 = arith.constant 0 : index
    %c0_226 = arith.constant 0 : index
    %183 = vector.load %arg4[%c0_225, %c0_226] : memref<121x25xf32, #tpu.memory_space<vmem>>, vector<121x25xf32>
    %cst_227 = arith.constant dense<0.000000e+00> : vector<16x25xf32>
    %184 = tpu.matmul %182, %183, %cst_227 {dimension_numbers = #tpu.dot_dimension_numbers<[1], [0], [0], [1], [0, 0, 1, 1], [], []>} : vector<16x121xf32>, vector<121x25xf32>, vector<16x25xf32> -> vector<16x25xf32>
    %c1_228 = arith.constant 1 : index
    %c0_229 = arith.constant 0 : index
    %c0_230 = arith.constant 0 : index
    %185 = vector.load %arg5[%c1_228, %c0_229, %c0_230] : memref<2x16x25xf32, #tpu.memory_space<vmem>>, vector<1x16x25xf32>
    %186 = vector.shape_cast %185 : vector<1x16x25xf32> to vector<16x25xf32>
    %187 = vector.shape_cast %184 : vector<16x25xf32> to vector<1x16x25xf32>
    tpu.vector_store %arg5[%c1_228, %c0_229, %c0_230], %187 {strides = array<i32>} : memref<2x16x25xf32, #tpu.memory_space<vmem>>, vector<1x16x25xf32>,
    return
  }
  func.func @transform_0(%arg0: i32) -> (i32, i32, i32) {
    %c0_i32 = arith.constant 0 : i32
    %c0_i32_0 = arith.constant 0 : i32
    %c0_i32_1 = arith.constant 0 : i32
    return %arg0, %c0_i32, %c0_i32_0 : i32, i32, i32
  }
  func.func @transform_1(%arg0: i32) -> (i32, i32) {
    %c0_i32 = arith.constant 0 : i32
    %c0_i32_0 = arith.constant 0 : i32
    %c0_i32_1 = arith.constant 0 : i32
    return %c0_i32, %c0_i32_0 : i32, i32
  }
  func.func @transform_2(%arg0: i32) -> (i32, i32) {
    %c0_i32 = arith.constant 0 : i32
    %c0_i32_0 = arith.constant 0 : i32
    %c0_i32_1 = arith.constant 0 : i32
    return %c0_i32, %c0_i32_0 : i32, i32
  }
  func.func @transform_3(%arg0: i32) -> (i32, i32) {
    %c0_i32 = arith.constant 0 : i32
    %c0_i32_0 = arith.constant 0 : i32
    %c0_i32_1 = arith.constant 0 : i32
    return %c0_i32, %c0_i32_0 : i32, i32
  }
  func.func @transform_4(%arg0: i32) -> (i32, i32, i32) {
    %c0_i32 = arith.constant 0 : i32
    %c0_i32_0 = arith.constant 0 : i32
    %c0_i32_1 = arith.constant 0 : i32
    return %arg0, %c0_i32, %c0_i32_0 : i32, i32, i32
  }
}

</mosaic_0001>

<llo_original>
// kernel: lenet_forward.5
$region0: #{lenet_forward.5}
  #allocation0 [shape = 'u32[]', space=smem, size = 0x4, offset = 0x4, fixed_abs, tag = 'smem constant byte address 0x4 - core index']
  #allocation1 [shape = 'u32[144,128]{1,0:T(1,128)}', space=vmem, size = 0x12000, scoped, tag = 'internal scratch']
  %s0 = inlined_call_operand.vmem [shape: f32[8,400], index: 0, kind: input, shape index: {}]
  %s1 = inlined_call_operand.vmem [shape: f32[400,128], index: 1, kind: input, shape index: {}]
  %s2 = inlined_call_operand.vmem [shape: f32[1,128], index: 2, kind: input, shape index: {}]
  %s3 = inlined_call_operand.vmem [shape: f32[128,128], index: 3, kind: input, shape index: {}]
  %s4 = inlined_call_operand.vmem [shape: f32[1,128], index: 4, kind: input, shape index: {}]
  %s5 = inlined_call_operand.vmem [shape: f32[128,128], index: 5, kind: input, shape index: {}]
  %s6 = inlined_call_operand.vmem [shape: f32[1,128], index: 6, kind: input, shape index: {}]
  %s7 = inlined_call_operand.vmem [shape: f32[8,128], index: 7, kind: output, shape index: {}]
  %s8 = sld [smem:[#allocation0]]
  $region38: #{lenet_forward.5} parent=0
    _
  %s10 = ssub.s32 1, %s8
  %s11 = scalar_select 0, %s10, %s8
  // Predicated region
  $region2: #{lenet_forward.5} parent=0 // pred_check
    _
  $region3: #{lenet_forward.5} parent=0 // pred_check_branch
    %13 = sbr.rel (0) target = $region5
  $region4: #{lenet_forward.5} parent=0 // pred_region
    _
  $region5: #{lenet_forward.5} parent=0 // pred_fallthru
    _
  // Predicated region
  $region6: #{lenet_forward.5} parent=0 // pred_check
    _
  $region7: #{lenet_forward.5} parent=0 // pred_check_branch
    %15 = sbr.rel (0) target = $region9
  $region8: #{lenet_forward.5} parent=0 // pred_region
    _
  $region9: #{lenet_forward.5} parent=0 // pred_fallthru
    _
  // Predicated region
  $region10: #{lenet_forward.5} parent=0 // pred_check
    _
  $region11: #{lenet_forward.5} parent=0 // pred_check_branch
    %17 = sbr.rel (0) target = $region13
  $region12: #{lenet_forward.5} parent=0 // pred_region
    _
  $region13: #{lenet_forward.5} parent=0 // pred_fallthru
    _
  // Predicated region
  $region14: #{lenet_forward.5} parent=0 // pred_check
    _
  $region15: #{lenet_forward.5} parent=0 // pred_check_branch
    %19 = sbr.rel (0) target = $region17
  $region16: #{lenet_forward.5} parent=0 // pred_region
    _
  $region17: #{lenet_forward.5} parent=0 // pred_fallthru
    _
  // Predicated region
  $region18: #{lenet_forward.5} parent=0 // pred_check
    _
  $region19: #{lenet_forward.5} parent=0 // pred_check_branch
    %21 = sbr.rel (0) target = $region21
  $region20: #{lenet_forward.5} parent=0 // pred_region
    _
  $region21: #{lenet_forward.5} parent=0 // pred_fallthru
    _
  // Predicated region
  $region22: #{lenet_forward.5} parent=0 // pred_check
    _
  $region23: #{lenet_forward.5} parent=0 // pred_check_branch
    %23 = sbr.rel (0) target = $region25
  $region24: #{lenet_forward.5} parent=0 // pred_region
    _
  $region25: #{lenet_forward.5} parent=0 // pred_fallthru
    _
  // Predicated region
  $region26: #{lenet_forward.5} parent=0 // pred_check
    _
  $region27: #{lenet_forward.5} parent=0 // pred_check_branch
    %25 = sbr.rel (0) target = $region29
  $region28: #{lenet_forward.5} parent=0 // pred_region
    _
  $region29: #{lenet_forward.5} parent=0 // pred_fallthru
    _
  %v26 = vld [vmem:[%s0] sm:$0xff]
  %v27 = vld [vmem:[%s0 + $0x8] sm:$0xff]
  %v28 = vld [vmem:[%s0 + $0x10] sm:$0xff]
  %v29 = vld [vmem:[%s0 + $0x18] sm:$0xff]
  %v30 = vld [vmem:[%s1] sm:$0xff]
  %v31 = vld [vmem:[%s1 + $0x8] sm:$0xff]
  %v32 = vld [vmem:[%s1 + $0x10] sm:$0xff]
  %v33 = vld [vmem:[%s1 + $0x18] sm:$0xff]
  %v34 = vld [vmem:[%s1 + $0x20] sm:$0xff]
  %v35 = vld [vmem:[%s1 + $0x28] sm:$0xff]
  %v36 = vld [vmem:[%s1 + $0x30] sm:$0xff]
  %v37 = vld [vmem:[%s1 + $0x38] sm:$0xff]
  %v38 = vld [vmem:[%s1 + $0x40] sm:$0xff]
  %v39 = vld [vmem:[%s1 + $0x48] sm:$0xff]
  %v40 = vld [vmem:[%s1 + $0x50] sm:$0xff]
  %v41 = vld [vmem:[%s1 + $0x58] sm:$0xff]
  %v42 = vld [vmem:[%s1 + $0x60] sm:$0xff]
  %v43 = vld [vmem:[%s1 + $0x68] sm:$0xff]
  %v44 = vld [vmem:[%s1 + $0x70] sm:$0xff]
  %v45 = vld [vmem:[%s1 + $0x78] sm:$0xff]
  %v46 = vld [vmem:[%s1 + $0x80] sm:$0xff]
  %v47 = vld [vmem:[%s1 + $0x88] sm:$0xff]
  %v48 = vld [vmem:[%s1 + $0x90] sm:$0xff]
  %v49 = vld [vmem:[%s1 + $0x98] sm:$0xff]
  %v50 = vld [vmem:[%s1 + $0xa0] sm:$0xff]
  %v51 = vld [vmem:[%s1 + $0xa8] sm:$0xff]
  %v52 = vld [vmem:[%s1 + $0xb0] sm:$0xff]
  %v53 = vld [vmem:[%s1 + $0xb8] sm:$0xff]
  %v54 = vld [vmem:[%s1 + $0xc0] sm:$0xff]
  %v55 = vld [vmem:[%s1 + $0xc8] sm:$0xff]
  %v56 = vld [vmem:[%s1 + $0xd0] sm:$0xff]
  %v57 = vld [vmem:[%s1 + $0xd8] sm:$0xff]
  %v58 = vld [vmem:[%s1 + $0xe0] sm:$0xff]
  %v59 = vld [vmem:[%s1 + $0xe8] sm:$0xff]
  %v60 = vld [vmem:[%s1 + $0xf0] sm:$0xff]
  %v61 = vld [vmem:[%s1 + $0xf8] sm:$0xff]
  %v62 = vld [vmem:[%s1 + $0x100] sm:$0xff]
  %v63 = vld [vmem:[%s1 + $0x108] sm:$0xff]
  %v64 = vld [vmem:[%s1 + $0x110] sm:$0xff]
  %v65 = vld [vmem:[%s1 + $0x118] sm:$0xff]
  %v66 = vld [vmem:[%s1 + $0x120] sm:$0xff]
  %v67 = vld [vmem:[%s1 + $0x128] sm:$0xff]
  %v68 = vld [vmem:[%s1 + $0x130] sm:$0xff]
  %v69 = vld [vmem:[%s1 + $0x138] sm:$0xff]
  %v70 = vld [vmem:[%s1 + $0x140] sm:$0xff]
  %v71 = vld [vmem:[%s1 + $0x148] sm:$0xff]
  %v72 = vld [vmem:[%s1 + $0x150] sm:$0xff]
  %v73 = vld [vmem:[%s1 + $0x158] sm:$0xff]
  %v74 = vld [vmem:[%s1 + $0x160] sm:$0xff]
  %v75 = vld [vmem:[%s1 + $0x168] sm:$0xff]
  %v76 = vld [vmem:[%s1 + $0x170] sm:$0xff]
  %v77 = vld [vmem:[%s1 + $0x178] sm:$0xff]
  %v78 = vld [vmem:[%s1 + $0x180] sm:$0xff]
  %v79 = vld [vmem:[%s1 + $0x188] sm:$0xff]
  %v80 = vld [vmem:[%s2] sm:$0x1]
  %v82 = vlaneseq
  %v83 = vshrl.u32 %v82, 7
  %v84 = vsub.s32 0, %v83
  %v85 = vrot.slane %v80, %v84
  %vm87 = vcmask 130048
  %v89 = vsel %vm87, %v29, 0
  %91 = vmatprep.subr.mxu0 0.0
  %92 = vmatpush1.msra.mxu0 %v30
  %93 = vmatprep.subr.mxu0 0.0
  %94 = vmatpush1.msra.mxu0 %v31
  %95 = vmatprep.subr.mxu0 0.0
  %96 = vmatpush1.msra.mxu0 %v32
  %97 = vmatprep.subr.mxu0 0.0
  %98 = vmatpush1.msra.mxu0 %v33
  %99 = vmatprep.subr.mxu0 0.0
  %100 = vmatpush1.msra.mxu0 %v34
  %101 = vmatprep.subr.mxu0 0.0
  %102 = vmatpush1.msra.mxu0 %v35
  %103 = vmatprep.subr.mxu0 0.0
  %104 = vmatpush1.msra.mxu0 %v36
  %105 = vmatprep.subr.mxu0 0.0
  %106 = vmatpush1.msra.mxu0 %v37
  %107 = vmatprep.subr.mxu0 0.0
  %108 = vmatpush1.msra.mxu0 %v38
  %109 = vmatprep.subr.mxu0 0.0
  %110 = vmatpush1.msra.mxu0 %v39
  %111 = vmatprep.subr.mxu0 0.0
  %112 = vmatpush1.msra.mxu0 %v40
  %113 = vmatprep.subr.mxu0 0.0
  %114 = vmatpush1.msra.mxu0 %v41
  %115 = vmatprep.subr.mxu0 0.0
  %116 = vmatpush1.msra.mxu0 %v42
  %117 = vmatprep.subr.mxu0 0.0
  %118 = vmatpush1.msra.mxu0 %v43
  %119 = vmatprep.subr.mxu0 0.0
  %120 = vmatpush1.msra.mxu0 %v44
  %121 = vmatprep.subr.mxu0 0.0
  %122 = vmatpush1.msra.mxu0 %v45
  %123 = vmatprep.subr.mxu0 0.0
  %124 = vmatpush1.msra.mxu0 %v46
  %125 = vmatprep.subr.mxu0 0.0
  %126 = vmatpush1.msra.mxu0 %v47
  %127 = vmatprep.subr.mxu0 0.0
  %128 = vmatpush1.msra.mxu0 %v48
  %129 = vmatprep.subr.mxu0 0.0
  %130 = vmatpush1.msra.mxu0 %v49
  %131 = vmatprep.subr.mxu0 0.0
  %132 = vmatpush1.msra.mxu0 %v50
  %133 = vmatprep.subr.mxu0 0.0
  %134 = vmatpush1.msra.mxu0 %v51
  %135 = vmatprep.subr.mxu0 0.0
  %136 = vmatpush1.msra.mxu0 %v52
  %137 = vmatprep.subr.mxu0 0.0
  %138 = vmatpush1.msra.mxu0 %v53
  %139 = vmatprep.subr.mxu0 0.0
  %140 = vmatpush1.msra.mxu0 %v54
  %141 = vmatprep.subr.mxu0 0.0
  %142 = vmatpush1.msra.mxu0 %v55
  %143 = vmatprep.subr.mxu0 0.0
  %144 = vmatpush1.msra.mxu0 %v56
  %145 = vmatprep.subr.mxu0 0.0
  %146 = vmatpush1.msra.mxu0 %v57
  %147 = vmatprep.subr.mxu0 0.0
  %148 = vmatpush1.msra.mxu0 %v58
  %149 = vmatprep.subr.mxu0 0.0
  %150 = vmatpush1.msra.mxu0 %v59
  %151 = vmatprep.subr.mxu0 0.0
  %152 = vmatpush1.msra.mxu0 %v60
  %153 = vmatprep.subr.mxu0 0.0
  %154 = vmatpush1.msra.mxu0 %v61
  %155 = vmatprep.mubr.f32.mxu0 %v27
  %156 = vmatmul.mubr.f32.gmra.mrb[0].mxu0 %v26
  %v157 = vpop.f32.mrb[0].mxu0
  %v158 = vadd.f32 %v85, %v157
  %v159 = vpop.f32.mrb[0].mxu0
  %160 = vdwg.mxu0
  %161 = vmatprep.subr.mxu0 0.0
  %162 = vmatpush1.msra.mxu0 %v62
  %163 = vmatprep.subr.mxu0 0.0
  %164 = vmatpush1.msra.mxu0 %v63
  %165 = vmatprep.subr.mxu0 0.0
  %166 = vmatpush1.msra.mxu0 %v64
  %167 = vmatprep.subr.mxu0 0.0
  %168 = vmatpush1.msra.mxu0 %v65
  %169 = vmatprep.subr.mxu0 0.0
  %170 = vmatpush1.msra.mxu0 %v66
  %171 = vmatprep.subr.mxu0 0.0
  %172 = vmatpush1.msra.mxu0 %v67
  %173 = vmatprep.subr.mxu0 0.0
  %174 = vmatpush1.msra.mxu0 %v68
  %175 = vmatprep.subr.mxu0 0.0
  %176 = vmatpush1.msra.mxu0 %v69
  %177 = vmatprep.subr.mxu0 0.0
  %178 = vmatpush1.msra.mxu0 %v70
  %179 = vmatprep.subr.mxu0 0.0
  %180 = vmatpush1.msra.mxu0 %v71
  %181 = vmatprep.subr.mxu0 0.0
  %182 = vmatpush1.msra.mxu0 %v72
  %183 = vmatprep.subr.mxu0 0.0
  %184 = vmatpush1.msra.mxu0 %v73
  %185 = vmatprep.subr.mxu0 0.0
  %186 = vmatpush1.msra.mxu0 %v74
  %187 = vmatprep.subr.mxu0 0.0
  %188 = vmatpush1.msra.mxu0 %v75
  %189 = vmatprep.subr.mxu0 0.0
  %190 = vmatpush1.msra.mxu0 %v76
  %191 = vmatprep.subr.mxu0 0.0
  %192 = vmatpush1.msra.mxu0 %v77
  %193 = vmatprep.subr.mxu0 0.0
  %194 = vmatpush1.msra.mxu0 %v78
  %195 = vmatprep.subr.mxu0 0.0
  %196 = vmatpush1.msra.mxu0 %v79
  %197 = vmatprep.subr.mxu0 0.0
  %198 = vmatpush1.msra.mxu0 0.0
  %199 = vmatprep.subr.mxu0 0.0
  %200 = vmatpush1.msra.mxu0 0.0
  %201 = vmatprep.subr.mxu0 0.0
  %202 = vmatpush1.msra.mxu0 0.0
  %203 = vmatprep.subr.mxu0 0.0
  %204 = vmatpush1.msra.mxu0 0.0
  %205 = vmatprep.subr.mxu0 0.0
  %206 = vmatpush1.msra.mxu0 0.0
  %207 = vmatprep.subr.mxu0 0.0
  %208 = vmatpush1.msra.mxu0 0.0
  %209 = vmatprep.subr.mxu0 0.0
  %210 = vmatpush1.msra.mxu0 0.0
  %211 = vmatprep.subr.mxu0 0.0
  %212 = vmatpush1.msra.mxu0 0.0
  %213 = vmatprep.subr.mxu0 0.0
  %214 = vmatpush1.msra.mxu0 0.0
  %215 = vmatprep.subr.mxu0 0.0
  %216 = vmatpush1.msra.mxu0 0.0
  %217 = vmatprep.subr.mxu0 0.0
  %218 = vmatpush1.msra.mxu0 0.0
  %219 = vmatprep.subr.mxu0 0.0
  %220 = vmatpush1.msra.mxu0 0.0
  %221 = vmatprep.subr.mxu0 0.0
  %222 = vmatpush1.msra.mxu0 0.0
  %223 = vmatprep.subr.mxu0 0.0
  %224 = vmatpush1.msra.mxu0 0.0
  %225 = vmatprep.mubr.f32.mxu0 %v89
  %226 = vmatmul.mubr.f32.gmra.mrb[0].mxu0 %v28
  %v227 = vpop.f32.mrb[0].mxu0
  %v228 = vadd.f32 %v158, %v227
  %v229 = vpop.f32.mrb[0].mxu0
  %230 = vdwg.mxu0
  %v231 = vmax.f32 %v228, 0.0
  %v232 = vld [vmem:[%s3] sm:$0xff]
  %v233 = vld [vmem:[%s3 + $0x8] sm:$0xff]
  %v234 = vld [vmem:[%s3 + $0x10] sm:$0xff]
  %v235 = vld [vmem:[%s3 + $0x18] sm:$0xff]
  %v236 = vld [vmem:[%s3 + $0x20] sm:$0xff]
  %v237 = vld [vmem:[%s3 + $0x28] sm:$0xff]
  %v238 = vld [vmem:[%s3 + $0x30] sm:$0xff]
  %v239 = vld [vmem:[%s3 + $0x38] sm:$0xff]
  %v240 = vld [vmem:[%s3 + $0x40] sm:$0xff]
  %v241 = vld [vmem:[%s3 + $0x48] sm:$0xff]
  %v242 = vld [vmem:[%s3 + $0x50] sm:$0xff]
  %v243 = vld [vmem:[%s3 + $0x58] sm:$0xff]
  %v244 = vld [vmem:[%s3 + $0x60] sm:$0xff]
  %v245 = vld [vmem:[%s3 + $0x68] sm:$0xff]
  %v246 = vld [vmem:[%s3 + $0x70] sm:$0xff]
  %v247 = vld [vmem:[%s3 + $0x78] sm:$0xff]
  %v248 = vld [vmem:[%s4] sm:$0x1]
  %v250 = vlaneseq
  %v251 = vshrl.u32 %v250, 7
  %v252 = vsub.s32 0, %v251
  %v253 = vrot.slane %v248, %v252
  %255 = vmatprep.subr.mxu0 0.0
  %256 = vmatpush1.msra.mxu0 %v232
  %257 = vmatprep.subr.mxu0 0.0
  %258 = vmatpush1.msra.mxu0 %v233
  %259 = vmatprep.subr.mxu0 0.0
  %260 = vmatpush1.msra.mxu0 %v234
  %261 = vmatprep.subr.mxu0 0.0
  %262 = vmatpush1.msra.mxu0 %v235
  %263 = vmatprep.subr.mxu0 0.0
  %264 = vmatpush1.msra.mxu0 %v236
  %265 = vmatprep.subr.mxu0 0.0
  %266 = vmatpush1.msra.mxu0 %v237
  %267 = vmatprep.subr.mxu0 0.0
  %268 = vmatpush1.msra.mxu0 %v238
  %269 = vmatprep.subr.mxu0 0.0
  %270 = vmatpush1.msra.mxu0 %v239
  %271 = vmatprep.subr.mxu0 0.0
  %272 = vmatpush1.msra.mxu0 %v240
  %273 = vmatprep.subr.mxu0 0.0
  %274 = vmatpush1.msra.mxu0 %v241
  %275 = vmatprep.subr.mxu0 0.0
  %276 = vmatpush1.msra.mxu0 %v242
  %277 = vmatprep.subr.mxu0 0.0
  %278 = vmatpush1.msra.mxu0 %v243
  %279 = vmatprep.subr.mxu0 0.0
  %280 = vmatpush1.msra.mxu0 %v244
  %281 = vmatprep.subr.mxu0 0.0
  %282 = vmatpush1.msra.mxu0 %v245
  %283 = vmatprep.subr.mxu0 0.0
  %284 = vmatpush1.msra.mxu0 %v246
  %285 = vmatprep.subr.mxu0 0.0
  %286 = vmatpush1.msra.mxu0 %v247
  %287 = vmatprep.subr.mxu0 0.0
  %288 = vmatpush1.msra.mxu0 0.0
  %289 = vmatprep.subr.mxu0 0.0
  %290 = vmatpush1.msra.mxu0 0.0
  %291 = vmatprep.subr.mxu0 0.0
  %292 = vmatpush1.msra.mxu0 0.0
  %293 = vmatprep.subr.mxu0 0.0
  %294 = vmatpush1.msra.mxu0 0.0
  %295 = vmatprep.subr.mxu0 0.0
  %296 = vmatpush1.msra.mxu0 0.0
  %297 = vmatprep.subr.mxu0 0.0
  %298 = vmatpush1.msra.mxu0 0.0
  %299 = vmatprep.subr.mxu0 0.0
  %300 = vmatpush1.msra.mxu0 0.0
  %301 = vmatprep.subr.mxu0 0.0
  %302 = vmatpush1.msra.mxu0 0.0
  %303 = vmatprep.subr.mxu0 0.0
  %304 = vmatpush1.msra.mxu0 0.0
  %305 = vmatprep.subr.mxu0 0.0
  %306 = vmatpush1.msra.mxu0 0.0
  %307 = vmatprep.subr.mxu0 0.0
  %308 = vmatpush1.msra.mxu0 0.0
  %309 = vmatprep.subr.mxu0 0.0
  %310 = vmatpush1.msra.mxu0 0.0
  %311 = vmatprep.subr.mxu0 0.0
  %312 = vmatpush1.msra.mxu0 0.0
  %313 = vmatprep.subr.mxu0 0.0
  %314 = vmatpush1.msra.mxu0 0.0
  %315 = vmatprep.subr.mxu0 0.0
  %316 = vmatpush1.msra.mxu0 0.0
  %317 = vmatprep.subr.mxu0 0.0
  %318 = vmatpush1.msra.mxu0 0.0
  %319 = vmatprep.mubr.f32.mxu0 0.0
  %320 = vmatmul.mubr.f32.gmra.mrb[0].mxu0 %v231
  %v321 = vpop.f32.mrb[0].mxu0
  %v322 = vadd.f32 %v253, %v321
  %v323 = vpop.f32.mrb[0].mxu0
  %324 = vdwg.mxu0
  %v325 = vmax.f32 %v322, 0.0
  %v326 = vld [vmem:[%s5] sm:$0xff]
  %v327 = vld [vmem:[%s5 + $0x8] sm:$0xff]
  %v328 = vld [vmem:[%s5 + $0x10] sm:$0xff]
  %v329 = vld [vmem:[%s5 + $0x18] sm:$0xff]
  %v330 = vld [vmem:[%s5 + $0x20] sm:$0xff]
  %v331 = vld [vmem:[%s5 + $0x28] sm:$0xff]
  %v332 = vld [vmem:[%s5 + $0x30] sm:$0xff]
  %v333 = vld [vmem:[%s5 + $0x38] sm:$0xff]
  %v334 = vld [vmem:[%s5 + $0x40] sm:$0xff]
  %v335 = vld [vmem:[%s5 + $0x48] sm:$0xff]
  %v336 = vld [vmem:[%s5 + $0x50] sm:$0xff]
  %v337 = vld [vmem:[%s5 + $0x58] sm:$0xff]
  %v338 = vld [vmem:[%s5 + $0x60] sm:$0xff]
  %v339 = vld [vmem:[%s5 + $0x68] sm:$0xff]
  %v340 = vld [vmem:[%s5 + $0x70] sm:$0xff]
  %v341 = vld [vmem:[%s5 + $0x78] sm:$0xff]
  %v342 = vld [vmem:[%s6] sm:$0x1]
  %v344 = vlaneseq
  %v345 = vshrl.u32 %v344, 7
  %v346 = vsub.s32 0, %v345
  %v347 = vrot.slane %v342, %v346
  %349 = vmatprep.subr.mxu0 0.0
  %350 = vmatpush1.msra.mxu0 %v326
  %351 = vmatprep.subr.mxu0 0.0
  %352 = vmatpush1.msra.mxu0 %v327
  %353 = vmatprep.subr.mxu0 0.0
  %354 = vmatpush1.msra.mxu0 %v328
  %355 = vmatprep.subr.mxu0 0.0
  %356 = vmatpush1.msra.mxu0 %v329
  %357 = vmatprep.subr.mxu0 0.0
  %358 = vmatpush1.msra.mxu0 %v330
  %359 = vmatprep.subr.mxu0 0.0
  %360 = vmatpush1.msra.mxu0 %v331
  %361 = vmatprep.subr.mxu0 0.0
  %362 = vmatpush1.msra.mxu0 %v332
  %363 = vmatprep.subr.mxu0 0.0
  %364 = vmatpush1.msra.mxu0 %v333
  %365 = vmatprep.subr.mxu0 0.0
  %366 = vmatpush1.msra.mxu0 %v334
  %367 = vmatprep.subr.mxu0 0.0
  %368 = vmatpush1.msra.mxu0 %v335
  %369 = vmatprep.subr.mxu0 0.0
  %370 = vmatpush1.msra.mxu0 %v336
  %371 = vmatprep.subr.mxu0 0.0
  %372 = vmatpush1.msra.mxu0 %v337
  %373 = vmatprep.subr.mxu0 0.0
  %374 = vmatpush1.msra.mxu0 %v338
  %375 = vmatprep.subr.mxu0 0.0
  %376 = vmatpush1.msra.mxu0 %v339
  %377 = vmatprep.subr.mxu0 0.0
  %378 = vmatpush1.msra.mxu0 %v340
  %379 = vmatprep.subr.mxu0 0.0
  %380 = vmatpush1.msra.mxu0 %v341
  %381 = vmatprep.subr.mxu0 0.0
  %382 = vmatpush1.msra.mxu0 0.0
  %383 = vmatprep.subr.mxu0 0.0
  %384 = vmatpush1.msra.mxu0 0.0
  %385 = vmatprep.subr.mxu0 0.0
  %386 = vmatpush1.msra.mxu0 0.0
  %387 = vmatprep.subr.mxu0 0.0
  %388 = vmatpush1.msra.mxu0 0.0
  %389 = vmatprep.subr.mxu0 0.0
  %390 = vmatpush1.msra.mxu0 0.0
  %391 = vmatprep.subr.mxu0 0.0
  %392 = vmatpush1.msra.mxu0 0.0
  %393 = vmatprep.subr.mxu0 0.0
  %394 = vmatpush1.msra.mxu0 0.0
  %395 = vmatprep.subr.mxu0 0.0
  %396 = vmatpush1.msra.mxu0 0.0
  %397 = vmatprep.subr.mxu0 0.0
  %398 = vmatpush1.msra.mxu0 0.0
  %399 = vmatprep.subr.mxu0 0.0
  %400 = vmatpush1.msra.mxu0 0.0
  %401 = vmatprep.subr.mxu0 0.0
  %402 = vmatpush1.msra.mxu0 0.0
  %403 = vmatprep.subr.mxu0 0.0
  %404 = vmatpush1.msra.mxu0 0.0
  %405 = vmatprep.subr.mxu0 0.0
  %406 = vmatpush1.msra.mxu0 0.0
  %407 = vmatprep.subr.mxu0 0.0
  %408 = vmatpush1.msra.mxu0 0.0
  %409 = vmatprep.subr.mxu0 0.0
  %410 = vmatpush1.msra.mxu0 0.0
  %411 = vmatprep.subr.mxu0 0.0
  %412 = vmatpush1.msra.mxu0 0.0
  %413 = vmatprep.mubr.f32.mxu0 0.0
  %414 = vmatmul.mubr.f32.gmra.mrb[0].mxu0 %v325
  %v415 = vpop.f32.mrb[0].mxu0
  %v416 = vadd.f32 %v347, %v415
  %v417 = vpop.f32.mrb[0].mxu0
  %418 = vdwg.mxu0
  %419 = vst [vmem:[%s7] sm:$0xff] %v416
  // Predicated region
  $region30: #{lenet_forward.5} parent=0 // pred_check
    _
  $region31: #{lenet_forward.5} parent=0 // pred_check_branch
    %421 = sbr.rel (0) target = $region33
  $region32: #{lenet_forward.5} parent=0 // pred_region
    _
  $region33: #{lenet_forward.5} parent=0 // pred_fallthru
    _
  // Predicated region
  $region34: #{lenet_forward.5} parent=0 // pred_check
    _
  $region35: #{lenet_forward.5} parent=0 // pred_check_branch
    %423 = sbr.rel (0) target = $region37
  $region36: #{lenet_forward.5} parent=0 // pred_region
    _
  $region37: #{lenet_forward.5} parent=0 // pred_fallthru
    _

// kernel: lenet_forward.4
$region0: #{lenet_forward.4}
  #allocation0 [shape = 'u32[]', space=smem, size = 0x4, offset = 0x4, fixed_abs, tag = 'smem constant byte address 0x4 - core index']
  #allocation1 [shape = 'u32[144,128]{1,0:T(1,128)}', space=vmem, size = 0x12000, scoped, tag = 'internal scratch']
  #allocation2 [shape = 'f32[200,136]{1,0:T(8,128)}', space=vmem, size = 0x32000, scoped, tag = 'scratch operand']
  %s0 = inlined_call_operand.vmem [shape: f32[2,8,196], index: 0, kind: input, shape index: {}]
  %s1 = inlined_call_operand.vmem [shape: f32[16,200], index: 1, kind: input, shape index: {}]
  %s2 = inlined_call_operand.vmem [shape: f32[16,1], index: 2, kind: input, shape index: {}]
  %s3 = inlined_call_operand.vmem [shape: f32[121,25], index: 3, kind: input, shape index: {}]
  %s4 = inlined_call_operand.vmem [shape: f32[2,16,25], index: 4, kind: output, shape index: {}]
  %s5 = sld [smem:[#allocation0]]
  $region26: #{lenet_forward.4} parent=0
    _
  %s7 = ssub.s32 1, %s5
  %s8 = scalar_select 0, %s7, %s5
  // Predicated region
  $region2: #{lenet_forward.4} parent=0 // pred_check
    _
  $region3: #{lenet_forward.4} parent=0 // pred_check_branch
    %10 = sbr.rel (0) target = $region5
  $region4: #{lenet_forward.4} parent=0 // pred_region
    _
  $region5: #{lenet_forward.4} parent=0 // pred_fallthru
    _
  // Predicated region
  $region6: #{lenet_forward.4} parent=0 // pred_check
    _
  $region7: #{lenet_forward.4} parent=0 // pred_check_branch
    %12 = sbr.rel (0) target = $region9
  $region8: #{lenet_forward.4} parent=0 // pred_region
    _
  $region9: #{lenet_forward.4} parent=0 // pred_fallthru
    _
  // Predicated region
  $region10: #{lenet_forward.4} parent=0 // pred_check
    _
  $region11: #{lenet_forward.4} parent=0 // pred_check_branch
    %14 = sbr.rel (0) target = $region13
  $region12: #{lenet_forward.4} parent=0 // pred_region
    _
  $region13: #{lenet_forward.4} parent=0 // pred_fallthru
    _
  // Predicated region
  $region14: #{lenet_forward.4} parent=0 // pred_check
    _
  $region15: #{lenet_forward.4} parent=0 // pred_check_branch
    %16 = sbr.rel (0) target = $region17
  $region16: #{lenet_forward.4} parent=0 // pred_region
    _
  $region17: #{lenet_forward.4} parent=0 // pred_fallthru
    _
  %v17 = vld [vmem:[%s0] sm:$0xff]
  %v18 = vld [vmem:[%s0 + $0x8] sm:$0xff]
  %19 = vst [vmem:[#allocation2] sm:$0xff] %v17
  %vm20 = vcmask 64512
  %21 = vst.msk [vmem:[#allocation2 + $0x8] sm:$0xff] %vm20, %v18
  %v22 = vld [vmem:[%s0] sm:$0xff]
  %v23 = vld [vmem:[%s0 + $0x8] sm:$0xff]
  %26 = vrot.lane.b32.xlu0 %v22, 127
  %v27 = vpop.permute.xlu0 %26
  %28 = vrot.lane.b32.xlu0 %v23, 127
  %v29 = vpop.permute.xlu0 %28
  %vm30 = vcmask 1039360
  %v31 = vsel %vm30, %v27, %v29
  %34 = vst [vmem:[#allocation2 + $0x10] sm:$0xff] %v31
  %35 = vst.msk [vmem:[#allocation2 + $0x18] sm:$0xff] %vm20, %v29
  %v36 = vld [vmem:[%s0] sm:$0xff]
  %v37 = vld [vmem:[%s0 + $0x8] sm:$0xff]
  %40 = vrot.lane.b32.xlu0 %v36, 126
  %v41 = vpop.permute.xlu0 %40
  %42 = vrot.lane.b32.xlu0 %v37, 126
  %v43 = vpop.permute.xlu0 %42
  %vm44 = vcmask 1031168
  %v45 = vsel %vm44, %v41, %v43
  %48 = vst [vmem:[#allocation2 + $0x20] sm:$0xff] %v45
  %49 = vst.msk [vmem:[#allocation2 + $0x28] sm:$0xff] %vm20, %v43
  %v50 = vld [vmem:[%s0] sm:$0xff]
  %v51 = vld [vmem:[%s0 + $0x8] sm:$0xff]
  %54 = vrot.lane.b32.xlu0 %v50, 125
  %v55 = vpop.permute.xlu0 %54
  %56 = vrot.lane.b32.xlu0 %v51, 125
  %v57 = vpop.permute.xlu0 %56
  %vm58 = vcmask 1022976
  %v59 = vsel %vm58, %v55, %v57
  %62 = vst [vmem:[#allocation2 + $0x30] sm:$0xff] %v59
  %63 = vst.msk [vmem:[#allocation2 + $0x38] sm:$0xff] %vm20, %v57
  %v64 = vld [vmem:[%s0] sm:$0xff]
  %v65 = vld [vmem:[%s0 + $0x8] sm:$0xff]
  %68 = vrot.lane.b32.xlu0 %v64, 124
  %v69 = vpop.permute.xlu0 %68
  %70 = vrot.lane.b32.xlu0 %v65, 124
  %v71 = vpop.permute.xlu0 %70
  %vm72 = vcmask 1014784
  %v73 = vsel %vm72, %v69, %v71
  %76 = vst [vmem:[#allocation2 + $0x40] sm:$0xff] %v73
  %77 = vst.msk [vmem:[#allocation2 + $0x48] sm:$0xff] %vm20, %v71
  %v78 = vld [vmem:[%s0] sm:$0xff]
  %v79 = vld [vmem:[%s0 + $0x8] sm:$0xff]
  %82 = vrot.lane.b32.xlu0 %v78, 114
  %v83 = vpop.permute.xlu0 %82
  %84 = vrot.lane.b32.xlu0 %v79, 114
  %v85 = vpop.permute.xlu0 %84
  %vm86 = vcmask 932864
  %v87 = vsel %vm86, %v83, %v85
  %90 = vst [vmem:[#allocation2 + $0x50] sm:$0xff] %v87
  %91 = vst.msk [vmem:[#allocation2 + $0x58] sm:$0xff] %vm20, %v85
  %v92 = vld [vmem:[%s0] sm:$0xff]
  %v93 = vld [vmem:[%s0 + $0x8] sm:$0xff]
  %96 = vrot.lane.b32.xlu0 %v92, 113
  %v97 = vpop.permute.xlu0 %96
  %98 = vrot.lane.b32.xlu0 %v93, 113
  %v99 = vpop.permute.xlu0 %98
  %vm100 = vcmask 924672
  %v101 = vsel %vm100, %v97, %v99
  %104 = vst [vmem:[#allocation2 + $0x60] sm:$0xff] %v101
  %105 = vst.msk [vmem:[#allocation2 + $0x68] sm:$0xff] %vm20, %v99
  %v106 = vld [vmem:[%s0] sm:$0xff]
  %v107 = vld [vmem:[%s0 + $0x8] sm:$0xff]
  %110 = vrot.lane.b32.xlu0 %v106, 112
  %v111 = vpop.permute.xlu0 %110
  %112 = vrot.lane.b32.xlu0 %v107, 112
  %v113 = vpop.permute.xlu0 %112
  %vm114 = vcmask 916480
  %v115 = vsel %vm114, %v111, %v113
  %118 = vst [vmem:[#allocation2 + $0x70] sm:$0xff] %v115
  %119 = vst.msk [vmem:[#allocation2 + $0x78] sm:$0xff] %vm20, %v113
  %v120 = vld [vmem:[%s0] sm:$0xff]
  %v121 = vld [vmem:[%s0 + $0x8] sm:$0xff]
  %124 = vrot.lane.b32.xlu0 %v120, 111
  %v125 = vpop.permute.xlu0 %124
  %126 = vrot.lane.b32.xlu0 %v121, 111
  %v127 = vpop.permute.xlu0 %126
  %vm128 = vcmask 908288
  %v129 = vsel %vm128, %v125, %v127
  %132 = vst [vmem:[#allocation2 + $0x80] sm:$0xff] %v129
  %133 = vst.msk [vmem:[#allocation2 + $0x88] sm:$0xff] %vm20, %v127
  %v134 = vld [vmem:[%s0] sm:$0xff]
  %v135 = vld [vmem:[%s0 + $0x8] sm:$0xff]
  %138 = vrot.lane.b32.xlu0 %v134, 110
  %v139 = vpop.permute.xlu0 %138
  %140 = vrot.lane.b32.xlu0 %v135, 110
  %v141 = vpop.permute.xlu0 %140
  %vm142 = vcmask 900096
  %v143 = vsel %vm142, %v139, %v141
  %146 = vst [vmem:[#allocation2 + $0x90] sm:$0xff] %v143
  %147 = vst.msk [vmem:[#allocation2 + $0x98] sm:$0xff] %vm20, %v141
  %v148 = vld [vmem:[%s0] sm:$0xff]
  %v149 = vld [vmem:[%s0 + $0x8] sm:$0xff]
  %152 = vrot.lane.b32.xlu0 %v148, 100
  %v153 = vpop.permute.xlu0 %152
  %154 = vrot.lane.b32.xlu0 %v149, 100
  %v155 = vpop.permute.xlu0 %154
  %vm156 = vcmask 818176
  %v157 = vsel %vm156, %v153, %v155
  %160 = vst [vmem:[#allocation2 + $0xa0] sm:$0xff] %v157
  %161 = vst.msk [vmem:[#allocation2 + $0xa8] sm:$0xff] %vm20, %v155
  %v162 = vld [vmem:[%s0] sm:$0xff]
  %v163 = vld [vmem:[%s0 + $0x8] sm:$0xff]
  %166 = vrot.lane.b32.xlu0 %v162, 99
  %v167 = vpop.permute.xlu0 %166
  %168 = vrot.lane.b32.xlu0 %v163, 99
  %v169 = vpop.permute.xlu0 %168
  %vm170 = vcmask 809984
  %v171 = vsel %vm170, %v167, %v169
  %174 = vst [vmem:[#allocation2 + $0xb0] sm:$0xff] %v171
  %175 = vst.msk [vmem:[#allocation2 + $0xb8] sm:$0xff] %vm20, %v169
  %v176 = vld [vmem:[%s0] sm:$0xff]
  %v177 = vld [vmem:[%s0 + $0x8] sm:$0xff]
  %180 = vrot.lane.b32.xlu0 %v176, 98
  %v181 = vpop.permute.xlu0 %180
  %182 = vrot.lane.b32.xlu0 %v177, 98
  %v183 = vpop.permute.xlu0 %182
  %vm184 = vcmask 801792
  %v185 = vsel %vm184, %v181, %v183
  %188 = vst [vmem:[#allocation2 + $0xc0] sm:$0xff] %v185
  %189 = vst.msk [vmem:[#allocation2 + $0xc8] sm:$0xff] %vm20, %v183
  %v190 = vld [vmem:[%s0] sm:$0xff]
  %v191 = vld [vmem:[%s0 + $0x8] sm:$0xff]
  %194 = vrot.lane.b32.xlu0 %v190, 97
  %v195 = vpop.permute.xlu0 %194
  %196 = vrot.lane.b32.xlu0 %v191, 97
  %v197 = vpop.permute.xlu0 %196
  %vm198 = vcmask 793600
  %v199 = vsel %vm198, %v195, %v197
  %202 = vst [vmem:[#allocation2 + $0xd0] sm:$0xff] %v199
  %203 = vst.msk [vmem:[#allocation2 + $0xd8] sm:$0xff] %vm20, %v197
  %v204 = vld [vmem:[%s0] sm:$0xff]
  %v205 = vld [vmem:[%s0 + $0x8] sm:$0xff]
  %208 = vrot.lane.b32.xlu0 %v204, 96
  %v209 = vpop.permute.xlu0 %208
  %210 = vrot.lane.b32.xlu0 %v205, 96
  %v211 = vpop.permute.xlu0 %210
  %vm212 = vcmask 785408
  %v213 = vsel %vm212, %v209, %v211
  %216 = vst [vmem:[#allocation2 + $0xe0] sm:$0xff] %v213
  %217 = vst.msk [vmem:[#allocation2 + $0xe8] sm:$0xff] %vm20, %v211
  %v218 = vld [vmem:[%s0] sm:$0xff]
  %v219 = vld [vmem:[%s0 + $0x8] sm:$0xff]
  %222 = vrot.lane.b32.xlu0 %v218, 86
  %v223 = vpop.permute.xlu0 %222
  %224 = vrot.lane.b32.xlu0 %v219, 86
  %v225 = vpop.permute.xlu0 %224
  %vm226 = vcmask 703488
  %v227 = vsel %vm226, %v223, %v225
  %230 = vst [vmem:[#allocation2 + $0xf0] sm:$0xff] %v227
  %231 = vst.msk [vmem:[#allocation2 + $0xf8] sm:$0xff] %vm20, %v225
  %v232 = vld [vmem:[%s0] sm:$0xff]
  %v233 = vld [vmem:[%s0 + $0x8] sm:$0xff]
  %236 = vrot.lane.b32.xlu0 %v232, 85
  %v237 = vpop.permute.xlu0 %236
  %238 = vrot.lane.b32.xlu0 %v233, 85
  %v239 = vpop.permute.xlu0 %238
  %vm240 = vcmask 695296
  %v241 = vsel %vm240, %v237, %v239
  %244 = vst [vmem:[#allocation2 + $0x100] sm:$0xff] %v241
  %245 = vst.msk [vmem:[#allocation2 + $0x108] sm:$0xff] %vm20, %v239
  %v246 = vld [vmem:[%s0] sm:$0xff]
  %v247 = vld [vmem:[%s0 + $0x8] sm:$0xff]
  %250 = vrot.lane.b32.xlu0 %v246, 84
  %v251 = vpop.permute.xlu0 %250
  %252 = vrot.lane.b32.xlu0 %v247, 84
  %v253 = vpop.permute.xlu0 %252
  %vm254 = vcmask 687104
  %v255 = vsel %vm254, %v251, %v253
  %258 = vst [vmem:[#allocation2 + $0x110] sm:$0xff] %v255
  %259 = vst.msk [vmem:[#allocation2 + $0x118] sm:$0xff] %vm20, %v253
  %v260 = vld [vmem:[%s0] sm:$0xff]
  %v261 = vld [vmem:[%s0 + $0x8] sm:$0xff]
  %264 = vrot.lane.b32.xlu0 %v260, 83
  %v265 = vpop.permute.xlu0 %264
  %266 = vrot.lane.b32.xlu0 %v261, 83
  %v267 = vpop.permute.xlu0 %266
  %vm268 = vcmask 678912
  %v269 = vsel %vm268, %v265, %v267
  %272 = vst [vmem:[#allocation2 + $0x120] sm:$0xff] %v269
  %273 = vst.msk [vmem:[#allocation2 + $0x128] sm:$0xff] %vm20, %v267
  %v274 = vld [vmem:[%s0] sm:$0xff]
  %v275 = vld [vmem:[%s0 + $0x8] sm:$0xff]
  %278 = vrot.lane.b32.xlu0 %v274, 82
  %v279 = vpop.permute.xlu0 %278
  %280 = vrot.lane.b32.xlu0 %v275, 82
  %v281 = vpop.permute.xlu0 %280
  %vm282 = vcmask 670720
  %v283 = vsel %vm282, %v279, %v281
  %286 = vst [vmem:[#allocation2 + $0x130] sm:$0xff] %v283
  %287 = vst.msk [vmem:[#allocation2 + $0x138] sm:$0xff] %vm20, %v281
  %v288 = vld [vmem:[%s0] sm:$0xff]
  %v289 = vld [vmem:[%s0 + $0x8] sm:$0xff]
  %292 = vrot.lane.b32.xlu0 %v288, 72
  %v293 = vpop.permute.xlu0 %292
  %294 = vrot.lane.b32.xlu0 %v289, 72
  %v295 = vpop.permute.xlu0 %294
  %vm296 = vcmask 588800
  %v297 = vsel %vm296, %v293, %v295
  %300 = vst [vmem:[#allocation2 + $0x140] sm:$0xff] %v297
  %301 = vst.msk [vmem:[#allocation2 + $0x148] sm:$0xff] %vm20, %v295
  %v302 = vld [vmem:[%s0] sm:$0xff]
  %v303 = vld [vmem:[%s0 + $0x8] sm:$0xff]
  %306 = vrot.lane.b32.xlu0 %v302, 71
  %v307 = vpop.permute.xlu0 %306
  %308 = vrot.lane.b32.xlu0 %v303, 71
  %v309 = vpop.permute.xlu0 %308
  %vm310 = vcmask 580608
  %v311 = vsel %vm310, %v307, %v309
  %314 = vst [vmem:[#allocation2 + $0x150] sm:$0xff] %v311
  %315 = vst.msk [vmem:[#allocation2 + $0x158] sm:$0xff] %vm20, %v309
  %v316 = vld [vmem:[%s0] sm:$0xff]
  %v317 = vld [vmem:[%s0 + $0x8] sm:$0xff]
  %320 = vrot.lane.b32.xlu0 %v316, 70
  %v321 = vpop.permute.xlu0 %320
  %322 = vrot.lane.b32.xlu0 %v317, 70
  %v323 = vpop.permute.xlu0 %322
  %vm324 = vcmask 572416
  %v325 = vsel %vm324, %v321, %v323
  %328 = vst [vmem:[#allocation2 + $0x160] sm:$0xff] %v325
  %329 = vst.msk [vmem:[#allocation2 + $0x168] sm:$0xff] %vm20, %v323
  %v330 = vld [vmem:[%s0] sm:$0xff]
  %v331 = vld [vmem:[%s0 + $0x8] sm:$0xff]
  %334 = vrot.lane.b32.xlu0 %v330, 69
  %v335 = vpop.permute.xlu0 %334
  %336 = vrot.lane.b32.xlu0 %v331, 69
  %v337 = vpop.permute.xlu0 %336
  %vm338 = vcmask 564224
  %v339 = vsel %vm338, %v335, %v337
  %342 = vst [vmem:[#allocation2 + $0x170] sm:$0xff] %v339
  %343 = vst.msk [vmem:[#allocation2 + $0x178] sm:$0xff] %vm20, %v337
  %v344 = vld [vmem:[%s0] sm:$0xff]
  %v345 = vld [vmem:[%s0 + $0x8] sm:$0xff]
  %348 = vrot.lane.b32.xlu0 %v344, 68
  %v349 = vpop.permute.xlu0 %348
  %350 = vrot.lane.b32.xlu0 %v345, 68
  %v351 = vpop.permute.xlu0 %350
  %vm352 = vcmask 556032
  %v353 = vsel %vm352, %v349, %v351
  %356 = vst [vmem:[#allocation2 + $0x180] sm:$0xff] %v353
  %357 = vst.msk [vmem:[#allocation2 + $0x188] sm:$0xff] %vm20, %v351
  %v358 = vld [vmem:[%s1] sm:$0xff]
  %v359 = vld [vmem:[%s1 + $0x8] sm:$0xff]
  %v360 = vld [vmem:[%s1 + $0x10] sm:$0xff]
  %v361 = vld [vmem:[%s1 + $0x18] sm:$0xff]
  %v362 = vld [vmem:[#allocation2] sm:$0xff]
  %v363 = vld [vmem:[#allocation2 + $0x8] sm:$0xff]
  %v364 = vld [vmem:[#allocation2 + $0x10] sm:$0xff]
  %v365 = vld [vmem:[#allocation2 + $0x18] sm:$0xff]
  %v366 = vld [vmem:[#allocation2 + $0x20] sm:$0xff]
  %v367 = vld [vmem:[#allocation2 + $0x28] sm:$0xff]
  %v368 = vld [vmem:[#allocation2 + $0x30] sm:$0xff]
  %v369 = vld [vmem:[#allocation2 + $0x38] sm:$0xff]
  %v370 = vld [vmem:[#allocation2 + $0x40] sm:$0xff]
  %v371 = vld [vmem:[#allocation2 + $0x48] sm:$0xff]
  %v372 = vld [vmem:[#allocation2 + $0x50] sm:$0xff]
  %v373 = vld [vmem:[#allocation2 + $0x58] sm:$0xff]
  %v374 = vld [vmem:[#allocation2 + $0x60] sm:$0xff]
  %v375 = vld [vmem:[#allocation2 + $0x68] sm:$0xff]
  %v376 = vld [vmem:[#allocation2 + $0x70] sm:$0xff]
  %v377 = vld [vmem:[#allocation2 + $0x78] sm:$0xff]
  %v378 = vld [vmem:[#allocation2 + $0x80] sm:$0xff]
  %v379 = vld [vmem:[#allocation2 + $0x88] sm:$0xff]
  %v380 = vld [vmem:[#allocation2 + $0x90] sm:$0xff]
  %v381 = vld [vmem:[#allocation2 + $0x98] sm:$0xff]
  %v382 = vld [vmem:[#allocation2 + $0xa0] sm:$0xff]
  %v383 = vld [vmem:[#allocation2 + $0xa8] sm:$0xff]
  %v384 = vld [vmem:[#allocation2 + $0xb0] sm:$0xff]
  %v385 = vld [vmem:[#allocation2 + $0xb8] sm:$0xff]
  %v386 = vld [vmem:[#allocation2 + $0xc0] sm:$0xff]
  %v387 = vld [vmem:[#allocation2 + $0xc8] sm:$0xff]
  %v388 = vld [vmem:[#allocation2 + $0xd0] sm:$0xff]
  %v389 = vld [vmem:[#allocation2 + $0xd8] sm:$0xff]
  %v390 = vld [vmem:[#allocation2 + $0xe0] sm:$0xff]
  %v391 = vld [vmem:[#allocation2 + $0xe8] sm:$0xff]
  %v392 = vld [vmem:[#allocation2 + $0xf0] sm:$0xff]
  %v393 = vld [vmem:[#allocation2 + $0xf8] sm:$0xff]
  %v394 = vld [vmem:[#allocation2 + $0x100] sm:$0xff]
  %v395 = vld [vmem:[#allocation2 + $0x108] sm:$0xff]
  %v396 = vld [vmem:[#allocation2 + $0x110] sm:$0xff]
  %v397 = vld [vmem:[#allocation2 + $0x118] sm:$0xff]
  %v398 = vld [vmem:[#allocation2 + $0x120] sm:$0xff]
  %v399 = vld [vmem:[#allocation2 + $0x128] sm:$0xff]
  %v400 = vld [vmem:[#allocation2 + $0x130] sm:$0xff]
  %v401 = vld [vmem:[#allocation2 + $0x138] sm:$0xff]
  %v402 = vld [vmem:[#allocation2 + $0x140] sm:$0xff]
  %v403 = vld [vmem:[#allocation2 + $0x148] sm:$0xff]
  %v404 = vld [vmem:[#allocation2 + $0x150] sm:$0xff]
  %v405 = vld [vmem:[#allocation2 + $0x158] sm:$0xff]
  %v406 = vld [vmem:[#allocation2 + $0x160] sm:$0xff]
  %v407 = vld [vmem:[#allocation2 + $0x168] sm:$0xff]
  %v408 = vld [vmem:[#allocation2 + $0x170] sm:$0xff]
  %v409 = vld [vmem:[#allocation2 + $0x178] sm:$0xff]
  %v410 = vld [vmem:[#allocation2 + $0x180] sm:$0xff]
  %v411 = vld [vmem:[#allocation2 + $0x188] sm:$0xff]
  %v412 = vld [vmem:[%s2] sm:$0xff]
  %v413 = vld [vmem:[%s2 + $0x8] sm:$0xff]
  %415 = vset.pattern.permute.xlu0 0
  %416 = vperm.xlu0 %415, %v412
  %v417 = vpop.permute.xlu0 %416
  %420 = vset.pattern.permute.xlu0 0
  %421 = vperm.xlu0 %420, %v413
  %v422 = vpop.permute.xlu0 %421
  %v425 = vsel %vm296, %v359, 0
  %v428 = vsel %vm296, %v361, 0
  %430 = vmatprep.subr.mxu0 %v363
  %431 = vmatpush1.msra.mxu0 %v362
  %432 = vmatprep.subr.mxu0 %v365
  %433 = vmatpush1.msra.mxu0 %v364
  %434 = vmatprep.subr.mxu0 %v367
  %435 = vmatpush1.msra.mxu0 %v366
  %436 = vmatprep.subr.mxu0 %v369
  %437 = vmatpush1.msra.mxu0 %v368
  %438 = vmatprep.subr.mxu0 %v371
  %439 = vmatpush1.msra.mxu0 %v370
  %440 = vmatprep.subr.mxu0 %v373
  %441 = vmatpush1.msra.mxu0 %v372
  %442 = vmatprep.subr.mxu0 %v375
  %443 = vmatpush1.msra.mxu0 %v374
  %444 = vmatprep.subr.mxu0 %v377
  %445 = vmatpush1.msra.mxu0 %v376
  %446 = vmatprep.subr.mxu0 %v379
  %447 = vmatpush1.msra.mxu0 %v378
  %448 = vmatprep.subr.mxu0 %v381
  %449 = vmatpush1.msra.mxu0 %v380
  %450 = vmatprep.subr.mxu0 %v383
  %451 = vmatpush1.msra.mxu0 %v382
  %452 = vmatprep.subr.mxu0 %v385
  %453 = vmatpush1.msra.mxu0 %v384
  %454 = vmatprep.subr.mxu0 %v387
  %455 = vmatpush1.msra.mxu0 %v386
  %456 = vmatprep.subr.mxu0 %v389
  %457 = vmatpush1.msra.mxu0 %v388
  %458 = vmatprep.subr.mxu0 %v391
  %459 = vmatpush1.msra.mxu0 %v390
  %460 = vmatprep.subr.mxu0 %v393
  %461 = vmatpush1.msra.mxu0 %v392
  %462 = vmatprep.subr.mxu0 %v395
  %463 = vmatpush1.msra.mxu0 %v394
  %464 = vmatprep.subr.mxu0 %v397
  %465 = vmatpush1.msra.mxu0 %v396
  %466 = vmatprep.subr.mxu0 %v399
  %467 = vmatpush1.msra.mxu0 %v398
  %468 = vmatprep.subr.mxu0 %v401
  %469 = vmatpush1.msra.mxu0 %v400
  %470 = vmatprep.subr.mxu0 %v403
  %471 = vmatpush1.msra.mxu0 %v402
  %472 = vmatprep.subr.mxu0 %v405
  %473 = vmatpush1.msra.mxu0 %v404
  %474 = vmatprep.subr.mxu0 %v407
  %475 = vmatpush1.msra.mxu0 %v406
  %476 = vmatprep.subr.mxu0 %v409
  %477 = vmatpush1.msra.mxu0 %v408
  %478 = vmatprep.subr.mxu0 %v411
  %479 = vmatpush1.msra.mxu0 %v410
  %480 = vmatprep.subr.mxu0 0.0
  %481 = vmatpush1.msra.mxu0 0.0
  %482 = vmatprep.subr.mxu0 0.0
  %483 = vmatpush1.msra.mxu0 0.0
  %484 = vmatprep.subr.mxu0 0.0
  %485 = vmatpush1.msra.mxu0 0.0
  %486 = vmatprep.subr.mxu0 0.0
  %487 = vmatpush1.msra.mxu0 0.0
  %488 = vmatprep.subr.mxu0 0.0
  %489 = vmatpush1.msra.mxu0 0.0
  %490 = vmatprep.subr.mxu0 0.0
  %491 = vmatpush1.msra.mxu0 0.0
  %492 = vmatprep.subr.mxu0 0.0
  %493 = vmatpush1.msra.mxu0 0.0
  %494 = vmatprep.mubr.f32.mxu0 %v425
  %495 = vmatmul.mubr.f32.gmra.mrb[0].mxu0 %v358
  %v496 = vpop.f32.mrb[0].mxu0
  %v497 = vadd.f32 %v417, %v496
  %v498 = vpop.f32.mrb[0].mxu0
  %v499 = vadd.f32 %v417, %v498
  %500 = vmatprep.mubr.f32.mxu0 %v428
  %501 = vmatmul.mubr.f32.gmra.mrb[0].mxu0 %v360
  %v502 = vpop.f32.mrb[0].mxu0
  %v503 = vadd.f32 %v422, %v502
  %v504 = vpop.f32.mrb[0].mxu0
  %v505 = vadd.f32 %v422, %v504
  %506 = vdwg.mxu0
  %v507 = vmax.f32 %v497, 0.0
  %v508 = vmax.f32 %v499, 0.0
  %v509 = vmax.f32 %v503, 0.0
  %v510 = vmax.f32 %v505, 0.0
  %515 = vrot.lane.b32.xlu0 %v507, 127
  %v516 = vpop.permute.xlu0 %515
  %517 = vrot.lane.b32.xlu0 %v508, 127
  %v518 = vpop.permute.xlu0 %517
  %519 = vrot.lane.b32.xlu0 %v509, 127
  %v520 = vpop.permute.xlu0 %519
  %521 = vrot.lane.b32.xlu0 %v510, 127
  %v522 = vpop.permute.xlu0 %521
  %v523 = vsel %vm30, %v516, %v518
  %v524 = vsel %vm30, %v520, %v522
  %v529 = vmax.f32 %v507, %v523
  %v530 = vmax.f32 %v508, %v518
  %v531 = vmax.f32 %v509, %v524
  %v532 = vmax.f32 %v510, %v522
  %537 = vrot.lane.b32.xlu0 %v529, 114
  %v538 = vpop.permute.xlu0 %537
  %539 = vrot.lane.b32.xlu0 %v530, 114
  %v540 = vpop.permute.xlu0 %539
  %541 = vrot.lane.b32.xlu0 %v531, 114
  %v542 = vpop.permute.xlu0 %541
  %543 = vrot.lane.b32.xlu0 %v532, 114
  %v544 = vpop.permute.xlu0 %543
  %v545 = vsel %vm86, %v538, %v540
  %v546 = vsel %vm86, %v542, %v544
  %v549 = vmax.f32 %v529, %v545
  %v550 = vmax.f32 %v531, %v546
  %v551 = vld [vmem:[%s3] sm:$0xff]
  %v552 = vld [vmem:[%s3 + $0x8] sm:$0xff]
  %v553 = vld [vmem:[%s3 + $0x10] sm:$0xff]
  %v554 = vld [vmem:[%s3 + $0x18] sm:$0xff]
  %v555 = vld [vmem:[%s3 + $0x20] sm:$0xff]
  %v556 = vld [vmem:[%s3 + $0x28] sm:$0xff]
  %v557 = vld [vmem:[%s3 + $0x30] sm:$0xff]
  %v558 = vld [vmem:[%s3 + $0x38] sm:$0xff]
  %v559 = vld [vmem:[%s3 + $0x40] sm:$0xff]
  %v560 = vld [vmem:[%s3 + $0x48] sm:$0xff]
  %v561 = vld [vmem:[%s3 + $0x50] sm:$0xff]
  %v562 = vld [vmem:[%s3 + $0x58] sm:$0xff]
  %v563 = vld [vmem:[%s3 + $0x60] sm:$0xff]
  %v564 = vld [vmem:[%s3 + $0x68] sm:$0xff]
  %v565 = vld [vmem:[%s3 + $0x70] sm:$0xff]
  %v566 = vld [vmem:[%s3 + $0x78] sm:$0x1]
  %vm567 = vcmask 990208
  %v569 = vsel %vm567, %v549, 0
  %v572 = vsel %vm567, %v550, 0
  %vm574 = vcmask 1040384
  %v576 = vsel %vm574, %v566, 0
  %578 = vmatprep.subr.mxu0 0.0
  %579 = vmatpush1.msra.mxu0 %v551
  %580 = vmatprep.subr.mxu0 0.0
  %581 = vmatpush1.msra.mxu0 %v552
  %582 = vmatprep.subr.mxu0 0.0
  %583 = vmatpush1.msra.mxu0 %v553
  %584 = vmatprep.subr.mxu0 0.0
  %585 = vmatpush1.msra.mxu0 %v554
  %586 = vmatprep.subr.mxu0 0.0
  %587 = vmatpush1.msra.mxu0 %v555
  %588 = vmatprep.subr.mxu0 0.0
  %589 = vmatpush1.msra.mxu0 %v556
  %590 = vmatprep.subr.mxu0 0.0
  %591 = vmatpush1.msra.mxu0 %v557
  %592 = vmatprep.subr.mxu0 0.0
  %593 = vmatpush1.msra.mxu0 %v558
  %594 = vmatprep.subr.mxu0 0.0
  %595 = vmatpush1.msra.mxu0 %v559
  %596 = vmatprep.subr.mxu0 0.0
  %597 = vmatpush1.msra.mxu0 %v560
  %598 = vmatprep.subr.mxu0 0.0
  %599 = vmatpush1.msra.mxu0 %v561
  %600 = vmatprep.subr.mxu0 0.0
  %601 = vmatpush1.msra.mxu0 %v562
  %602 = vmatprep.subr.mxu0 0.0
  %603 = vmatpush1.msra.mxu0 %v563
  %604 = vmatprep.subr.mxu0 0.0
  %605 = vmatpush1.msra.mxu0 %v564
  %606 = vmatprep.subr.mxu0 0.0
  %607 = vmatpush1.msra.mxu0 %v565
  %608 = vmatprep.subr.mxu0 0.0
  %609 = vmatpush1.msra.mxu0 %v576
  %610 = vmatprep.subr.mxu0 0.0
  %611 = vmatpush1.msra.mxu0 0.0
  %612 = vmatprep.subr.mxu0 0.0
  %613 = vmatpush1.msra.mxu0 0.0
  %614 = vmatprep.subr.mxu0 0.0
  %615 = vmatpush1.msra.mxu0 0.0
  %616 = vmatprep.subr.mxu0 0.0
  %617 = vmatpush1.msra.mxu0 0.0
  %618 = vmatprep.subr.mxu0 0.0
  %619 = vmatpush1.msra.mxu0 0.0
  %620 = vmatprep.subr.mxu0 0.0
  %621 = vmatpush1.msra.mxu0 0.0
  %622 = vmatprep.subr.mxu0 0.0
  %623 = vmatpush1.msra.mxu0 0.0
  %624 = vmatprep.subr.mxu0 0.0
  %625 = vmatpush1.msra.mxu0 0.0
  %626 = vmatprep.subr.mxu0 0.0
  %627 = vmatpush1.msra.mxu0 0.0
  %628 = vmatprep.subr.mxu0 0.0
  %629 = vmatpush1.msra.mxu0 0.0
  %630 = vmatprep.subr.mxu0 0.0
  %631 = vmatpush1.msra.mxu0 0.0
  %632 = vmatprep.subr.mxu0 0.0
  %633 = vmatpush1.msra.mxu0 0.0
  %634 = vmatprep.subr.mxu0 0.0
  %635 = vmatpush1.msra.mxu0 0.0
  %636 = vmatprep.subr.mxu0 0.0
  %637 = vmatpush1.msra.mxu0 0.0
  %638 = vmatprep.subr.mxu0 0.0
  %639 = vmatpush1.msra.mxu0 0.0
  %640 = vmatprep.subr.mxu0 0.0
  %641 = vmatpush1.msra.mxu0 0.0
  %642 = vmatprep.mubr.f32.mxu0 0.0
  %643 = vmatmul.mubr.f32.gmra.mrb[0].mxu0 %v569
  %v644 = vpop.f32.mrb[0].mxu0
  %v645 = vadd.f32 0.0, %v644
  %v646 = vpop.f32.mrb[0].mxu0
  %647 = vmatprep.mubr.f32.mxu0 0.0
  %648 = vmatmul.mubr.f32.gmra.mrb[0].mxu0 %v572
  %v649 = vpop.f32.mrb[0].mxu0
  %v650 = vadd.f32 0.0, %v649
  %v651 = vpop.f32.mrb[0].mxu0
  %652 = vdwg.mxu0
  %vm653 = vcmask 203776
  %654 = vst.msk [vmem:[%s4] sm:$0xff] %vm653, %v645
  %655 = vst.msk [vmem:[%s4 + $0x8] sm:$0xff] %vm653, %v650
  %s656 = scalar_lea.vmem %s0, 16
  %v657 = vld [vmem:[%s656] sm:$0xff]
  %v658 = vld [vmem:[%s656 + $0x8] sm:$0xff]
  %659 = vst [vmem:[#allocation2] sm:$0xff] %v657
  %660 = vst.msk [vmem:[#allocation2 + $0x8] sm:$0xff] %vm20, %v658
  %v661 = vld [vmem:[%s656] sm:$0xff]
  %v662 = vld [vmem:[%s656 + $0x8] sm:$0xff]
  %665 = vrot.lane.b32.xlu0 %v661, 127
  %v666 = vpop.permute.xlu0 %665
  %667 = vrot.lane.b32.xlu0 %v662, 127
  %v668 = vpop.permute.xlu0 %667
  %v669 = vsel %vm30, %v666, %v668
  %672 = vst [vmem:[#allocation2 + $0x10] sm:$0xff] %v669
  %673 = vst.msk [vmem:[#allocation2 + $0x18] sm:$0xff] %vm20, %v668
  %v674 = vld [vmem:[%s656] sm:$0xff]
  %v675 = vld [vmem:[%s656 + $0x8] sm:$0xff]
  %678 = vrot.lane.b32.xlu0 %v674, 126
  %v679 = vpop.permute.xlu0 %678
  %680 = vrot.lane.b32.xlu0 %v675, 126
  %v681 = vpop.permute.xlu0 %680
  %v682 = vsel %vm44, %v679, %v681
  %685 = vst [vmem:[#allocation2 + $0x20] sm:$0xff] %v682
  %686 = vst.msk [vmem:[#allocation2 + $0x28] sm:$0xff] %vm20, %v681
  %v687 = vld [vmem:[%s656] sm:$0xff]
  %v688 = vld [vmem:[%s656 + $0x8] sm:$0xff]
  %691 = vrot.lane.b32.xlu0 %v687, 125
  %v692 = vpop.permute.xlu0 %691
  %693 = vrot.lane.b32.xlu0 %v688, 125
  %v694 = vpop.permute.xlu0 %693
  %v695 = vsel %vm58, %v692, %v694
  %698 = vst [vmem:[#allocation2 + $0x30] sm:$0xff] %v695
  %699 = vst.msk [vmem:[#allocation2 + $0x38] sm:$0xff] %vm20, %v694
  %v700 = vld [vmem:[%s656] sm:$0xff]
  %v701 = vld [vmem:[%s656 + $0x8] sm:$0xff]
  %704 = vrot.lane.b32.xlu0 %v700, 124
  %v705 = vpop.permute.xlu0 %704
  %706 = vrot.lane.b32.xlu0 %v701, 124
  %v707 = vpop.permute.xlu0 %706
  %v708 = vsel %vm72, %v705, %v707
  %711 = vst [vmem:[#allocation2 + $0x40] sm:$0xff] %v708
  %712 = vst.msk [vmem:[#allocation2 + $0x48] sm:$0xff] %vm20, %v707
  %v713 = vld [vmem:[%s656] sm:$0xff]
  %v714 = vld [vmem:[%s656 + $0x8] sm:$0xff]
  %717 = vrot.lane.b32.xlu0 %v713, 114
  %v718 = vpop.permute.xlu0 %717
  %719 = vrot.lane.b32.xlu0 %v714, 114
  %v720 = vpop.permute.xlu0 %719
  %v721 = vsel %vm86, %v718, %v720
  %724 = vst [vmem:[#allocation2 + $0x50] sm:$0xff] %v721
  %725 = vst.msk [vmem:[#allocation2 + $0x58] sm:$0xff] %vm20, %v720
  %v726 = vld [vmem:[%s656] sm:$0xff]
  %v727 = vld [vmem:[%s656 + $0x8] sm:$0xff]
  %730 = vrot.lane.b32.xlu0 %v726, 113
  %v731 = vpop.permute.xlu0 %730
  %732 = vrot.lane.b32.xlu0 %v727, 113
  %v733 = vpop.permute.xlu0 %732
  %v734 = vsel %vm100, %v731, %v733
  %737 = vst [vmem:[#allocation2 + $0x60] sm:$0xff] %v734
  %738 = vst.msk [vmem:[#allocation2 + $0x68] sm:$0xff] %vm20, %v733
  %v739 = vld [vmem:[%s656] sm:$0xff]
  %v740 = vld [vmem:[%s656 + $0x8] sm:$0xff]
  %743 = vrot.lane.b32.xlu0 %v739, 112
  %v744 = vpop.permute.xlu0 %743
  %745 = vrot.lane.b32.xlu0 %v740, 112
  %v746 = vpop.permute.xlu0 %745
  %v747 = vsel %vm114, %v744, %v746
  %750 = vst [vmem:[#allocation2 + $0x70] sm:$0xff] %v747
  %751 = vst.msk [vmem:[#allocation2 + $0x78] sm:$0xff] %vm20, %v746
  %v752 = vld [vmem:[%s656] sm:$0xff]
  %v753 = vld [vmem:[%s656 + $0x8] sm:$0xff]
  %756 = vrot.lane.b32.xlu0 %v752, 111
  %v757 = vpop.permute.xlu0 %756
  %758 = vrot.lane.b32.xlu0 %v753, 111
  %v759 = vpop.permute.xlu0 %758
  %v760 = vsel %vm128, %v757, %v759
  %763 = vst [vmem:[#allocation2 + $0x80] sm:$0xff] %v760
  %764 = vst.msk [vmem:[#allocation2 + $0x88] sm:$0xff] %vm20, %v759
  %v765 = vld [vmem:[%s656] sm:$0xff]
  %v766 = vld [vmem:[%s656 + $0x8] sm:$0xff]
  %769 = vrot.lane.b32.xlu0 %v765, 110
  %v770 = vpop.permute.xlu0 %769
  %771 = vrot.lane.b32.xlu0 %v766, 110
  %v772 = vpop.permute.xlu0 %771
  %v773 = vsel %vm142, %v770, %v772
  %776 = vst [vmem:[#allocation2 + $0x90] sm:$0xff] %v773
  %777 = vst.msk [vmem:[#allocation2 + $0x98] sm:$0xff] %vm20, %v772
  %v778 = vld [vmem:[%s656] sm:$0xff]
  %v779 = vld [vmem:[%s656 + $0x8] sm:$0xff]
  %782 = vrot.lane.b32.xlu0 %v778, 100
  %v783 = vpop.permute.xlu0 %782
  %784 = vrot.lane.b32.xlu0 %v779, 100
  %v785 = vpop.permute.xlu0 %784
  %v786 = vsel %vm156, %v783, %v785
  %789 = vst [vmem:[#allocation2 + $0xa0] sm:$0xff] %v786
  %790 = vst.msk [vmem:[#allocation2 + $0xa8] sm:$0xff] %vm20, %v785
  %v791 = vld [vmem:[%s656] sm:$0xff]
  %v792 = vld [vmem:[%s656 + $0x8] sm:$0xff]
  %795 = vrot.lane.b32.xlu0 %v791, 99
  %v796 = vpop.permute.xlu0 %795
  %797 = vrot.lane.b32.xlu0 %v792, 99
  %v798 = vpop.permute.xlu0 %797
  %v799 = vsel %vm170, %v796, %v798
  %802 = vst [vmem:[#allocation2 + $0xb0] sm:$0xff] %v799
  %803 = vst.msk [vmem:[#allocation2 + $0xb8] sm:$0xff] %vm20, %v798
  %v804 = vld [vmem:[%s656] sm:$0xff]
  %v805 = vld [vmem:[%s656 + $0x8] sm:$0xff]
  %808 = vrot.lane.b32.xlu0 %v804, 98
  %v809 = vpop.permute.xlu0 %808
  %810 = vrot.lane.b32.xlu0 %v805, 98
  %v811 = vpop.permute.xlu0 %810
  %v812 = vsel %vm184, %v809, %v811
  %815 = vst [vmem:[#allocation2 + $0xc0] sm:$0xff] %v812
  %816 = vst.msk [vmem:[#allocation2 + $0xc8] sm:$0xff] %vm20, %v811
  %v817 = vld [vmem:[%s656] sm:$0xff]
  %v818 = vld [vmem:[%s656 + $0x8] sm:$0xff]
  %821 = vrot.lane.b32.xlu0 %v817, 97
  %v822 = vpop.permute.xlu0 %821
  %823 = vrot.lane.b32.xlu0 %v818, 97
  %v824 = vpop.permute.xlu0 %823
  %v825 = vsel %vm198, %v822, %v824
  %828 = vst [vmem:[#allocation2 + $0xd0] sm:$0xff] %v825
  %829 = vst.msk [vmem:[#allocation2 + $0xd8] sm:$0xff] %vm20, %v824
  %v830 = vld [vmem:[%s656] sm:$0xff]
  %v831 = vld [vmem:[%s656 + $0x8] sm:$0xff]
  %834 = vrot.lane.b32.xlu0 %v830, 96
  %v835 = vpop.permute.xlu0 %834
  %836 = vrot.lane.b32.xlu0 %v831, 96
  %v837 = vpop.permute.xlu0 %836
  %v838 = vsel %vm212, %v835, %v837
  %841 = vst [vmem:[#allocation2 + $0xe0] sm:$0xff] %v838
  %842 = vst.msk [vmem:[#allocation2 + $0xe8] sm:$0xff] %vm20, %v837
  %v843 = vld [vmem:[%s656] sm:$0xff]
  %v844 = vld [vmem:[%s656 + $0x8] sm:$0xff]
  %847 = vrot.lane.b32.xlu0 %v843, 86
  %v848 = vpop.permute.xlu0 %847
  %849 = vrot.lane.b32.xlu0 %v844, 86
  %v850 = vpop.permute.xlu0 %849
  %v851 = vsel %vm226, %v848, %v850
  %854 = vst [vmem:[#allocation2 + $0xf0] sm:$0xff] %v851
  %855 = vst.msk [vmem:[#allocation2 + $0xf8] sm:$0xff] %vm20, %v850
  %v856 = vld [vmem:[%s656] sm:$0xff]
  %v857 = vld [vmem:[%s656 + $0x8] sm:$0xff]
  %860 = vrot.lane.b32.xlu0 %v856, 85
  %v861 = vpop.permute.xlu0 %860
  %862 = vrot.lane.b32.xlu0 %v857, 85
  %v863 = vpop.permute.xlu0 %862
  %v864 = vsel %vm240, %v861, %v863
  %867 = vst [vmem:[#allocation2 + $0x100] sm:$0xff] %v864
  %868 = vst.msk [vmem:[#allocation2 + $0x108] sm:$0xff] %vm20, %v863
  %v869 = vld [vmem:[%s656] sm:$0xff]
  %v870 = vld [vmem:[%s656 + $0x8] sm:$0xff]
  %873 = vrot.lane.b32.xlu0 %v869, 84
  %v874 = vpop.permute.xlu0 %873
  %875 = vrot.lane.b32.xlu0 %v870, 84
  %v876 = vpop.permute.xlu0 %875
  %v877 = vsel %vm254, %v874, %v876
  %880 = vst [vmem:[#allocation2 + $0x110] sm:$0xff] %v877
  %881 = vst.msk [vmem:[#allocation2 + $0x118] sm:$0xff] %vm20, %v876
  %v882 = vld [vmem:[%s656] sm:$0xff]
  %v883 = vld [vmem:[%s656 + $0x8] sm:$0xff]
  %886 = vrot.lane.b32.xlu0 %v882, 83
  %v887 = vpop.permute.xlu0 %886
  %888 = vrot.lane.b32.xlu0 %v883, 83
  %v889 = vpop.permute.xlu0 %888
  %v890 = vsel %vm268, %v887, %v889
  %893 = vst [vmem:[#allocation2 + $0x120] sm:$0xff] %v890
  %894 = vst.msk [vmem:[#allocation2 + $0x128] sm:$0xff] %vm20, %v889
  %v895 = vld [vmem:[%s656] sm:$0xff]
  %v896 = vld [vmem:[%s656 + $0x8] sm:$0xff]
  %899 = vrot.lane.b32.xlu0 %v895, 82
  %v900 = vpop.permute.xlu0 %899
  %901 = vrot.lane.b32.xlu0 %v896, 82
  %v902 = vpop.permute.xlu0 %901
  %v903 = vsel %vm282, %v900, %v902
  %906 = vst [vmem:[#allocation2 + $0x130] sm:$0xff] %v903
  %907 = vst.msk [vmem:[#allocation2 + $0x138] sm:$0xff] %vm20, %v902
  %v908 = vld [vmem:[%s656] sm:$0xff]
  %v909 = vld [vmem:[%s656 + $0x8] sm:$0xff]
  %912 = vrot.lane.b32.xlu0 %v908, 72
  %v913 = vpop.permute.xlu0 %912
  %914 = vrot.lane.b32.xlu0 %v909, 72
  %v915 = vpop.permute.xlu0 %914
  %v916 = vsel %vm296, %v913, %v915
  %919 = vst [vmem:[#allocation2 + $0x140] sm:$0xff] %v916
  %920 = vst.msk [vmem:[#allocation2 + $0x148] sm:$0xff] %vm20, %v915
  %v921 = vld [vmem:[%s656] sm:$0xff]
  %v922 = vld [vmem:[%s656 + $0x8] sm:$0xff]
  %925 = vrot.lane.b32.xlu0 %v921, 71
  %v926 = vpop.permute.xlu0 %925
  %927 = vrot.lane.b32.xlu0 %v922, 71
  %v928 = vpop.permute.xlu0 %927
  %v929 = vsel %vm310, %v926, %v928
  %932 = vst [vmem:[#allocation2 + $0x150] sm:$0xff] %v929
  %933 = vst.msk [vmem:[#allocation2 + $0x158] sm:$0xff] %vm20, %v928
  %v934 = vld [vmem:[%s656] sm:$0xff]
  %v935 = vld [vmem:[%s656 + $0x8] sm:$0xff]
  %938 = vrot.lane.b32.xlu0 %v934, 70
  %v939 = vpop.permute.xlu0 %938
  %940 = vrot.lane.b32.xlu0 %v935, 70
  %v941 = vpop.permute.xlu0 %940
  %v942 = vsel %vm324, %v939, %v941
  %945 = vst [vmem:[#allocation2 + $0x160] sm:$0xff] %v942
  %946 = vst.msk [vmem:[#allocation2 + $0x168] sm:$0xff] %vm20, %v941
  %v947 = vld [vmem:[%s656] sm:$0xff]
  %v948 = vld [vmem:[%s656 + $0x8] sm:$0xff]
  %951 = vrot.lane.b32.xlu0 %v947, 69
  %v952 = vpop.permute.xlu0 %951
  %953 = vrot.lane.b32.xlu0 %v948, 69
  %v954 = vpop.permute.xlu0 %953
  %v955 = vsel %vm338, %v952, %v954
  %958 = vst [vmem:[#allocation2 + $0x170] sm:$0xff] %v955
  %959 = vst.msk [vmem:[#allocation2 + $0x178] sm:$0xff] %vm20, %v954
  %v960 = vld [vmem:[%s656] sm:$0xff]
  %v961 = vld [vmem:[%s656 + $0x8] sm:$0xff]
  %964 = vrot.lane.b32.xlu0 %v960, 68
  %v965 = vpop.permute.xlu0 %964
  %966 = vrot.lane.b32.xlu0 %v961, 68
  %v967 = vpop.permute.xlu0 %966
  %v968 = vsel %vm352, %v965, %v967
  %971 = vst [vmem:[#allocation2 + $0x180] sm:$0xff] %v968
  %972 = vst.msk [vmem:[#allocation2 + $0x188] sm:$0xff] %vm20, %v967
  %v973 = vld [vmem:[%s1] sm:$0xff]
  %v974 = vld [vmem:[%s1 + $0x8] sm:$0xff]
  %v975 = vld [vmem:[%s1 + $0x10] sm:$0xff]
  %v976 = vld [vmem:[%s1 + $0x18] sm:$0xff]
  %v977 = vld [vmem:[#allocation2] sm:$0xff]
  %v978 = vld [vmem:[#allocation2 + $0x8] sm:$0xff]
  %v979 = vld [vmem:[#allocation2 + $0x10] sm:$0xff]
  %v980 = vld [vmem:[#allocation2 + $0x18] sm:$0xff]
  %v981 = vld [vmem:[#allocation2 + $0x20] sm:$0xff]
  %v982 = vld [vmem:[#allocation2 + $0x28] sm:$0xff]
  %v983 = vld [vmem:[#allocation2 + $0x30] sm:$0xff]
  %v984 = vld [vmem:[#allocation2 + $0x38] sm:$0xff]
  %v985 = vld [vmem:[#allocation2 + $0x40] sm:$0xff]
  %v986 = vld [vmem:[#allocation2 + $0x48] sm:$0xff]
  %v987 = vld [vmem:[#allocation2 + $0x50] sm:$0xff]
  %v988 = vld [vmem:[#allocation2 + $0x58] sm:$0xff]
  %v989 = vld [vmem:[#allocation2 + $0x60] sm:$0xff]
  %v990 = vld [vmem:[#allocation2 + $0x68] sm:$0xff]
  %v991 = vld [vmem:[#allocation2 + $0x70] sm:$0xff]
  %v992 = vld [vmem:[#allocation2 + $0x78] sm:$0xff]
  %v993 = vld [vmem:[#allocation2 + $0x80] sm:$0xff]
  %v994 = vld [vmem:[#allocation2 + $0x88] sm:$0xff]
  %v995 = vld [vmem:[#allocation2 + $0x90] sm:$0xff]
  %v996 = vld [vmem:[#allocation2 + $0x98] sm:$0xff]
  %v997 = vld [vmem:[#allocation2 + $0xa0] sm:$0xff]
  %v998 = vld [vmem:[#allocation2 + $0xa8] sm:$0xff]
  %v999 = vld [vmem:[#allocation2 + $0xb0] sm:$0xff]
  %v1000 = vld [vmem:[#allocation2 + $0xb8] sm:$0xff]
  %v1001 = vld [vmem:[#allocation2 + $0xc0] sm:$0xff]
  %v1002 = vld [vmem:[#allocation2 + $0xc8] sm:$0xff]
  %v1003 = vld [vmem:[#allocation2 + $0xd0] sm:$0xff]
  %v1004 = vld [vmem:[#allocation2 + $0xd8] sm:$0xff]
  %v1005 = vld [vmem:[#allocation2 + $0xe0] sm:$0xff]
  %v1006 = vld [vmem:[#allocation2 + $0xe8] sm:$0xff]
  %v1007 = vld [vmem:[#allocation2 + $0xf0] sm:$0xff]
  %v1008 = vld [vmem:[#allocation2 + $0xf8] sm:$0xff]
  %v1009 = vld [vmem:[#allocation2 + $0x100] sm:$0xff]
  %v1010 = vld [vmem:[#allocation2 + $0x108] sm:$0xff]
  %v1011 = vld [vmem:[#allocation2 + $0x110] sm:$0xff]
  %v1012 = vld [vmem:[#allocation2 + $0x118] sm:$0xff]
  %v1013 = vld [vmem:[#allocation2 + $0x120] sm:$0xff]
  %v1014 = vld [vmem:[#allocation2 + $0x128] sm:$0xff]
  %v1015 = vld [vmem:[#allocation2 + $0x130] sm:$0xff]
  %v1016 = vld [vmem:[#allocation2 + $0x138] sm:$0xff]
  %v1017 = vld [vmem:[#allocation2 + $0x140] sm:$0xff]
  %v1018 = vld [vmem:[#allocation2 + $0x148] sm:$0xff]
  %v1019 = vld [vmem:[#allocation2 + $0x150] sm:$0xff]
  %v1020 = vld [vmem:[#allocation2 + $0x158] sm:$0xff]
  %v1021 = vld [vmem:[#allocation2 + $0x160] sm:$0xff]
  %v1022 = vld [vmem:[#allocation2 + $0x168] sm:$0xff]
  %v1023 = vld [vmem:[#allocation2 + $0x170] sm:$0xff]
  %v1024 = vld [vmem:[#allocation2 + $0x178] sm:$0xff]
  %v1025 = vld [vmem:[#allocation2 + $0x180] sm:$0xff]
  %v1026 = vld [vmem:[#allocation2 + $0x188] sm:$0xff]
  %v1027 = vld [vmem:[%s2] sm:$0xff]
  %v1028 = vld [vmem:[%s2 + $0x8] sm:$0xff]
  %1030 = vset.pattern.permute.xlu0 0
  %1031 = vperm.xlu0 %1030, %v1027
  %v1032 = vpop.permute.xlu0 %1031
  %1035 = vset.pattern.permute.xlu0 0
  %1036 = vperm.xlu0 %1035, %v1028
  %v1037 = vpop.permute.xlu0 %1036
  %v1040 = vsel %vm296, %v974, 0
  %v1043 = vsel %vm296, %v976, 0
  %1045 = vmatprep.subr.mxu0 %v978
  %1046 = vmatpush1.msra.mxu0 %v977
  %1047 = vmatprep.subr.mxu0 %v980
  %1048 = vmatpush1.msra.mxu0 %v979
  %1049 = vmatprep.subr.mxu0 %v982
  %1050 = vmatpush1.msra.mxu0 %v981
  %1051 = vmatprep.subr.mxu0 %v984
  %1052 = vmatpush1.msra.mxu0 %v983
  %1053 = vmatprep.subr.mxu0 %v986
  %1054 = vmatpush1.msra.mxu0 %v985
  %1055 = vmatprep.subr.mxu0 %v988
  %1056 = vmatpush1.msra.mxu0 %v987
  %1057 = vmatprep.subr.mxu0 %v990
  %1058 = vmatpush1.msra.mxu0 %v989
  %1059 = vmatprep.subr.mxu0 %v992
  %1060 = vmatpush1.msra.mxu0 %v991
  %1061 = vmatprep.subr.mxu0 %v994
  %1062 = vmatpush1.msra.mxu0 %v993
  %1063 = vmatprep.subr.mxu0 %v996
  %1064 = vmatpush1.msra.mxu0 %v995
  %1065 = vmatprep.subr.mxu0 %v998
  %1066 = vmatpush1.msra.mxu0 %v997
  %1067 = vmatprep.subr.mxu0 %v1000
  %1068 = vmatpush1.msra.mxu0 %v999
  %1069 = vmatprep.subr.mxu0 %v1002
  %1070 = vmatpush1.msra.mxu0 %v1001
  %1071 = vmatprep.subr.mxu0 %v1004
  %1072 = vmatpush1.msra.mxu0 %v1003
  %1073 = vmatprep.subr.mxu0 %v1006
  %1074 = vmatpush1.msra.mxu0 %v1005
  %1075 = vmatprep.subr.mxu0 %v1008
  %1076 = vmatpush1.msra.mxu0 %v1007
  %1077 = vmatprep.subr.mxu0 %v1010
  %1078 = vmatpush1.msra.mxu0 %v1009
  %1079 = vmatprep.subr.mxu0 %v1012
  %1080 = vmatpush1.msra.mxu0 %v1011
  %1081 = vmatprep.subr.mxu0 %v1014
  %1082 = vmatpush1.msra.mxu0 %v1013
  %1083 = vmatprep.subr.mxu0 %v1016
  %1084 = vmatpush1.msra.mxu0 %v1015
  %1085 = vmatprep.subr.mxu0 %v1018
  %1086 = vmatpush1.msra.mxu0 %v1017
  %1087 = vmatprep.subr.mxu0 %v1020
  %1088 = vmatpush1.msra.mxu0 %v1019
  %1089 = vmatprep.subr.mxu0 %v1022
  %1090 = vmatpush1.msra.mxu0 %v1021
  %1091 = vmatprep.subr.mxu0 %v1024
  %1092 = vmatpush1.msra.mxu0 %v1023
  %1093 = vmatprep.subr.mxu0 %v1026
  %1094 = vmatpush1.msra.mxu0 %v1025
  %1095 = vmatprep.subr.mxu0 0.0
  %1096 = vmatpush1.msra.mxu0 0.0
  %1097 = vmatprep.subr.mxu0 0.0
  %1098 = vmatpush1.msra.mxu0 0.0
  %1099 = vmatprep.subr.mxu0 0.0
  %1100 = vmatpush1.msra.mxu0 0.0
  %1101 = vmatprep.subr.mxu0 0.0
  %1102 = vmatpush1.msra.mxu0 0.0
  %1103 = vmatprep.subr.mxu0 0.0
  %1104 = vmatpush1.msra.mxu0 0.0
  %1105 = vmatprep.subr.mxu0 0.0
  %1106 = vmatpush1.msra.mxu0 0.0
  %1107 = vmatprep.subr.mxu0 0.0
  %1108 = vmatpush1.msra.mxu0 0.0
  %1109 = vmatprep.mubr.f32.mxu0 %v1040
  %1110 = vmatmul.mubr.f32.gmra.mrb[0].mxu0 %v973
  %v1111 = vpop.f32.mrb[0].mxu0
  %v1112 = vadd.f32 %v1032, %v1111
  %v1113 = vpop.f32.mrb[0].mxu0
  %v1114 = vadd.f32 %v1032, %v1113
  %1115 = vmatprep.mubr.f32.mxu0 %v1043
  %1116 = vmatmul.mubr.f32.gmra.mrb[0].mxu0 %v975
  %v1117 = vpop.f32.mrb[0].mxu0
  %v1118 = vadd.f32 %v1037, %v1117
  %v1119 = vpop.f32.mrb[0].mxu0
  %v1120 = vadd.f32 %v1037, %v1119
  %1121 = vdwg.mxu0
  %v1122 = vmax.f32 %v1112, 0.0
  %v1123 = vmax.f32 %v1114, 0.0
  %v1124 = vmax.f32 %v1118, 0.0
  %v1125 = vmax.f32 %v1120, 0.0
  %1130 = vrot.lane.b32.xlu0 %v1122, 127
  %v1131 = vpop.permute.xlu0 %1130
  %1132 = vrot.lane.b32.xlu0 %v1123, 127
  %v1133 = vpop.permute.xlu0 %1132
  %1134 = vrot.lane.b32.xlu0 %v1124, 127
  %v1135 = vpop.permute.xlu0 %1134
  %1136 = vrot.lane.b32.xlu0 %v1125, 127
  %v1137 = vpop.permute.xlu0 %1136
  %v1138 = vsel %vm30, %v1131, %v1133
  %v1139 = vsel %vm30, %v1135, %v1137
  %v1144 = vmax.f32 %v1122, %v1138
  %v1145 = vmax.f32 %v1123, %v1133
  %v1146 = vmax.f32 %v1124, %v1139
  %v1147 = vmax.f32 %v1125, %v1137
  %1152 = vrot.lane.b32.xlu0 %v1144, 114
  %v1153 = vpop.permute.xlu0 %1152
  %1154 = vrot.lane.b32.xlu0 %v1145, 114
  %v1155 = vpop.permute.xlu0 %1154
  %1156 = vrot.lane.b32.xlu0 %v1146, 114
  %v1157 = vpop.permute.xlu0 %1156
  %1158 = vrot.lane.b32.xlu0 %v1147, 114
  %v1159 = vpop.permute.xlu0 %1158
  %v1160 = vsel %vm86, %v1153, %v1155
  %v1161 = vsel %vm86, %v1157, %v1159
  %v1164 = vmax.f32 %v1144, %v1160
  %v1165 = vmax.f32 %v1146, %v1161
  %v1166 = vld [vmem:[%s3] sm:$0xff]
  %v1167 = vld [vmem:[%s3 + $0x8] sm:$0xff]
  %v1168 = vld [vmem:[%s3 + $0x10] sm:$0xff]
  %v1169 = vld [vmem:[%s3 + $0x18] sm:$0xff]
  %v1170 = vld [vmem:[%s3 + $0x20] sm:$0xff]
  %v1171 = vld [vmem:[%s3 + $0x28] sm:$0xff]
  %v1172 = vld [vmem:[%s3 + $0x30] sm:$0xff]
  %v1173 = vld [vmem:[%s3 + $0x38] sm:$0xff]
  %v1174 = vld [vmem:[%s3 + $0x40] sm:$0xff]
  %v1175 = vld [vmem:[%s3 + $0x48] sm:$0xff]
  %v1176 = vld [vmem:[%s3 + $0x50] sm:$0xff]
  %v1177 = vld [vmem:[%s3 + $0x58] sm:$0xff]
  %v1178 = vld [vmem:[%s3 + $0x60] sm:$0xff]
  %v1179 = vld [vmem:[%s3 + $0x68] sm:$0xff]
  %v1180 = vld [vmem:[%s3 + $0x70] sm:$0xff]
  %v1181 = vld [vmem:[%s3 + $0x78] sm:$0x1]
  %v1183 = vsel %vm567, %v1164, 0
  %v1186 = vsel %vm567, %v1165, 0
  %v1189 = vsel %vm574, %v1181, 0
  %1191 = vmatprep.subr.mxu0 0.0
  %1192 = vmatpush1.msra.mxu0 %v1166
  %1193 = vmatprep.subr.mxu0 0.0
  %1194 = vmatpush1.msra.mxu0 %v1167
  %1195 = vmatprep.subr.mxu0 0.0
  %1196 = vmatpush1.msra.mxu0 %v1168
  %1197 = vmatprep.subr.mxu0 0.0
  %1198 = vmatpush1.msra.mxu0 %v1169
  %1199 = vmatprep.subr.mxu0 0.0
  %1200 = vmatpush1.msra.mxu0 %v1170
  %1201 = vmatprep.subr.mxu0 0.0
  %1202 = vmatpush1.msra.mxu0 %v1171
  %1203 = vmatprep.subr.mxu0 0.0
  %1204 = vmatpush1.msra.mxu0 %v1172
  %1205 = vmatprep.subr.mxu0 0.0
  %1206 = vmatpush1.msra.mxu0 %v1173
  %1207 = vmatprep.subr.mxu0 0.0
  %1208 = vmatpush1.msra.mxu0 %v1174
  %1209 = vmatprep.subr.mxu0 0.0
  %1210 = vmatpush1.msra.mxu0 %v1175
  %1211 = vmatprep.subr.mxu0 0.0
  %1212 = vmatpush1.msra.mxu0 %v1176
  %1213 = vmatprep.subr.mxu0 0.0
  %1214 = vmatpush1.msra.mxu0 %v1177
  %1215 = vmatprep.subr.mxu0 0.0
  %1216 = vmatpush1.msra.mxu0 %v1178
  %1217 = vmatprep.subr.mxu0 0.0
  %1218 = vmatpush1.msra.mxu0 %v1179
  %1219 = vmatprep.subr.mxu0 0.0
  %1220 = vmatpush1.msra.mxu0 %v1180
  %1221 = vmatprep.subr.mxu0 0.0
  %1222 = vmatpush1.msra.mxu0 %v1189
  %1223 = vmatprep.subr.mxu0 0.0
  %1224 = vmatpush1.msra.mxu0 0.0
  %1225 = vmatprep.subr.mxu0 0.0
  %1226 = vmatpush1.msra.mxu0 0.0
  %1227 = vmatprep.subr.mxu0 0.0
  %1228 = vmatpush1.msra.mxu0 0.0
  %1229 = vmatprep.subr.mxu0 0.0
  %1230 = vmatpush1.msra.mxu0 0.0
  %1231 = vmatprep.subr.mxu0 0.0
  %1232 = vmatpush1.msra.mxu0 0.0
  %1233 = vmatprep.subr.mxu0 0.0
  %1234 = vmatpush1.msra.mxu0 0.0
  %1235 = vmatprep.subr.mxu0 0.0
  %1236 = vmatpush1.msra.mxu0 0.0
  %1237 = vmatprep.subr.mxu0 0.0
  %1238 = vmatpush1.msra.mxu0 0.0
  %1239 = vmatprep.subr.mxu0 0.0
  %1240 = vmatpush1.msra.mxu0 0.0
  %1241 = vmatprep.subr.mxu0 0.0
  %1242 = vmatpush1.msra.mxu0 0.0
  %1243 = vmatprep.subr.mxu0 0.0
  %1244 = vmatpush1.msra.mxu0 0.0
  %1245 = vmatprep.subr.mxu0 0.0
  %1246 = vmatpush1.msra.mxu0 0.0
  %1247 = vmatprep.subr.mxu0 0.0
  %1248 = vmatpush1.msra.mxu0 0.0
  %1249 = vmatprep.subr.mxu0 0.0
  %1250 = vmatpush1.msra.mxu0 0.0
  %1251 = vmatprep.subr.mxu0 0.0
  %1252 = vmatpush1.msra.mxu0 0.0
  %1253 = vmatprep.subr.mxu0 0.0
  %1254 = vmatpush1.msra.mxu0 0.0
  %1255 = vmatprep.mubr.f32.mxu0 0.0
  %1256 = vmatmul.mubr.f32.gmra.mrb[0].mxu0 %v1183
  %v1257 = vpop.f32.mrb[0].mxu0
  %v1258 = vadd.f32 0.0, %v1257
  %v1259 = vpop.f32.mrb[0].mxu0
  %1260 = vmatprep.mubr.f32.mxu0 0.0
  %1261 = vmatmul.mubr.f32.gmra.mrb[0].mxu0 %v1186
  %v1262 = vpop.f32.mrb[0].mxu0
  %v1263 = vadd.f32 0.0, %v1262
  %v1264 = vpop.f32.mrb[0].mxu0
  %1265 = vdwg.mxu0
  %s1266 = scalar_lea.vmem %s4, 16
  %1267 = vst.msk [vmem:[%s1266] sm:$0xff] %vm653, %v1258
  %1268 = vst.msk [vmem:[%s1266 + $0x8] sm:$0xff] %vm653, %v1263
  // Predicated region
  $region18: #{lenet_forward.4} parent=0 // pred_check
    _
  $region19: #{lenet_forward.4} parent=0 // pred_check_branch
    %1270 = sbr.rel (0) target = $region21
  $region20: #{lenet_forward.4} parent=0 // pred_region
    _
  $region21: #{lenet_forward.4} parent=0 // pred_fallthru
    _
  // Predicated region
  $region22: #{lenet_forward.4} parent=0 // pred_check
    _
  $region23: #{lenet_forward.4} parent=0 // pred_check_branch
    %1272 = sbr.rel (0) target = $region25
  $region24: #{lenet_forward.4} parent=0 // pred_region
    _
  $region25: #{lenet_forward.4} parent=0 // pred_fallthru
    _

// kernel: lenet_forward.3
$region0: #{lenet_forward.3}
  #allocation0 [shape = 'u32[]', space=smem, size = 0x4, offset = 0x4, fixed_abs, tag = 'smem constant byte address 0x4 - core index']
  #allocation1 [shape = 'u32[144,128]{1,0:T(1,128)}', space=vmem, size = 0x12000, scoped, tag = 'internal scratch']
  #allocation2 [shape = 'f32[200,892]{1,0:T(8,128)}', space=vmem, size = 0xaf000, scoped, tag = 'scratch operand']
  %s0 = inlined_call_operand.vmem [shape: f32[2,8,1024], index: 0, kind: input, shape index: {}]
  %s1 = inlined_call_operand.vmem [shape: f32[8,200], index: 1, kind: input, shape index: {}]
  %s2 = inlined_call_operand.vmem [shape: f32[8,1], index: 2, kind: input, shape index: {}]
  %s3 = inlined_call_operand.vmem [shape: f32[859,196], index: 3, kind: input, shape index: {}]
  %s4 = inlined_call_operand.vmem [shape: f32[2,8,196], index: 4, kind: output, shape index: {}]
  %s5 = sld [smem:[#allocation0]]
  $region26: #{lenet_forward.3} parent=0
    _
  %s7 = ssub.s32 1, %s5
  %s8 = scalar_select 0, %s7, %s5
  // Predicated region
  $region2: #{lenet_forward.3} parent=0 // pred_check
    _
  $region3: #{lenet_forward.3} parent=0 // pred_check_branch
    %10 = sbr.rel (0) target = $region5
  $region4: #{lenet_forward.3} parent=0 // pred_region
    _
  $region5: #{lenet_forward.3} parent=0 // pred_fallthru
    _
  // Predicated region
  $region6: #{lenet_forward.3} parent=0 // pred_check
    _
  $region7: #{lenet_forward.3} parent=0 // pred_check_branch
    %12 = sbr.rel (0) target = $region9
  $region8: #{lenet_forward.3} parent=0 // pred_region
    _
  $region9: #{lenet_forward.3} parent=0 // pred_fallthru
    _
  // Predicated region
  $region10: #{lenet_forward.3} parent=0 // pred_check
    _
  $region11: #{lenet_forward.3} parent=0 // pred_check_branch
    %14 = sbr.rel (0) target = $region13
  $region12: #{lenet_forward.3} parent=0 // pred_region
    _
  $region13: #{lenet_forward.3} parent=0 // pred_fallthru
    _
  // Predicated region
  $region14: #{lenet_forward.3} parent=0 // pred_check
    _
  $region15: #{lenet_forward.3} parent=0 // pred_check_branch
    %16 = sbr.rel (0) target = $region17
  $region16: #{lenet_forward.3} parent=0 // pred_region
    _
  $region17: #{lenet_forward.3} parent=0 // pred_fallthru
    _
  %v17 = vld [vmem:[%s0] sm:$0xff]
  %v18 = vld [vmem:[%s0 + $0x8] sm:$0xff]
  %v19 = vld [vmem:[%s0 + $0x10] sm:$0xff]
  %v20 = vld [vmem:[%s0 + $0x18] sm:$0xff]
  %v21 = vld [vmem:[%s0 + $0x20] sm:$0xff]
  %v22 = vld [vmem:[%s0 + $0x28] sm:$0xff]
  %v23 = vld [vmem:[%s0 + $0x30] sm:$0xff]
  %24 = vst [vmem:[#allocation2] sm:$0xff] %v17
  %25 = vst [vmem:[#allocation2 + $0x8] sm:$0xff] %v18
  %26 = vst [vmem:[#allocation2 + $0x10] sm:$0xff] %v19
  %27 = vst [vmem:[#allocation2 + $0x18] sm:$0xff] %v20
  %28 = vst [vmem:[#allocation2 + $0x20] sm:$0xff] %v21
  %29 = vst [vmem:[#allocation2 + $0x28] sm:$0xff] %v22
  %vm30 = vcmask 1014784
  %31 = vst.msk [vmem:[#allocation2 + $0x30] sm:$0xff] %vm30, %v23
  %v32 = vld [vmem:[%s0] sm:$0xff]
  %v33 = vld [vmem:[%s0 + $0x8] sm:$0xff]
  %v34 = vld [vmem:[%s0 + $0x10] sm:$0xff]
  %v35 = vld [vmem:[%s0 + $0x18] sm:$0xff]
  %v36 = vld [vmem:[%s0 + $0x20] sm:$0xff]
  %v37 = vld [vmem:[%s0 + $0x28] sm:$0xff]
  %v38 = vld [vmem:[%s0 + $0x30] sm:$0xff]
  %46 = vrot.lane.b32.xlu0 %v32, 127
  %v47 = vpop.permute.xlu0 %46
  %48 = vrot.lane.b32.xlu0 %v33, 127
  %v49 = vpop.permute.xlu0 %48
  %50 = vrot.lane.b32.xlu0 %v34, 127
  %v51 = vpop.permute.xlu0 %50
  %52 = vrot.lane.b32.xlu0 %v35, 127
  %v53 = vpop.permute.xlu0 %52
  %54 = vrot.lane.b32.xlu0 %v36, 127
  %v55 = vpop.permute.xlu0 %54
  %56 = vrot.lane.b32.xlu0 %v37, 127
  %v57 = vpop.permute.xlu0 %56
  %58 = vrot.lane.b32.xlu0 %v38, 127
  %v59 = vpop.permute.xlu0 %58
  %vm60 = vcmask 1039360
  %v61 = vsel %vm60, %v47, %v49
  %v62 = vsel %vm60, %v49, %v51
  %v63 = vsel %vm60, %v51, %v53
  %v64 = vsel %vm60, %v53, %v55
  %v65 = vsel %vm60, %v55, %v57
  %v66 = vsel %vm60, %v57, %v59
  %74 = vst [vmem:[#allocation2 + $0x38] sm:$0xff] %v61
  %75 = vst [vmem:[#allocation2 + $0x40] sm:$0xff] %v62
  %76 = vst [vmem:[#allocation2 + $0x48] sm:$0xff] %v63
  %77 = vst [vmem:[#allocation2 + $0x50] sm:$0xff] %v64
  %78 = vst [vmem:[#allocation2 + $0x58] sm:$0xff] %v65
  %79 = vst [vmem:[#allocation2 + $0x60] sm:$0xff] %v66
  %80 = vst.msk [vmem:[#allocation2 + $0x68] sm:$0xff] %vm30, %v59
  %v81 = vld [vmem:[%s0] sm:$0xff]
  %v82 = vld [vmem:[%s0 + $0x8] sm:$0xff]
  %v83 = vld [vmem:[%s0 + $0x10] sm:$0xff]
  %v84 = vld [vmem:[%s0 + $0x18] sm:$0xff]
  %v85 = vld [vmem:[%s0 + $0x20] sm:$0xff]
  %v86 = vld [vmem:[%s0 + $0x28] sm:$0xff]
  %v87 = vld [vmem:[%s0 + $0x30] sm:$0xff]
  %95 = vrot.lane.b32.xlu0 %v81, 126
  %v96 = vpop.permute.xlu0 %95
  %97 = vrot.lane.b32.xlu0 %v82, 126
  %v98 = vpop.permute.xlu0 %97
  %99 = vrot.lane.b32.xlu0 %v83, 126
  %v100 = vpop.permute.xlu0 %99
  %101 = vrot.lane.b32.xlu0 %v84, 126
  %v102 = vpop.permute.xlu0 %101
  %103 = vrot.lane.b32.xlu0 %v85, 126
  %v104 = vpop.permute.xlu0 %103
  %105 = vrot.lane.b32.xlu0 %v86, 126
  %v106 = vpop.permute.xlu0 %105
  %107 = vrot.lane.b32.xlu0 %v87, 126
  %v108 = vpop.permute.xlu0 %107
  %vm109 = vcmask 1031168
  %v110 = vsel %vm109, %v96, %v98
  %v111 = vsel %vm109, %v98, %v100
  %v112 = vsel %vm109, %v100, %v102
  %v113 = vsel %vm109, %v102, %v104
  %v114 = vsel %vm109, %v104, %v106
  %v115 = vsel %vm109, %v106, %v108
  %123 = vst [vmem:[#allocation2 + $0x70] sm:$0xff] %v110
  %124 = vst [vmem:[#allocation2 + $0x78] sm:$0xff] %v111
  %125 = vst [vmem:[#allocation2 + $0x80] sm:$0xff] %v112
  %126 = vst [vmem:[#allocation2 + $0x88] sm:$0xff] %v113
  %127 = vst [vmem:[#allocation2 + $0x90] sm:$0xff] %v114
  %128 = vst [vmem:[#allocation2 + $0x98] sm:$0xff] %v115
  %129 = vst.msk [vmem:[#allocation2 + $0xa0] sm:$0xff] %vm30, %v108
  %v130 = vld [vmem:[%s0] sm:$0xff]
  %v131 = vld [vmem:[%s0 + $0x8] sm:$0xff]
  %v132 = vld [vmem:[%s0 + $0x10] sm:$0xff]
  %v133 = vld [vmem:[%s0 + $0x18] sm:$0xff]
  %v134 = vld [vmem:[%s0 + $0x20] sm:$0xff]
  %v135 = vld [vmem:[%s0 + $0x28] sm:$0xff]
  %v136 = vld [vmem:[%s0 + $0x30] sm:$0xff]
  %144 = vrot.lane.b32.xlu0 %v130, 125
  %v145 = vpop.permute.xlu0 %144
  %146 = vrot.lane.b32.xlu0 %v131, 125
  %v147 = vpop.permute.xlu0 %146
  %148 = vrot.lane.b32.xlu0 %v132, 125
  %v149 = vpop.permute.xlu0 %148
  %150 = vrot.lane.b32.xlu0 %v133, 125
  %v151 = vpop.permute.xlu0 %150
  %152 = vrot.lane.b32.xlu0 %v134, 125
  %v153 = vpop.permute.xlu0 %152
  %154 = vrot.lane.b32.xlu0 %v135, 125
  %v155 = vpop.permute.xlu0 %154
  %156 = vrot.lane.b32.xlu0 %v136, 125
  %v157 = vpop.permute.xlu0 %156
  %vm158 = vcmask 1022976
  %v159 = vsel %vm158, %v145, %v147
  %v160 = vsel %vm158, %v147, %v149
  %v161 = vsel %vm158, %v149, %v151
  %v162 = vsel %vm158, %v151, %v153
  %v163 = vsel %vm158, %v153, %v155
  %v164 = vsel %vm158, %v155, %v157
  %172 = vst [vmem:[#allocation2 + $0xa8] sm:$0xff] %v159
  %173 = vst [vmem:[#allocation2 + $0xb0] sm:$0xff] %v160
  %174 = vst [vmem:[#allocation2 + $0xb8] sm:$0xff] %v161
  %175 = vst [vmem:[#allocation2 + $0xc0] sm:$0xff] %v162
  %176 = vst [vmem:[#allocation2 + $0xc8] sm:$0xff] %v163
  %177 = vst [vmem:[#allocation2 + $0xd0] sm:$0xff] %v164
  %178 = vst.msk [vmem:[#allocation2 + $0xd8] sm:$0xff] %vm30, %v157
  %v179 = vld [vmem:[%s0] sm:$0xff]
  %v180 = vld [vmem:[%s0 + $0x8] sm:$0xff]
  %v181 = vld [vmem:[%s0 + $0x10] sm:$0xff]
  %v182 = vld [vmem:[%s0 + $0x18] sm:$0xff]
  %v183 = vld [vmem:[%s0 + $0x20] sm:$0xff]
  %v184 = vld [vmem:[%s0 + $0x28] sm:$0xff]
  %v185 = vld [vmem:[%s0 + $0x30] sm:$0xff]
  %193 = vrot.lane.b32.xlu0 %v179, 124
  %v194 = vpop.permute.xlu0 %193
  %195 = vrot.lane.b32.xlu0 %v180, 124
  %v196 = vpop.permute.xlu0 %195
  %197 = vrot.lane.b32.xlu0 %v181, 124
  %v198 = vpop.permute.xlu0 %197
  %199 = vrot.lane.b32.xlu0 %v182, 124
  %v200 = vpop.permute.xlu0 %199
  %201 = vrot.lane.b32.xlu0 %v183, 124
  %v202 = vpop.permute.xlu0 %201
  %203 = vrot.lane.b32.xlu0 %v184, 124
  %v204 = vpop.permute.xlu0 %203
  %205 = vrot.lane.b32.xlu0 %v185, 124
  %v206 = vpop.permute.xlu0 %205
  %v207 = vsel %vm30, %v194, %v196
  %v208 = vsel %vm30, %v196, %v198
  %v209 = vsel %vm30, %v198, %v200
  %v210 = vsel %vm30, %v200, %v202
  %v211 = vsel %vm30, %v202, %v204
  %v212 = vsel %vm30, %v204, %v206
  %220 = vst [vmem:[#allocation2 + $0xe0] sm:$0xff] %v207
  %221 = vst [vmem:[#allocation2 + $0xe8] sm:$0xff] %v208
  %222 = vst [vmem:[#allocation2 + $0xf0] sm:$0xff] %v209
  %223 = vst [vmem:[#allocation2 + $0xf8] sm:$0xff] %v210
  %224 = vst [vmem:[#allocation2 + $0x100] sm:$0xff] %v211
  %225 = vst [vmem:[#allocation2 + $0x108] sm:$0xff] %v212
  %226 = vst.msk [vmem:[#allocation2 + $0x110] sm:$0xff] %vm30, %v206
  %v227 = vld [vmem:[%s0] sm:$0xff]
  %v228 = vld [vmem:[%s0 + $0x8] sm:$0xff]
  %v229 = vld [vmem:[%s0 + $0x10] sm:$0xff]
  %v230 = vld [vmem:[%s0 + $0x18] sm:$0xff]
  %v231 = vld [vmem:[%s0 + $0x20] sm:$0xff]
  %v232 = vld [vmem:[%s0 + $0x28] sm:$0xff]
  %v233 = vld [vmem:[%s0 + $0x30] sm:$0xff]
  %v234 = vld [vmem:[%s0 + $0x38] sm:$0xff]
  %243 = vrot.lane.b32.xlu0 %v227, 96
  %v244 = vpop.permute.xlu0 %243
  %245 = vrot.lane.b32.xlu0 %v228, 96
  %v246 = vpop.permute.xlu0 %245
  %247 = vrot.lane.b32.xlu0 %v229, 96
  %v248 = vpop.permute.xlu0 %247
  %249 = vrot.lane.b32.xlu0 %v230, 96
  %v250 = vpop.permute.xlu0 %249
  %251 = vrot.lane.b32.xlu0 %v231, 96
  %v252 = vpop.permute.xlu0 %251
  %253 = vrot.lane.b32.xlu0 %v232, 96
  %v254 = vpop.permute.xlu0 %253
  %255 = vrot.lane.b32.xlu0 %v233, 96
  %v256 = vpop.permute.xlu0 %255
  %257 = vrot.lane.b32.xlu0 %v234, 96
  %v258 = vpop.permute.xlu0 %257
  %vm259 = vcmask 785408
  %v260 = vsel %vm259, %v244, %v246
  %v261 = vsel %vm259, %v246, %v248
  %v262 = vsel %vm259, %v248, %v250
  %v263 = vsel %vm259, %v250, %v252
  %v264 = vsel %vm259, %v252, %v254
  %v265 = vsel %vm259, %v254, %v256
  %v266 = vsel %vm259, %v256, %v258
  %274 = vst [vmem:[#allocation2 + $0x118] sm:$0xff] %v260
  %275 = vst [vmem:[#allocation2 + $0x120] sm:$0xff] %v261
  %276 = vst [vmem:[#allocation2 + $0x128] sm:$0xff] %v262
  %277 = vst [vmem:[#allocation2 + $0x130] sm:$0xff] %v263
  %278 = vst [vmem:[#allocation2 + $0x138] sm:$0xff] %v264
  %279 = vst [vmem:[#allocation2 + $0x140] sm:$0xff] %v265
  %280 = vst.msk [vmem:[#allocation2 + $0x148] sm:$0xff] %vm30, %v266
  %v281 = vld [vmem:[%s0] sm:$0xff]
  %v282 = vld [vmem:[%s0 + $0x8] sm:$0xff]
  %v283 = vld [vmem:[%s0 + $0x10] sm:$0xff]
  %v284 = vld [vmem:[%s0 + $0x18] sm:$0xff]
  %v285 = vld [vmem:[%s0 + $0x20] sm:$0xff]
  %v286 = vld [vmem:[%s0 + $0x28] sm:$0xff]
  %v287 = vld [vmem:[%s0 + $0x30] sm:$0xff]
  %v288 = vld [vmem:[%s0 + $0x38] sm:$0xff]
  %297 = vrot.lane.b32.xlu0 %v281, 95
  %v298 = vpop.permute.xlu0 %297
  %299 = vrot.lane.b32.xlu0 %v282, 95
  %v300 = vpop.permute.xlu0 %299
  %301 = vrot.lane.b32.xlu0 %v283, 95
  %v302 = vpop.permute.xlu0 %301
  %303 = vrot.lane.b32.xlu0 %v284, 95
  %v304 = vpop.permute.xlu0 %303
  %305 = vrot.lane.b32.xlu0 %v285, 95
  %v306 = vpop.permute.xlu0 %305
  %307 = vrot.lane.b32.xlu0 %v286, 95
  %v308 = vpop.permute.xlu0 %307
  %309 = vrot.lane.b32.xlu0 %v287, 95
  %v310 = vpop.permute.xlu0 %309
  %311 = vrot.lane.b32.xlu0 %v288, 95
  %v312 = vpop.permute.xlu0 %311
  %vm313 = vcmask 777216
  %v314 = vsel %vm313, %v298, %v300
  %v315 = vsel %vm313, %v300, %v302
  %v316 = vsel %vm313, %v302, %v304
  %v317 = vsel %vm313, %v304, %v306
  %v318 = vsel %vm313, %v306, %v308
  %v319 = vsel %vm313, %v308, %v310
  %v320 = vsel %vm313, %v310, %v312
  %328 = vst [vmem:[#allocation2 + $0x150] sm:$0xff] %v314
  %329 = vst [vmem:[#allocation2 + $0x158] sm:$0xff] %v315
  %330 = vst [vmem:[#allocation2 + $0x160] sm:$0xff] %v316
  %331 = vst [vmem:[#allocation2 + $0x168] sm:$0xff] %v317
  %332 = vst [vmem:[#allocation2 + $0x170] sm:$0xff] %v318
  %333 = vst [vmem:[#allocation2 + $0x178] sm:$0xff] %v319
  %334 = vst.msk [vmem:[#allocation2 + $0x180] sm:$0xff] %vm30, %v320
  %v335 = vld [vmem:[%s0] sm:$0xff]
  %v336 = vld [vmem:[%s0 + $0x8] sm:$0xff]
  %v337 = vld [vmem:[%s0 + $0x10] sm:$0xff]
  %v338 = vld [vmem:[%s0 + $0x18] sm:$0xff]
  %v339 = vld [vmem:[%s0 + $0x20] sm:$0xff]
  %v340 = vld [vmem:[%s0 + $0x28] sm:$0xff]
  %v341 = vld [vmem:[%s0 + $0x30] sm:$0xff]
  %v342 = vld [vmem:[%s0 + $0x38] sm:$0xff]
  %351 = vrot.lane.b32.xlu0 %v335, 94
  %v352 = vpop.permute.xlu0 %351
  %353 = vrot.lane.b32.xlu0 %v336, 94
  %v354 = vpop.permute.xlu0 %353
  %355 = vrot.lane.b32.xlu0 %v337, 94
  %v356 = vpop.permute.xlu0 %355
  %357 = vrot.lane.b32.xlu0 %v338, 94
  %v358 = vpop.permute.xlu0 %357
  %359 = vrot.lane.b32.xlu0 %v339, 94
  %v360 = vpop.permute.xlu0 %359
  %361 = vrot.lane.b32.xlu0 %v340, 94
  %v362 = vpop.permute.xlu0 %361
  %363 = vrot.lane.b32.xlu0 %v341, 94
  %v364 = vpop.permute.xlu0 %363
  %365 = vrot.lane.b32.xlu0 %v342, 94
  %v366 = vpop.permute.xlu0 %365
  %vm367 = vcmask 769024
  %v368 = vsel %vm367, %v352, %v354
  %v369 = vsel %vm367, %v354, %v356
  %v370 = vsel %vm367, %v356, %v358
  %v371 = vsel %vm367, %v358, %v360
  %v372 = vsel %vm367, %v360, %v362
  %v373 = vsel %vm367, %v362, %v364
  %v374 = vsel %vm367, %v364, %v366
  %382 = vst [vmem:[#allocation2 + $0x188] sm:$0xff] %v368
  %383 = vst [vmem:[#allocation2 + $0x190] sm:$0xff] %v369
  %384 = vst [vmem:[#allocation2 + $0x198] sm:$0xff] %v370
  %385 = vst [vmem:[#allocation2 + $0x1a0] sm:$0xff] %v371
  %386 = vst [vmem:[#allocation2 + $0x1a8] sm:$0xff] %v372
  %387 = vst [vmem:[#allocation2 + $0x1b0] sm:$0xff] %v373
  %388 = vst.msk [vmem:[#allocation2 + $0x1b8] sm:$0xff] %vm30, %v374
  %v389 = vld [vmem:[%s0] sm:$0xff]
  %v390 = vld [vmem:[%s0 + $0x8] sm:$0xff]
  %v391 = vld [vmem:[%s0 + $0x10] sm:$0xff]
  %v392 = vld [vmem:[%s0 + $0x18] sm:$0xff]
  %v393 = vld [vmem:[%s0 + $0x20] sm:$0xff]
  %v394 = vld [vmem:[%s0 + $0x28] sm:$0xff]
  %v395 = vld [vmem:[%s0 + $0x30] sm:$0xff]
  %v396 = vld [vmem:[%s0 + $0x38] sm:$0xff]
  %405 = vrot.lane.b32.xlu0 %v389, 93
  %v406 = vpop.permute.xlu0 %405
  %407 = vrot.lane.b32.xlu0 %v390, 93
  %v408 = vpop.permute.xlu0 %407
  %409 = vrot.lane.b32.xlu0 %v391, 93
  %v410 = vpop.permute.xlu0 %409
  %411 = vrot.lane.b32.xlu0 %v392, 93
  %v412 = vpop.permute.xlu0 %411
  %413 = vrot.lane.b32.xlu0 %v393, 93
  %v414 = vpop.permute.xlu0 %413
  %415 = vrot.lane.b32.xlu0 %v394, 93
  %v416 = vpop.permute.xlu0 %415
  %417 = vrot.lane.b32.xlu0 %v395, 93
  %v418 = vpop.permute.xlu0 %417
  %419 = vrot.lane.b32.xlu0 %v396, 93
  %v420 = vpop.permute.xlu0 %419
  %vm421 = vcmask 760832
  %v422 = vsel %vm421, %v406, %v408
  %v423 = vsel %vm421, %v408, %v410
  %v424 = vsel %vm421, %v410, %v412
  %v425 = vsel %vm421, %v412, %v414
  %v426 = vsel %vm421, %v414, %v416
  %v427 = vsel %vm421, %v416, %v418
  %v428 = vsel %vm421, %v418, %v420
  %436 = vst [vmem:[#allocation2 + $0x1c0] sm:$0xff] %v422
  %437 = vst [vmem:[#allocation2 + $0x1c8] sm:$0xff] %v423
  %438 = vst [vmem:[#allocation2 + $0x1d0] sm:$0xff] %v424
  %439 = vst [vmem:[#allocation2 + $0x1d8] sm:$0xff] %v425
  %440 = vst [vmem:[#allocation2 + $0x1e0] sm:$0xff] %v426
  %441 = vst [vmem:[#allocation2 + $0x1e8] sm:$0xff] %v427
  %442 = vst.msk [vmem:[#allocation2 + $0x1f0] sm:$0xff] %vm30, %v428
  %v443 = vld [vmem:[%s0] sm:$0xff]
  %v444 = vld [vmem:[%s0 + $0x8] sm:$0xff]
  %v445 = vld [vmem:[%s0 + $0x10] sm:$0xff]
  %v446 = vld [vmem:[%s0 + $0x18] sm:$0xff]
  %v447 = vld [vmem:[%s0 + $0x20] sm:$0xff]
  %v448 = vld [vmem:[%s0 + $0x28] sm:$0xff]
  %v449 = vld [vmem:[%s0 + $0x30] sm:$0xff]
  %v450 = vld [vmem:[%s0 + $0x38] sm:$0xff]
  %459 = vrot.lane.b32.xlu0 %v443, 92
  %v460 = vpop.permute.xlu0 %459
  %461 = vrot.lane.b32.xlu0 %v444, 92
  %v462 = vpop.permute.xlu0 %461
  %463 = vrot.lane.b32.xlu0 %v445, 92
  %v464 = vpop.permute.xlu0 %463
  %465 = vrot.lane.b32.xlu0 %v446, 92
  %v466 = vpop.permute.xlu0 %465
  %467 = vrot.lane.b32.xlu0 %v447, 92
  %v468 = vpop.permute.xlu0 %467
  %469 = vrot.lane.b32.xlu0 %v448, 92
  %v470 = vpop.permute.xlu0 %469
  %471 = vrot.lane.b32.xlu0 %v449, 92
  %v472 = vpop.permute.xlu0 %471
  %473 = vrot.lane.b32.xlu0 %v450, 92
  %v474 = vpop.permute.xlu0 %473
  %vm475 = vcmask 752640
  %v476 = vsel %vm475, %v460, %v462
  %v477 = vsel %vm475, %v462, %v464
  %v478 = vsel %vm475, %v464, %v466
  %v479 = vsel %vm475, %v466, %v468
  %v480 = vsel %vm475, %v468, %v470
  %v481 = vsel %vm475, %v470, %v472
  %v482 = vsel %vm475, %v472, %v474
  %490 = vst [vmem:[#allocation2 + $0x1f8] sm:$0xff] %v476
  %491 = vst [vmem:[#allocation2 + $0x200] sm:$0xff] %v477
  %492 = vst [vmem:[#allocation2 + $0x208] sm:$0xff] %v478
  %493 = vst [vmem:[#allocation2 + $0x210] sm:$0xff] %v479
  %494 = vst [vmem:[#allocation2 + $0x218] sm:$0xff] %v480
  %495 = vst [vmem:[#allocation2 + $0x220] sm:$0xff] %v481
  %496 = vst.msk [vmem:[#allocation2 + $0x228] sm:$0xff] %vm30, %v482
  %v497 = vld [vmem:[%s0] sm:$0xff]
  %v498 = vld [vmem:[%s0 + $0x8] sm:$0xff]
  %v499 = vld [vmem:[%s0 + $0x10] sm:$0xff]
  %v500 = vld [vmem:[%s0 + $0x18] sm:$0xff]
  %v501 = vld [vmem:[%s0 + $0x20] sm:$0xff]
  %v502 = vld [vmem:[%s0 + $0x28] sm:$0xff]
  %v503 = vld [vmem:[%s0 + $0x30] sm:$0xff]
  %v504 = vld [vmem:[%s0 + $0x38] sm:$0xff]
  %513 = vrot.lane.b32.xlu0 %v497, 64
  %v514 = vpop.permute.xlu0 %513
  %515 = vrot.lane.b32.xlu0 %v498, 64
  %v516 = vpop.permute.xlu0 %515
  %517 = vrot.lane.b32.xlu0 %v499, 64
  %v518 = vpop.permute.xlu0 %517
  %519 = vrot.lane.b32.xlu0 %v500, 64
  %v520 = vpop.permute.xlu0 %519
  %521 = vrot.lane.b32.xlu0 %v501, 64
  %v522 = vpop.permute.xlu0 %521
  %523 = vrot.lane.b32.xlu0 %v502, 64
  %v524 = vpop.permute.xlu0 %523
  %525 = vrot.lane.b32.xlu0 %v503, 64
  %v526 = vpop.permute.xlu0 %525
  %527 = vrot.lane.b32.xlu0 %v504, 64
  %v528 = vpop.permute.xlu0 %527
  %vm529 = vcmask 523264
  %v530 = vsel %vm529, %v514, %v516
  %v531 = vsel %vm529, %v516, %v518
  %v532 = vsel %vm529, %v518, %v520
  %v533 = vsel %vm529, %v520, %v522
  %v534 = vsel %vm529, %v522, %v524
  %v535 = vsel %vm529, %v524, %v526
  %v536 = vsel %vm529, %v526, %v528
  %544 = vst [vmem:[#allocation2 + $0x230] sm:$0xff] %v530
  %545 = vst [vmem:[#allocation2 + $0x238] sm:$0xff] %v531
  %546 = vst [vmem:[#allocation2 + $0x240] sm:$0xff] %v532
  %547 = vst [vmem:[#allocation2 + $0x248] sm:$0xff] %v533
  %548 = vst [vmem:[#allocation2 + $0x250] sm:$0xff] %v534
  %549 = vst [vmem:[#allocation2 + $0x258] sm:$0xff] %v535
  %550 = vst.msk [vmem:[#allocation2 + $0x260] sm:$0xff] %vm30, %v536
  %v551 = vld [vmem:[%s0] sm:$0xff]
  %v552 = vld [vmem:[%s0 + $0x8] sm:$0xff]
  %v553 = vld [vmem:[%s0 + $0x10] sm:$0xff]
  %v554 = vld [vmem:[%s0 + $0x18] sm:$0xff]
  %v555 = vld [vmem:[%s0 + $0x20] sm:$0xff]
  %v556 = vld [vmem:[%s0 + $0x28] sm:$0xff]
  %v557 = vld [vmem:[%s0 + $0x30] sm:$0xff]
  %v558 = vld [vmem:[%s0 + $0x38] sm:$0xff]
  %567 = vrot.lane.b32.xlu0 %v551, 63
  %v568 = vpop.permute.xlu0 %567
  %569 = vrot.lane.b32.xlu0 %v552, 63
  %v570 = vpop.permute.xlu0 %569
  %571 = vrot.lane.b32.xlu0 %v553, 63
  %v572 = vpop.permute.xlu0 %571
  %573 = vrot.lane.b32.xlu0 %v554, 63
  %v574 = vpop.permute.xlu0 %573
  %575 = vrot.lane.b32.xlu0 %v555, 63
  %v576 = vpop.permute.xlu0 %575
  %577 = vrot.lane.b32.xlu0 %v556, 63
  %v578 = vpop.permute.xlu0 %577
  %579 = vrot.lane.b32.xlu0 %v557, 63
  %v580 = vpop.permute.xlu0 %579
  %581 = vrot.lane.b32.xlu0 %v558, 63
  %v582 = vpop.permute.xlu0 %581
  %vm583 = vcmask 515072
  %v584 = vsel %vm583, %v568, %v570
  %v585 = vsel %vm583, %v570, %v572
  %v586 = vsel %vm583, %v572, %v574
  %v587 = vsel %vm583, %v574, %v576
  %v588 = vsel %vm583, %v576, %v578
  %v589 = vsel %vm583, %v578, %v580
  %v590 = vsel %vm583, %v580, %v582
  %598 = vst [vmem:[#allocation2 + $0x268] sm:$0xff] %v584
  %599 = vst [vmem:[#allocation2 + $0x270] sm:$0xff] %v585
  %600 = vst [vmem:[#allocation2 + $0x278] sm:$0xff] %v586
  %601 = vst [vmem:[#allocation2 + $0x280] sm:$0xff] %v587
  %602 = vst [vmem:[#allocation2 + $0x288] sm:$0xff] %v588
  %603 = vst [vmem:[#allocation2 + $0x290] sm:$0xff] %v589
  %604 = vst.msk [vmem:[#allocation2 + $0x298] sm:$0xff] %vm30, %v590
  %v605 = vld [vmem:[%s0] sm:$0xff]
  %v606 = vld [vmem:[%s0 + $0x8] sm:$0xff]
  %v607 = vld [vmem:[%s0 + $0x10] sm:$0xff]
  %v608 = vld [vmem:[%s0 + $0x18] sm:$0xff]
  %v609 = vld [vmem:[%s0 + $0x20] sm:$0xff]
  %v610 = vld [vmem:[%s0 + $0x28] sm:$0xff]
  %v611 = vld [vmem:[%s0 + $0x30] sm:$0xff]
  %v612 = vld [vmem:[%s0 + $0x38] sm:$0xff]
  %621 = vrot.lane.b32.xlu0 %v605, 62
  %v622 = vpop.permute.xlu0 %621
  %623 = vrot.lane.b32.xlu0 %v606, 62
  %v624 = vpop.permute.xlu0 %623
  %625 = vrot.lane.b32.xlu0 %v607, 62
  %v626 = vpop.permute.xlu0 %625
  %627 = vrot.lane.b32.xlu0 %v608, 62
  %v628 = vpop.permute.xlu0 %627
  %629 = vrot.lane.b32.xlu0 %v609, 62
  %v630 = vpop.permute.xlu0 %629
  %631 = vrot.lane.b32.xlu0 %v610, 62
  %v632 = vpop.permute.xlu0 %631
  %633 = vrot.lane.b32.xlu0 %v611, 62
  %v634 = vpop.permute.xlu0 %633
  %635 = vrot.lane.b32.xlu0 %v612, 62
  %v636 = vpop.permute.xlu0 %635
  %vm637 = vcmask 506880
  %v638 = vsel %vm637, %v622, %v624
  %v639 = vsel %vm637, %v624, %v626
  %v640 = vsel %vm637, %v626, %v628
  %v641 = vsel %vm637, %v628, %v630
  %v642 = vsel %vm637, %v630, %v632
  %v643 = vsel %vm637, %v632, %v634
  %v644 = vsel %vm637, %v634, %v636
  %652 = vst [vmem:[#allocation2 + $0x2a0] sm:$0xff] %v638
  %653 = vst [vmem:[#allocation2 + $0x2a8] sm:$0xff] %v639
  %654 = vst [vmem:[#allocation2 + $0x2b0] sm:$0xff] %v640
  %655 = vst [vmem:[#allocation2 + $0x2b8] sm:$0xff] %v641
  %656 = vst [vmem:[#allocation2 + $0x2c0] sm:$0xff] %v642
  %657 = vst [vmem:[#allocation2 + $0x2c8] sm:$0xff] %v643
  %658 = vst.msk [vmem:[#allocation2 + $0x2d0] sm:$0xff] %vm30, %v644
  %v659 = vld [vmem:[%s0] sm:$0xff]
  %v660 = vld [vmem:[%s0 + $0x8] sm:$0xff]
  %v661 = vld [vmem:[%s0 + $0x10] sm:$0xff]
  %v662 = vld [vmem:[%s0 + $0x18] sm:$0xff]
  %v663 = vld [vmem:[%s0 + $0x20] sm:$0xff]
  %v664 = vld [vmem:[%s0 + $0x28] sm:$0xff]
  %v665 = vld [vmem:[%s0 + $0x30] sm:$0xff]
  %v666 = vld [vmem:[%s0 + $0x38] sm:$0xff]
  %675 = vrot.lane.b32.xlu0 %v659, 61
  %v676 = vpop.permute.xlu0 %675
  %677 = vrot.lane.b32.xlu0 %v660, 61
  %v678 = vpop.permute.xlu0 %677
  %679 = vrot.lane.b32.xlu0 %v661, 61
  %v680 = vpop.permute.xlu0 %679
  %681 = vrot.lane.b32.xlu0 %v662, 61
  %v682 = vpop.permute.xlu0 %681
  %683 = vrot.lane.b32.xlu0 %v663, 61
  %v684 = vpop.permute.xlu0 %683
  %685 = vrot.lane.b32.xlu0 %v664, 61
  %v686 = vpop.permute.xlu0 %685
  %687 = vrot.lane.b32.xlu0 %v665, 61
  %v688 = vpop.permute.xlu0 %687
  %689 = vrot.lane.b32.xlu0 %v666, 61
  %v690 = vpop.permute.xlu0 %689
  %vm691 = vcmask 498688
  %v692 = vsel %vm691, %v676, %v678
  %v693 = vsel %vm691, %v678, %v680
  %v694 = vsel %vm691, %v680, %v682
  %v695 = vsel %vm691, %v682, %v684
  %v696 = vsel %vm691, %v684, %v686
  %v697 = vsel %vm691, %v686, %v688
  %v698 = vsel %vm691, %v688, %v690
  %706 = vst [vmem:[#allocation2 + $0x2d8] sm:$0xff] %v692
  %707 = vst [vmem:[#allocation2 + $0x2e0] sm:$0xff] %v693
  %708 = vst [vmem:[#allocation2 + $0x2e8] sm:$0xff] %v694
  %709 = vst [vmem:[#allocation2 + $0x2f0] sm:$0xff] %v695
  %710 = vst [vmem:[#allocation2 + $0x2f8] sm:$0xff] %v696
  %711 = vst [vmem:[#allocation2 + $0x300] sm:$0xff] %v697
  %712 = vst.msk [vmem:[#allocation2 + $0x308] sm:$0xff] %vm30, %v698
  %v713 = vld [vmem:[%s0] sm:$0xff]
  %v714 = vld [vmem:[%s0 + $0x8] sm:$0xff]
  %v715 = vld [vmem:[%s0 + $0x10] sm:$0xff]
  %v716 = vld [vmem:[%s0 + $0x18] sm:$0xff]
  %v717 = vld [vmem:[%s0 + $0x20] sm:$0xff]
  %v718 = vld [vmem:[%s0 + $0x28] sm:$0xff]
  %v719 = vld [vmem:[%s0 + $0x30] sm:$0xff]
  %v720 = vld [vmem:[%s0 + $0x38] sm:$0xff]
  %729 = vrot.lane.b32.xlu0 %v713, 60
  %v730 = vpop.permute.xlu0 %729
  %731 = vrot.lane.b32.xlu0 %v714, 60
  %v732 = vpop.permute.xlu0 %731
  %733 = vrot.lane.b32.xlu0 %v715, 60
  %v734 = vpop.permute.xlu0 %733
  %735 = vrot.lane.b32.xlu0 %v716, 60
  %v736 = vpop.permute.xlu0 %735
  %737 = vrot.lane.b32.xlu0 %v717, 60
  %v738 = vpop.permute.xlu0 %737
  %739 = vrot.lane.b32.xlu0 %v718, 60
  %v740 = vpop.permute.xlu0 %739
  %741 = vrot.lane.b32.xlu0 %v719, 60
  %v742 = vpop.permute.xlu0 %741
  %743 = vrot.lane.b32.xlu0 %v720, 60
  %v744 = vpop.permute.xlu0 %743
  %vm745 = vcmask 490496
  %v746 = vsel %vm745, %v730, %v732
  %v747 = vsel %vm745, %v732, %v734
  %v748 = vsel %vm745, %v734, %v736
  %v749 = vsel %vm745, %v736, %v738
  %v750 = vsel %vm745, %v738, %v740
  %v751 = vsel %vm745, %v740, %v742
  %v752 = vsel %vm745, %v742, %v744
  %760 = vst [vmem:[#allocation2 + $0x310] sm:$0xff] %v746
  %761 = vst [vmem:[#allocation2 + $0x318] sm:$0xff] %v747
  %762 = vst [vmem:[#allocation2 + $0x320] sm:$0xff] %v748
  %763 = vst [vmem:[#allocation2 + $0x328] sm:$0xff] %v749
  %764 = vst [vmem:[#allocation2 + $0x330] sm:$0xff] %v750
  %765 = vst [vmem:[#allocation2 + $0x338] sm:$0xff] %v751
  %766 = vst.msk [vmem:[#allocation2 + $0x340] sm:$0xff] %vm30, %v752
  %v767 = vld [vmem:[%s0] sm:$0xff]
  %v768 = vld [vmem:[%s0 + $0x8] sm:$0xff]
  %v769 = vld [vmem:[%s0 + $0x10] sm:$0xff]
  %v770 = vld [vmem:[%s0 + $0x18] sm:$0xff]
  %v771 = vld [vmem:[%s0 + $0x20] sm:$0xff]
  %v772 = vld [vmem:[%s0 + $0x28] sm:$0xff]
  %v773 = vld [vmem:[%s0 + $0x30] sm:$0xff]
  %v774 = vld [vmem:[%s0 + $0x38] sm:$0xff]
  %783 = vrot.lane.b32.xlu0 %v767, 32
  %v784 = vpop.permute.xlu0 %783
  %785 = vrot.lane.b32.xlu0 %v768, 32
  %v786 = vpop.permute.xlu0 %785
  %787 = vrot.lane.b32.xlu0 %v769, 32
  %v788 = vpop.permute.xlu0 %787
  %789 = vrot.lane.b32.xlu0 %v770, 32
  %v790 = vpop.permute.xlu0 %789
  %791 = vrot.lane.b32.xlu0 %v771, 32
  %v792 = vpop.permute.xlu0 %791
  %793 = vrot.lane.b32.xlu0 %v772, 32
  %v794 = vpop.permute.xlu0 %793
  %795 = vrot.lane.b32.xlu0 %v773, 32
  %v796 = vpop.permute.xlu0 %795
  %797 = vrot.lane.b32.xlu0 %v774, 32
  %v798 = vpop.permute.xlu0 %797
  %vm799 = vcmask 261120
  %v800 = vsel %vm799, %v784, %v786
  %v801 = vsel %vm799, %v786, %v788
  %v802 = vsel %vm799, %v788, %v790
  %v803 = vsel %vm799, %v790, %v792
  %v804 = vsel %vm799, %v792, %v794
  %v805 = vsel %vm799, %v794, %v796
  %v806 = vsel %vm799, %v796, %v798
  %814 = vst [vmem:[#allocation2 + $0x348] sm:$0xff] %v800
  %815 = vst [vmem:[#allocation2 + $0x350] sm:$0xff] %v801
  %816 = vst [vmem:[#allocation2 + $0x358] sm:$0xff] %v802
  %817 = vst [vmem:[#allocation2 + $0x360] sm:$0xff] %v803
  %818 = vst [vmem:[#allocation2 + $0x368] sm:$0xff] %v804
  %819 = vst [vmem:[#allocation2 + $0x370] sm:$0xff] %v805
  %820 = vst.msk [vmem:[#allocation2 + $0x378] sm:$0xff] %vm30, %v806
  %v821 = vld [vmem:[%s0] sm:$0xff]
  %v822 = vld [vmem:[%s0 + $0x8] sm:$0xff]
  %v823 = vld [vmem:[%s0 + $0x10] sm:$0xff]
  %v824 = vld [vmem:[%s0 + $0x18] sm:$0xff]
  %v825 = vld [vmem:[%s0 + $0x20] sm:$0xff]
  %v826 = vld [vmem:[%s0 + $0x28] sm:$0xff]
  %v827 = vld [vmem:[%s0 + $0x30] sm:$0xff]
  %v828 = vld [vmem:[%s0 + $0x38] sm:$0xff]
  %837 = vrot.lane.b32.xlu0 %v821, 31
  %v838 = vpop.permute.xlu0 %837
  %839 = vrot.lane.b32.xlu0 %v822, 31
  %v840 = vpop.permute.xlu0 %839
  %841 = vrot.lane.b32.xlu0 %v823, 31
  %v842 = vpop.permute.xlu0 %841
  %843 = vrot.lane.b32.xlu0 %v824, 31
  %v844 = vpop.permute.xlu0 %843
  %845 = vrot.lane.b32.xlu0 %v825, 31
  %v846 = vpop.permute.xlu0 %845
  %847 = vrot.lane.b32.xlu0 %v826, 31
  %v848 = vpop.permute.xlu0 %847
  %849 = vrot.lane.b32.xlu0 %v827, 31
  %v850 = vpop.permute.xlu0 %849
  %851 = vrot.lane.b32.xlu0 %v828, 31
  %v852 = vpop.permute.xlu0 %851
  %vm853 = vcmask 252928
  %v854 = vsel %vm853, %v838, %v840
  %v855 = vsel %vm853, %v840, %v842
  %v856 = vsel %vm853, %v842, %v844
  %v857 = vsel %vm853, %v844, %v846
  %v858 = vsel %vm853, %v846, %v848
  %v859 = vsel %vm853, %v848, %v850
  %v860 = vsel %vm853, %v850, %v852
  %868 = vst [vmem:[#allocation2 + $0x380] sm:$0xff] %v854
  %869 = vst [vmem:[#allocation2 + $0x388] sm:$0xff] %v855
  %870 = vst [vmem:[#allocation2 + $0x390] sm:$0xff] %v856
  %871 = vst [vmem:[#allocation2 + $0x398] sm:$0xff] %v857
  %872 = vst [vmem:[#allocation2 + $0x3a0] sm:$0xff] %v858
  %873 = vst [vmem:[#allocation2 + $0x3a8] sm:$0xff] %v859
  %874 = vst.msk [vmem:[#allocation2 + $0x3b0] sm:$0xff] %vm30, %v860
  %v875 = vld [vmem:[%s0] sm:$0xff]
  %v876 = vld [vmem:[%s0 + $0x8] sm:$0xff]
  %v877 = vld [vmem:[%s0 + $0x10] sm:$0xff]
  %v878 = vld [vmem:[%s0 + $0x18] sm:$0xff]
  %v879 = vld [vmem:[%s0 + $0x20] sm:$0xff]
  %v880 = vld [vmem:[%s0 + $0x28] sm:$0xff]
  %v881 = vld [vmem:[%s0 + $0x30] sm:$0xff]
  %v882 = vld [vmem:[%s0 + $0x38] sm:$0xff]
  %891 = vrot.lane.b32.xlu0 %v875, 30
  %v892 = vpop.permute.xlu0 %891
  %893 = vrot.lane.b32.xlu0 %v876, 30
  %v894 = vpop.permute.xlu0 %893
  %895 = vrot.lane.b32.xlu0 %v877, 30
  %v896 = vpop.permute.xlu0 %895
  %897 = vrot.lane.b32.xlu0 %v878, 30
  %v898 = vpop.permute.xlu0 %897
  %899 = vrot.lane.b32.xlu0 %v879, 30
  %v900 = vpop.permute.xlu0 %899
  %901 = vrot.lane.b32.xlu0 %v880, 30
  %v902 = vpop.permute.xlu0 %901
  %903 = vrot.lane.b32.xlu0 %v881, 30
  %v904 = vpop.permute.xlu0 %903
  %905 = vrot.lane.b32.xlu0 %v882, 30
  %v906 = vpop.permute.xlu0 %905
  %vm907 = vcmask 244736
  %v908 = vsel %vm907, %v892, %v894
  %v909 = vsel %vm907, %v894, %v896
  %v910 = vsel %vm907, %v896, %v898
  %v911 = vsel %vm907, %v898, %v900
  %v912 = vsel %vm907, %v900, %v902
  %v913 = vsel %vm907, %v902, %v904
  %v914 = vsel %vm907, %v904, %v906
  %922 = vst [vmem:[#allocation2 + $0x3b8] sm:$0xff] %v908
  %923 = vst [vmem:[#allocation2 + $0x3c0] sm:$0xff] %v909
  %924 = vst [vmem:[#allocation2 + $0x3c8] sm:$0xff] %v910
  %925 = vst [vmem:[#allocation2 + $0x3d0] sm:$0xff] %v911
  %926 = vst [vmem:[#allocation2 + $0x3d8] sm:$0xff] %v912
  %927 = vst [vmem:[#allocation2 + $0x3e0] sm:$0xff] %v913
  %928 = vst.msk [vmem:[#allocation2 + $0x3e8] sm:$0xff] %vm30, %v914
  %v929 = vld [vmem:[%s0] sm:$0xff]
  %v930 = vld [vmem:[%s0 + $0x8] sm:$0xff]
  %v931 = vld [vmem:[%s0 + $0x10] sm:$0xff]
  %v932 = vld [vmem:[%s0 + $0x18] sm:$0xff]
  %v933 = vld [vmem:[%s0 + $0x20] sm:$0xff]
  %v934 = vld [vmem:[%s0 + $0x28] sm:$0xff]
  %v935 = vld [vmem:[%s0 + $0x30] sm:$0xff]
  %v936 = vld [vmem:[%s0 + $0x38] sm:$0xff]
  %945 = vrot.lane.b32.xlu0 %v929, 29
  %v946 = vpop.permute.xlu0 %945
  %947 = vrot.lane.b32.xlu0 %v930, 29
  %v948 = vpop.permute.xlu0 %947
  %949 = vrot.lane.b32.xlu0 %v931, 29
  %v950 = vpop.permute.xlu0 %949
  %951 = vrot.lane.b32.xlu0 %v932, 29
  %v952 = vpop.permute.xlu0 %951
  %953 = vrot.lane.b32.xlu0 %v933, 29
  %v954 = vpop.permute.xlu0 %953
  %955 = vrot.lane.b32.xlu0 %v934, 29
  %v956 = vpop.permute.xlu0 %955
  %957 = vrot.lane.b32.xlu0 %v935, 29
  %v958 = vpop.permute.xlu0 %957
  %959 = vrot.lane.b32.xlu0 %v936, 29
  %v960 = vpop.permute.xlu0 %959
  %vm961 = vcmask 236544
  %v962 = vsel %vm961, %v946, %v948
  %v963 = vsel %vm961, %v948, %v950
  %v964 = vsel %vm961, %v950, %v952
  %v965 = vsel %vm961, %v952, %v954
  %v966 = vsel %vm961, %v954, %v956
  %v967 = vsel %vm961, %v956, %v958
  %v968 = vsel %vm961, %v958, %v960
  %976 = vst [vmem:[#allocation2 + $0x3f0] sm:$0xff] %v962
  %977 = vst [vmem:[#allocation2 + $0x3f8] sm:$0xff] %v963
  %978 = vst [vmem:[#allocation2 + $0x400] sm:$0xff] %v964
  %979 = vst [vmem:[#allocation2 + $0x408] sm:$0xff] %v965
  %980 = vst [vmem:[#allocation2 + $0x410] sm:$0xff] %v966
  %981 = vst [vmem:[#allocation2 + $0x418] sm:$0xff] %v967
  %982 = vst.msk [vmem:[#allocation2 + $0x420] sm:$0xff] %vm30, %v968
  %v983 = vld [vmem:[%s0] sm:$0xff]
  %v984 = vld [vmem:[%s0 + $0x8] sm:$0xff]
  %v985 = vld [vmem:[%s0 + $0x10] sm:$0xff]
  %v986 = vld [vmem:[%s0 + $0x18] sm:$0xff]
  %v987 = vld [vmem:[%s0 + $0x20] sm:$0xff]
  %v988 = vld [vmem:[%s0 + $0x28] sm:$0xff]
  %v989 = vld [vmem:[%s0 + $0x30] sm:$0xff]
  %v990 = vld [vmem:[%s0 + $0x38] sm:$0xff]
  %999 = vrot.lane.b32.xlu0 %v983, 28
  %v1000 = vpop.permute.xlu0 %999
  %1001 = vrot.lane.b32.xlu0 %v984, 28
  %v1002 = vpop.permute.xlu0 %1001
  %1003 = vrot.lane.b32.xlu0 %v985, 28
  %v1004 = vpop.permute.xlu0 %1003
  %1005 = vrot.lane.b32.xlu0 %v986, 28
  %v1006 = vpop.permute.xlu0 %1005
  %1007 = vrot.lane.b32.xlu0 %v987, 28
  %v1008 = vpop.permute.xlu0 %1007
  %1009 = vrot.lane.b32.xlu0 %v988, 28
  %v1010 = vpop.permute.xlu0 %1009
  %1011 = vrot.lane.b32.xlu0 %v989, 28
  %v1012 = vpop.permute.xlu0 %1011
  %1013 = vrot.lane.b32.xlu0 %v990, 28
  %v1014 = vpop.permute.xlu0 %1013
  %vm1015 = vcmask 228352
  %v1016 = vsel %vm1015, %v1000, %v1002
  %v1017 = vsel %vm1015, %v1002, %v1004
  %v1018 = vsel %vm1015, %v1004, %v1006
  %v1019 = vsel %vm1015, %v1006, %v1008
  %v1020 = vsel %vm1015, %v1008, %v1010
  %v1021 = vsel %vm1015, %v1010, %v1012
  %v1022 = vsel %vm1015, %v1012, %v1014
  %1030 = vst [vmem:[#allocation2 + $0x428] sm:$0xff] %v1016
  %1031 = vst [vmem:[#allocation2 + $0x430] sm:$0xff] %v1017
  %1032 = vst [vmem:[#allocation2 + $0x438] sm:$0xff] %v1018
  %1033 = vst [vmem:[#allocation2 + $0x440] sm:$0xff] %v1019
  %1034 = vst [vmem:[#allocation2 + $0x448] sm:$0xff] %v1020
  %1035 = vst [vmem:[#allocation2 + $0x450] sm:$0xff] %v1021
  %1036 = vst.msk [vmem:[#allocation2 + $0x458] sm:$0xff] %vm30, %v1022
  %v1037 = vld [vmem:[%s0 + $0x8] sm:$0xff]
  %v1038 = vld [vmem:[%s0 + $0x10] sm:$0xff]
  %v1039 = vld [vmem:[%s0 + $0x18] sm:$0xff]
  %v1040 = vld [vmem:[%s0 + $0x20] sm:$0xff]
  %v1041 = vld [vmem:[%s0 + $0x28] sm:$0xff]
  %v1042 = vld [vmem:[%s0 + $0x30] sm:$0xff]
  %v1043 = vld [vmem:[%s0 + $0x38] sm:$0xff]
  %1044 = vst [vmem:[#allocation2 + $0x460] sm:$0xff] %v1037
  %1045 = vst [vmem:[#allocation2 + $0x468] sm:$0xff] %v1038
  %1046 = vst [vmem:[#allocation2 + $0x470] sm:$0xff] %v1039
  %1047 = vst [vmem:[#allocation2 + $0x478] sm:$0xff] %v1040
  %1048 = vst [vmem:[#allocation2 + $0x480] sm:$0xff] %v1041
  %1049 = vst [vmem:[#allocation2 + $0x488] sm:$0xff] %v1042
  %1050 = vst.msk [vmem:[#allocation2 + $0x490] sm:$0xff] %vm30, %v1043
  %v1051 = vld [vmem:[%s0 + $0x8] sm:$0xff]
  %v1052 = vld [vmem:[%s0 + $0x10] sm:$0xff]
  %v1053 = vld [vmem:[%s0 + $0x18] sm:$0xff]
  %v1054 = vld [vmem:[%s0 + $0x20] sm:$0xff]
  %v1055 = vld [vmem:[%s0 + $0x28] sm:$0xff]
  %v1056 = vld [vmem:[%s0 + $0x30] sm:$0xff]
  %v1057 = vld [vmem:[%s0 + $0x38] sm:$0xff]
  %1065 = vrot.lane.b32.xlu0 %v1051, 127
  %v1066 = vpop.permute.xlu0 %1065
  %1067 = vrot.lane.b32.xlu0 %v1052, 127
  %v1068 = vpop.permute.xlu0 %1067
  %1069 = vrot.lane.b32.xlu0 %v1053, 127
  %v1070 = vpop.permute.xlu0 %1069
  %1071 = vrot.lane.b32.xlu0 %v1054, 127
  %v1072 = vpop.permute.xlu0 %1071
  %1073 = vrot.lane.b32.xlu0 %v1055, 127
  %v1074 = vpop.permute.xlu0 %1073
  %1075 = vrot.lane.b32.xlu0 %v1056, 127
  %v1076 = vpop.permute.xlu0 %1075
  %1077 = vrot.lane.b32.xlu0 %v1057, 127
  %v1078 = vpop.permute.xlu0 %1077
  %v1079 = vsel %vm60, %v1066, %v1068
  %v1080 = vsel %vm60, %v1068, %v1070
  %v1081 = vsel %vm60, %v1070, %v1072
  %v1082 = vsel %vm60, %v1072, %v1074
  %v1083 = vsel %vm60, %v1074, %v1076
  %v1084 = vsel %vm60, %v1076, %v1078
  %1092 = vst [vmem:[#allocation2 + $0x498] sm:$0xff] %v1079
  %1093 = vst [vmem:[#allocation2 + $0x4a0] sm:$0xff] %v1080
  %1094 = vst [vmem:[#allocation2 + $0x4a8] sm:$0xff] %v1081
  %1095 = vst [vmem:[#allocation2 + $0x4b0] sm:$0xff] %v1082
  %1096 = vst [vmem:[#allocation2 + $0x4b8] sm:$0xff] %v1083
  %1097 = vst [vmem:[#allocation2 + $0x4c0] sm:$0xff] %v1084
  %1098 = vst.msk [vmem:[#allocation2 + $0x4c8] sm:$0xff] %vm30, %v1078
  %v1099 = vld [vmem:[%s0 + $0x8] sm:$0xff]
  %v1100 = vld [vmem:[%s0 + $0x10] sm:$0xff]
  %v1101 = vld [vmem:[%s0 + $0x18] sm:$0xff]
  %v1102 = vld [vmem:[%s0 + $0x20] sm:$0xff]
  %v1103 = vld [vmem:[%s0 + $0x28] sm:$0xff]
  %v1104 = vld [vmem:[%s0 + $0x30] sm:$0xff]
  %v1105 = vld [vmem:[%s0 + $0x38] sm:$0xff]
  %1113 = vrot.lane.b32.xlu0 %v1099, 126
  %v1114 = vpop.permute.xlu0 %1113
  %1115 = vrot.lane.b32.xlu0 %v1100, 126
  %v1116 = vpop.permute.xlu0 %1115
  %1117 = vrot.lane.b32.xlu0 %v1101, 126
  %v1118 = vpop.permute.xlu0 %1117
  %1119 = vrot.lane.b32.xlu0 %v1102, 126
  %v1120 = vpop.permute.xlu0 %1119
  %1121 = vrot.lane.b32.xlu0 %v1103, 126
  %v1122 = vpop.permute.xlu0 %1121
  %1123 = vrot.lane.b32.xlu0 %v1104, 126
  %v1124 = vpop.permute.xlu0 %1123
  %1125 = vrot.lane.b32.xlu0 %v1105, 126
  %v1126 = vpop.permute.xlu0 %1125
  %v1127 = vsel %vm109, %v1114, %v1116
  %v1128 = vsel %vm109, %v1116, %v1118
  %v1129 = vsel %vm109, %v1118, %v1120
  %v1130 = vsel %vm109, %v1120, %v1122
  %v1131 = vsel %vm109, %v1122, %v1124
  %v1132 = vsel %vm109, %v1124, %v1126
  %1140 = vst [vmem:[#allocation2 + $0x4d0] sm:$0xff] %v1127
  %1141 = vst [vmem:[#allocation2 + $0x4d8] sm:$0xff] %v1128
  %1142 = vst [vmem:[#allocation2 + $0x4e0] sm:$0xff] %v1129
  %1143 = vst [vmem:[#allocation2 + $0x4e8] sm:$0xff] %v1130
  %1144 = vst [vmem:[#allocation2 + $0x4f0] sm:$0xff] %v1131
  %1145 = vst [vmem:[#allocation2 + $0x4f8] sm:$0xff] %v1132
  %1146 = vst.msk [vmem:[#allocation2 + $0x500] sm:$0xff] %vm30, %v1126
  %v1147 = vld [vmem:[%s0 + $0x8] sm:$0xff]
  %v1148 = vld [vmem:[%s0 + $0x10] sm:$0xff]
  %v1149 = vld [vmem:[%s0 + $0x18] sm:$0xff]
  %v1150 = vld [vmem:[%s0 + $0x20] sm:$0xff]
  %v1151 = vld [vmem:[%s0 + $0x28] sm:$0xff]
  %v1152 = vld [vmem:[%s0 + $0x30] sm:$0xff]
  %v1153 = vld [vmem:[%s0 + $0x38] sm:$0xff]
  %1161 = vrot.lane.b32.xlu0 %v1147, 125
  %v1162 = vpop.permute.xlu0 %1161
  %1163 = vrot.lane.b32.xlu0 %v1148, 125
  %v1164 = vpop.permute.xlu0 %1163
  %1165 = vrot.lane.b32.xlu0 %v1149, 125
  %v1166 = vpop.permute.xlu0 %1165
  %1167 = vrot.lane.b32.xlu0 %v1150, 125
  %v1168 = vpop.permute.xlu0 %1167
  %1169 = vrot.lane.b32.xlu0 %v1151, 125
  %v1170 = vpop.permute.xlu0 %1169
  %1171 = vrot.lane.b32.xlu0 %v1152, 125
  %v1172 = vpop.permute.xlu0 %1171
  %1173 = vrot.lane.b32.xlu0 %v1153, 125
  %v1174 = vpop.permute.xlu0 %1173
  %v1175 = vsel %vm158, %v1162, %v1164
  %v1176 = vsel %vm158, %v1164, %v1166
  %v1177 = vsel %vm158, %v1166, %v1168
  %v1178 = vsel %vm158, %v1168, %v1170
  %v1179 = vsel %vm158, %v1170, %v1172
  %v1180 = vsel %vm158, %v1172, %v1174
  %1188 = vst [vmem:[#allocation2 + $0x508] sm:$0xff] %v1175
  %1189 = vst [vmem:[#allocation2 + $0x510] sm:$0xff] %v1176
  %1190 = vst [vmem:[#allocation2 + $0x518] sm:$0xff] %v1177
  %1191 = vst [vmem:[#allocation2 + $0x520] sm:$0xff] %v1178
  %1192 = vst [vmem:[#allocation2 + $0x528] sm:$0xff] %v1179
  %1193 = vst [vmem:[#allocation2 + $0x530] sm:$0xff] %v1180
  %1194 = vst.msk [vmem:[#allocation2 + $0x538] sm:$0xff] %vm30, %v1174
  %v1195 = vld [vmem:[%s0 + $0x8] sm:$0xff]
  %v1196 = vld [vmem:[%s0 + $0x10] sm:$0xff]
  %v1197 = vld [vmem:[%s0 + $0x18] sm:$0xff]
  %v1198 = vld [vmem:[%s0 + $0x20] sm:$0xff]
  %v1199 = vld [vmem:[%s0 + $0x28] sm:$0xff]
  %v1200 = vld [vmem:[%s0 + $0x30] sm:$0xff]
  %v1201 = vld [vmem:[%s0 + $0x38] sm:$0xff]
  %1209 = vrot.lane.b32.xlu0 %v1195, 124
  %v1210 = vpop.permute.xlu0 %1209
  %1211 = vrot.lane.b32.xlu0 %v1196, 124
  %v1212 = vpop.permute.xlu0 %1211
  %1213 = vrot.lane.b32.xlu0 %v1197, 124
  %v1214 = vpop.permute.xlu0 %1213
  %1215 = vrot.lane.b32.xlu0 %v1198, 124
  %v1216 = vpop.permute.xlu0 %1215
  %1217 = vrot.lane.b32.xlu0 %v1199, 124
  %v1218 = vpop.permute.xlu0 %1217
  %1219 = vrot.lane.b32.xlu0 %v1200, 124
  %v1220 = vpop.permute.xlu0 %1219
  %1221 = vrot.lane.b32.xlu0 %v1201, 124
  %v1222 = vpop.permute.xlu0 %1221
  %v1223 = vsel %vm30, %v1210, %v1212
  %v1224 = vsel %vm30, %v1212, %v1214
  %v1225 = vsel %vm30, %v1214, %v1216
  %v1226 = vsel %vm30, %v1216, %v1218
  %v1227 = vsel %vm30, %v1218, %v1220
  %v1228 = vsel %vm30, %v1220, %v1222
  %1236 = vst [vmem:[#allocation2 + $0x540] sm:$0xff] %v1223
  %1237 = vst [vmem:[#allocation2 + $0x548] sm:$0xff] %v1224
  %1238 = vst [vmem:[#allocation2 + $0x550] sm:$0xff] %v1225
  %1239 = vst [vmem:[#allocation2 + $0x558] sm:$0xff] %v1226
  %1240 = vst [vmem:[#allocation2 + $0x560] sm:$0xff] %v1227
  %1241 = vst [vmem:[#allocation2 + $0x568] sm:$0xff] %v1228
  %1242 = vst.msk [vmem:[#allocation2 + $0x570] sm:$0xff] %vm30, %v1222
  %v1243 = vld [vmem:[%s1] sm:$0xff]
  %v1244 = vld [vmem:[%s1 + $0x8] sm:$0xff]
  %v1245 = vld [vmem:[#allocation2] sm:$0xff]
  %v1246 = vld [vmem:[#allocation2 + $0x8] sm:$0xff]
  %v1247 = vld [vmem:[#allocation2 + $0x10] sm:$0xff]
  %v1248 = vld [vmem:[#allocation2 + $0x18] sm:$0xff]
  %v1249 = vld [vmem:[#allocation2 + $0x20] sm:$0xff]
  %v1250 = vld [vmem:[#allocation2 + $0x28] sm:$0xff]
  %v1251 = vld [vmem:[#allocation2 + $0x30] sm:$0xff]
  %v1252 = vld [vmem:[#allocation2 + $0x38] sm:$0xff]
  %v1253 = vld [vmem:[#allocation2 + $0x40] sm:$0xff]
  %v1254 = vld [vmem:[#allocation2 + $0x48] sm:$0xff]
  %v1255 = vld [vmem:[#allocation2 + $0x50] sm:$0xff]
  %v1256 = vld [vmem:[#allocation2 + $0x58] sm:$0xff]
  %v1257 = vld [vmem:[#allocation2 + $0x60] sm:$0xff]
  %v1258 = vld [vmem:[#allocation2 + $0x68] sm:$0xff]
  %v1259 = vld [vmem:[#allocation2 + $0x70] sm:$0xff]
  %v1260 = vld [vmem:[#allocation2 + $0x78] sm:$0xff]
  %v1261 = vld [vmem:[#allocation2 + $0x80] sm:$0xff]
  %v1262 = vld [vmem:[#allocation2 + $0x88] sm:$0xff]
  %v1263 = vld [vmem:[#allocation2 + $0x90] sm:$0xff]
  %v1264 = vld [vmem:[#allocation2 + $0x98] sm:$0xff]
  %v1265 = vld [vmem:[#allocation2 + $0xa0] sm:$0xff]
  %v1266 = vld [vmem:[#allocation2 + $0xa8] sm:$0xff]
  %v1267 = vld [vmem:[#allocation2 + $0xb0] sm:$0xff]
  %v1268 = vld [vmem:[#allocation2 + $0xb8] sm:$0xff]
  %v1269 = vld [vmem:[#allocation2 + $0xc0] sm:$0xff]
  %v1270 = vld [vmem:[#allocation2 + $0xc8] sm:$0xff]
  %v1271 = vld [vmem:[#allocation2 + $0xd0] sm:$0xff]
  %v1272 = vld [vmem:[#allocation2 + $0xd8] sm:$0xff]
  %v1273 = vld [vmem:[#allocation2 + $0xe0] sm:$0xff]
  %v1274 = vld [vmem:[#allocation2 + $0xe8] sm:$0xff]
  %v1275 = vld [vmem:[#allocation2 + $0xf0] sm:$0xff]
  %v1276 = vld [vmem:[#allocation2 + $0xf8] sm:$0xff]
  %v1277 = vld [vmem:[#allocation2 + $0x100] sm:$0xff]
  %v1278 = vld [vmem:[#allocation2 + $0x108] sm:$0xff]
  %v1279 = vld [vmem:[#allocation2 + $0x110] sm:$0xff]
  %v1280 = vld [vmem:[#allocation2 + $0x118] sm:$0xff]
  %v1281 = vld [vmem:[#allocation2 + $0x120] sm:$0xff]
  %v1282 = vld [vmem:[#allocation2 + $0x128] sm:$0xff]
  %v1283 = vld [vmem:[#allocation2 + $0x130] sm:$0xff]
  %v1284 = vld [vmem:[#allocation2 + $0x138] sm:$0xff]
  %v1285 = vld [vmem:[#allocation2 + $0x140] sm:$0xff]
  %v1286 = vld [vmem:[#allocation2 + $0x148] sm:$0xff]
  %v1287 = vld [vmem:[#allocation2 + $0x150] sm:$0xff]
  %v1288 = vld [vmem:[#allocation2 + $0x158] sm:$0xff]
  %v1289 = vld [vmem:[#allocation2 + $0x160] sm:$0xff]
  %v1290 = vld [vmem:[#allocation2 + $0x168] sm:$0xff]
  %v1291 = vld [vmem:[#allocation2 + $0x170] sm:$0xff]
  %v1292 = vld [vmem:[#allocation2 + $0x178] sm:$0xff]
  %v1293 = vld [vmem:[#allocation2 + $0x180] sm:$0xff]
  %v1294 = vld [vmem:[#allocation2 + $0x188] sm:$0xff]
  %v1295 = vld [vmem:[#allocation2 + $0x190] sm:$0xff]
  %v1296 = vld [vmem:[#allocation2 + $0x198] sm:$0xff]
  %v1297 = vld [vmem:[#allocation2 + $0x1a0] sm:$0xff]
  %v1298 = vld [vmem:[#allocation2 + $0x1a8] sm:$0xff]
  %v1299 = vld [vmem:[#allocation2 + $0x1b0] sm:$0xff]
  %v1300 = vld [vmem:[#allocation2 + $0x1b8] sm:$0xff]
  %v1301 = vld [vmem:[#allocation2 + $0x1c0] sm:$0xff]
  %v1302 = vld [vmem:[#allocation2 + $0x1c8] sm:$0xff]
  %v1303 = vld [vmem:[#allocation2 + $0x1d0] sm:$0xff]
  %v1304 = vld [vmem:[#allocation2 + $0x1d8] sm:$0xff]
  %v1305 = vld [vmem:[#allocation2 + $0x1e0] sm:$0xff]
  %v1306 = vld [vmem:[#allocation2 + $0x1e8] sm:$0xff]
  %v1307 = vld [vmem:[#allocation2 + $0x1f0] sm:$0xff]
  %v1308 = vld [vmem:[#allocation2 + $0x1f8] sm:$0xff]
  %v1309 = vld [vmem:[#allocation2 + $0x200] sm:$0xff]
  %v1310 = vld [vmem:[#allocation2 + $0x208] sm:$0xff]
  %v1311 = vld [vmem:[#allocation2 + $0x210] sm:$0xff]
  %v1312 = vld [vmem:[#allocation2 + $0x218] sm:$0xff]
  %v1313 = vld [vmem:[#allocation2 + $0x220] sm:$0xff]
  %v1314 = vld [vmem:[#allocation2 + $0x228] sm:$0xff]
  %v1315 = vld [vmem:[#allocation2 + $0x230] sm:$0xff]
  %v1316 = vld [vmem:[#allocation2 + $0x238] sm:$0xff]
  %v1317 = vld [vmem:[#allocation2 + $0x240] sm:$0xff]
  %v1318 = vld [vmem:[#allocation2 + $0x248] sm:$0xff]
  %v1319 = vld [vmem:[#allocation2 + $0x250] sm:$0xff]
  %v1320 = vld [vmem:[#allocation2 + $0x258] sm:$0xff]
  %v1321 = vld [vmem:[#allocation2 + $0x260] sm:$0xff]
  %v1322 = vld [vmem:[#allocation2 + $0x268] sm:$0xff]
  %v1323 = vld [vmem:[#allocation2 + $0x270] sm:$0xff]
  %v1324 = vld [vmem:[#allocation2 + $0x278] sm:$0xff]
  %v1325 = vld [vmem:[#allocation2 + $0x280] sm:$0xff]
  %v1326 = vld [vmem:[#allocation2 + $0x288] sm:$0xff]
  %v1327 = vld [vmem:[#allocation2 + $0x290] sm:$0xff]
  %v1328 = vld [vmem:[#allocation2 + $0x298] sm:$0xff]
  %v1329 = vld [vmem:[#allocation2 + $0x2a0] sm:$0xff]
  %v1330 = vld [vmem:[#allocation2 + $0x2a8] sm:$0xff]
  %v1331 = vld [vmem:[#allocation2 + $0x2b0] sm:$0xff]
  %v1332 = vld [vmem:[#allocation2 + $0x2b8] sm:$0xff]
  %v1333 = vld [vmem:[#allocation2 + $0x2c0] sm:$0xff]
  %v1334 = vld [vmem:[#allocation2 + $0x2c8] sm:$0xff]
  %v1335 = vld [vmem:[#allocation2 + $0x2d0] sm:$0xff]
  %v1336 = vld [vmem:[#allocation2 + $0x2d8] sm:$0xff]
  %v1337 = vld [vmem:[#allocation2 + $0x2e0] sm:$0xff]
  %v1338 = vld [vmem:[#allocation2 + $0x2e8] sm:$0xff]
  %v1339 = vld [vmem:[#allocation2 + $0x2f0] sm:$0xff]
  %v1340 = vld [vmem:[#allocation2 + $0x2f8] sm:$0xff]
  %v1341 = vld [vmem:[#allocation2 + $0x300] sm:$0xff]
  %v1342 = vld [vmem:[#allocation2 + $0x308] sm:$0xff]
  %v1343 = vld [vmem:[#allocation2 + $0x310] sm:$0xff]
  %v1344 = vld [vmem:[#allocation2 + $0x318] sm:$0xff]
  %v1345 = vld [vmem:[#allocation2 + $0x320] sm:$0xff]
  %v1346 = vld [vmem:[#allocation2 + $0x328] sm:$0xff]
  %v1347 = vld [vmem:[#allocation2 + $0x330] sm:$0xff]
  %v1348 = vld [vmem:[#allocation2 + $0x338] sm:$0xff]
  %v1349 = vld [vmem:[#allocation2 + $0x340] sm:$0xff]
  %v1350 = vld [vmem:[#allocation2 + $0x348] sm:$0xff]
  %v1351 = vld [vmem:[#allocation2 + $0x350] sm:$0xff]
  %v1352 = vld [vmem:[#allocation2 + $0x358] sm:$0xff]
  %v1353 = vld [vmem:[#allocation2 + $0x360] sm:$0xff]
  %v1354 = vld [vmem:[#allocation2 + $0x368] sm:$0xff]
  %v1355 = vld [vmem:[#allocation2 + $0x370] sm:$0xff]
  %v1356 = vld [vmem:[#allocation2 + $0x378] sm:$0xff]
  %v1357 = vld [vmem:[#allocation2 + $0x380] sm:$0xff]
  %v1358 = vld [vmem:[#allocation2 + $0x388] sm:$0xff]
  %v1359 = vld [vmem:[#allocation2 + $0x390] sm:$0xff]
  %v1360 = vld [vmem:[#allocation2 + $0x398] sm:$0xff]
  %v1361 = vld [vmem:[#allocation2 + $0x3a0] sm:$0xff]
  %v1362 = vld [vmem:[#allocation2 + $0x3a8] sm:$0xff]
  %v1363 = vld [vmem:[#allocation2 + $0x3b0] sm:$0xff]
  %v1364 = vld [vmem:[#allocation2 + $0x3b8] sm:$0xff]
  %v1365 = vld [vmem:[#allocation2 + $0x3c0] sm:$0xff]
  %v1366 = vld [vmem:[#allocation2 + $0x3c8] sm:$0xff]
  %v1367 = vld [vmem:[#allocation2 + $0x3d0] sm:$0xff]
  %v1368 = vld [vmem:[#allocation2 + $0x3d8] sm:$0xff]
  %v1369 = vld [vmem:[#allocation2 + $0x3e0] sm:$0xff]
  %v1370 = vld [vmem:[#allocation2 + $0x3e8] sm:$0xff]
  %v1371 = vld [vmem:[#allocation2 + $0x3f0] sm:$0xff]
  %v1372 = vld [vmem:[#allocation2 + $0x3f8] sm:$0xff]
  %v1373 = vld [vmem:[#allocation2 + $0x400] sm:$0xff]
  %v1374 = vld [vmem:[#allocation2 + $0x408] sm:$0xff]
  %v1375 = vld [vmem:[#allocation2 + $0x410] sm:$0xff]
  %v1376 = vld [vmem:[#allocation2 + $0x418] sm:$0xff]
  %v1377 = vld [vmem:[#allocation2 + $0x420] sm:$0xff]
  %v1378 = vld [vmem:[#allocation2 + $0x428] sm:$0xff]
  %v1379 = vld [vmem:[#allocation2 + $0x430] sm:$0xff]
  %v1380 = vld [vmem:[#allocation2 + $0x438] sm:$0xff]
  %v1381 = vld [vmem:[#allocation2 + $0x440] sm:$0xff]
  %v1382 = vld [vmem:[#allocation2 + $0x448] sm:$0xff]
  %v1383 = vld [vmem:[#allocation2 + $0x450] sm:$0xff]
  %v1384 = vld [vmem:[#allocation2 + $0x458] sm:$0xff]
  %v1385 = vld [vmem:[#allocation2 + $0x460] sm:$0xff]
  %v1386 = vld [vmem:[#allocation2 + $0x468] sm:$0xff]
  %v1387 = vld [vmem:[#allocation2 + $0x470] sm:$0xff]
  %v1388 = vld [vmem:[#allocation2 + $0x478] sm:$0xff]
  %v1389 = vld [vmem:[#allocation2 + $0x480] sm:$0xff]
  %v1390 = vld [vmem:[#allocation2 + $0x488] sm:$0xff]
  %v1391 = vld [vmem:[#allocation2 + $0x490] sm:$0xff]
  %v1392 = vld [vmem:[#allocation2 + $0x498] sm:$0xff]
  %v1393 = vld [vmem:[#allocation2 + $0x4a0] sm:$0xff]
  %v1394 = vld [vmem:[#allocation2 + $0x4a8] sm:$0xff]
  %v1395 = vld [vmem:[#allocation2 + $0x4b0] sm:$0xff]
  %v1396 = vld [vmem:[#allocation2 + $0x4b8] sm:$0xff]
  %v1397 = vld [vmem:[#allocation2 + $0x4c0] sm:$0xff]
  %v1398 = vld [vmem:[#allocation2 + $0x4c8] sm:$0xff]
  %v1399 = vld [vmem:[#allocation2 + $0x4d0] sm:$0xff]
  %v1400 = vld [vmem:[#allocation2 + $0x4d8] sm:$0xff]
  %v1401 = vld [vmem:[#allocation2 + $0x4e0] sm:$0xff]
  %v1402 = vld [vmem:[#allocation2 + $0x4e8] sm:$0xff]
  %v1403 = vld [vmem:[#allocation2 + $0x4f0] sm:$0xff]
  %v1404 = vld [vmem:[#allocation2 + $0x4f8] sm:$0xff]
  %v1405 = vld [vmem:[#allocation2 + $0x500] sm:$0xff]
  %v1406 = vld [vmem:[#allocation2 + $0x508] sm:$0xff]
  %v1407 = vld [vmem:[#allocation2 + $0x510] sm:$0xff]
  %v1408 = vld [vmem:[#allocation2 + $0x518] sm:$0xff]
  %v1409 = vld [vmem:[#allocation2 + $0x520] sm:$0xff]
  %v1410 = vld [vmem:[#allocation2 + $0x528] sm:$0xff]
  %v1411 = vld [vmem:[#allocation2 + $0x530] sm:$0xff]
  %v1412 = vld [vmem:[#allocation2 + $0x538] sm:$0xff]
  %v1413 = vld [vmem:[#allocation2 + $0x540] sm:$0xff]
  %v1414 = vld [vmem:[#allocation2 + $0x548] sm:$0xff]
  %v1415 = vld [vmem:[#allocation2 + $0x550] sm:$0xff]
  %v1416 = vld [vmem:[#allocation2 + $0x558] sm:$0xff]
  %v1417 = vld [vmem:[#allocation2 + $0x560] sm:$0xff]
  %v1418 = vld [vmem:[#allocation2 + $0x568] sm:$0xff]
  %v1419 = vld [vmem:[#allocation2 + $0x570] sm:$0xff]
  %v1420 = vld [vmem:[%s2] sm:$0xff]
  %1422 = vset.pattern.permute.xlu0 0
  %1423 = vperm.xlu0 %1422, %v1420
  %v1424 = vpop.permute.xlu0 %1423
  %vm1426 = vcmask 588800
  %v1428 = vsel %vm1426, %v1244, 0
  %1430 = vmatprep.subr.mxu0 %v1246
  %1431 = vmatpush1.msra.mxu0 %v1245
  %1432 = vmatprep.subr.mxu0 %v1253
  %1433 = vmatpush1.msra.mxu0 %v1252
  %1434 = vmatprep.subr.mxu0 %v1260
  %1435 = vmatpush1.msra.mxu0 %v1259
  %1436 = vmatprep.subr.mxu0 %v1267
  %1437 = vmatpush1.msra.mxu0 %v1266
  %1438 = vmatprep.subr.mxu0 %v1274
  %1439 = vmatpush1.msra.mxu0 %v1273
  %1440 = vmatprep.subr.mxu0 %v1281
  %1441 = vmatpush1.msra.mxu0 %v1280
  %1442 = vmatprep.subr.mxu0 %v1288
  %1443 = vmatpush1.msra.mxu0 %v1287
  %1444 = vmatprep.subr.mxu0 %v1295
  %1445 = vmatpush1.msra.mxu0 %v1294
  %1446 = vmatprep.subr.mxu0 %v1302
  %1447 = vmatpush1.msra.mxu0 %v1301
  %1448 = vmatprep.subr.mxu0 %v1309
  %1449 = vmatpush1.msra.mxu0 %v1308
  %1450 = vmatprep.subr.mxu0 %v1316
  %1451 = vmatpush1.msra.mxu0 %v1315
  %1452 = vmatprep.subr.mxu0 %v1323
  %1453 = vmatpush1.msra.mxu0 %v1322
  %1454 = vmatprep.subr.mxu0 %v1330
  %1455 = vmatpush1.msra.mxu0 %v1329
  %1456 = vmatprep.subr.mxu0 %v1337
  %1457 = vmatpush1.msra.mxu0 %v1336
  %1458 = vmatprep.subr.mxu0 %v1344
  %1459 = vmatpush1.msra.mxu0 %v1343
  %1460 = vmatprep.subr.mxu0 %v1351
  %1461 = vmatpush1.msra.mxu0 %v1350
  %1462 = vmatprep.subr.mxu0 %v1358
  %1463 = vmatpush1.msra.mxu0 %v1357
  %1464 = vmatprep.subr.mxu0 %v1365
  %1465 = vmatpush1.msra.mxu0 %v1364
  %1466 = vmatprep.subr.mxu0 %v1372
  %1467 = vmatpush1.msra.mxu0 %v1371
  %1468 = vmatprep.subr.mxu0 %v1379
  %1469 = vmatpush1.msra.mxu0 %v1378
  %1470 = vmatprep.subr.mxu0 %v1386
  %1471 = vmatpush1.msra.mxu0 %v1385
  %1472 = vmatprep.subr.mxu0 %v1393
  %1473 = vmatpush1.msra.mxu0 %v1392
  %1474 = vmatprep.subr.mxu0 %v1400
  %1475 = vmatpush1.msra.mxu0 %v1399
  %1476 = vmatprep.subr.mxu0 %v1407
  %1477 = vmatpush1.msra.mxu0 %v1406
  %1478 = vmatprep.subr.mxu0 %v1414
  %1479 = vmatpush1.msra.mxu0 %v1413
  %1480 = vmatprep.subr.mxu0 0.0
  %1481 = vmatpush1.msra.mxu0 0.0
  %1482 = vmatprep.subr.mxu0 0.0
  %1483 = vmatpush1.msra.mxu0 0.0
  %1484 = vmatprep.subr.mxu0 0.0
  %1485 = vmatpush1.msra.mxu0 0.0
  %1486 = vmatprep.subr.mxu0 0.0
  %1487 = vmatpush1.msra.mxu0 0.0
  %1488 = vmatprep.subr.mxu0 0.0
  %1489 = vmatpush1.msra.mxu0 0.0
  %1490 = vmatprep.subr.mxu0 0.0
  %1491 = vmatpush1.msra.mxu0 0.0
  %1492 = vmatprep.subr.mxu0 0.0
  %1493 = vmatpush1.msra.mxu0 0.0
  %1494 = vmatprep.mubr.f32.mxu0 %v1428
  %1495 = vmatmul.mubr.f32.gmra.mrb[0].mxu0 %v1243
  %v1496 = vpop.f32.mrb[0].mxu0
  %v1497 = vadd.f32 %v1424, %v1496
  %v1498 = vpop.f32.mrb[0].mxu0
  %v1499 = vadd.f32 %v1424, %v1498
  %1500 = vdwg.mxu0
  %1501 = vmatprep.subr.mxu0 %v1248
  %1502 = vmatpush1.msra.mxu0 %v1247
  %1503 = vmatprep.subr.mxu0 %v1255
  %1504 = vmatpush1.msra.mxu0 %v1254
  %1505 = vmatprep.subr.mxu0 %v1262
  %1506 = vmatpush1.msra.mxu0 %v1261
  %1507 = vmatprep.subr.mxu0 %v1269
  %1508 = vmatpush1.msra.mxu0 %v1268
  %1509 = vmatprep.subr.mxu0 %v1276
  %1510 = vmatpush1.msra.mxu0 %v1275
  %1511 = vmatprep.subr.mxu0 %v1283
  %1512 = vmatpush1.msra.mxu0 %v1282
  %1513 = vmatprep.subr.mxu0 %v1290
  %1514 = vmatpush1.msra.mxu0 %v1289
  %1515 = vmatprep.subr.mxu0 %v1297
  %1516 = vmatpush1.msra.mxu0 %v1296
  %1517 = vmatprep.subr.mxu0 %v1304
  %1518 = vmatpush1.msra.mxu0 %v1303
  %1519 = vmatprep.subr.mxu0 %v1311
  %1520 = vmatpush1.msra.mxu0 %v1310
  %1521 = vmatprep.subr.mxu0 %v1318
  %1522 = vmatpush1.msra.mxu0 %v1317
  %1523 = vmatprep.subr.mxu0 %v1325
  %1524 = vmatpush1.msra.mxu0 %v1324
  %1525 = vmatprep.subr.mxu0 %v1332
  %1526 = vmatpush1.msra.mxu0 %v1331
  %1527 = vmatprep.subr.mxu0 %v1339
  %1528 = vmatpush1.msra.mxu0 %v1338
  %1529 = vmatprep.subr.mxu0 %v1346
  %1530 = vmatpush1.msra.mxu0 %v1345
  %1531 = vmatprep.subr.mxu0 %v1353
  %1532 = vmatpush1.msra.mxu0 %v1352
  %1533 = vmatprep.subr.mxu0 %v1360
  %1534 = vmatpush1.msra.mxu0 %v1359
  %1535 = vmatprep.subr.mxu0 %v1367
  %1536 = vmatpush1.msra.mxu0 %v1366
  %1537 = vmatprep.subr.mxu0 %v1374
  %1538 = vmatpush1.msra.mxu0 %v1373
  %1539 = vmatprep.subr.mxu0 %v1381
  %1540 = vmatpush1.msra.mxu0 %v1380
  %1541 = vmatprep.subr.mxu0 %v1388
  %1542 = vmatpush1.msra.mxu0 %v1387
  %1543 = vmatprep.subr.mxu0 %v1395
  %1544 = vmatpush1.msra.mxu0 %v1394
  %1545 = vmatprep.subr.mxu0 %v1402
  %1546 = vmatpush1.msra.mxu0 %v1401
  %1547 = vmatprep.subr.mxu0 %v1409
  %1548 = vmatpush1.msra.mxu0 %v1408
  %1549 = vmatprep.subr.mxu0 %v1416
  %1550 = vmatpush1.msra.mxu0 %v1415
  %1551 = vmatprep.subr.mxu0 0.0
  %1552 = vmatpush1.msra.mxu0 0.0
  %1553 = vmatprep.subr.mxu0 0.0
  %1554 = vmatpush1.msra.mxu0 0.0
  %1555 = vmatprep.subr.mxu0 0.0
  %1556 = vmatpush1.msra.mxu0 0.0
  %1557 = vmatprep.subr.mxu0 0.0
  %1558 = vmatpush1.msra.mxu0 0.0
  %1559 = vmatprep.subr.mxu0 0.0
  %1560 = vmatpush1.msra.mxu0 0.0
  %1561 = vmatprep.subr.mxu0 0.0
  %1562 = vmatpush1.msra.mxu0 0.0
  %1563 = vmatprep.subr.mxu0 0.0
  %1564 = vmatpush1.msra.mxu0 0.0
  %1565 = vmatprep.mubr.f32.mxu0 %v1428
  %1566 = vmatmul.mubr.f32.gmra.mrb[0].mxu0 %v1243
  %v1567 = vpop.f32.mrb[0].mxu0
  %v1568 = vadd.f32 %v1424, %v1567
  %v1569 = vpop.f32.mrb[0].mxu0
  %v1570 = vadd.f32 %v1424, %v1569
  %1571 = vdwg.mxu0
  %1572 = vmatprep.subr.mxu0 %v1250
  %1573 = vmatpush1.msra.mxu0 %v1249
  %1574 = vmatprep.subr.mxu0 %v1257
  %1575 = vmatpush1.msra.mxu0 %v1256
  %1576 = vmatprep.subr.mxu0 %v1264
  %1577 = vmatpush1.msra.mxu0 %v1263
  %1578 = vmatprep.subr.mxu0 %v1271
  %1579 = vmatpush1.msra.mxu0 %v1270
  %1580 = vmatprep.subr.mxu0 %v1278
  %1581 = vmatpush1.msra.mxu0 %v1277
  %1582 = vmatprep.subr.mxu0 %v1285
  %1583 = vmatpush1.msra.mxu0 %v1284
  %1584 = vmatprep.subr.mxu0 %v1292
  %1585 = vmatpush1.msra.mxu0 %v1291
  %1586 = vmatprep.subr.mxu0 %v1299
  %1587 = vmatpush1.msra.mxu0 %v1298
  %1588 = vmatprep.subr.mxu0 %v1306
  %1589 = vmatpush1.msra.mxu0 %v1305
  %1590 = vmatprep.subr.mxu0 %v1313
  %1591 = vmatpush1.msra.mxu0 %v1312
  %1592 = vmatprep.subr.mxu0 %v1320
  %1593 = vmatpush1.msra.mxu0 %v1319
  %1594 = vmatprep.subr.mxu0 %v1327
  %1595 = vmatpush1.msra.mxu0 %v1326
  %1596 = vmatprep.subr.mxu0 %v1334
  %1597 = vmatpush1.msra.mxu0 %v1333
  %1598 = vmatprep.subr.mxu0 %v1341
  %1599 = vmatpush1.msra.mxu0 %v1340
  %1600 = vmatprep.subr.mxu0 %v1348
  %1601 = vmatpush1.msra.mxu0 %v1347
  %1602 = vmatprep.subr.mxu0 %v1355
  %1603 = vmatpush1.msra.mxu0 %v1354
  %1604 = vmatprep.subr.mxu0 %v1362
  %1605 = vmatpush1.msra.mxu0 %v1361
  %1606 = vmatprep.subr.mxu0 %v1369
  %1607 = vmatpush1.msra.mxu0 %v1368
  %1608 = vmatprep.subr.mxu0 %v1376
  %1609 = vmatpush1.msra.mxu0 %v1375
  %1610 = vmatprep.subr.mxu0 %v1383
  %1611 = vmatpush1.msra.mxu0 %v1382
  %1612 = vmatprep.subr.mxu0 %v1390
  %1613 = vmatpush1.msra.mxu0 %v1389
  %1614 = vmatprep.subr.mxu0 %v1397
  %1615 = vmatpush1.msra.mxu0 %v1396
  %1616 = vmatprep.subr.mxu0 %v1404
  %1617 = vmatpush1.msra.mxu0 %v1403
  %1618 = vmatprep.subr.mxu0 %v1411
  %1619 = vmatpush1.msra.mxu0 %v1410
  %1620 = vmatprep.subr.mxu0 %v1418
  %1621 = vmatpush1.msra.mxu0 %v1417
  %1622 = vmatprep.subr.mxu0 0.0
  %1623 = vmatpush1.msra.mxu0 0.0
  %1624 = vmatprep.subr.mxu0 0.0
  %1625 = vmatpush1.msra.mxu0 0.0
  %1626 = vmatprep.subr.mxu0 0.0
  %1627 = vmatpush1.msra.mxu0 0.0
  %1628 = vmatprep.subr.mxu0 0.0
  %1629 = vmatpush1.msra.mxu0 0.0
  %1630 = vmatprep.subr.mxu0 0.0
  %1631 = vmatpush1.msra.mxu0 0.0
  %1632 = vmatprep.subr.mxu0 0.0
  %1633 = vmatpush1.msra.mxu0 0.0
  %1634 = vmatprep.subr.mxu0 0.0
  %1635 = vmatpush1.msra.mxu0 0.0
  %1636 = vmatprep.mubr.f32.mxu0 %v1428
  %1637 = vmatmul.mubr.f32.gmra.mrb[0].mxu0 %v1243
  %v1638 = vpop.f32.mrb[0].mxu0
  %v1639 = vadd.f32 %v1424, %v1638
  %v1640 = vpop.f32.mrb[0].mxu0
  %v1641 = vadd.f32 %v1424, %v1640
  %1642 = vdwg.mxu0
  %1643 = vmatprep.subr.mxu0 0.0
  %1644 = vmatpush1.msra.mxu0 %v1251
  %1645 = vmatprep.subr.mxu0 0.0
  %1646 = vmatpush1.msra.mxu0 %v1258
  %1647 = vmatprep.subr.mxu0 0.0
  %1648 = vmatpush1.msra.mxu0 %v1265
  %1649 = vmatprep.subr.mxu0 0.0
  %1650 = vmatpush1.msra.mxu0 %v1272
  %1651 = vmatprep.subr.mxu0 0.0
  %1652 = vmatpush1.msra.mxu0 %v1279
  %1653 = vmatprep.subr.mxu0 0.0
  %1654 = vmatpush1.msra.mxu0 %v1286
  %1655 = vmatprep.subr.mxu0 0.0
  %1656 = vmatpush1.msra.mxu0 %v1293
  %1657 = vmatprep.subr.mxu0 0.0
  %1658 = vmatpush1.msra.mxu0 %v1300
  %1659 = vmatprep.subr.mxu0 0.0
  %1660 = vmatpush1.msra.mxu0 %v1307
  %1661 = vmatprep.subr.mxu0 0.0
  %1662 = vmatpush1.msra.mxu0 %v1314
  %1663 = vmatprep.subr.mxu0 0.0
  %1664 = vmatpush1.msra.mxu0 %v1321
  %1665 = vmatprep.subr.mxu0 0.0
  %1666 = vmatpush1.msra.mxu0 %v1328
  %1667 = vmatprep.subr.mxu0 0.0
  %1668 = vmatpush1.msra.mxu0 %v1335
  %1669 = vmatprep.subr.mxu0 0.0
  %1670 = vmatpush1.msra.mxu0 %v1342
  %1671 = vmatprep.subr.mxu0 0.0
  %1672 = vmatpush1.msra.mxu0 %v1349
  %1673 = vmatprep.subr.mxu0 0.0
  %1674 = vmatpush1.msra.mxu0 %v1356
  %1675 = vmatprep.subr.mxu0 0.0
  %1676 = vmatpush1.msra.mxu0 %v1363
  %1677 = vmatprep.subr.mxu0 0.0
  %1678 = vmatpush1.msra.mxu0 %v1370
  %1679 = vmatprep.subr.mxu0 0.0
  %1680 = vmatpush1.msra.mxu0 %v1377
  %1681 = vmatprep.subr.mxu0 0.0
  %1682 = vmatpush1.msra.mxu0 %v1384
  %1683 = vmatprep.subr.mxu0 0.0
  %1684 = vmatpush1.msra.mxu0 %v1391
  %1685 = vmatprep.subr.mxu0 0.0
  %1686 = vmatpush1.msra.mxu0 %v1398
  %1687 = vmatprep.subr.mxu0 0.0
  %1688 = vmatpush1.msra.mxu0 %v1405
  %1689 = vmatprep.subr.mxu0 0.0
  %1690 = vmatpush1.msra.mxu0 %v1412
  %1691 = vmatprep.subr.mxu0 0.0
  %1692 = vmatpush1.msra.mxu0 %v1419
  %1693 = vmatprep.subr.mxu0 0.0
  %1694 = vmatpush1.msra.mxu0 0.0
  %1695 = vmatprep.subr.mxu0 0.0
  %1696 = vmatpush1.msra.mxu0 0.0
  %1697 = vmatprep.subr.mxu0 0.0
  %1698 = vmatpush1.msra.mxu0 0.0
  %1699 = vmatprep.subr.mxu0 0.0
  %1700 = vmatpush1.msra.mxu0 0.0
  %1701 = vmatprep.subr.mxu0 0.0
  %1702 = vmatpush1.msra.mxu0 0.0
  %1703 = vmatprep.subr.mxu0 0.0
  %1704 = vmatpush1.msra.mxu0 0.0
  %1705 = vmatprep.subr.mxu0 0.0
  %1706 = vmatpush1.msra.mxu0 0.0
  %1707 = vmatprep.mubr.f32.mxu0 %v1428
  %1708 = vmatmul.mubr.f32.gmra.mrb[0].mxu0 %v1243
  %v1709 = vpop.f32.mrb[0].mxu0
  %v1710 = vadd.f32 %v1424, %v1709
  %v1711 = vpop.f32.mrb[0].mxu0
  %1712 = vdwg.mxu0
  %v1713 = vmax.f32 %v1497, 0.0
  %v1714 = vmax.f32 %v1499, 0.0
  %v1715 = vmax.f32 %v1568, 0.0
  %v1716 = vmax.f32 %v1570, 0.0
  %v1717 = vmax.f32 %v1639, 0.0
  %v1718 = vmax.f32 %v1641, 0.0
  %v1719 = vmax.f32 %v1710, 0.0
  %1727 = vrot.lane.b32.xlu0 %v1713, 127
  %v1728 = vpop.permute.xlu0 %1727
  %1729 = vrot.lane.b32.xlu0 %v1714, 127
  %v1730 = vpop.permute.xlu0 %1729
  %1731 = vrot.lane.b32.xlu0 %v1715, 127
  %v1732 = vpop.permute.xlu0 %1731
  %1733 = vrot.lane.b32.xlu0 %v1716, 127
  %v1734 = vpop.permute.xlu0 %1733
  %1735 = vrot.lane.b32.xlu0 %v1717, 127
  %v1736 = vpop.permute.xlu0 %1735
  %1737 = vrot.lane.b32.xlu0 %v1718, 127
  %v1738 = vpop.permute.xlu0 %1737
  %1739 = vrot.lane.b32.xlu0 %v1719, 127
  %v1740 = vpop.permute.xlu0 %1739
  %v1741 = vsel %vm60, %v1728, %v1730
  %v1742 = vsel %vm60, %v1730, %v1732
  %v1743 = vsel %vm60, %v1732, %v1734
  %v1744 = vsel %vm60, %v1734, %v1736
  %v1745 = vsel %vm60, %v1736, %v1738
  %v1746 = vsel %vm60, %v1738, %v1740
  %v1754 = vmax.f32 %v1713, %v1741
  %v1755 = vmax.f32 %v1714, %v1742
  %v1756 = vmax.f32 %v1715, %v1743
  %v1757 = vmax.f32 %v1716, %v1744
  %v1758 = vmax.f32 %v1717, %v1745
  %v1759 = vmax.f32 %v1718, %v1746
  %v1760 = vmax.f32 %v1719, %v1740
  %1768 = vrot.lane.b32.xlu0 %v1754, 96
  %v1769 = vpop.permute.xlu0 %1768
  %1770 = vrot.lane.b32.xlu0 %v1755, 96
  %v1771 = vpop.permute.xlu0 %1770
  %1772 = vrot.lane.b32.xlu0 %v1756, 96
  %v1773 = vpop.permute.xlu0 %1772
  %1774 = vrot.lane.b32.xlu0 %v1757, 96
  %v1775 = vpop.permute.xlu0 %1774
  %1776 = vrot.lane.b32.xlu0 %v1758, 96
  %v1777 = vpop.permute.xlu0 %1776
  %1778 = vrot.lane.b32.xlu0 %v1759, 96
  %v1779 = vpop.permute.xlu0 %1778
  %1780 = vrot.lane.b32.xlu0 %v1760, 96
  %v1781 = vpop.permute.xlu0 %1780
  %v1782 = vsel %vm259, %v1769, %v1771
  %v1783 = vsel %vm259, %v1771, %v1773
  %v1784 = vsel %vm259, %v1773, %v1775
  %v1785 = vsel %vm259, %v1775, %v1777
  %v1786 = vsel %vm259, %v1777, %v1779
  %v1787 = vsel %vm259, %v1779, %v1781
  %v1795 = vmax.f32 %v1754, %v1782
  %v1796 = vmax.f32 %v1755, %v1783
  %v1797 = vmax.f32 %v1756, %v1784
  %v1798 = vmax.f32 %v1757, %v1785
  %v1799 = vmax.f32 %v1758, %v1786
  %v1800 = vmax.f32 %v1759, %v1787
  %v1801 = vmax.f32 %v1760, %v1781
  %v1802 = vld [vmem:[%s3] sm:$0xff]
  %v1803 = vld [vmem:[%s3 + $0x8] sm:$0xff]
  %v1804 = vld [vmem:[%s3 + $0x10] sm:$0xff]
  %v1805 = vld [vmem:[%s3 + $0x18] sm:$0xff]
  %v1806 = vld [vmem:[%s3 + $0x20] sm:$0xff]
  %v1807 = vld [vmem:[%s3 + $0x28] sm:$0xff]
  %v1808 = vld [vmem:[%s3 + $0x30] sm:$0xff]
  %v1809 = vld [vmem:[%s3 + $0x38] sm:$0xff]
  %v1810 = vld [vmem:[%s3 + $0x40] sm:$0xff]
  %v1811 = vld [vmem:[%s3 + $0x48] sm:$0xff]
  %v1812 = vld [vmem:[%s3 + $0x50] sm:$0xff]
  %v1813 = vld [vmem:[%s3 + $0x58] sm:$0xff]
  %v1814 = vld [vmem:[%s3 + $0x60] sm:$0xff]
  %v1815 = vld [vmem:[%s3 + $0x68] sm:$0xff]
  %v1816 = vld [vmem:[%s3 + $0x70] sm:$0xff]
  %v1817 = vld [vmem:[%s3 + $0x78] sm:$0xff]
  %v1818 = vld [vmem:[%s3 + $0x80] sm:$0xff]
  %v1819 = vld [vmem:[%s3 + $0x88] sm:$0xff]
  %v1820 = vld [vmem:[%s3 + $0x90] sm:$0xff]
  %v1821 = vld [vmem:[%s3 + $0x98] sm:$0xff]
  %v1822 = vld [vmem:[%s3 + $0xa0] sm:$0xff]
  %v1823 = vld [vmem:[%s3 + $0xa8] sm:$0xff]
  %v1824 = vld [vmem:[%s3 + $0xb0] sm:$0xff]
  %v1825 = vld [vmem:[%s3 + $0xb8] sm:$0xff]
  %v1826 = vld [vmem:[%s3 + $0xc0] sm:$0xff]
  %v1827 = vld [vmem:[%s3 + $0xc8] sm:$0xff]
  %v1828 = vld [vmem:[%s3 + $0xd0] sm:$0xff]
  %v1829 = vld [vmem:[%s3 + $0xd8] sm:$0xff]
  %v1830 = vld [vmem:[%s3 + $0xe0] sm:$0xff]
  %v1831 = vld [vmem:[%s3 + $0xe8] sm:$0xff]
  %v1832 = vld [vmem:[%s3 + $0xf0] sm:$0xff]
  %v1833 = vld [vmem:[%s3 + $0xf8] sm:$0xff]
  %v1834 = vld [vmem:[%s3 + $0x100] sm:$0xff]
  %v1835 = vld [vmem:[%s3 + $0x108] sm:$0xff]
  %v1836 = vld [vmem:[%s3 + $0x110] sm:$0xff]
  %v1837 = vld [vmem:[%s3 + $0x118] sm:$0xff]
  %v1838 = vld [vmem:[%s3 + $0x120] sm:$0xff]
  %v1839 = vld [vmem:[%s3 + $0x128] sm:$0xff]
  %v1840 = vld [vmem:[%s3 + $0x130] sm:$0xff]
  %v1841 = vld [vmem:[%s3 + $0x138] sm:$0xff]
  %v1842 = vld [vmem:[%s3 + $0x140] sm:$0xff]
  %v1843 = vld [vmem:[%s3 + $0x148] sm:$0xff]
  %v1844 = vld [vmem:[%s3 + $0x150] sm:$0xff]
  %v1845 = vld [vmem:[%s3 + $0x158] sm:$0xff]
  %v1846 = vld [vmem:[%s3 + $0x160] sm:$0xff]
  %v1847 = vld [vmem:[%s3 + $0x168] sm:$0xff]
  %v1848 = vld [vmem:[%s3 + $0x170] sm:$0xff]
  %v1849 = vld [vmem:[%s3 + $0x178] sm:$0xff]
  %v1850 = vld [vmem:[%s3 + $0x180] sm:$0xff]
  %v1851 = vld [vmem:[%s3 + $0x188] sm:$0xff]
  %v1852 = vld [vmem:[%s3 + $0x190] sm:$0xff]
  %v1853 = vld [vmem:[%s3 + $0x198] sm:$0xff]
  %v1854 = vld [vmem:[%s3 + $0x1a0] sm:$0xff]
  %v1855 = vld [vmem:[%s3 + $0x1a8] sm:$0xff]
  %v1856 = vld [vmem:[%s3 + $0x1b0] sm:$0xff]
  %v1857 = vld [vmem:[%s3 + $0x1b8] sm:$0xff]
  %v1858 = vld [vmem:[%s3 + $0x1c0] sm:$0xff]
  %v1859 = vld [vmem:[%s3 + $0x1c8] sm:$0xff]
  %v1860 = vld [vmem:[%s3 + $0x1d0] sm:$0xff]
  %v1861 = vld [vmem:[%s3 + $0x1d8] sm:$0xff]
  %v1862 = vld [vmem:[%s3 + $0x1e0] sm:$0xff]
  %v1863 = vld [vmem:[%s3 + $0x1e8] sm:$0xff]
  %v1864 = vld [vmem:[%s3 + $0x1f0] sm:$0xff]
  %v1865 = vld [vmem:[%s3 + $0x1f8] sm:$0xff]
  %v1866 = vld [vmem:[%s3 + $0x200] sm:$0xff]
  %v1867 = vld [vmem:[%s3 + $0x208] sm:$0xff]
  %v1868 = vld [vmem:[%s3 + $0x210] sm:$0xff]
  %v1869 = vld [vmem:[%s3 + $0x218] sm:$0xff]
  %v1870 = vld [vmem:[%s3 + $0x220] sm:$0xff]
  %v1871 = vld [vmem:[%s3 + $0x228] sm:$0xff]
  %v1872 = vld [vmem:[%s3 + $0x230] sm:$0xff]
  %v1873 = vld [vmem:[%s3 + $0x238] sm:$0xff]
  %v1874 = vld [vmem:[%s3 + $0x240] sm:$0xff]
  %v1875 = vld [vmem:[%s3 + $0x248] sm:$0xff]
  %v1876 = vld [vmem:[%s3 + $0x250] sm:$0xff]
  %v1877 = vld [vmem:[%s3 + $0x258] sm:$0xff]
  %v1878 = vld [vmem:[%s3 + $0x260] sm:$0xff]
  %v1879 = vld [vmem:[%s3 + $0x268] sm:$0xff]
  %v1880 = vld [vmem:[%s3 + $0x270] sm:$0xff]
  %v1881 = vld [vmem:[%s3 + $0x278] sm:$0xff]
  %v1882 = vld [vmem:[%s3 + $0x280] sm:$0xff]
  %v1883 = vld [vmem:[%s3 + $0x288] sm:$0xff]
  %v1884 = vld [vmem:[%s3 + $0x290] sm:$0xff]
  %v1885 = vld [vmem:[%s3 + $0x298] sm:$0xff]
  %v1886 = vld [vmem:[%s3 + $0x2a0] sm:$0xff]
  %v1887 = vld [vmem:[%s3 + $0x2a8] sm:$0xff]
  %v1888 = vld [vmem:[%s3 + $0x2b0] sm:$0xff]
  %v1889 = vld [vmem:[%s3 + $0x2b8] sm:$0xff]
  %v1890 = vld [vmem:[%s3 + $0x2c0] sm:$0xff]
  %v1891 = vld [vmem:[%s3 + $0x2c8] sm:$0xff]
  %v1892 = vld [vmem:[%s3 + $0x2d0] sm:$0xff]
  %v1893 = vld [vmem:[%s3 + $0x2d8] sm:$0xff]
  %v1894 = vld [vmem:[%s3 + $0x2e0] sm:$0xff]
  %v1895 = vld [vmem:[%s3 + $0x2e8] sm:$0xff]
  %v1896 = vld [vmem:[%s3 + $0x2f0] sm:$0xff]
  %v1897 = vld [vmem:[%s3 + $0x2f8] sm:$0xff]
  %v1898 = vld [vmem:[%s3 + $0x300] sm:$0xff]
  %v1899 = vld [vmem:[%s3 + $0x308] sm:$0xff]
  %v1900 = vld [vmem:[%s3 + $0x310] sm:$0xff]
  %v1901 = vld [vmem:[%s3 + $0x318] sm:$0xff]
  %v1902 = vld [vmem:[%s3 + $0x320] sm:$0xff]
  %v1903 = vld [vmem:[%s3 + $0x328] sm:$0xff]
  %v1904 = vld [vmem:[%s3 + $0x330] sm:$0xff]
  %v1905 = vld [vmem:[%s3 + $0x338] sm:$0xff]
  %v1906 = vld [vmem:[%s3 + $0x340] sm:$0xff]
  %v1907 = vld [vmem:[%s3 + $0x348] sm:$0xff]
  %v1908 = vld [vmem:[%s3 + $0x350] sm:$0xff]
  %v1909 = vld [vmem:[%s3 + $0x358] sm:$0xff]
  %v1910 = vld [vmem:[%s3 + $0x360] sm:$0xff]
  %v1911 = vld [vmem:[%s3 + $0x368] sm:$0xff]
  %v1912 = vld [vmem:[%s3 + $0x370] sm:$0xff]
  %v1913 = vld [vmem:[%s3 + $0x378] sm:$0xff]
  %v1914 = vld [vmem:[%s3 + $0x380] sm:$0xff]
  %v1915 = vld [vmem:[%s3 + $0x388] sm:$0xff]
  %v1916 = vld [vmem:[%s3 + $0x390] sm:$0xff]
  %v1917 = vld [vmem:[%s3 + $0x398] sm:$0xff]
  %v1918 = vld [vmem:[%s3 + $0x3a0] sm:$0xff]
  %v1919 = vld [vmem:[%s3 + $0x3a8] sm:$0xff]
  %v1920 = vld [vmem:[%s3 + $0x3b0] sm:$0xff]
  %v1921 = vld [vmem:[%s3 + $0x3b8] sm:$0xff]
  %v1922 = vld [vmem:[%s3 + $0x3c0] sm:$0xff]
  %v1923 = vld [vmem:[%s3 + $0x3c8] sm:$0xff]
  %v1924 = vld [vmem:[%s3 + $0x3d0] sm:$0xff]
  %v1925 = vld [vmem:[%s3 + $0x3d8] sm:$0xff]
  %v1926 = vld [vmem:[%s3 + $0x3e0] sm:$0xff]
  %v1927 = vld [vmem:[%s3 + $0x3e8] sm:$0xff]
  %v1928 = vld [vmem:[%s3 + $0x3f0] sm:$0xff]
  %v1929 = vld [vmem:[%s3 + $0x3f8] sm:$0xff]
  %v1930 = vld [vmem:[%s3 + $0x400] sm:$0xff]
  %v1931 = vld [vmem:[%s3 + $0x408] sm:$0xff]
  %v1932 = vld [vmem:[%s3 + $0x410] sm:$0xff]
  %v1933 = vld [vmem:[%s3 + $0x418] sm:$0xff]
  %v1934 = vld [vmem:[%s3 + $0x420] sm:$0xff]
  %v1935 = vld [vmem:[%s3 + $0x428] sm:$0xff]
  %v1936 = vld [vmem:[%s3 + $0x430] sm:$0xff]
  %v1937 = vld [vmem:[%s3 + $0x438] sm:$0xff]
  %v1938 = vld [vmem:[%s3 + $0x440] sm:$0xff]
  %v1939 = vld [vmem:[%s3 + $0x448] sm:$0xff]
  %v1940 = vld [vmem:[%s3 + $0x450] sm:$0xff]
  %v1941 = vld [vmem:[%s3 + $0x458] sm:$0xff]
  %v1942 = vld [vmem:[%s3 + $0x460] sm:$0xff]
  %v1943 = vld [vmem:[%s3 + $0x468] sm:$0xff]
  %v1944 = vld [vmem:[%s3 + $0x470] sm:$0xff]
  %v1945 = vld [vmem:[%s3 + $0x478] sm:$0xff]
  %v1946 = vld [vmem:[%s3 + $0x480] sm:$0xff]
  %v1947 = vld [vmem:[%s3 + $0x488] sm:$0xff]
  %v1948 = vld [vmem:[%s3 + $0x490] sm:$0xff]
  %v1949 = vld [vmem:[%s3 + $0x498] sm:$0xff]
  %v1950 = vld [vmem:[%s3 + $0x4a0] sm:$0xff]
  %v1951 = vld [vmem:[%s3 + $0x4a8] sm:$0xff]
  %v1952 = vld [vmem:[%s3 + $0x4b0] sm:$0xff]
  %v1953 = vld [vmem:[%s3 + $0x4b8] sm:$0xff]
  %v1954 = vld [vmem:[%s3 + $0x4c0] sm:$0xff]
  %v1955 = vld [vmem:[%s3 + $0x4c8] sm:$0xff]
  %v1956 = vld [vmem:[%s3 + $0x4d0] sm:$0xff]
  %v1957 = vld [vmem:[%s3 + $0x4d8] sm:$0xff]
  %v1958 = vld [vmem:[%s3 + $0x4e0] sm:$0xff]
  %v1959 = vld [vmem:[%s3 + $0x4e8] sm:$0xff]
  %v1960 = vld [vmem:[%s3 + $0x4f0] sm:$0xff]
  %v1961 = vld [vmem:[%s3 + $0x4f8] sm:$0xff]
  %v1962 = vld [vmem:[%s3 + $0x500] sm:$0xff]
  %v1963 = vld [vmem:[%s3 + $0x508] sm:$0xff]
  %v1964 = vld [vmem:[%s3 + $0x510] sm:$0xff]
  %v1965 = vld [vmem:[%s3 + $0x518] sm:$0xff]
  %v1966 = vld [vmem:[%s3 + $0x520] sm:$0xff]
  %v1967 = vld [vmem:[%s3 + $0x528] sm:$0xff]
  %v1968 = vld [vmem:[%s3 + $0x530] sm:$0xff]
  %v1969 = vld [vmem:[%s3 + $0x538] sm:$0xff]
  %v1970 = vld [vmem:[%s3 + $0x540] sm:$0xff]
  %v1971 = vld [vmem:[%s3 + $0x548] sm:$0xff]
  %v1972 = vld [vmem:[%s3 + $0x550] sm:$0xff]
  %v1973 = vld [vmem:[%s3 + $0x558] sm:$0xff]
  %v1974 = vld [vmem:[%s3 + $0x560] sm:$0xff]
  %v1975 = vld [vmem:[%s3 + $0x568] sm:$0xff]
  %v1976 = vld [vmem:[%s3 + $0x570] sm:$0xff]
  %v1977 = vld [vmem:[%s3 + $0x578] sm:$0xff]
  %v1978 = vld [vmem:[%s3 + $0x580] sm:$0xff]
  %v1979 = vld [vmem:[%s3 + $0x588] sm:$0xff]
  %v1980 = vld [vmem:[%s3 + $0x590] sm:$0xff]
  %v1981 = vld [vmem:[%s3 + $0x598] sm:$0xff]
  %v1982 = vld [vmem:[%s3 + $0x5a0] sm:$0xff]
  %v1983 = vld [vmem:[%s3 + $0x5a8] sm:$0xff]
  %v1984 = vld [vmem:[%s3 + $0x5b0] sm:$0xff]
  %v1985 = vld [vmem:[%s3 + $0x5b8] sm:$0xff]
  %v1986 = vld [vmem:[%s3 + $0x5c0] sm:$0xff]
  %v1987 = vld [vmem:[%s3 + $0x5c8] sm:$0xff]
  %v1988 = vld [vmem:[%s3 + $0x5d0] sm:$0xff]
  %v1989 = vld [vmem:[%s3 + $0x5d8] sm:$0xff]
  %v1990 = vld [vmem:[%s3 + $0x5e0] sm:$0xff]
  %v1991 = vld [vmem:[%s3 + $0x5e8] sm:$0xff]
  %v1992 = vld [vmem:[%s3 + $0x5f0] sm:$0xff]
  %v1993 = vld [vmem:[%s3 + $0x5f8] sm:$0xff]
  %v1994 = vld [vmem:[%s3 + $0x600] sm:$0xff]
  %v1995 = vld [vmem:[%s3 + $0x608] sm:$0xff]
  %v1996 = vld [vmem:[%s3 + $0x610] sm:$0xff]
  %v1997 = vld [vmem:[%s3 + $0x618] sm:$0xff]
  %v1998 = vld [vmem:[%s3 + $0x620] sm:$0xff]
  %v1999 = vld [vmem:[%s3 + $0x628] sm:$0xff]
  %v2000 = vld [vmem:[%s3 + $0x630] sm:$0xff]
  %v2001 = vld [vmem:[%s3 + $0x638] sm:$0xff]
  %v2002 = vld [vmem:[%s3 + $0x640] sm:$0xff]
  %v2003 = vld [vmem:[%s3 + $0x648] sm:$0xff]
  %v2004 = vld [vmem:[%s3 + $0x650] sm:$0xff]
  %v2005 = vld [vmem:[%s3 + $0x658] sm:$0xff]
  %v2006 = vld [vmem:[%s3 + $0x660] sm:$0xff]
  %v2007 = vld [vmem:[%s3 + $0x668] sm:$0xff]
  %v2008 = vld [vmem:[%s3 + $0x670] sm:$0xff]
  %v2009 = vld [vmem:[%s3 + $0x678] sm:$0xff]
  %v2010 = vld [vmem:[%s3 + $0x680] sm:$0xff]
  %v2011 = vld [vmem:[%s3 + $0x688] sm:$0xff]
  %v2012 = vld [vmem:[%s3 + $0x690] sm:$0xff]
  %v2013 = vld [vmem:[%s3 + $0x698] sm:$0xff]
  %v2014 = vld [vmem:[%s3 + $0x6a0] sm:$0xff]
  %v2015 = vld [vmem:[%s3 + $0x6a8] sm:$0xff]
  %v2016 = vld [vmem:[%s3 + $0x6b0] sm:$0x7]
  %v2017 = vld [vmem:[%s3 + $0x6b8] sm:$0x7]
  %vm2018 = vcmask 744448
  %v2020 = vsel %vm2018, %v1801, 0
  %vm2022 = vcmask 1042432
  %v2024 = vsel %vm2022, %v2016, 0
  %v2027 = vsel %vm2022, %v2017, 0
  %2029 = vmatprep.subr.mxu0 %v1803
  %2030 = vmatpush1.msra.mxu0 %v1802
  %2031 = vmatprep.subr.mxu0 %v1805
  %2032 = vmatpush1.msra.mxu0 %v1804
  %2033 = vmatprep.subr.mxu0 %v1807
  %2034 = vmatpush1.msra.mxu0 %v1806
  %2035 = vmatprep.subr.mxu0 %v1809
  %2036 = vmatpush1.msra.mxu0 %v1808
  %2037 = vmatprep.subr.mxu0 %v1811
  %2038 = vmatpush1.msra.mxu0 %v1810
  %2039 = vmatprep.subr.mxu0 %v1813
  %2040 = vmatpush1.msra.mxu0 %v1812
  %2041 = vmatprep.subr.mxu0 %v1815
  %2042 = vmatpush1.msra.mxu0 %v1814
  %2043 = vmatprep.subr.mxu0 %v1817
  %2044 = vmatpush1.msra.mxu0 %v1816
  %2045 = vmatprep.subr.mxu0 %v1819
  %2046 = vmatpush1.msra.mxu0 %v1818
  %2047 = vmatprep.subr.mxu0 %v1821
  %2048 = vmatpush1.msra.mxu0 %v1820
  %2049 = vmatprep.subr.mxu0 %v1823
  %2050 = vmatpush1.msra.mxu0 %v1822
  %2051 = vmatprep.subr.mxu0 %v1825
  %2052 = vmatpush1.msra.mxu0 %v1824
  %2053 = vmatprep.subr.mxu0 %v1827
  %2054 = vmatpush1.msra.mxu0 %v1826
  %2055 = vmatprep.subr.mxu0 %v1829
  %2056 = vmatpush1.msra.mxu0 %v1828
  %2057 = vmatprep.subr.mxu0 %v1831
  %2058 = vmatpush1.msra.mxu0 %v1830
  %2059 = vmatprep.subr.mxu0 %v1833
  %2060 = vmatpush1.msra.mxu0 %v1832
  %2061 = vmatprep.subr.mxu0 %v1835
  %2062 = vmatpush1.msra.mxu0 %v1834
  %2063 = vmatprep.subr.mxu0 %v1837
  %2064 = vmatpush1.msra.mxu0 %v1836
  %2065 = vmatprep.subr.mxu0 %v1839
  %2066 = vmatpush1.msra.mxu0 %v1838
  %2067 = vmatprep.subr.mxu0 %v1841
  %2068 = vmatpush1.msra.mxu0 %v1840
  %2069 = vmatprep.subr.mxu0 %v1843
  %2070 = vmatpush1.msra.mxu0 %v1842
  %2071 = vmatprep.subr.mxu0 %v1845
  %2072 = vmatpush1.msra.mxu0 %v1844
  %2073 = vmatprep.subr.mxu0 %v1847
  %2074 = vmatpush1.msra.mxu0 %v1846
  %2075 = vmatprep.subr.mxu0 %v1849
  %2076 = vmatpush1.msra.mxu0 %v1848
  %2077 = vmatprep.subr.mxu0 %v1851
  %2078 = vmatpush1.msra.mxu0 %v1850
  %2079 = vmatprep.subr.mxu0 %v1853
  %2080 = vmatpush1.msra.mxu0 %v1852
  %2081 = vmatprep.subr.mxu0 %v1855
  %2082 = vmatpush1.msra.mxu0 %v1854
  %2083 = vmatprep.subr.mxu0 %v1857
  %2084 = vmatpush1.msra.mxu0 %v1856
  %2085 = vmatprep.subr.mxu0 %v1859
  %2086 = vmatpush1.msra.mxu0 %v1858
  %2087 = vmatprep.subr.mxu0 %v1861
  %2088 = vmatpush1.msra.mxu0 %v1860
  %2089 = vmatprep.subr.mxu0 %v1863
  %2090 = vmatpush1.msra.mxu0 %v1862
  %2091 = vmatprep.subr.mxu0 %v1865
  %2092 = vmatpush1.msra.mxu0 %v1864
  %2093 = vmatprep.mubr.f32.mxu0 %v1796
  %2094 = vmatmul.mubr.f32.gmra.mrb[0].mxu0 %v1795
  %v2095 = vpop.f32.mrb[0].mxu0
  %v2096 = vadd.f32 0.0, %v2095
  %v2097 = vpop.f32.mrb[0].mxu0
  %v2098 = vadd.f32 0.0, %v2097
  %2099 = vdwg.mxu0
  %2100 = vmatprep.subr.mxu0 %v1867
  %2101 = vmatpush1.msra.mxu0 %v1866
  %2102 = vmatprep.subr.mxu0 %v1869
  %2103 = vmatpush1.msra.mxu0 %v1868
  %2104 = vmatprep.subr.mxu0 %v1871
  %2105 = vmatpush1.msra.mxu0 %v1870
  %2106 = vmatprep.subr.mxu0 %v1873
  %2107 = vmatpush1.msra.mxu0 %v1872
  %2108 = vmatprep.subr.mxu0 %v1875
  %2109 = vmatpush1.msra.mxu0 %v1874
  %2110 = vmatprep.subr.mxu0 %v1877
  %2111 = vmatpush1.msra.mxu0 %v1876
  %2112 = vmatprep.subr.mxu0 %v1879
  %2113 = vmatpush1.msra.mxu0 %v1878
  %2114 = vmatprep.subr.mxu0 %v1881
  %2115 = vmatpush1.msra.mxu0 %v1880
  %2116 = vmatprep.subr.mxu0 %v1883
  %2117 = vmatpush1.msra.mxu0 %v1882
  %2118 = vmatprep.subr.mxu0 %v1885
  %2119 = vmatpush1.msra.mxu0 %v1884
  %2120 = vmatprep.subr.mxu0 %v1887
  %2121 = vmatpush1.msra.mxu0 %v1886
  %2122 = vmatprep.subr.mxu0 %v1889
  %2123 = vmatpush1.msra.mxu0 %v1888
  %2124 = vmatprep.subr.mxu0 %v1891
  %2125 = vmatpush1.msra.mxu0 %v1890
  %2126 = vmatprep.subr.mxu0 %v1893
  %2127 = vmatpush1.msra.mxu0 %v1892
  %2128 = vmatprep.subr.mxu0 %v1895
  %2129 = vmatpush1.msra.mxu0 %v1894
  %2130 = vmatprep.subr.mxu0 %v1897
  %2131 = vmatpush1.msra.mxu0 %v1896
  %2132 = vmatprep.subr.mxu0 %v1899
  %2133 = vmatpush1.msra.mxu0 %v1898
  %2134 = vmatprep.subr.mxu0 %v1901
  %2135 = vmatpush1.msra.mxu0 %v1900
  %2136 = vmatprep.subr.mxu0 %v1903
  %2137 = vmatpush1.msra.mxu0 %v1902
  %2138 = vmatprep.subr.mxu0 %v1905
  %2139 = vmatpush1.msra.mxu0 %v1904
  %2140 = vmatprep.subr.mxu0 %v1907
  %2141 = vmatpush1.msra.mxu0 %v1906
  %2142 = vmatprep.subr.mxu0 %v1909
  %2143 = vmatpush1.msra.mxu0 %v1908
  %2144 = vmatprep.subr.mxu0 %v1911
  %2145 = vmatpush1.msra.mxu0 %v1910
  %2146 = vmatprep.subr.mxu0 %v1913
  %2147 = vmatpush1.msra.mxu0 %v1912
  %2148 = vmatprep.subr.mxu0 %v1915
  %2149 = vmatpush1.msra.mxu0 %v1914
  %2150 = vmatprep.subr.mxu0 %v1917
  %2151 = vmatpush1.msra.mxu0 %v1916
  %2152 = vmatprep.subr.mxu0 %v1919
  %2153 = vmatpush1.msra.mxu0 %v1918
  %2154 = vmatprep.subr.mxu0 %v1921
  %2155 = vmatpush1.msra.mxu0 %v1920
  %2156 = vmatprep.subr.mxu0 %v1923
  %2157 = vmatpush1.msra.mxu0 %v1922
  %2158 = vmatprep.subr.mxu0 %v1925
  %2159 = vmatpush1.msra.mxu0 %v1924
  %2160 = vmatprep.subr.mxu0 %v1927
  %2161 = vmatpush1.msra.mxu0 %v1926
  %2162 = vmatprep.subr.mxu0 %v1929
  %2163 = vmatpush1.msra.mxu0 %v1928
  %2164 = vmatprep.mubr.f32.mxu0 %v1798
  %2165 = vmatmul.mubr.f32.gmra.mrb[0].mxu0 %v1797
  %v2166 = vpop.f32.mrb[0].mxu0
  %v2167 = vadd.f32 %v2096, %v2166
  %v2168 = vpop.f32.mrb[0].mxu0
  %v2169 = vadd.f32 %v2098, %v2168
  %2170 = vdwg.mxu0
  %2171 = vmatprep.subr.mxu0 %v1931
  %2172 = vmatpush1.msra.mxu0 %v1930
  %2173 = vmatprep.subr.mxu0 %v1933
  %2174 = vmatpush1.msra.mxu0 %v1932
  %2175 = vmatprep.subr.mxu0 %v1935
  %2176 = vmatpush1.msra.mxu0 %v1934
  %2177 = vmatprep.subr.mxu0 %v1937
  %2178 = vmatpush1.msra.mxu0 %v1936
  %2179 = vmatprep.subr.mxu0 %v1939
  %2180 = vmatpush1.msra.mxu0 %v1938
  %2181 = vmatprep.subr.mxu0 %v1941
  %2182 = vmatpush1.msra.mxu0 %v1940
  %2183 = vmatprep.subr.mxu0 %v1943
  %2184 = vmatpush1.msra.mxu0 %v1942
  %2185 = vmatprep.subr.mxu0 %v1945
  %2186 = vmatpush1.msra.mxu0 %v1944
  %2187 = vmatprep.subr.mxu0 %v1947
  %2188 = vmatpush1.msra.mxu0 %v1946
  %2189 = vmatprep.subr.mxu0 %v1949
  %2190 = vmatpush1.msra.mxu0 %v1948
  %2191 = vmatprep.subr.mxu0 %v1951
  %2192 = vmatpush1.msra.mxu0 %v1950
  %2193 = vmatprep.subr.mxu0 %v1953
  %2194 = vmatpush1.msra.mxu0 %v1952
  %2195 = vmatprep.subr.mxu0 %v1955
  %2196 = vmatpush1.msra.mxu0 %v1954
  %2197 = vmatprep.subr.mxu0 %v1957
  %2198 = vmatpush1.msra.mxu0 %v1956
  %2199 = vmatprep.subr.mxu0 %v1959
  %2200 = vmatpush1.msra.mxu0 %v1958
  %2201 = vmatprep.subr.mxu0 %v1961
  %2202 = vmatpush1.msra.mxu0 %v1960
  %2203 = vmatprep.subr.mxu0 %v1963
  %2204 = vmatpush1.msra.mxu0 %v1962
  %2205 = vmatprep.subr.mxu0 %v1965
  %2206 = vmatpush1.msra.mxu0 %v1964
  %2207 = vmatprep.subr.mxu0 %v1967
  %2208 = vmatpush1.msra.mxu0 %v1966
  %2209 = vmatprep.subr.mxu0 %v1969
  %2210 = vmatpush1.msra.mxu0 %v1968
  %2211 = vmatprep.subr.mxu0 %v1971
  %2212 = vmatpush1.msra.mxu0 %v1970
  %2213 = vmatprep.subr.mxu0 %v1973
  %2214 = vmatpush1.msra.mxu0 %v1972
  %2215 = vmatprep.subr.mxu0 %v1975
  %2216 = vmatpush1.msra.mxu0 %v1974
  %2217 = vmatprep.subr.mxu0 %v1977
  %2218 = vmatpush1.msra.mxu0 %v1976
  %2219 = vmatprep.subr.mxu0 %v1979
  %2220 = vmatpush1.msra.mxu0 %v1978
  %2221 = vmatprep.subr.mxu0 %v1981
  %2222 = vmatpush1.msra.mxu0 %v1980
  %2223 = vmatprep.subr.mxu0 %v1983
  %2224 = vmatpush1.msra.mxu0 %v1982
  %2225 = vmatprep.subr.mxu0 %v1985
  %2226 = vmatpush1.msra.mxu0 %v1984
  %2227 = vmatprep.subr.mxu0 %v1987
  %2228 = vmatpush1.msra.mxu0 %v1986
  %2229 = vmatprep.subr.mxu0 %v1989
  %2230 = vmatpush1.msra.mxu0 %v1988
  %2231 = vmatprep.subr.mxu0 %v1991
  %2232 = vmatpush1.msra.mxu0 %v1990
  %2233 = vmatprep.subr.mxu0 %v1993
  %2234 = vmatpush1.msra.mxu0 %v1992
  %2235 = vmatprep.mubr.f32.mxu0 %v1800
  %2236 = vmatmul.mubr.f32.gmra.mrb[0].mxu0 %v1799
  %v2237 = vpop.f32.mrb[0].mxu0
  %v2238 = vadd.f32 %v2167, %v2237
  %v2239 = vpop.f32.mrb[0].mxu0
  %v2240 = vadd.f32 %v2169, %v2239
  %2241 = vdwg.mxu0
  %2242 = vmatprep.subr.mxu0 %v1995
  %2243 = vmatpush1.msra.mxu0 %v1994
  %2244 = vmatprep.subr.mxu0 %v1997
  %2245 = vmatpush1.msra.mxu0 %v1996
  %2246 = vmatprep.subr.mxu0 %v1999
  %2247 = vmatpush1.msra.mxu0 %v1998
  %2248 = vmatprep.subr.mxu0 %v2001
  %2249 = vmatpush1.msra.mxu0 %v2000
  %2250 = vmatprep.subr.mxu0 %v2003
  %2251 = vmatpush1.msra.mxu0 %v2002
  %2252 = vmatprep.subr.mxu0 %v2005
  %2253 = vmatpush1.msra.mxu0 %v2004
  %2254 = vmatprep.subr.mxu0 %v2007
  %2255 = vmatpush1.msra.mxu0 %v2006
  %2256 = vmatprep.subr.mxu0 %v2009
  %2257 = vmatpush1.msra.mxu0 %v2008
  %2258 = vmatprep.subr.mxu0 %v2011
  %2259 = vmatpush1.msra.mxu0 %v2010
  %2260 = vmatprep.subr.mxu0 %v2013
  %2261 = vmatpush1.msra.mxu0 %v2012
  %2262 = vmatprep.subr.mxu0 %v2015
  %2263 = vmatpush1.msra.mxu0 %v2014
  %2264 = vmatprep.subr.mxu0 %v2027
  %2265 = vmatpush1.msra.mxu0 %v2024
  %2266 = vmatprep.subr.mxu0 0.0
  %2267 = vmatpush1.msra.mxu0 0.0
  %2268 = vmatprep.subr.mxu0 0.0
  %2269 = vmatpush1.msra.mxu0 0.0
  %2270 = vmatprep.subr.mxu0 0.0
  %2271 = vmatpush1.msra.mxu0 0.0
  %2272 = vmatprep.subr.mxu0 0.0
  %2273 = vmatpush1.msra.mxu0 0.0
  %2274 = vmatprep.subr.mxu0 0.0
  %2275 = vmatpush1.msra.mxu0 0.0
  %2276 = vmatprep.subr.mxu0 0.0
  %2277 = vmatpush1.msra.mxu0 0.0
  %2278 = vmatprep.subr.mxu0 0.0
  %2279 = vmatpush1.msra.mxu0 0.0
  %2280 = vmatprep.subr.mxu0 0.0
  %2281 = vmatpush1.msra.mxu0 0.0
  %2282 = vmatprep.subr.mxu0 0.0
  %2283 = vmatpush1.msra.mxu0 0.0
  %2284 = vmatprep.subr.mxu0 0.0
  %2285 = vmatpush1.msra.mxu0 0.0
  %2286 = vmatprep.subr.mxu0 0.0
  %2287 = vmatpush1.msra.mxu0 0.0
  %2288 = vmatprep.subr.mxu0 0.0
  %2289 = vmatpush1.msra.mxu0 0.0
  %2290 = vmatprep.subr.mxu0 0.0
  %2291 = vmatpush1.msra.mxu0 0.0
  %2292 = vmatprep.subr.mxu0 0.0
  %2293 = vmatpush1.msra.mxu0 0.0
  %2294 = vmatprep.subr.mxu0 0.0
  %2295 = vmatpush1.msra.mxu0 0.0
  %2296 = vmatprep.subr.mxu0 0.0
  %2297 = vmatpush1.msra.mxu0 0.0
  %2298 = vmatprep.subr.mxu0 0.0
  %2299 = vmatpush1.msra.mxu0 0.0
  %2300 = vmatprep.subr.mxu0 0.0
  %2301 = vmatpush1.msra.mxu0 0.0
  %2302 = vmatprep.subr.mxu0 0.0
  %2303 = vmatpush1.msra.mxu0 0.0
  %2304 = vmatprep.subr.mxu0 0.0
  %2305 = vmatpush1.msra.mxu0 0.0
  %2306 = vmatprep.mubr.f32.mxu0 0.0
  %2307 = vmatmul.mubr.f32.gmra.mrb[0].mxu0 %v2020
  %v2308 = vpop.f32.mrb[0].mxu0
  %v2309 = vadd.f32 %v2238, %v2308
  %v2310 = vpop.f32.mrb[0].mxu0
  %v2311 = vadd.f32 %v2240, %v2310
  %2312 = vdwg.mxu0
  %2313 = vst [vmem:[%s4] sm:$0xff] %v2309
  %vm2314 = vcmask 556032
  %2315 = vst.msk [vmem:[%s4 + $0x8] sm:$0xff] %vm2314, %v2311
  %s2316 = scalar_lea.vmem %s0, 64
  %v2317 = vld [vmem:[%s2316] sm:$0xff]
  %v2318 = vld [vmem:[%s2316 + $0x8] sm:$0xff]
  %v2319 = vld [vmem:[%s2316 + $0x10] sm:$0xff]
  %v2320 = vld [vmem:[%s2316 + $0x18] sm:$0xff]
  %v2321 = vld [vmem:[%s2316 + $0x20] sm:$0xff]
  %v2322 = vld [vmem:[%s2316 + $0x28] sm:$0xff]
  %v2323 = vld [vmem:[%s2316 + $0x30] sm:$0xff]
  %2324 = vst [vmem:[#allocation2] sm:$0xff] %v2317
  %2325 = vst [vmem:[#allocation2 + $0x8] sm:$0xff] %v2318
  %2326 = vst [vmem:[#allocation2 + $0x10] sm:$0xff] %v2319
  %2327 = vst [vmem:[#allocation2 + $0x18] sm:$0xff] %v2320
  %2328 = vst [vmem:[#allocation2 + $0x20] sm:$0xff] %v2321
  %2329 = vst [vmem:[#allocation2 + $0x28] sm:$0xff] %v2322
  %2330 = vst.msk [vmem:[#allocation2 + $0x30] sm:$0xff] %vm30, %v2323
  %v2331 = vld [vmem:[%s2316] sm:$0xff]
  %v2332 = vld [vmem:[%s2316 + $0x8] sm:$0xff]
  %v2333 = vld [vmem:[%s2316 + $0x10] sm:$0xff]
  %v2334 = vld [vmem:[%s2316 + $0x18] sm:$0xff]
  %v2335 = vld [vmem:[%s2316 + $0x20] sm:$0xff]
  %v2336 = vld [vmem:[%s2316 + $0x28] sm:$0xff]
  %v2337 = vld [vmem:[%s2316 + $0x30] sm:$0xff]
  %2345 = vrot.lane.b32.xlu0 %v2331, 127
  %v2346 = vpop.permute.xlu0 %2345
  %2347 = vrot.lane.b32.xlu0 %v2332, 127
  %v2348 = vpop.permute.xlu0 %2347
  %2349 = vrot.lane.b32.xlu0 %v2333, 127
  %v2350 = vpop.permute.xlu0 %2349
  %2351 = vrot.lane.b32.xlu0 %v2334, 127
  %v2352 = vpop.permute.xlu0 %2351
  %2353 = vrot.lane.b32.xlu0 %v2335, 127
  %v2354 = vpop.permute.xlu0 %2353
  %2355 = vrot.lane.b32.xlu0 %v2336, 127
  %v2356 = vpop.permute.xlu0 %2355
  %2357 = vrot.lane.b32.xlu0 %v2337, 127
  %v2358 = vpop.permute.xlu0 %2357
  %v2359 = vsel %vm60, %v2346, %v2348
  %v2360 = vsel %vm60, %v2348, %v2350
  %v2361 = vsel %vm60, %v2350, %v2352
  %v2362 = vsel %vm60, %v2352, %v2354
  %v2363 = vsel %vm60, %v2354, %v2356
  %v2364 = vsel %vm60, %v2356, %v2358
  %2372 = vst [vmem:[#allocation2 + $0x38] sm:$0xff] %v2359
  %2373 = vst [vmem:[#allocation2 + $0x40] sm:$0xff] %v2360
  %2374 = vst [vmem:[#allocation2 + $0x48] sm:$0xff] %v2361
  %2375 = vst [vmem:[#allocation2 + $0x50] sm:$0xff] %v2362
  %2376 = vst [vmem:[#allocation2 + $0x58] sm:$0xff] %v2363
  %2377 = vst [vmem:[#allocation2 + $0x60] sm:$0xff] %v2364
  %2378 = vst.msk [vmem:[#allocation2 + $0x68] sm:$0xff] %vm30, %v2358
  %v2379 = vld [vmem:[%s2316] sm:$0xff]
  %v2380 = vld [vmem:[%s2316 + $0x8] sm:$0xff]
  %v2381 = vld [vmem:[%s2316 + $0x10] sm:$0xff]
  %v2382 = vld [vmem:[%s2316 + $0x18] sm:$0xff]
  %v2383 = vld [vmem:[%s2316 + $0x20] sm:$0xff]
  %v2384 = vld [vmem:[%s2316 + $0x28] sm:$0xff]
  %v2385 = vld [vmem:[%s2316 + $0x30] sm:$0xff]
  %2393 = vrot.lane.b32.xlu0 %v2379, 126
  %v2394 = vpop.permute.xlu0 %2393
  %2395 = vrot.lane.b32.xlu0 %v2380, 126
  %v2396 = vpop.permute.xlu0 %2395
  %2397 = vrot.lane.b32.xlu0 %v2381, 126
  %v2398 = vpop.permute.xlu0 %2397
  %2399 = vrot.lane.b32.xlu0 %v2382, 126
  %v2400 = vpop.permute.xlu0 %2399
  %2401 = vrot.lane.b32.xlu0 %v2383, 126
  %v2402 = vpop.permute.xlu0 %2401
  %2403 = vrot.lane.b32.xlu0 %v2384, 126
  %v2404 = vpop.permute.xlu0 %2403
  %2405 = vrot.lane.b32.xlu0 %v2385, 126
  %v2406 = vpop.permute.xlu0 %2405
  %v2407 = vsel %vm109, %v2394, %v2396
  %v2408 = vsel %vm109, %v2396, %v2398
  %v2409 = vsel %vm109, %v2398, %v2400
  %v2410 = vsel %vm109, %v2400, %v2402
  %v2411 = vsel %vm109, %v2402, %v2404
  %v2412 = vsel %vm109, %v2404, %v2406
  %2420 = vst [vmem:[#allocation2 + $0x70] sm:$0xff] %v2407
  %2421 = vst [vmem:[#allocation2 + $0x78] sm:$0xff] %v2408
  %2422 = vst [vmem:[#allocation2 + $0x80] sm:$0xff] %v2409
  %2423 = vst [vmem:[#allocation2 + $0x88] sm:$0xff] %v2410
  %2424 = vst [vmem:[#allocation2 + $0x90] sm:$0xff] %v2411
  %2425 = vst [vmem:[#allocation2 + $0x98] sm:$0xff] %v2412
  %2426 = vst.msk [vmem:[#allocation2 + $0xa0] sm:$0xff] %vm30, %v2406
  %v2427 = vld [vmem:[%s2316] sm:$0xff]
  %v2428 = vld [vmem:[%s2316 + $0x8] sm:$0xff]
  %v2429 = vld [vmem:[%s2316 + $0x10] sm:$0xff]
  %v2430 = vld [vmem:[%s2316 + $0x18] sm:$0xff]
  %v2431 = vld [vmem:[%s2316 + $0x20] sm:$0xff]
  %v2432 = vld [vmem:[%s2316 + $0x28] sm:$0xff]
  %v2433 = vld [vmem:[%s2316 + $0x30] sm:$0xff]
  %2441 = vrot.lane.b32.xlu0 %v2427, 125
  %v2442 = vpop.permute.xlu0 %2441
  %2443 = vrot.lane.b32.xlu0 %v2428, 125
  %v2444 = vpop.permute.xlu0 %2443
  %2445 = vrot.lane.b32.xlu0 %v2429, 125
  %v2446 = vpop.permute.xlu0 %2445
  %2447 = vrot.lane.b32.xlu0 %v2430, 125
  %v2448 = vpop.permute.xlu0 %2447
  %2449 = vrot.lane.b32.xlu0 %v2431, 125
  %v2450 = vpop.permute.xlu0 %2449
  %2451 = vrot.lane.b32.xlu0 %v2432, 125
  %v2452 = vpop.permute.xlu0 %2451
  %2453 = vrot.lane.b32.xlu0 %v2433, 125
  %v2454 = vpop.permute.xlu0 %2453
  %v2455 = vsel %vm158, %v2442, %v2444
  %v2456 = vsel %vm158, %v2444, %v2446
  %v2457 = vsel %vm158, %v2446, %v2448
  %v2458 = vsel %vm158, %v2448, %v2450
  %v2459 = vsel %vm158, %v2450, %v2452
  %v2460 = vsel %vm158, %v2452, %v2454
  %2468 = vst [vmem:[#allocation2 + $0xa8] sm:$0xff] %v2455
  %2469 = vst [vmem:[#allocation2 + $0xb0] sm:$0xff] %v2456
  %2470 = vst [vmem:[#allocation2 + $0xb8] sm:$0xff] %v2457
  %2471 = vst [vmem:[#allocation2 + $0xc0] sm:$0xff] %v2458
  %2472 = vst [vmem:[#allocation2 + $0xc8] sm:$0xff] %v2459
  %2473 = vst [vmem:[#allocation2 + $0xd0] sm:$0xff] %v2460
  %2474 = vst.msk [vmem:[#allocation2 + $0xd8] sm:$0xff] %vm30, %v2454
  %v2475 = vld [vmem:[%s2316] sm:$0xff]
  %v2476 = vld [vmem:[%s2316 + $0x8] sm:$0xff]
  %v2477 = vld [vmem:[%s2316 + $0x10] sm:$0xff]
  %v2478 = vld [vmem:[%s2316 + $0x18] sm:$0xff]
  %v2479 = vld [vmem:[%s2316 + $0x20] sm:$0xff]
  %v2480 = vld [vmem:[%s2316 + $0x28] sm:$0xff]
  %v2481 = vld [vmem:[%s2316 + $0x30] sm:$0xff]
  %2489 = vrot.lane.b32.xlu0 %v2475, 124
  %v2490 = vpop.permute.xlu0 %2489
  %2491 = vrot.lane.b32.xlu0 %v2476, 124
  %v2492 = vpop.permute.xlu0 %2491
  %2493 = vrot.lane.b32.xlu0 %v2477, 124
  %v2494 = vpop.permute.xlu0 %2493
  %2495 = vrot.lane.b32.xlu0 %v2478, 124
  %v2496 = vpop.permute.xlu0 %2495
  %2497 = vrot.lane.b32.xlu0 %v2479, 124
  %v2498 = vpop.permute.xlu0 %2497
  %2499 = vrot.lane.b32.xlu0 %v2480, 124
  %v2500 = vpop.permute.xlu0 %2499
  %2501 = vrot.lane.b32.xlu0 %v2481, 124
  %v2502 = vpop.permute.xlu0 %2501
  %v2503 = vsel %vm30, %v2490, %v2492
  %v2504 = vsel %vm30, %v2492, %v2494
  %v2505 = vsel %vm30, %v2494, %v2496
  %v2506 = vsel %vm30, %v2496, %v2498
  %v2507 = vsel %vm30, %v2498, %v2500
  %v2508 = vsel %vm30, %v2500, %v2502
  %2516 = vst [vmem:[#allocation2 + $0xe0] sm:$0xff] %v2503
  %2517 = vst [vmem:[#allocation2 + $0xe8] sm:$0xff] %v2504
  %2518 = vst [vmem:[#allocation2 + $0xf0] sm:$0xff] %v2505
  %2519 = vst [vmem:[#allocation2 + $0xf8] sm:$0xff] %v2506
  %2520 = vst [vmem:[#allocation2 + $0x100] sm:$0xff] %v2507
  %2521 = vst [vmem:[#allocation2 + $0x108] sm:$0xff] %v2508
  %2522 = vst.msk [vmem:[#allocation2 + $0x110] sm:$0xff] %vm30, %v2502
  %v2523 = vld [vmem:[%s2316] sm:$0xff]
  %v2524 = vld [vmem:[%s2316 + $0x8] sm:$0xff]
  %v2525 = vld [vmem:[%s2316 + $0x10] sm:$0xff]
  %v2526 = vld [vmem:[%s2316 + $0x18] sm:$0xff]
  %v2527 = vld [vmem:[%s2316 + $0x20] sm:$0xff]
  %v2528 = vld [vmem:[%s2316 + $0x28] sm:$0xff]
  %v2529 = vld [vmem:[%s2316 + $0x30] sm:$0xff]
  %v2530 = vld [vmem:[%s2316 + $0x38] sm:$0xff]
  %2539 = vrot.lane.b32.xlu0 %v2523, 96
  %v2540 = vpop.permute.xlu0 %2539
  %2541 = vrot.lane.b32.xlu0 %v2524, 96
  %v2542 = vpop.permute.xlu0 %2541
  %2543 = vrot.lane.b32.xlu0 %v2525, 96
  %v2544 = vpop.permute.xlu0 %2543
  %2545 = vrot.lane.b32.xlu0 %v2526, 96
  %v2546 = vpop.permute.xlu0 %2545
  %2547 = vrot.lane.b32.xlu0 %v2527, 96
  %v2548 = vpop.permute.xlu0 %2547
  %2549 = vrot.lane.b32.xlu0 %v2528, 96
  %v2550 = vpop.permute.xlu0 %2549
  %2551 = vrot.lane.b32.xlu0 %v2529, 96
  %v2552 = vpop.permute.xlu0 %2551
  %2553 = vrot.lane.b32.xlu0 %v2530, 96
  %v2554 = vpop.permute.xlu0 %2553
  %v2555 = vsel %vm259, %v2540, %v2542
  %v2556 = vsel %vm259, %v2542, %v2544
  %v2557 = vsel %vm259, %v2544, %v2546
  %v2558 = vsel %vm259, %v2546, %v2548
  %v2559 = vsel %vm259, %v2548, %v2550
  %v2560 = vsel %vm259, %v2550, %v2552
  %v2561 = vsel %vm259, %v2552, %v2554
  %2569 = vst [vmem:[#allocation2 + $0x118] sm:$0xff] %v2555
  %2570 = vst [vmem:[#allocation2 + $0x120] sm:$0xff] %v2556
  %2571 = vst [vmem:[#allocation2 + $0x128] sm:$0xff] %v2557
  %2572 = vst [vmem:[#allocation2 + $0x130] sm:$0xff] %v2558
  %2573 = vst [vmem:[#allocation2 + $0x138] sm:$0xff] %v2559
  %2574 = vst [vmem:[#allocation2 + $0x140] sm:$0xff] %v2560
  %2575 = vst.msk [vmem:[#allocation2 + $0x148] sm:$0xff] %vm30, %v2561
  %v2576 = vld [vmem:[%s2316] sm:$0xff]
  %v2577 = vld [vmem:[%s2316 + $0x8] sm:$0xff]
  %v2578 = vld [vmem:[%s2316 + $0x10] sm:$0xff]
  %v2579 = vld [vmem:[%s2316 + $0x18] sm:$0xff]
  %v2580 = vld [vmem:[%s2316 + $0x20] sm:$0xff]
  %v2581 = vld [vmem:[%s2316 + $0x28] sm:$0xff]
  %v2582 = vld [vmem:[%s2316 + $0x30] sm:$0xff]
  %v2583 = vld [vmem:[%s2316 + $0x38] sm:$0xff]
  %2592 = vrot.lane.b32.xlu0 %v2576, 95
  %v2593 = vpop.permute.xlu0 %2592
  %2594 = vrot.lane.b32.xlu0 %v2577, 95
  %v2595 = vpop.permute.xlu0 %2594
  %2596 = vrot.lane.b32.xlu0 %v2578, 95
  %v2597 = vpop.permute.xlu0 %2596
  %2598 = vrot.lane.b32.xlu0 %v2579, 95
  %v2599 = vpop.permute.xlu0 %2598
  %2600 = vrot.lane.b32.xlu0 %v2580, 95
  %v2601 = vpop.permute.xlu0 %2600
  %2602 = vrot.lane.b32.xlu0 %v2581, 95
  %v2603 = vpop.permute.xlu0 %2602
  %2604 = vrot.lane.b32.xlu0 %v2582, 95
  %v2605 = vpop.permute.xlu0 %2604
  %2606 = vrot.lane.b32.xlu0 %v2583, 95
  %v2607 = vpop.permute.xlu0 %2606
  %v2608 = vsel %vm313, %v2593, %v2595
  %v2609 = vsel %vm313, %v2595, %v2597
  %v2610 = vsel %vm313, %v2597, %v2599
  %v2611 = vsel %vm313, %v2599, %v2601
  %v2612 = vsel %vm313, %v2601, %v2603
  %v2613 = vsel %vm313, %v2603, %v2605
  %v2614 = vsel %vm313, %v2605, %v2607
  %2622 = vst [vmem:[#allocation2 + $0x150] sm:$0xff] %v2608
  %2623 = vst [vmem:[#allocation2 + $0x158] sm:$0xff] %v2609
  %2624 = vst [vmem:[#allocation2 + $0x160] sm:$0xff] %v2610
  %2625 = vst [vmem:[#allocation2 + $0x168] sm:$0xff] %v2611
  %2626 = vst [vmem:[#allocation2 + $0x170] sm:$0xff] %v2612
  %2627 = vst [vmem:[#allocation2 + $0x178] sm:$0xff] %v2613
  %2628 = vst.msk [vmem:[#allocation2 + $0x180] sm:$0xff] %vm30, %v2614
  %v2629 = vld [vmem:[%s2316] sm:$0xff]
  %v2630 = vld [vmem:[%s2316 + $0x8] sm:$0xff]
  %v2631 = vld [vmem:[%s2316 + $0x10] sm:$0xff]
  %v2632 = vld [vmem:[%s2316 + $0x18] sm:$0xff]
  %v2633 = vld [vmem:[%s2316 + $0x20] sm:$0xff]
  %v2634 = vld [vmem:[%s2316 + $0x28] sm:$0xff]
  %v2635 = vld [vmem:[%s2316 + $0x30] sm:$0xff]
  %v2636 = vld [vmem:[%s2316 + $0x38] sm:$0xff]
  %2645 = vrot.lane.b32.xlu0 %v2629, 94
  %v2646 = vpop.permute.xlu0 %2645
  %2647 = vrot.lane.b32.xlu0 %v2630, 94
  %v2648 = vpop.permute.xlu0 %2647
  %2649 = vrot.lane.b32.xlu0 %v2631, 94
  %v2650 = vpop.permute.xlu0 %2649
  %2651 = vrot.lane.b32.xlu0 %v2632, 94
  %v2652 = vpop.permute.xlu0 %2651
  %2653 = vrot.lane.b32.xlu0 %v2633, 94
  %v2654 = vpop.permute.xlu0 %2653
  %2655 = vrot.lane.b32.xlu0 %v2634, 94
  %v2656 = vpop.permute.xlu0 %2655
  %2657 = vrot.lane.b32.xlu0 %v2635, 94
  %v2658 = vpop.permute.xlu0 %2657
  %2659 = vrot.lane.b32.xlu0 %v2636, 94
  %v2660 = vpop.permute.xlu0 %2659
  %v2661 = vsel %vm367, %v2646, %v2648
  %v2662 = vsel %vm367, %v2648, %v2650
  %v2663 = vsel %vm367, %v2650, %v2652
  %v2664 = vsel %vm367, %v2652, %v2654
  %v2665 = vsel %vm367, %v2654, %v2656
  %v2666 = vsel %vm367, %v2656, %v2658
  %v2667 = vsel %vm367, %v2658, %v2660
  %2675 = vst [vmem:[#allocation2 + $0x188] sm:$0xff] %v2661
  %2676 = vst [vmem:[#allocation2 + $0x190] sm:$0xff] %v2662
  %2677 = vst [vmem:[#allocation2 + $0x198] sm:$0xff] %v2663
  %2678 = vst [vmem:[#allocation2 + $0x1a0] sm:$0xff] %v2664
  %2679 = vst [vmem:[#allocation2 + $0x1a8] sm:$0xff] %v2665
  %2680 = vst [vmem:[#allocation2 + $0x1b0] sm:$0xff] %v2666
  %2681 = vst.msk [vmem:[#allocation2 + $0x1b8] sm:$0xff] %vm30, %v2667
  %v2682 = vld [vmem:[%s2316] sm:$0xff]
  %v2683 = vld [vmem:[%s2316 + $0x8] sm:$0xff]
  %v2684 = vld [vmem:[%s2316 + $0x10] sm:$0xff]
  %v2685 = vld [vmem:[%s2316 + $0x18] sm:$0xff]
  %v2686 = vld [vmem:[%s2316 + $0x20] sm:$0xff]
  %v2687 = vld [vmem:[%s2316 + $0x28] sm:$0xff]
  %v2688 = vld [vmem:[%s2316 + $0x30] sm:$0xff]
  %v2689 = vld [vmem:[%s2316 + $0x38] sm:$0xff]
  %2698 = vrot.lane.b32.xlu0 %v2682, 93
  %v2699 = vpop.permute.xlu0 %2698
  %2700 = vrot.lane.b32.xlu0 %v2683, 93
  %v2701 = vpop.permute.xlu0 %2700
  %2702 = vrot.lane.b32.xlu0 %v2684, 93
  %v2703 = vpop.permute.xlu0 %2702
  %2704 = vrot.lane.b32.xlu0 %v2685, 93
  %v2705 = vpop.permute.xlu0 %2704
  %2706 = vrot.lane.b32.xlu0 %v2686, 93
  %v2707 = vpop.permute.xlu0 %2706
  %2708 = vrot.lane.b32.xlu0 %v2687, 93
  %v2709 = vpop.permute.xlu0 %2708
  %2710 = vrot.lane.b32.xlu0 %v2688, 93
  %v2711 = vpop.permute.xlu0 %2710
  %2712 = vrot.lane.b32.xlu0 %v2689, 93
  %v2713 = vpop.permute.xlu0 %2712
  %v2714 = vsel %vm421, %v2699, %v2701
  %v2715 = vsel %vm421, %v2701, %v2703
  %v2716 = vsel %vm421, %v2703, %v2705
  %v2717 = vsel %vm421, %v2705, %v2707
  %v2718 = vsel %vm421, %v2707, %v2709
  %v2719 = vsel %vm421, %v2709, %v2711
  %v2720 = vsel %vm421, %v2711, %v2713
  %2728 = vst [vmem:[#allocation2 + $0x1c0] sm:$0xff] %v2714
  %2729 = vst [vmem:[#allocation2 + $0x1c8] sm:$0xff] %v2715
  %2730 = vst [vmem:[#allocation2 + $0x1d0] sm:$0xff] %v2716
  %2731 = vst [vmem:[#allocation2 + $0x1d8] sm:$0xff] %v2717
  %2732 = vst [vmem:[#allocation2 + $0x1e0] sm:$0xff] %v2718
  %2733 = vst [vmem:[#allocation2 + $0x1e8] sm:$0xff] %v2719
  %2734 = vst.msk [vmem:[#allocation2 + $0x1f0] sm:$0xff] %vm30, %v2720
  %v2735 = vld [vmem:[%s2316] sm:$0xff]
  %v2736 = vld [vmem:[%s2316 + $0x8] sm:$0xff]
  %v2737 = vld [vmem:[%s2316 + $0x10] sm:$0xff]
  %v2738 = vld [vmem:[%s2316 + $0x18] sm:$0xff]
  %v2739 = vld [vmem:[%s2316 + $0x20] sm:$0xff]
  %v2740 = vld [vmem:[%s2316 + $0x28] sm:$0xff]
  %v2741 = vld [vmem:[%s2316 + $0x30] sm:$0xff]
  %v2742 = vld [vmem:[%s2316 + $0x38] sm:$0xff]
  %2751 = vrot.lane.b32.xlu0 %v2735, 92
  %v2752 = vpop.permute.xlu0 %2751
  %2753 = vrot.lane.b32.xlu0 %v2736, 92
  %v2754 = vpop.permute.xlu0 %2753
  %2755 = vrot.lane.b32.xlu0 %v2737, 92
  %v2756 = vpop.permute.xlu0 %2755
  %2757 = vrot.lane.b32.xlu0 %v2738, 92
  %v2758 = vpop.permute.xlu0 %2757
  %2759 = vrot.lane.b32.xlu0 %v2739, 92
  %v2760 = vpop.permute.xlu0 %2759
  %2761 = vrot.lane.b32.xlu0 %v2740, 92
  %v2762 = vpop.permute.xlu0 %2761
  %2763 = vrot.lane.b32.xlu0 %v2741, 92
  %v2764 = vpop.permute.xlu0 %2763
  %2765 = vrot.lane.b32.xlu0 %v2742, 92
  %v2766 = vpop.permute.xlu0 %2765
  %v2767 = vsel %vm475, %v2752, %v2754
  %v2768 = vsel %vm475, %v2754, %v2756
  %v2769 = vsel %vm475, %v2756, %v2758
  %v2770 = vsel %vm475, %v2758, %v2760
  %v2771 = vsel %vm475, %v2760, %v2762
  %v2772 = vsel %vm475, %v2762, %v2764
  %v2773 = vsel %vm475, %v2764, %v2766
  %2781 = vst [vmem:[#allocation2 + $0x1f8] sm:$0xff] %v2767
  %2782 = vst [vmem:[#allocation2 + $0x200] sm:$0xff] %v2768
  %2783 = vst [vmem:[#allocation2 + $0x208] sm:$0xff] %v2769
  %2784 = vst [vmem:[#allocation2 + $0x210] sm:$0xff] %v2770
  %2785 = vst [vmem:[#allocation2 + $0x218] sm:$0xff] %v2771
  %2786 = vst [vmem:[#allocation2 + $0x220] sm:$0xff] %v2772
  %2787 = vst.msk [vmem:[#allocation2 + $0x228] sm:$0xff] %vm30, %v2773
  %v2788 = vld [vmem:[%s2316] sm:$0xff]
  %v2789 = vld [vmem:[%s2316 + $0x8] sm:$0xff]
  %v2790 = vld [vmem:[%s2316 + $0x10] sm:$0xff]
  %v2791 = vld [vmem:[%s2316 + $0x18] sm:$0xff]
  %v2792 = vld [vmem:[%s2316 + $0x20] sm:$0xff]
  %v2793 = vld [vmem:[%s2316 + $0x28] sm:$0xff]
  %v2794 = vld [vmem:[%s2316 + $0x30] sm:$0xff]
  %v2795 = vld [vmem:[%s2316 + $0x38] sm:$0xff]
  %2804 = vrot.lane.b32.xlu0 %v2788, 64
  %v2805 = vpop.permute.xlu0 %2804
  %2806 = vrot.lane.b32.xlu0 %v2789, 64
  %v2807 = vpop.permute.xlu0 %2806
  %2808 = vrot.lane.b32.xlu0 %v2790, 64
  %v2809 = vpop.permute.xlu0 %2808
  %2810 = vrot.lane.b32.xlu0 %v2791, 64
  %v2811 = vpop.permute.xlu0 %2810
  %2812 = vrot.lane.b32.xlu0 %v2792, 64
  %v2813 = vpop.permute.xlu0 %2812
  %2814 = vrot.lane.b32.xlu0 %v2793, 64
  %v2815 = vpop.permute.xlu0 %2814
  %2816 = vrot.lane.b32.xlu0 %v2794, 64
  %v2817 = vpop.permute.xlu0 %2816
  %2818 = vrot.lane.b32.xlu0 %v2795, 64
  %v2819 = vpop.permute.xlu0 %2818
  %v2820 = vsel %vm529, %v2805, %v2807
  %v2821 = vsel %vm529, %v2807, %v2809
  %v2822 = vsel %vm529, %v2809, %v2811
  %v2823 = vsel %vm529, %v2811, %v2813
  %v2824 = vsel %vm529, %v2813, %v2815
  %v2825 = vsel %vm529, %v2815, %v2817
  %v2826 = vsel %vm529, %v2817, %v2819
  %2834 = vst [vmem:[#allocation2 + $0x230] sm:$0xff] %v2820
  %2835 = vst [vmem:[#allocation2 + $0x238] sm:$0xff] %v2821
  %2836 = vst [vmem:[#allocation2 + $0x240] sm:$0xff] %v2822
  %2837 = vst [vmem:[#allocation2 + $0x248] sm:$0xff] %v2823
  %2838 = vst [vmem:[#allocation2 + $0x250] sm:$0xff] %v2824
  %2839 = vst [vmem:[#allocation2 + $0x258] sm:$0xff] %v2825
  %2840 = vst.msk [vmem:[#allocation2 + $0x260] sm:$0xff] %vm30, %v2826
  %v2841 = vld [vmem:[%s2316] sm:$0xff]
  %v2842 = vld [vmem:[%s2316 + $0x8] sm:$0xff]
  %v2843 = vld [vmem:[%s2316 + $0x10] sm:$0xff]
  %v2844 = vld [vmem:[%s2316 + $0x18] sm:$0xff]
  %v2845 = vld [vmem:[%s2316 + $0x20] sm:$0xff]
  %v2846 = vld [vmem:[%s2316 + $0x28] sm:$0xff]
  %v2847 = vld [vmem:[%s2316 + $0x30] sm:$0xff]
  %v2848 = vld [vmem:[%s2316 + $0x38] sm:$0xff]
  %2857 = vrot.lane.b32.xlu0 %v2841, 63
  %v2858 = vpop.permute.xlu0 %2857
  %2859 = vrot.lane.b32.xlu0 %v2842, 63
  %v2860 = vpop.permute.xlu0 %2859
  %2861 = vrot.lane.b32.xlu0 %v2843, 63
  %v2862 = vpop.permute.xlu0 %2861
  %2863 = vrot.lane.b32.xlu0 %v2844, 63
  %v2864 = vpop.permute.xlu0 %2863
  %2865 = vrot.lane.b32.xlu0 %v2845, 63
  %v2866 = vpop.permute.xlu0 %2865
  %2867 = vrot.lane.b32.xlu0 %v2846, 63
  %v2868 = vpop.permute.xlu0 %2867
  %2869 = vrot.lane.b32.xlu0 %v2847, 63
  %v2870 = vpop.permute.xlu0 %2869
  %2871 = vrot.lane.b32.xlu0 %v2848, 63
  %v2872 = vpop.permute.xlu0 %2871
  %v2873 = vsel %vm583, %v2858, %v2860
  %v2874 = vsel %vm583, %v2860, %v2862
  %v2875 = vsel %vm583, %v2862, %v2864
  %v2876 = vsel %vm583, %v2864, %v2866
  %v2877 = vsel %vm583, %v2866, %v2868
  %v2878 = vsel %vm583, %v2868, %v2870
  %v2879 = vsel %vm583, %v2870, %v2872
  %2887 = vst [vmem:[#allocation2 + $0x268] sm:$0xff] %v2873
  %2888 = vst [vmem:[#allocation2 + $0x270] sm:$0xff] %v2874
  %2889 = vst [vmem:[#allocation2 + $0x278] sm:$0xff] %v2875
  %2890 = vst [vmem:[#allocation2 + $0x280] sm:$0xff] %v2876
  %2891 = vst [vmem:[#allocation2 + $0x288] sm:$0xff] %v2877
  %2892 = vst [vmem:[#allocation2 + $0x290] sm:$0xff] %v2878
  %2893 = vst.msk [vmem:[#allocation2 + $0x298] sm:$0xff] %vm30, %v2879
  %v2894 = vld [vmem:[%s2316] sm:$0xff]
  %v2895 = vld [vmem:[%s2316 + $0x8] sm:$0xff]
  %v2896 = vld [vmem:[%s2316 + $0x10] sm:$0xff]
  %v2897 = vld [vmem:[%s2316 + $0x18] sm:$0xff]
  %v2898 = vld [vmem:[%s2316 + $0x20] sm:$0xff]
  %v2899 = vld [vmem:[%s2316 + $0x28] sm:$0xff]
  %v2900 = vld [vmem:[%s2316 + $0x30] sm:$0xff]
  %v2901 = vld [vmem:[%s2316 + $0x38] sm:$0xff]
  %2910 = vrot.lane.b32.xlu0 %v2894, 62
  %v2911 = vpop.permute.xlu0 %2910
  %2912 = vrot.lane.b32.xlu0 %v2895, 62
  %v2913 = vpop.permute.xlu0 %2912
  %2914 = vrot.lane.b32.xlu0 %v2896, 62
  %v2915 = vpop.permute.xlu0 %2914
  %2916 = vrot.lane.b32.xlu0 %v2897, 62
  %v2917 = vpop.permute.xlu0 %2916
  %2918 = vrot.lane.b32.xlu0 %v2898, 62
  %v2919 = vpop.permute.xlu0 %2918
  %2920 = vrot.lane.b32.xlu0 %v2899, 62
  %v2921 = vpop.permute.xlu0 %2920
  %2922 = vrot.lane.b32.xlu0 %v2900, 62
  %v2923 = vpop.permute.xlu0 %2922
  %2924 = vrot.lane.b32.xlu0 %v2901, 62
  %v2925 = vpop.permute.xlu0 %2924
  %v2926 = vsel %vm637, %v2911, %v2913
  %v2927 = vsel %vm637, %v2913, %v2915
  %v2928 = vsel %vm637, %v2915, %v2917
  %v2929 = vsel %vm637, %v2917, %v2919
  %v2930 = vsel %vm637, %v2919, %v2921
  %v2931 = vsel %vm637, %v2921, %v2923
  %v2932 = vsel %vm637, %v2923, %v2925
  %2940 = vst [vmem:[#allocation2 + $0x2a0] sm:$0xff] %v2926
  %2941 = vst [vmem:[#allocation2 + $0x2a8] sm:$0xff] %v2927
  %2942 = vst [vmem:[#allocation2 + $0x2b0] sm:$0xff] %v2928
  %2943 = vst [vmem:[#allocation2 + $0x2b8] sm:$0xff] %v2929
  %2944 = vst [vmem:[#allocation2 + $0x2c0] sm:$0xff] %v2930
  %2945 = vst [vmem:[#allocation2 + $0x2c8] sm:$0xff] %v2931
  %2946 = vst.msk [vmem:[#allocation2 + $0x2d0] sm:$0xff] %vm30, %v2932
  %v2947 = vld [vmem:[%s2316] sm:$0xff]
  %v2948 = vld [vmem:[%s2316 + $0x8] sm:$0xff]
  %v2949 = vld [vmem:[%s2316 + $0x10] sm:$0xff]
  %v2950 = vld [vmem:[%s2316 + $0x18] sm:$0xff]
  %v2951 = vld [vmem:[%s2316 + $0x20] sm:$0xff]
  %v2952 = vld [vmem:[%s2316 + $0x28] sm:$0xff]
  %v2953 = vld [vmem:[%s2316 + $0x30] sm:$0xff]
  %v2954 = vld [vmem:[%s2316 + $0x38] sm:$0xff]
  %2963 = vrot.lane.b32.xlu0 %v2947, 61
  %v2964 = vpop.permute.xlu0 %2963
  %2965 = vrot.lane.b32.xlu0 %v2948, 61
  %v2966 = vpop.permute.xlu0 %2965
  %2967 = vrot.lane.b32.xlu0 %v2949, 61
  %v2968 = vpop.permute.xlu0 %2967
  %2969 = vrot.lane.b32.xlu0 %v2950, 61
  %v2970 = vpop.permute.xlu0 %2969
  %2971 = vrot.lane.b32.xlu0 %v2951, 61
  %v2972 = vpop.permute.xlu0 %2971
  %2973 = vrot.lane.b32.xlu0 %v2952, 61
  %v2974 = vpop.permute.xlu0 %2973
  %2975 = vrot.lane.b32.xlu0 %v2953, 61
  %v2976 = vpop.permute.xlu0 %2975
  %2977 = vrot.lane.b32.xlu0 %v2954, 61
  %v2978 = vpop.permute.xlu0 %2977
  %v2979 = vsel %vm691, %v2964, %v2966
  %v2980 = vsel %vm691, %v2966, %v2968
  %v2981 = vsel %vm691, %v2968, %v2970
  %v2982 = vsel %vm691, %v2970, %v2972
  %v2983 = vsel %vm691, %v2972, %v2974
  %v2984 = vsel %vm691, %v2974, %v2976
  %v2985 = vsel %vm691, %v2976, %v2978
  %2993 = vst [vmem:[#allocation2 + $0x2d8] sm:$0xff] %v2979
  %2994 = vst [vmem:[#allocation2 + $0x2e0] sm:$0xff] %v2980
  %2995 = vst [vmem:[#allocation2 + $0x2e8] sm:$0xff] %v2981
  %2996 = vst [vmem:[#allocation2 + $0x2f0] sm:$0xff] %v2982
  %2997 = vst [vmem:[#allocation2 + $0x2f8] sm:$0xff] %v2983
  %2998 = vst [vmem:[#allocation2 + $0x300] sm:$0xff] %v2984
  %2999 = vst.msk [vmem:[#allocation2 + $0x308] sm:$0xff] %vm30, %v2985
  %v3000 = vld [vmem:[%s2316] sm:$0xff]
  %v3001 = vld [vmem:[%s2316 + $0x8] sm:$0xff]
  %v3002 = vld [vmem:[%s2316 + $0x10] sm:$0xff]
  %v3003 = vld [vmem:[%s2316 + $0x18] sm:$0xff]
  %v3004 = vld [vmem:[%s2316 + $0x20] sm:$0xff]
  %v3005 = vld [vmem:[%s2316 + $0x28] sm:$0xff]
  %v3006 = vld [vmem:[%s2316 + $0x30] sm:$0xff]
  %v3007 = vld [vmem:[%s2316 + $0x38] sm:$0xff]
  %3016 = vrot.lane.b32.xlu0 %v3000, 60
  %v3017 = vpop.permute.xlu0 %3016
  %3018 = vrot.lane.b32.xlu0 %v3001, 60
  %v3019 = vpop.permute.xlu0 %3018
  %3020 = vrot.lane.b32.xlu0 %v3002, 60
  %v3021 = vpop.permute.xlu0 %3020
  %3022 = vrot.lane.b32.xlu0 %v3003, 60
  %v3023 = vpop.permute.xlu0 %3022
  %3024 = vrot.lane.b32.xlu0 %v3004, 60
  %v3025 = vpop.permute.xlu0 %3024
  %3026 = vrot.lane.b32.xlu0 %v3005, 60
  %v3027 = vpop.permute.xlu0 %3026
  %3028 = vrot.lane.b32.xlu0 %v3006, 60
  %v3029 = vpop.permute.xlu0 %3028
  %3030 = vrot.lane.b32.xlu0 %v3007, 60
  %v3031 = vpop.permute.xlu0 %3030
  %v3032 = vsel %vm745, %v3017, %v3019
  %v3033 = vsel %vm745, %v3019, %v3021
  %v3034 = vsel %vm745, %v3021, %v3023
  %v3035 = vsel %vm745, %v3023, %v3025
  %v3036 = vsel %vm745, %v3025, %v3027
  %v3037 = vsel %vm745, %v3027, %v3029
  %v3038 = vsel %vm745, %v3029, %v3031
  %3046 = vst [vmem:[#allocation2 + $0x310] sm:$0xff] %v3032
  %3047 = vst [vmem:[#allocation2 + $0x318] sm:$0xff] %v3033
  %3048 = vst [vmem:[#allocation2 + $0x320] sm:$0xff] %v3034
  %3049 = vst [vmem:[#allocation2 + $0x328] sm:$0xff] %v3035
  %3050 = vst [vmem:[#allocation2 + $0x330] sm:$0xff] %v3036
  %3051 = vst [vmem:[#allocation2 + $0x338] sm:$0xff] %v3037
  %3052 = vst.msk [vmem:[#allocation2 + $0x340] sm:$0xff] %vm30, %v3038
  %v3053 = vld [vmem:[%s2316] sm:$0xff]
  %v3054 = vld [vmem:[%s2316 + $0x8] sm:$0xff]
  %v3055 = vld [vmem:[%s2316 + $0x10] sm:$0xff]
  %v3056 = vld [vmem:[%s2316 + $0x18] sm:$0xff]
  %v3057 = vld [vmem:[%s2316 + $0x20] sm:$0xff]
  %v3058 = vld [vmem:[%s2316 + $0x28] sm:$0xff]
  %v3059 = vld [vmem:[%s2316 + $0x30] sm:$0xff]
  %v3060 = vld [vmem:[%s2316 + $0x38] sm:$0xff]
  %3069 = vrot.lane.b32.xlu0 %v3053, 32
  %v3070 = vpop.permute.xlu0 %3069
  %3071 = vrot.lane.b32.xlu0 %v3054, 32
  %v3072 = vpop.permute.xlu0 %3071
  %3073 = vrot.lane.b32.xlu0 %v3055, 32
  %v3074 = vpop.permute.xlu0 %3073
  %3075 = vrot.lane.b32.xlu0 %v3056, 32
  %v3076 = vpop.permute.xlu0 %3075
  %3077 = vrot.lane.b32.xlu0 %v3057, 32
  %v3078 = vpop.permute.xlu0 %3077
  %3079 = vrot.lane.b32.xlu0 %v3058, 32
  %v3080 = vpop.permute.xlu0 %3079
  %3081 = vrot.lane.b32.xlu0 %v3059, 32
  %v3082 = vpop.permute.xlu0 %3081
  %3083 = vrot.lane.b32.xlu0 %v3060, 32
  %v3084 = vpop.permute.xlu0 %3083
  %v3085 = vsel %vm799, %v3070, %v3072
  %v3086 = vsel %vm799, %v3072, %v3074
  %v3087 = vsel %vm799, %v3074, %v3076
  %v3088 = vsel %vm799, %v3076, %v3078
  %v3089 = vsel %vm799, %v3078, %v3080
  %v3090 = vsel %vm799, %v3080, %v3082
  %v3091 = vsel %vm799, %v3082, %v3084
  %3099 = vst [vmem:[#allocation2 + $0x348] sm:$0xff] %v3085
  %3100 = vst [vmem:[#allocation2 + $0x350] sm:$0xff] %v3086
  %3101 = vst [vmem:[#allocation2 + $0x358] sm:$0xff] %v3087
  %3102 = vst [vmem:[#allocation2 + $0x360] sm:$0xff] %v3088
  %3103 = vst [vmem:[#allocation2 + $0x368] sm:$0xff] %v3089
  %3104 = vst [vmem:[#allocation2 + $0x370] sm:$0xff] %v3090
  %3105 = vst.msk [vmem:[#allocation2 + $0x378] sm:$0xff] %vm30, %v3091
  %v3106 = vld [vmem:[%s2316] sm:$0xff]
  %v3107 = vld [vmem:[%s2316 + $0x8] sm:$0xff]
  %v3108 = vld [vmem:[%s2316 + $0x10] sm:$0xff]
  %v3109 = vld [vmem:[%s2316 + $0x18] sm:$0xff]
  %v3110 = vld [vmem:[%s2316 + $0x20] sm:$0xff]
  %v3111 = vld [vmem:[%s2316 + $0x28] sm:$0xff]
  %v3112 = vld [vmem:[%s2316 + $0x30] sm:$0xff]
  %v3113 = vld [vmem:[%s2316 + $0x38] sm:$0xff]
  %3122 = vrot.lane.b32.xlu0 %v3106, 31
  %v3123 = vpop.permute.xlu0 %3122
  %3124 = vrot.lane.b32.xlu0 %v3107, 31
  %v3125 = vpop.permute.xlu0 %3124
  %3126 = vrot.lane.b32.xlu0 %v3108, 31
  %v3127 = vpop.permute.xlu0 %3126
  %3128 = vrot.lane.b32.xlu0 %v3109, 31
  %v3129 = vpop.permute.xlu0 %3128
  %3130 = vrot.lane.b32.xlu0 %v3110, 31
  %v3131 = vpop.permute.xlu0 %3130
  %3132 = vrot.lane.b32.xlu0 %v3111, 31
  %v3133 = vpop.permute.xlu0 %3132
  %3134 = vrot.lane.b32.xlu0 %v3112, 31
  %v3135 = vpop.permute.xlu0 %3134
  %3136 = vrot.lane.b32.xlu0 %v3113, 31
  %v3137 = vpop.permute.xlu0 %3136
  %v3138 = vsel %vm853, %v3123, %v3125
  %v3139 = vsel %vm853, %v3125, %v3127
  %v3140 = vsel %vm853, %v3127, %v3129
  %v3141 = vsel %vm853, %v3129, %v3131
  %v3142 = vsel %vm853, %v3131, %v3133
  %v3143 = vsel %vm853, %v3133, %v3135
  %v3144 = vsel %vm853, %v3135, %v3137
  %3152 = vst [vmem:[#allocation2 + $0x380] sm:$0xff] %v3138
  %3153 = vst [vmem:[#allocation2 + $0x388] sm:$0xff] %v3139
  %3154 = vst [vmem:[#allocation2 + $0x390] sm:$0xff] %v3140
  %3155 = vst [vmem:[#allocation2 + $0x398] sm:$0xff] %v3141
  %3156 = vst [vmem:[#allocation2 + $0x3a0] sm:$0xff] %v3142
  %3157 = vst [vmem:[#allocation2 + $0x3a8] sm:$0xff] %v3143
  %3158 = vst.msk [vmem:[#allocation2 + $0x3b0] sm:$0xff] %vm30, %v3144
  %v3159 = vld [vmem:[%s2316] sm:$0xff]
  %v3160 = vld [vmem:[%s2316 + $0x8] sm:$0xff]
  %v3161 = vld [vmem:[%s2316 + $0x10] sm:$0xff]
  %v3162 = vld [vmem:[%s2316 + $0x18] sm:$0xff]
  %v3163 = vld [vmem:[%s2316 + $0x20] sm:$0xff]
  %v3164 = vld [vmem:[%s2316 + $0x28] sm:$0xff]
  %v3165 = vld [vmem:[%s2316 + $0x30] sm:$0xff]
  %v3166 = vld [vmem:[%s2316 + $0x38] sm:$0xff]
  %3175 = vrot.lane.b32.xlu0 %v3159, 30
  %v3176 = vpop.permute.xlu0 %3175
  %3177 = vrot.lane.b32.xlu0 %v3160, 30
  %v3178 = vpop.permute.xlu0 %3177
  %3179 = vrot.lane.b32.xlu0 %v3161, 30
  %v3180 = vpop.permute.xlu0 %3179
  %3181 = vrot.lane.b32.xlu0 %v3162, 30
  %v3182 = vpop.permute.xlu0 %3181
  %3183 = vrot.lane.b32.xlu0 %v3163, 30
  %v3184 = vpop.permute.xlu0 %3183
  %3185 = vrot.lane.b32.xlu0 %v3164, 30
  %v3186 = vpop.permute.xlu0 %3185
  %3187 = vrot.lane.b32.xlu0 %v3165, 30
  %v3188 = vpop.permute.xlu0 %3187
  %3189 = vrot.lane.b32.xlu0 %v3166, 30
  %v3190 = vpop.permute.xlu0 %3189
  %v3191 = vsel %vm907, %v3176, %v3178
  %v3192 = vsel %vm907, %v3178, %v3180
  %v3193 = vsel %vm907, %v3180, %v3182
  %v3194 = vsel %vm907, %v3182, %v3184
  %v3195 = vsel %vm907, %v3184, %v3186
  %v3196 = vsel %vm907, %v3186, %v3188
  %v3197 = vsel %vm907, %v3188, %v3190
  %3205 = vst [vmem:[#allocation2 + $0x3b8] sm:$0xff] %v3191
  %3206 = vst [vmem:[#allocation2 + $0x3c0] sm:$0xff] %v3192
  %3207 = vst [vmem:[#allocation2 + $0x3c8] sm:$0xff] %v3193
  %3208 = vst [vmem:[#allocation2 + $0x3d0] sm:$0xff] %v3194
  %3209 = vst [vmem:[#allocation2 + $0x3d8] sm:$0xff] %v3195
  %3210 = vst [vmem:[#allocation2 + $0x3e0] sm:$0xff] %v3196
  %3211 = vst.msk [vmem:[#allocation2 + $0x3e8] sm:$0xff] %vm30, %v3197
  %v3212 = vld [vmem:[%s2316] sm:$0xff]
  %v3213 = vld [vmem:[%s2316 + $0x8] sm:$0xff]
  %v3214 = vld [vmem:[%s2316 + $0x10] sm:$0xff]
  %v3215 = vld [vmem:[%s2316 + $0x18] sm:$0xff]
  %v3216 = vld [vmem:[%s2316 + $0x20] sm:$0xff]
  %v3217 = vld [vmem:[%s2316 + $0x28] sm:$0xff]
  %v3218 = vld [vmem:[%s2316 + $0x30] sm:$0xff]
  %v3219 = vld [vmem:[%s2316 + $0x38] sm:$0xff]
  %3228 = vrot.lane.b32.xlu0 %v3212, 29
  %v3229 = vpop.permute.xlu0 %3228
  %3230 = vrot.lane.b32.xlu0 %v3213, 29
  %v3231 = vpop.permute.xlu0 %3230
  %3232 = vrot.lane.b32.xlu0 %v3214, 29
  %v3233 = vpop.permute.xlu0 %3232
  %3234 = vrot.lane.b32.xlu0 %v3215, 29
  %v3235 = vpop.permute.xlu0 %3234
  %3236 = vrot.lane.b32.xlu0 %v3216, 29
  %v3237 = vpop.permute.xlu0 %3236
  %3238 = vrot.lane.b32.xlu0 %v3217, 29
  %v3239 = vpop.permute.xlu0 %3238
  %3240 = vrot.lane.b32.xlu0 %v3218, 29
  %v3241 = vpop.permute.xlu0 %3240
  %3242 = vrot.lane.b32.xlu0 %v3219, 29
  %v3243 = vpop.permute.xlu0 %3242
  %v3244 = vsel %vm961, %v3229, %v3231
  %v3245 = vsel %vm961, %v3231, %v3233
  %v3246 = vsel %vm961, %v3233, %v3235
  %v3247 = vsel %vm961, %v3235, %v3237
  %v3248 = vsel %vm961, %v3237, %v3239
  %v3249 = vsel %vm961, %v3239, %v3241
  %v3250 = vsel %vm961, %v3241, %v3243
  %3258 = vst [vmem:[#allocation2 + $0x3f0] sm:$0xff] %v3244
  %3259 = vst [vmem:[#allocation2 + $0x3f8] sm:$0xff] %v3245
  %3260 = vst [vmem:[#allocation2 + $0x400] sm:$0xff] %v3246
  %3261 = vst [vmem:[#allocation2 + $0x408] sm:$0xff] %v3247
  %3262 = vst [vmem:[#allocation2 + $0x410] sm:$0xff] %v3248
  %3263 = vst [vmem:[#allocation2 + $0x418] sm:$0xff] %v3249
  %3264 = vst.msk [vmem:[#allocation2 + $0x420] sm:$0xff] %vm30, %v3250
  %v3265 = vld [vmem:[%s2316] sm:$0xff]
  %v3266 = vld [vmem:[%s2316 + $0x8] sm:$0xff]
  %v3267 = vld [vmem:[%s2316 + $0x10] sm:$0xff]
  %v3268 = vld [vmem:[%s2316 + $0x18] sm:$0xff]
  %v3269 = vld [vmem:[%s2316 + $0x20] sm:$0xff]
  %v3270 = vld [vmem:[%s2316 + $0x28] sm:$0xff]
  %v3271 = vld [vmem:[%s2316 + $0x30] sm:$0xff]
  %v3272 = vld [vmem:[%s2316 + $0x38] sm:$0xff]
  %3281 = vrot.lane.b32.xlu0 %v3265, 28
  %v3282 = vpop.permute.xlu0 %3281
  %3283 = vrot.lane.b32.xlu0 %v3266, 28
  %v3284 = vpop.permute.xlu0 %3283
  %3285 = vrot.lane.b32.xlu0 %v3267, 28
  %v3286 = vpop.permute.xlu0 %3285
  %3287 = vrot.lane.b32.xlu0 %v3268, 28
  %v3288 = vpop.permute.xlu0 %3287
  %3289 = vrot.lane.b32.xlu0 %v3269, 28
  %v3290 = vpop.permute.xlu0 %3289
  %3291 = vrot.lane.b32.xlu0 %v3270, 28
  %v3292 = vpop.permute.xlu0 %3291
  %3293 = vrot.lane.b32.xlu0 %v3271, 28
  %v3294 = vpop.permute.xlu0 %3293
  %3295 = vrot.lane.b32.xlu0 %v3272, 28
  %v3296 = vpop.permute.xlu0 %3295
  %v3297 = vsel %vm1015, %v3282, %v3284
  %v3298 = vsel %vm1015, %v3284, %v3286
  %v3299 = vsel %vm1015, %v3286, %v3288
  %v3300 = vsel %vm1015, %v3288, %v3290
  %v3301 = vsel %vm1015, %v3290, %v3292
  %v3302 = vsel %vm1015, %v3292, %v3294
  %v3303 = vsel %vm1015, %v3294, %v3296
  %3311 = vst [vmem:[#allocation2 + $0x428] sm:$0xff] %v3297
  %3312 = vst [vmem:[#allocation2 + $0x430] sm:$0xff] %v3298
  %3313 = vst [vmem:[#allocation2 + $0x438] sm:$0xff] %v3299
  %3314 = vst [vmem:[#allocation2 + $0x440] sm:$0xff] %v3300
  %3315 = vst [vmem:[#allocation2 + $0x448] sm:$0xff] %v3301
  %3316 = vst [vmem:[#allocation2 + $0x450] sm:$0xff] %v3302
  %3317 = vst.msk [vmem:[#allocation2 + $0x458] sm:$0xff] %vm30, %v3303
  %v3318 = vld [vmem:[%s2316 + $0x8] sm:$0xff]
  %v3319 = vld [vmem:[%s2316 + $0x10] sm:$0xff]
  %v3320 = vld [vmem:[%s2316 + $0x18] sm:$0xff]
  %v3321 = vld [vmem:[%s2316 + $0x20] sm:$0xff]
  %v3322 = vld [vmem:[%s2316 + $0x28] sm:$0xff]
  %v3323 = vld [vmem:[%s2316 + $0x30] sm:$0xff]
  %v3324 = vld [vmem:[%s2316 + $0x38] sm:$0xff]
  %3325 = vst [vmem:[#allocation2 + $0x460] sm:$0xff] %v3318
  %3326 = vst [vmem:[#allocation2 + $0x468] sm:$0xff] %v3319
  %3327 = vst [vmem:[#allocation2 + $0x470] sm:$0xff] %v3320
  %3328 = vst [vmem:[#allocation2 + $0x478] sm:$0xff] %v3321
  %3329 = vst [vmem:[#allocation2 + $0x480] sm:$0xff] %v3322
  %3330 = vst [vmem:[#allocation2 + $0x488] sm:$0xff] %v3323
  %3331 = vst.msk [vmem:[#allocation2 + $0x490] sm:$0xff] %vm30, %v3324
  %v3332 = vld [vmem:[%s2316 + $0x8] sm:$0xff]
  %v3333 = vld [vmem:[%s2316 + $0x10] sm:$0xff]
  %v3334 = vld [vmem:[%s2316 + $0x18] sm:$0xff]
  %v3335 = vld [vmem:[%s2316 + $0x20] sm:$0xff]
  %v3336 = vld [vmem:[%s2316 + $0x28] sm:$0xff]
  %v3337 = vld [vmem:[%s2316 + $0x30] sm:$0xff]
  %v3338 = vld [vmem:[%s2316 + $0x38] sm:$0xff]
  %3346 = vrot.lane.b32.xlu0 %v3332, 127
  %v3347 = vpop.permute.xlu0 %3346
  %3348 = vrot.lane.b32.xlu0 %v3333, 127
  %v3349 = vpop.permute.xlu0 %3348
  %3350 = vrot.lane.b32.xlu0 %v3334, 127
  %v3351 = vpop.permute.xlu0 %3350
  %3352 = vrot.lane.b32.xlu0 %v3335, 127
  %v3353 = vpop.permute.xlu0 %3352
  %3354 = vrot.lane.b32.xlu0 %v3336, 127
  %v3355 = vpop.permute.xlu0 %3354
  %3356 = vrot.lane.b32.xlu0 %v3337, 127
  %v3357 = vpop.permute.xlu0 %3356
  %3358 = vrot.lane.b32.xlu0 %v3338, 127
  %v3359 = vpop.permute.xlu0 %3358
  %v3360 = vsel %vm60, %v3347, %v3349
  %v3361 = vsel %vm60, %v3349, %v3351
  %v3362 = vsel %vm60, %v3351, %v3353
  %v3363 = vsel %vm60, %v3353, %v3355
  %v3364 = vsel %vm60, %v3355, %v3357
  %v3365 = vsel %vm60, %v3357, %v3359
  %3373 = vst [vmem:[#allocation2 + $0x498] sm:$0xff] %v3360
  %3374 = vst [vmem:[#allocation2 + $0x4a0] sm:$0xff] %v3361
  %3375 = vst [vmem:[#allocation2 + $0x4a8] sm:$0xff] %v3362
  %3376 = vst [vmem:[#allocation2 + $0x4b0] sm:$0xff] %v3363
  %3377 = vst [vmem:[#allocation2 + $0x4b8] sm:$0xff] %v3364
  %3378 = vst [vmem:[#allocation2 + $0x4c0] sm:$0xff] %v3365
  %3379 = vst.msk [vmem:[#allocation2 + $0x4c8] sm:$0xff] %vm30, %v3359
  %v3380 = vld [vmem:[%s2316 + $0x8] sm:$0xff]
  %v3381 = vld [vmem:[%s2316 + $0x10] sm:$0xff]
  %v3382 = vld [vmem:[%s2316 + $0x18] sm:$0xff]
  %v3383 = vld [vmem:[%s2316 + $0x20] sm:$0xff]
  %v3384 = vld [vmem:[%s2316 + $0x28] sm:$0xff]
  %v3385 = vld [vmem:[%s2316 + $0x30] sm:$0xff]
  %v3386 = vld [vmem:[%s2316 + $0x38] sm:$0xff]
  %3394 = vrot.lane.b32.xlu0 %v3380, 126
  %v3395 = vpop.permute.xlu0 %3394
  %3396 = vrot.lane.b32.xlu0 %v3381, 126
  %v3397 = vpop.permute.xlu0 %3396
  %3398 = vrot.lane.b32.xlu0 %v3382, 126
  %v3399 = vpop.permute.xlu0 %3398
  %3400 = vrot.lane.b32.xlu0 %v3383, 126
  %v3401 = vpop.permute.xlu0 %3400
  %3402 = vrot.lane.b32.xlu0 %v3384, 126
  %v3403 = vpop.permute.xlu0 %3402
  %3404 = vrot.lane.b32.xlu0 %v3385, 126
  %v3405 = vpop.permute.xlu0 %3404
  %3406 = vrot.lane.b32.xlu0 %v3386, 126
  %v3407 = vpop.permute.xlu0 %3406
  %v3408 = vsel %vm109, %v3395, %v3397
  %v3409 = vsel %vm109, %v3397, %v3399
  %v3410 = vsel %vm109, %v3399, %v3401
  %v3411 = vsel %vm109, %v3401, %v3403
  %v3412 = vsel %vm109, %v3403, %v3405
  %v3413 = vsel %vm109, %v3405, %v3407
  %3421 = vst [vmem:[#allocation2 + $0x4d0] sm:$0xff] %v3408
  %3422 = vst [vmem:[#allocation2 + $0x4d8] sm:$0xff] %v3409
  %3423 = vst [vmem:[#allocation2 + $0x4e0] sm:$0xff] %v3410
  %3424 = vst [vmem:[#allocation2 + $0x4e8] sm:$0xff] %v3411
  %3425 = vst [vmem:[#allocation2 + $0x4f0] sm:$0xff] %v3412
  %3426 = vst [vmem:[#allocation2 + $0x4f8] sm:$0xff] %v3413
  %3427 = vst.msk [vmem:[#allocation2 + $0x500] sm:$0xff] %vm30, %v3407
  %v3428 = vld [vmem:[%s2316 + $0x8] sm:$0xff]
  %v3429 = vld [vmem:[%s2316 + $0x10] sm:$0xff]
  %v3430 = vld [vmem:[%s2316 + $0x18] sm:$0xff]
  %v3431 = vld [vmem:[%s2316 + $0x20] sm:$0xff]
  %v3432 = vld [vmem:[%s2316 + $0x28] sm:$0xff]
  %v3433 = vld [vmem:[%s2316 + $0x30] sm:$0xff]
  %v3434 = vld [vmem:[%s2316 + $0x38] sm:$0xff]
  %3442 = vrot.lane.b32.xlu0 %v3428, 125
  %v3443 = vpop.permute.xlu0 %3442
  %3444 = vrot.lane.b32.xlu0 %v3429, 125
  %v3445 = vpop.permute.xlu0 %3444
  %3446 = vrot.lane.b32.xlu0 %v3430, 125
  %v3447 = vpop.permute.xlu0 %3446
  %3448 = vrot.lane.b32.xlu0 %v3431, 125
  %v3449 = vpop.permute.xlu0 %3448
  %3450 = vrot.lane.b32.xlu0 %v3432, 125
  %v3451 = vpop.permute.xlu0 %3450
  %3452 = vrot.lane.b32.xlu0 %v3433, 125
  %v3453 = vpop.permute.xlu0 %3452
  %3454 = vrot.lane.b32.xlu0 %v3434, 125
  %v3455 = vpop.permute.xlu0 %3454
  %v3456 = vsel %vm158, %v3443, %v3445
  %v3457 = vsel %vm158, %v3445, %v3447
  %v3458 = vsel %vm158, %v3447, %v3449
  %v3459 = vsel %vm158, %v3449, %v3451
  %v3460 = vsel %vm158, %v3451, %v3453
  %v3461 = vsel %vm158, %v3453, %v3455
  %3469 = vst [vmem:[#allocation2 + $0x508] sm:$0xff] %v3456
  %3470 = vst [vmem:[#allocation2 + $0x510] sm:$0xff] %v3457
  %3471 = vst [vmem:[#allocation2 + $0x518] sm:$0xff] %v3458
  %3472 = vst [vmem:[#allocation2 + $0x520] sm:$0xff] %v3459
  %3473 = vst [vmem:[#allocation2 + $0x528] sm:$0xff] %v3460
  %3474 = vst [vmem:[#allocation2 + $0x530] sm:$0xff] %v3461
  %3475 = vst.msk [vmem:[#allocation2 + $0x538] sm:$0xff] %vm30, %v3455
  %v3476 = vld [vmem:[%s2316 + $0x8] sm:$0xff]
  %v3477 = vld [vmem:[%s2316 + $0x10] sm:$0xff]
  %v3478 = vld [vmem:[%s2316 + $0x18] sm:$0xff]
  %v3479 = vld [vmem:[%s2316 + $0x20] sm:$0xff]
  %v3480 = vld [vmem:[%s2316 + $0x28] sm:$0xff]
  %v3481 = vld [vmem:[%s2316 + $0x30] sm:$0xff]
  %v3482 = vld [vmem:[%s2316 + $0x38] sm:$0xff]
  %3490 = vrot.lane.b32.xlu0 %v3476, 124
  %v3491 = vpop.permute.xlu0 %3490
  %3492 = vrot.lane.b32.xlu0 %v3477, 124
  %v3493 = vpop.permute.xlu0 %3492
  %3494 = vrot.lane.b32.xlu0 %v3478, 124
  %v3495 = vpop.permute.xlu0 %3494
  %3496 = vrot.lane.b32.xlu0 %v3479, 124
  %v3497 = vpop.permute.xlu0 %3496
  %3498 = vrot.lane.b32.xlu0 %v3480, 124
  %v3499 = vpop.permute.xlu0 %3498
  %3500 = vrot.lane.b32.xlu0 %v3481, 124
  %v3501 = vpop.permute.xlu0 %3500
  %3502 = vrot.lane.b32.xlu0 %v3482, 124
  %v3503 = vpop.permute.xlu0 %3502
  %v3504 = vsel %vm30, %v3491, %v3493
  %v3505 = vsel %vm30, %v3493, %v3495
  %v3506 = vsel %vm30, %v3495, %v3497
  %v3507 = vsel %vm30, %v3497, %v3499
  %v3508 = vsel %vm30, %v3499, %v3501
  %v3509 = vsel %vm30, %v3501, %v3503
  %3517 = vst [vmem:[#allocation2 + $0x540] sm:$0xff] %v3504
  %3518 = vst [vmem:[#allocation2 + $0x548] sm:$0xff] %v3505
  %3519 = vst [vmem:[#allocation2 + $0x550] sm:$0xff] %v3506
  %3520 = vst [vmem:[#allocation2 + $0x558] sm:$0xff] %v3507
  %3521 = vst [vmem:[#allocation2 + $0x560] sm:$0xff] %v3508
  %3522 = vst [vmem:[#allocation2 + $0x568] sm:$0xff] %v3509
  %3523 = vst.msk [vmem:[#allocation2 + $0x570] sm:$0xff] %vm30, %v3503
  %v3524 = vld [vmem:[%s1] sm:$0xff]
  %v3525 = vld [vmem:[%s1 + $0x8] sm:$0xff]
  %v3526 = vld [vmem:[#allocation2] sm:$0xff]
  %v3527 = vld [vmem:[#allocation2 + $0x8] sm:$0xff]
  %v3528 = vld [vmem:[#allocation2 + $0x10] sm:$0xff]
  %v3529 = vld [vmem:[#allocation2 + $0x18] sm:$0xff]
  %v3530 = vld [vmem:[#allocation2 + $0x20] sm:$0xff]
  %v3531 = vld [vmem:[#allocation2 + $0x28] sm:$0xff]
  %v3532 = vld [vmem:[#allocation2 + $0x30] sm:$0xff]
  %v3533 = vld [vmem:[#allocation2 + $0x38] sm:$0xff]
  %v3534 = vld [vmem:[#allocation2 + $0x40] sm:$0xff]
  %v3535 = vld [vmem:[#allocation2 + $0x48] sm:$0xff]
  %v3536 = vld [vmem:[#allocation2 + $0x50] sm:$0xff]
  %v3537 = vld [vmem:[#allocation2 + $0x58] sm:$0xff]
  %v3538 = vld [vmem:[#allocation2 + $0x60] sm:$0xff]
  %v3539 = vld [vmem:[#allocation2 + $0x68] sm:$0xff]
  %v3540 = vld [vmem:[#allocation2 + $0x70] sm:$0xff]
  %v3541 = vld [vmem:[#allocation2 + $0x78] sm:$0xff]
  %v3542 = vld [vmem:[#allocation2 + $0x80] sm:$0xff]
  %v3543 = vld [vmem:[#allocation2 + $0x88] sm:$0xff]
  %v3544 = vld [vmem:[#allocation2 + $0x90] sm:$0xff]
  %v3545 = vld [vmem:[#allocation2 + $0x98] sm:$0xff]
  %v3546 = vld [vmem:[#allocation2 + $0xa0] sm:$0xff]
  %v3547 = vld [vmem:[#allocation2 + $0xa8] sm:$0xff]
  %v3548 = vld [vmem:[#allocation2 + $0xb0] sm:$0xff]
  %v3549 = vld [vmem:[#allocation2 + $0xb8] sm:$0xff]
  %v3550 = vld [vmem:[#allocation2 + $0xc0] sm:$0xff]
  %v3551 = vld [vmem:[#allocation2 + $0xc8] sm:$0xff]
  %v3552 = vld [vmem:[#allocation2 + $0xd0] sm:$0xff]
  %v3553 = vld [vmem:[#allocation2 + $0xd8] sm:$0xff]
  %v3554 = vld [vmem:[#allocation2 + $0xe0] sm:$0xff]
  %v3555 = vld [vmem:[#allocation2 + $0xe8] sm:$0xff]
  %v3556 = vld [vmem:[#allocation2 + $0xf0] sm:$0xff]
  %v3557 = vld [vmem:[#allocation2 + $0xf8] sm:$0xff]
  %v3558 = vld [vmem:[#allocation2 + $0x100] sm:$0xff]
  %v3559 = vld [vmem:[#allocation2 + $0x108] sm:$0xff]
  %v3560 = vld [vmem:[#allocation2 + $0x110] sm:$0xff]
  %v3561 = vld [vmem:[#allocation2 + $0x118] sm:$0xff]
  %v3562 = vld [vmem:[#allocation2 + $0x120] sm:$0xff]
  %v3563 = vld [vmem:[#allocation2 + $0x128] sm:$0xff]
  %v3564 = vld [vmem:[#allocation2 + $0x130] sm:$0xff]
  %v3565 = vld [vmem:[#allocation2 + $0x138] sm:$0xff]
  %v3566 = vld [vmem:[#allocation2 + $0x140] sm:$0xff]
  %v3567 = vld [vmem:[#allocation2 + $0x148] sm:$0xff]
  %v3568 = vld [vmem:[#allocation2 + $0x150] sm:$0xff]
  %v3569 = vld [vmem:[#allocation2 + $0x158] sm:$0xff]
  %v3570 = vld [vmem:[#allocation2 + $0x160] sm:$0xff]
  %v3571 = vld [vmem:[#allocation2 + $0x168] sm:$0xff]
  %v3572 = vld [vmem:[#allocation2 + $0x170] sm:$0xff]
  %v3573 = vld [vmem:[#allocation2 + $0x178] sm:$0xff]
  %v3574 = vld [vmem:[#allocation2 + $0x180] sm:$0xff]
  %v3575 = vld [vmem:[#allocation2 + $0x188] sm:$0xff]
  %v3576 = vld [vmem:[#allocation2 + $0x190] sm:$0xff]
  %v3577 = vld [vmem:[#allocation2 + $0x198] sm:$0xff]
  %v3578 = vld [vmem:[#allocation2 + $0x1a0] sm:$0xff]
  %v3579 = vld [vmem:[#allocation2 + $0x1a8] sm:$0xff]
  %v3580 = vld [vmem:[#allocation2 + $0x1b0] sm:$0xff]
  %v3581 = vld [vmem:[#allocation2 + $0x1b8] sm:$0xff]
  %v3582 = vld [vmem:[#allocation2 + $0x1c0] sm:$0xff]
  %v3583 = vld [vmem:[#allocation2 + $0x1c8] sm:$0xff]
  %v3584 = vld [vmem:[#allocation2 + $0x1d0] sm:$0xff]
  %v3585 = vld [vmem:[#allocation2 + $0x1d8] sm:$0xff]
  %v3586 = vld [vmem:[#allocation2 + $0x1e0] sm:$0xff]
  %v3587 = vld [vmem:[#allocation2 + $0x1e8] sm:$0xff]
  %v3588 = vld [vmem:[#allocation2 + $0x1f0] sm:$0xff]
  %v3589 = vld [vmem:[#allocation2 + $0x1f8] sm:$0xff]
  %v3590 = vld [vmem:[#allocation2 + $0x200] sm:$0xff]
  %v3591 = vld [vmem:[#allocation2 + $0x208] sm:$0xff]
  %v3592 = vld [vmem:[#allocation2 + $0x210] sm:$0xff]
  %v3593 = vld [vmem:[#allocation2 + $0x218] sm:$0xff]
  %v3594 = vld [vmem:[#allocation2 + $0x220] sm:$0xff]
  %v3595 = vld [vmem:[#allocation2 + $0x228] sm:$0xff]
  %v3596 = vld [vmem:[#allocation2 + $0x230] sm:$0xff]
  %v3597 = vld [vmem:[#allocation2 + $0x238] sm:$0xff]
  %v3598 = vld [vmem:[#allocation2 + $0x240] sm:$0xff]
  %v3599 = vld [vmem:[#allocation2 + $0x248] sm:$0xff]
  %v3600 = vld [vmem:[#allocation2 + $0x250] sm:$0xff]
  %v3601 = vld [vmem:[#allocation2 + $0x258] sm:$0xff]
  %v3602 = vld [vmem:[#allocation2 + $0x260] sm:$0xff]
  %v3603 = vld [vmem:[#allocation2 + $0x268] sm:$0xff]
  %v3604 = vld [vmem:[#allocation2 + $0x270] sm:$0xff]
  %v3605 = vld [vmem:[#allocation2 + $0x278] sm:$0xff]
  %v3606 = vld [vmem:[#allocation2 + $0x280] sm:$0xff]
  %v3607 = vld [vmem:[#allocation2 + $0x288] sm:$0xff]
  %v3608 = vld [vmem:[#allocation2 + $0x290] sm:$0xff]
  %v3609 = vld [vmem:[#allocation2 + $0x298] sm:$0xff]
  %v3610 = vld [vmem:[#allocation2 + $0x2a0] sm:$0xff]
  %v3611 = vld [vmem:[#allocation2 + $0x2a8] sm:$0xff]
  %v3612 = vld [vmem:[#allocation2 + $0x2b0] sm:$0xff]
  %v3613 = vld [vmem:[#allocation2 + $0x2b8] sm:$0xff]
  %v3614 = vld [vmem:[#allocation2 + $0x2c0] sm:$0xff]
  %v3615 = vld [vmem:[#allocation2 + $0x2c8] sm:$0xff]
  %v3616 = vld [vmem:[#allocation2 + $0x2d0] sm:$0xff]
  %v3617 = vld [vmem:[#allocation2 + $0x2d8] sm:$0xff]
  %v3618 = vld [vmem:[#allocation2 + $0x2e0] sm:$0xff]
  %v3619 = vld [vmem:[#allocation2 + $0x2e8] sm:$0xff]
  %v3620 = vld [vmem:[#allocation2 + $0x2f0] sm:$0xff]
  %v3621 = vld [vmem:[#allocation2 + $0x2f8] sm:$0xff]
  %v3622 = vld [vmem:[#allocation2 + $0x300] sm:$0xff]
  %v3623 = vld [vmem:[#allocation2 + $0x308] sm:$0xff]
  %v3624 = vld [vmem:[#allocation2 + $0x310] sm:$0xff]
  %v3625 = vld [vmem:[#allocation2 + $0x318] sm:$0xff]
  %v3626 = vld [vmem:[#allocation2 + $0x320] sm:$0xff]
  %v3627 = vld [vmem:[#allocation2 + $0x328] sm:$0xff]
  %v3628 = vld [vmem:[#allocation2 + $0x330] sm:$0xff]
  %v3629 = vld [vmem:[#allocation2 + $0x338] sm:$0xff]
  %v3630 = vld [vmem:[#allocation2 + $0x340] sm:$0xff]
  %v3631 = vld [vmem:[#allocation2 + $0x348] sm:$0xff]
  %v3632 = vld [vmem:[#allocation2 + $0x350] sm:$0xff]
  %v3633 = vld [vmem:[#allocation2 + $0x358] sm:$0xff]
  %v3634 = vld [vmem:[#allocation2 + $0x360] sm:$0xff]
  %v3635 = vld [vmem:[#allocation2 + $0x368] sm:$0xff]
  %v3636 = vld [vmem:[#allocation2 + $0x370] sm:$0xff]
  %v3637 = vld [vmem:[#allocation2 + $0x378] sm:$0xff]
  %v3638 = vld [vmem:[#allocation2 + $0x380] sm:$0xff]
  %v3639 = vld [vmem:[#allocation2 + $0x388] sm:$0xff]
  %v3640 = vld [vmem:[#allocation2 + $0x390] sm:$0xff]
  %v3641 = vld [vmem:[#allocation2 + $0x398] sm:$0xff]
  %v3642 = vld [vmem:[#allocation2 + $0x3a0] sm:$0xff]
  %v3643 = vld [vmem:[#allocation2 + $0x3a8] sm:$0xff]
  %v3644 = vld [vmem:[#allocation2 + $0x3b0] sm:$0xff]
  %v3645 = vld [vmem:[#allocation2 + $0x3b8] sm:$0xff]
  %v3646 = vld [vmem:[#allocation2 + $0x3c0] sm:$0xff]
  %v3647 = vld [vmem:[#allocation2 + $0x3c8] sm:$0xff]
  %v3648 = vld [vmem:[#allocation2 + $0x3d0] sm:$0xff]
  %v3649 = vld [vmem:[#allocation2 + $0x3d8] sm:$0xff]
  %v3650 = vld [vmem:[#allocation2 + $0x3e0] sm:$0xff]
  %v3651 = vld [vmem:[#allocation2 + $0x3e8] sm:$0xff]
  %v3652 = vld [vmem:[#allocation2 + $0x3f0] sm:$0xff]
  %v3653 = vld [vmem:[#allocation2 + $0x3f8] sm:$0xff]
  %v3654 = vld [vmem:[#allocation2 + $0x400] sm:$0xff]
  %v3655 = vld [vmem:[#allocation2 + $0x408] sm:$0xff]
  %v3656 = vld [vmem:[#allocation2 + $0x410] sm:$0xff]
  %v3657 = vld [vmem:[#allocation2 + $0x418] sm:$0xff]
  %v3658 = vld [vmem:[#allocation2 + $0x420] sm:$0xff]
  %v3659 = vld [vmem:[#allocation2 + $0x428] sm:$0xff]
  %v3660 = vld [vmem:[#allocation2 + $0x430] sm:$0xff]
  %v3661 = vld [vmem:[#allocation2 + $0x438] sm:$0xff]
  %v3662 = vld [vmem:[#allocation2 + $0x440] sm:$0xff]
  %v3663 = vld [vmem:[#allocation2 + $0x448] sm:$0xff]
  %v3664 = vld [vmem:[#allocation2 + $0x450] sm:$0xff]
  %v3665 = vld [vmem:[#allocation2 + $0x458] sm:$0xff]
  %v3666 = vld [vmem:[#allocation2 + $0x460] sm:$0xff]
  %v3667 = vld [vmem:[#allocation2 + $0x468] sm:$0xff]
  %v3668 = vld [vmem:[#allocation2 + $0x470] sm:$0xff]
  %v3669 = vld [vmem:[#allocation2 + $0x478] sm:$0xff]
  %v3670 = vld [vmem:[#allocation2 + $0x480] sm:$0xff]
  %v3671 = vld [vmem:[#allocation2 + $0x488] sm:$0xff]
  %v3672 = vld [vmem:[#allocation2 + $0x490] sm:$0xff]
  %v3673 = vld [vmem:[#allocation2 + $0x498] sm:$0xff]
  %v3674 = vld [vmem:[#allocation2 + $0x4a0] sm:$0xff]
  %v3675 = vld [vmem:[#allocation2 + $0x4a8] sm:$0xff]
  %v3676 = vld [vmem:[#allocation2 + $0x4b0] sm:$0xff]
  %v3677 = vld [vmem:[#allocation2 + $0x4b8] sm:$0xff]
  %v3678 = vld [vmem:[#allocation2 + $0x4c0] sm:$0xff]
  %v3679 = vld [vmem:[#allocation2 + $0x4c8] sm:$0xff]
  %v3680 = vld [vmem:[#allocation2 + $0x4d0] sm:$0xff]
  %v3681 = vld [vmem:[#allocation2 + $0x4d8] sm:$0xff]
  %v3682 = vld [vmem:[#allocation2 + $0x4e0] sm:$0xff]
  %v3683 = vld [vmem:[#allocation2 + $0x4e8] sm:$0xff]
  %v3684 = vld [vmem:[#allocation2 + $0x4f0] sm:$0xff]
  %v3685 = vld [vmem:[#allocation2 + $0x4f8] sm:$0xff]
  %v3686 = vld [vmem:[#allocation2 + $0x500] sm:$0xff]
  %v3687 = vld [vmem:[#allocation2 + $0x508] sm:$0xff]
  %v3688 = vld [vmem:[#allocation2 + $0x510] sm:$0xff]
  %v3689 = vld [vmem:[#allocation2 + $0x518] sm:$0xff]
  %v3690 = vld [vmem:[#allocation2 + $0x520] sm:$0xff]
  %v3691 = vld [vmem:[#allocation2 + $0x528] sm:$0xff]
  %v3692 = vld [vmem:[#allocation2 + $0x530] sm:$0xff]
  %v3693 = vld [vmem:[#allocation2 + $0x538] sm:$0xff]
  %v3694 = vld [vmem:[#allocation2 + $0x540] sm:$0xff]
  %v3695 = vld [vmem:[#allocation2 + $0x548] sm:$0xff]
  %v3696 = vld [vmem:[#allocation2 + $0x550] sm:$0xff]
  %v3697 = vld [vmem:[#allocation2 + $0x558] sm:$0xff]
  %v3698 = vld [vmem:[#allocation2 + $0x560] sm:$0xff]
  %v3699 = vld [vmem:[#allocation2 + $0x568] sm:$0xff]
  %v3700 = vld [vmem:[#allocation2 + $0x570] sm:$0xff]
  %v3701 = vld [vmem:[%s2] sm:$0xff]
  %3703 = vset.pattern.permute.xlu0 0
  %3704 = vperm.xlu0 %3703, %v3701
  %v3705 = vpop.permute.xlu0 %3704
  %v3708 = vsel %vm1426, %v3525, 0
  %3710 = vmatprep.subr.mxu0 %v3527
  %3711 = vmatpush1.msra.mxu0 %v3526
  %3712 = vmatprep.subr.mxu0 %v3534
  %3713 = vmatpush1.msra.mxu0 %v3533
  %3714 = vmatprep.subr.mxu0 %v3541
  %3715 = vmatpush1.msra.mxu0 %v3540
  %3716 = vmatprep.subr.mxu0 %v3548
  %3717 = vmatpush1.msra.mxu0 %v3547
  %3718 = vmatprep.subr.mxu0 %v3555
  %3719 = vmatpush1.msra.mxu0 %v3554
  %3720 = vmatprep.subr.mxu0 %v3562
  %3721 = vmatpush1.msra.mxu0 %v3561
  %3722 = vmatprep.subr.mxu0 %v3569
  %3723 = vmatpush1.msra.mxu0 %v3568
  %3724 = vmatprep.subr.mxu0 %v3576
  %3725 = vmatpush1.msra.mxu0 %v3575
  %3726 = vmatprep.subr.mxu0 %v3583
  %3727 = vmatpush1.msra.mxu0 %v3582
  %3728 = vmatprep.subr.mxu0 %v3590
  %3729 = vmatpush1.msra.mxu0 %v3589
  %3730 = vmatprep.subr.mxu0 %v3597
  %3731 = vmatpush1.msra.mxu0 %v3596
  %3732 = vmatprep.subr.mxu0 %v3604
  %3733 = vmatpush1.msra.mxu0 %v3603
  %3734 = vmatprep.subr.mxu0 %v3611
  %3735 = vmatpush1.msra.mxu0 %v3610
  %3736 = vmatprep.subr.mxu0 %v3618
  %3737 = vmatpush1.msra.mxu0 %v3617
  %3738 = vmatprep.subr.mxu0 %v3625
  %3739 = vmatpush1.msra.mxu0 %v3624
  %3740 = vmatprep.subr.mxu0 %v3632
  %3741 = vmatpush1.msra.mxu0 %v3631
  %3742 = vmatprep.subr.mxu0 %v3639
  %3743 = vmatpush1.msra.mxu0 %v3638
  %3744 = vmatprep.subr.mxu0 %v3646
  %3745 = vmatpush1.msra.mxu0 %v3645
  %3746 = vmatprep.subr.mxu0 %v3653
  %3747 = vmatpush1.msra.mxu0 %v3652
  %3748 = vmatprep.subr.mxu0 %v3660
  %3749 = vmatpush1.msra.mxu0 %v3659
  %3750 = vmatprep.subr.mxu0 %v3667
  %3751 = vmatpush1.msra.mxu0 %v3666
  %3752 = vmatprep.subr.mxu0 %v3674
  %3753 = vmatpush1.msra.mxu0 %v3673
  %3754 = vmatprep.subr.mxu0 %v3681
  %3755 = vmatpush1.msra.mxu0 %v3680
  %3756 = vmatprep.subr.mxu0 %v3688
  %3757 = vmatpush1.msra.mxu0 %v3687
  %3758 = vmatprep.subr.mxu0 %v3695
  %3759 = vmatpush1.msra.mxu0 %v3694
  %3760 = vmatprep.subr.mxu0 0.0
  %3761 = vmatpush1.msra.mxu0 0.0
  %3762 = vmatprep.subr.mxu0 0.0
  %3763 = vmatpush1.msra.mxu0 0.0
  %3764 = vmatprep.subr.mxu0 0.0
  %3765 = vmatpush1.msra.mxu0 0.0
  %3766 = vmatprep.subr.mxu0 0.0
  %3767 = vmatpush1.msra.mxu0 0.0
  %3768 = vmatprep.subr.mxu0 0.0
  %3769 = vmatpush1.msra.mxu0 0.0
  %3770 = vmatprep.subr.mxu0 0.0
  %3771 = vmatpush1.msra.mxu0 0.0
  %3772 = vmatprep.subr.mxu0 0.0
  %3773 = vmatpush1.msra.mxu0 0.0
  %3774 = vmatprep.mubr.f32.mxu0 %v3708
  %3775 = vmatmul.mubr.f32.gmra.mrb[0].mxu0 %v3524
  %v3776 = vpop.f32.mrb[0].mxu0
  %v3777 = vadd.f32 %v3705, %v3776
  %v3778 = vpop.f32.mrb[0].mxu0
  %v3779 = vadd.f32 %v3705, %v3778
  %3780 = vdwg.mxu0
  %3781 = vmatprep.subr.mxu0 %v3529
  %3782 = vmatpush1.msra.mxu0 %v3528
  %3783 = vmatprep.subr.mxu0 %v3536
  %3784 = vmatpush1.msra.mxu0 %v3535
  %3785 = vmatprep.subr.mxu0 %v3543
  %3786 = vmatpush1.msra.mxu0 %v3542
  %3787 = vmatprep.subr.mxu0 %v3550
  %3788 = vmatpush1.msra.mxu0 %v3549
  %3789 = vmatprep.subr.mxu0 %v3557
  %3790 = vmatpush1.msra.mxu0 %v3556
  %3791 = vmatprep.subr.mxu0 %v3564
  %3792 = vmatpush1.msra.mxu0 %v3563
  %3793 = vmatprep.subr.mxu0 %v3571
  %3794 = vmatpush1.msra.mxu0 %v3570
  %3795 = vmatprep.subr.mxu0 %v3578
  %3796 = vmatpush1.msra.mxu0 %v3577
  %3797 = vmatprep.subr.mxu0 %v3585
  %3798 = vmatpush1.msra.mxu0 %v3584
  %3799 = vmatprep.subr.mxu0 %v3592
  %3800 = vmatpush1.msra.mxu0 %v3591
  %3801 = vmatprep.subr.mxu0 %v3599
  %3802 = vmatpush1.msra.mxu0 %v3598
  %3803 = vmatprep.subr.mxu0 %v3606
  %3804 = vmatpush1.msra.mxu0 %v3605
  %3805 = vmatprep.subr.mxu0 %v3613
  %3806 = vmatpush1.msra.mxu0 %v3612
  %3807 = vmatprep.subr.mxu0 %v3620
  %3808 = vmatpush1.msra.mxu0 %v3619
  %3809 = vmatprep.subr.mxu0 %v3627
  %3810 = vmatpush1.msra.mxu0 %v3626
  %3811 = vmatprep.subr.mxu0 %v3634
  %3812 = vmatpush1.msra.mxu0 %v3633
  %3813 = vmatprep.subr.mxu0 %v3641
  %3814 = vmatpush1.msra.mxu0 %v3640
  %3815 = vmatprep.subr.mxu0 %v3648
  %3816 = vmatpush1.msra.mxu0 %v3647
  %3817 = vmatprep.subr.mxu0 %v3655
  %3818 = vmatpush1.msra.mxu0 %v3654
  %3819 = vmatprep.subr.mxu0 %v3662
  %3820 = vmatpush1.msra.mxu0 %v3661
  %3821 = vmatprep.subr.mxu0 %v3669
  %3822 = vmatpush1.msra.mxu0 %v3668
  %3823 = vmatprep.subr.mxu0 %v3676
  %3824 = vmatpush1.msra.mxu0 %v3675
  %3825 = vmatprep.subr.mxu0 %v3683
  %3826 = vmatpush1.msra.mxu0 %v3682
  %3827 = vmatprep.subr.mxu0 %v3690
  %3828 = vmatpush1.msra.mxu0 %v3689
  %3829 = vmatprep.subr.mxu0 %v3697
  %3830 = vmatpush1.msra.mxu0 %v3696
  %3831 = vmatprep.subr.mxu0 0.0
  %3832 = vmatpush1.msra.mxu0 0.0
  %3833 = vmatprep.subr.mxu0 0.0
  %3834 = vmatpush1.msra.mxu0 0.0
  %3835 = vmatprep.subr.mxu0 0.0
  %3836 = vmatpush1.msra.mxu0 0.0
  %3837 = vmatprep.subr.mxu0 0.0
  %3838 = vmatpush1.msra.mxu0 0.0
  %3839 = vmatprep.subr.mxu0 0.0
  %3840 = vmatpush1.msra.mxu0 0.0
  %3841 = vmatprep.subr.mxu0 0.0
  %3842 = vmatpush1.msra.mxu0 0.0
  %3843 = vmatprep.subr.mxu0 0.0
  %3844 = vmatpush1.msra.mxu0 0.0
  %3845 = vmatprep.mubr.f32.mxu0 %v3708
  %3846 = vmatmul.mubr.f32.gmra.mrb[0].mxu0 %v3524
  %v3847 = vpop.f32.mrb[0].mxu0
  %v3848 = vadd.f32 %v3705, %v3847
  %v3849 = vpop.f32.mrb[0].mxu0
  %v3850 = vadd.f32 %v3705, %v3849
  %3851 = vdwg.mxu0
  %3852 = vmatprep.subr.mxu0 %v3531
  %3853 = vmatpush1.msra.mxu0 %v3530
  %3854 = vmatprep.subr.mxu0 %v3538
  %3855 = vmatpush1.msra.mxu0 %v3537
  %3856 = vmatprep.subr.mxu0 %v3545
  %3857 = vmatpush1.msra.mxu0 %v3544
  %3858 = vmatprep.subr.mxu0 %v3552
  %3859 = vmatpush1.msra.mxu0 %v3551
  %3860 = vmatprep.subr.mxu0 %v3559
  %3861 = vmatpush1.msra.mxu0 %v3558
  %3862 = vmatprep.subr.mxu0 %v3566
  %3863 = vmatpush1.msra.mxu0 %v3565
  %3864 = vmatprep.subr.mxu0 %v3573
  %3865 = vmatpush1.msra.mxu0 %v3572
  %3866 = vmatprep.subr.mxu0 %v3580
  %3867 = vmatpush1.msra.mxu0 %v3579
  %3868 = vmatprep.subr.mxu0 %v3587
  %3869 = vmatpush1.msra.mxu0 %v3586
  %3870 = vmatprep.subr.mxu0 %v3594
  %3871 = vmatpush1.msra.mxu0 %v3593
  %3872 = vmatprep.subr.mxu0 %v3601
  %3873 = vmatpush1.msra.mxu0 %v3600
  %3874 = vmatprep.subr.mxu0 %v3608
  %3875 = vmatpush1.msra.mxu0 %v3607
  %3876 = vmatprep.subr.mxu0 %v3615
  %3877 = vmatpush1.msra.mxu0 %v3614
  %3878 = vmatprep.subr.mxu0 %v3622
  %3879 = vmatpush1.msra.mxu0 %v3621
  %3880 = vmatprep.subr.mxu0 %v3629
  %3881 = vmatpush1.msra.mxu0 %v3628
  %3882 = vmatprep.subr.mxu0 %v3636
  %3883 = vmatpush1.msra.mxu0 %v3635
  %3884 = vmatprep.subr.mxu0 %v3643
  %3885 = vmatpush1.msra.mxu0 %v3642
  %3886 = vmatprep.subr.mxu0 %v3650
  %3887 = vmatpush1.msra.mxu0 %v3649
  %3888 = vmatprep.subr.mxu0 %v3657
  %3889 = vmatpush1.msra.mxu0 %v3656
  %3890 = vmatprep.subr.mxu0 %v3664
  %3891 = vmatpush1.msra.mxu0 %v3663
  %3892 = vmatprep.subr.mxu0 %v3671
  %3893 = vmatpush1.msra.mxu0 %v3670
  %3894 = vmatprep.subr.mxu0 %v3678
  %3895 = vmatpush1.msra.mxu0 %v3677
  %3896 = vmatprep.subr.mxu0 %v3685
  %3897 = vmatpush1.msra.mxu0 %v3684
  %3898 = vmatprep.subr.mxu0 %v3692
  %3899 = vmatpush1.msra.mxu0 %v3691
  %3900 = vmatprep.subr.mxu0 %v3699
  %3901 = vmatpush1.msra.mxu0 %v3698
  %3902 = vmatprep.subr.mxu0 0.0
  %3903 = vmatpush1.msra.mxu0 0.0
  %3904 = vmatprep.subr.mxu0 0.0
  %3905 = vmatpush1.msra.mxu0 0.0
  %3906 = vmatprep.subr.mxu0 0.0
  %3907 = vmatpush1.msra.mxu0 0.0
  %3908 = vmatprep.subr.mxu0 0.0
  %3909 = vmatpush1.msra.mxu0 0.0
  %3910 = vmatprep.subr.mxu0 0.0
  %3911 = vmatpush1.msra.mxu0 0.0
  %3912 = vmatprep.subr.mxu0 0.0
  %3913 = vmatpush1.msra.mxu0 0.0
  %3914 = vmatprep.subr.mxu0 0.0
  %3915 = vmatpush1.msra.mxu0 0.0
  %3916 = vmatprep.mubr.f32.mxu0 %v3708
  %3917 = vmatmul.mubr.f32.gmra.mrb[0].mxu0 %v3524
  %v3918 = vpop.f32.mrb[0].mxu0
  %v3919 = vadd.f32 %v3705, %v3918
  %v3920 = vpop.f32.mrb[0].mxu0
  %v3921 = vadd.f32 %v3705, %v3920
  %3922 = vdwg.mxu0
  %3923 = vmatprep.subr.mxu0 0.0
  %3924 = vmatpush1.msra.mxu0 %v3532
  %3925 = vmatprep.subr.mxu0 0.0
  %3926 = vmatpush1.msra.mxu0 %v3539
  %3927 = vmatprep.subr.mxu0 0.0
  %3928 = vmatpush1.msra.mxu0 %v3546
  %3929 = vmatprep.subr.mxu0 0.0
  %3930 = vmatpush1.msra.mxu0 %v3553
  %3931 = vmatprep.subr.mxu0 0.0
  %3932 = vmatpush1.msra.mxu0 %v3560
  %3933 = vmatprep.subr.mxu0 0.0
  %3934 = vmatpush1.msra.mxu0 %v3567
  %3935 = vmatprep.subr.mxu0 0.0
  %3936 = vmatpush1.msra.mxu0 %v3574
  %3937 = vmatprep.subr.mxu0 0.0
  %3938 = vmatpush1.msra.mxu0 %v3581
  %3939 = vmatprep.subr.mxu0 0.0
  %3940 = vmatpush1.msra.mxu0 %v3588
  %3941 = vmatprep.subr.mxu0 0.0
  %3942 = vmatpush1.msra.mxu0 %v3595
  %3943 = vmatprep.subr.mxu0 0.0
  %3944 = vmatpush1.msra.mxu0 %v3602
  %3945 = vmatprep.subr.mxu0 0.0
  %3946 = vmatpush1.msra.mxu0 %v3609
  %3947 = vmatprep.subr.mxu0 0.0
  %3948 = vmatpush1.msra.mxu0 %v3616
  %3949 = vmatprep.subr.mxu0 0.0
  %3950 = vmatpush1.msra.mxu0 %v3623
  %3951 = vmatprep.subr.mxu0 0.0
  %3952 = vmatpush1.msra.mxu0 %v3630
  %3953 = vmatprep.subr.mxu0 0.0
  %3954 = vmatpush1.msra.mxu0 %v3637
  %3955 = vmatprep.subr.mxu0 0.0
  %3956 = vmatpush1.msra.mxu0 %v3644
  %3957 = vmatprep.subr.mxu0 0.0
  %3958 = vmatpush1.msra.mxu0 %v3651
  %3959 = vmatprep.subr.mxu0 0.0
  %3960 = vmatpush1.msra.mxu0 %v3658
  %3961 = vmatprep.subr.mxu0 0.0
  %3962 = vmatpush1.msra.mxu0 %v3665
  %3963 = vmatprep.subr.mxu0 0.0
  %3964 = vmatpush1.msra.mxu0 %v3672
  %3965 = vmatprep.subr.mxu0 0.0
  %3966 = vmatpush1.msra.mxu0 %v3679
  %3967 = vmatprep.subr.mxu0 0.0
  %3968 = vmatpush1.msra.mxu0 %v3686
  %3969 = vmatprep.subr.mxu0 0.0
  %3970 = vmatpush1.msra.mxu0 %v3693
  %3971 = vmatprep.subr.mxu0 0.0
  %3972 = vmatpush1.msra.mxu0 %v3700
  %3973 = vmatprep.subr.mxu0 0.0
  %3974 = vmatpush1.msra.mxu0 0.0
  %3975 = vmatprep.subr.mxu0 0.0
  %3976 = vmatpush1.msra.mxu0 0.0
  %3977 = vmatprep.subr.mxu0 0.0
  %3978 = vmatpush1.msra.mxu0 0.0
  %3979 = vmatprep.subr.mxu0 0.0
  %3980 = vmatpush1.msra.mxu0 0.0
  %3981 = vmatprep.subr.mxu0 0.0
  %3982 = vmatpush1.msra.mxu0 0.0
  %3983 = vmatprep.subr.mxu0 0.0
  %3984 = vmatpush1.msra.mxu0 0.0
  %3985 = vmatprep.subr.mxu0 0.0
  %3986 = vmatpush1.msra.mxu0 0.0
  %3987 = vmatprep.mubr.f32.mxu0 %v3708
  %3988 = vmatmul.mubr.f32.gmra.mrb[0].mxu0 %v3524
  %v3989 = vpop.f32.mrb[0].mxu0
  %v3990 = vadd.f32 %v3705, %v3989
  %v3991 = vpop.f32.mrb[0].mxu0
  %3992 = vdwg.mxu0
  %v3993 = vmax.f32 %v3777, 0.0
  %v3994 = vmax.f32 %v3779, 0.0
  %v3995 = vmax.f32 %v3848, 0.0
  %v3996 = vmax.f32 %v3850, 0.0
  %v3997 = vmax.f32 %v3919, 0.0
  %v3998 = vmax.f32 %v3921, 0.0
  %v3999 = vmax.f32 %v3990, 0.0
  %4007 = vrot.lane.b32.xlu0 %v3993, 127
  %v4008 = vpop.permute.xlu0 %4007
  %4009 = vrot.lane.b32.xlu0 %v3994, 127
  %v4010 = vpop.permute.xlu0 %4009
  %4011 = vrot.lane.b32.xlu0 %v3995, 127
  %v4012 = vpop.permute.xlu0 %4011
  %4013 = vrot.lane.b32.xlu0 %v3996, 127
  %v4014 = vpop.permute.xlu0 %4013
  %4015 = vrot.lane.b32.xlu0 %v3997, 127
  %v4016 = vpop.permute.xlu0 %4015
  %4017 = vrot.lane.b32.xlu0 %v3998, 127
  %v4018 = vpop.permute.xlu0 %4017
  %4019 = vrot.lane.b32.xlu0 %v3999, 127
  %v4020 = vpop.permute.xlu0 %4019
  %v4021 = vsel %vm60, %v4008, %v4010
  %v4022 = vsel %vm60, %v4010, %v4012
  %v4023 = vsel %vm60, %v4012, %v4014
  %v4024 = vsel %vm60, %v4014, %v4016
  %v4025 = vsel %vm60, %v4016, %v4018
  %v4026 = vsel %vm60, %v4018, %v4020
  %v4034 = vmax.f32 %v3993, %v4021
  %v4035 = vmax.f32 %v3994, %v4022
  %v4036 = vmax.f32 %v3995, %v4023
  %v4037 = vmax.f32 %v3996, %v4024
  %v4038 = vmax.f32 %v3997, %v4025
  %v4039 = vmax.f32 %v3998, %v4026
  %v4040 = vmax.f32 %v3999, %v4020
  %4048 = vrot.lane.b32.xlu0 %v4034, 96
  %v4049 = vpop.permute.xlu0 %4048
  %4050 = vrot.lane.b32.xlu0 %v4035, 96
  %v4051 = vpop.permute.xlu0 %4050
  %4052 = vrot.lane.b32.xlu0 %v4036, 96
  %v4053 = vpop.permute.xlu0 %4052
  %4054 = vrot.lane.b32.xlu0 %v4037, 96
  %v4055 = vpop.permute.xlu0 %4054
  %4056 = vrot.lane.b32.xlu0 %v4038, 96
  %v4057 = vpop.permute.xlu0 %4056
  %4058 = vrot.lane.b32.xlu0 %v4039, 96
  %v4059 = vpop.permute.xlu0 %4058
  %4060 = vrot.lane.b32.xlu0 %v4040, 96
  %v4061 = vpop.permute.xlu0 %4060
  %v4062 = vsel %vm259, %v4049, %v4051
  %v4063 = vsel %vm259, %v4051, %v4053
  %v4064 = vsel %vm259, %v4053, %v4055
  %v4065 = vsel %vm259, %v4055, %v4057
  %v4066 = vsel %vm259, %v4057, %v4059
  %v4067 = vsel %vm259, %v4059, %v4061
  %v4075 = vmax.f32 %v4034, %v4062
  %v4076 = vmax.f32 %v4035, %v4063
  %v4077 = vmax.f32 %v4036, %v4064
  %v4078 = vmax.f32 %v4037, %v4065
  %v4079 = vmax.f32 %v4038, %v4066
  %v4080 = vmax.f32 %v4039, %v4067
  %v4081 = vmax.f32 %v4040, %v4061
  %v4082 = vld [vmem:[%s3] sm:$0xff]
  %v4083 = vld [vmem:[%s3 + $0x8] sm:$0xff]
  %v4084 = vld [vmem:[%s3 + $0x10] sm:$0xff]
  %v4085 = vld [vmem:[%s3 + $0x18] sm:$0xff]
  %v4086 = vld [vmem:[%s3 + $0x20] sm:$0xff]
  %v4087 = vld [vmem:[%s3 + $0x28] sm:$0xff]
  %v4088 = vld [vmem:[%s3 + $0x30] sm:$0xff]
  %v4089 = vld [vmem:[%s3 + $0x38] sm:$0xff]
  %v4090 = vld [vmem:[%s3 + $0x40] sm:$0xff]
  %v4091 = vld [vmem:[%s3 + $0x48] sm:$0xff]
  %v4092 = vld [vmem:[%s3 + $0x50] sm:$0xff]
  %v4093 = vld [vmem:[%s3 + $0x58] sm:$0xff]
  %v4094 = vld [vmem:[%s3 + $0x60] sm:$0xff]
  %v4095 = vld [vmem:[%s3 + $0x68] sm:$0xff]
  %v4096 = vld [vmem:[%s3 + $0x70] sm:$0xff]
  %v4097 = vld [vmem:[%s3 + $0x78] sm:$0xff]
  %v4098 = vld [vmem:[%s3 + $0x80] sm:$0xff]
  %v4099 = vld [vmem:[%s3 + $0x88] sm:$0xff]
  %v4100 = vld [vmem:[%s3 + $0x90] sm:$0xff]
  %v4101 = vld [vmem:[%s3 + $0x98] sm:$0xff]
  %v4102 = vld [vmem:[%s3 + $0xa0] sm:$0xff]
  %v4103 = vld [vmem:[%s3 + $0xa8] sm:$0xff]
  %v4104 = vld [vmem:[%s3 + $0xb0] sm:$0xff]
  %v4105 = vld [vmem:[%s3 + $0xb8] sm:$0xff]
  %v4106 = vld [vmem:[%s3 + $0xc0] sm:$0xff]
  %v4107 = vld [vmem:[%s3 + $0xc8] sm:$0xff]
  %v4108 = vld [vmem:[%s3 + $0xd0] sm:$0xff]
  %v4109 = vld [vmem:[%s3 + $0xd8] sm:$0xff]
  %v4110 = vld [vmem:[%s3 + $0xe0] sm:$0xff]
  %v4111 = vld [vmem:[%s3 + $0xe8] sm:$0xff]
  %v4112 = vld [vmem:[%s3 + $0xf0] sm:$0xff]
  %v4113 = vld [vmem:[%s3 + $0xf8] sm:$0xff]
  %v4114 = vld [vmem:[%s3 + $0x100] sm:$0xff]
  %v4115 = vld [vmem:[%s3 + $0x108] sm:$0xff]
  %v4116 = vld [vmem:[%s3 + $0x110] sm:$0xff]
  %v4117 = vld [vmem:[%s3 + $0x118] sm:$0xff]
  %v4118 = vld [vmem:[%s3 + $0x120] sm:$0xff]
  %v4119 = vld [vmem:[%s3 + $0x128] sm:$0xff]
  %v4120 = vld [vmem:[%s3 + $0x130] sm:$0xff]
  %v4121 = vld [vmem:[%s3 + $0x138] sm:$0xff]
  %v4122 = vld [vmem:[%s3 + $0x140] sm:$0xff]
  %v4123 = vld [vmem:[%s3 + $0x148] sm:$0xff]
  %v4124 = vld [vmem:[%s3 + $0x150] sm:$0xff]
  %v4125 = vld [vmem:[%s3 + $0x158] sm:$0xff]
  %v4126 = vld [vmem:[%s3 + $0x160] sm:$0xff]
  %v4127 = vld [vmem:[%s3 + $0x168] sm:$0xff]
  %v4128 = vld [vmem:[%s3 + $0x170] sm:$0xff]
  %v4129 = vld [vmem:[%s3 + $0x178] sm:$0xff]
  %v4130 = vld [vmem:[%s3 + $0x180] sm:$0xff]
  %v4131 = vld [vmem:[%s3 + $0x188] sm:$0xff]
  %v4132 = vld [vmem:[%s3 + $0x190] sm:$0xff]
  %v4133 = vld [vmem:[%s3 + $0x198] sm:$0xff]
  %v4134 = vld [vmem:[%s3 + $0x1a0] sm:$0xff]
  %v4135 = vld [vmem:[%s3 + $0x1a8] sm:$0xff]
  %v4136 = vld [vmem:[%s3 + $0x1b0] sm:$0xff]
  %v4137 = vld [vmem:[%s3 + $0x1b8] sm:$0xff]
  %v4138 = vld [vmem:[%s3 + $0x1c0] sm:$0xff]
  %v4139 = vld [vmem:[%s3 + $0x1c8] sm:$0xff]
  %v4140 = vld [vmem:[%s3 + $0x1d0] sm:$0xff]
  %v4141 = vld [vmem:[%s3 + $0x1d8] sm:$0xff]
  %v4142 = vld [vmem:[%s3 + $0x1e0] sm:$0xff]
  %v4143 = vld [vmem:[%s3 + $0x1e8] sm:$0xff]
  %v4144 = vld [vmem:[%s3 + $0x1f0] sm:$0xff]
  %v4145 = vld [vmem:[%s3 + $0x1f8] sm:$0xff]
  %v4146 = vld [vmem:[%s3 + $0x200] sm:$0xff]
  %v4147 = vld [vmem:[%s3 + $0x208] sm:$0xff]
  %v4148 = vld [vmem:[%s3 + $0x210] sm:$0xff]
  %v4149 = vld [vmem:[%s3 + $0x218] sm:$0xff]
  %v4150 = vld [vmem:[%s3 + $0x220] sm:$0xff]
  %v4151 = vld [vmem:[%s3 + $0x228] sm:$0xff]
  %v4152 = vld [vmem:[%s3 + $0x230] sm:$0xff]
  %v4153 = vld [vmem:[%s3 + $0x238] sm:$0xff]
  %v4154 = vld [vmem:[%s3 + $0x240] sm:$0xff]
  %v4155 = vld [vmem:[%s3 + $0x248] sm:$0xff]
  %v4156 = vld [vmem:[%s3 + $0x250] sm:$0xff]
  %v4157 = vld [vmem:[%s3 + $0x258] sm:$0xff]
  %v4158 = vld [vmem:[%s3 + $0x260] sm:$0xff]
  %v4159 = vld [vmem:[%s3 + $0x268] sm:$0xff]
  %v4160 = vld [vmem:[%s3 + $0x270] sm:$0xff]
  %v4161 = vld [vmem:[%s3 + $0x278] sm:$0xff]
  %v4162 = vld [vmem:[%s3 + $0x280] sm:$0xff]
  %v4163 = vld [vmem:[%s3 + $0x288] sm:$0xff]
  %v4164 = vld [vmem:[%s3 + $0x290] sm:$0xff]
  %v4165 = vld [vmem:[%s3 + $0x298] sm:$0xff]
  %v4166 = vld [vmem:[%s3 + $0x2a0] sm:$0xff]
  %v4167 = vld [vmem:[%s3 + $0x2a8] sm:$0xff]
  %v4168 = vld [vmem:[%s3 + $0x2b0] sm:$0xff]
  %v4169 = vld [vmem:[%s3 + $0x2b8] sm:$0xff]
  %v4170 = vld [vmem:[%s3 + $0x2c0] sm:$0xff]
  %v4171 = vld [vmem:[%s3 + $0x2c8] sm:$0xff]
  %v4172 = vld [vmem:[%s3 + $0x2d0] sm:$0xff]
  %v4173 = vld [vmem:[%s3 + $0x2d8] sm:$0xff]
  %v4174 = vld [vmem:[%s3 + $0x2e0] sm:$0xff]
  %v4175 = vld [vmem:[%s3 + $0x2e8] sm:$0xff]
  %v4176 = vld [vmem:[%s3 + $0x2f0] sm:$0xff]
  %v4177 = vld [vmem:[%s3 + $0x2f8] sm:$0xff]
  %v4178 = vld [vmem:[%s3 + $0x300] sm:$0xff]
  %v4179 = vld [vmem:[%s3 + $0x308] sm:$0xff]
  %v4180 = vld [vmem:[%s3 + $0x310] sm:$0xff]
  %v4181 = vld [vmem:[%s3 + $0x318] sm:$0xff]
  %v4182 = vld [vmem:[%s3 + $0x320] sm:$0xff]
  %v4183 = vld [vmem:[%s3 + $0x328] sm:$0xff]
  %v4184 = vld [vmem:[%s3 + $0x330] sm:$0xff]
  %v4185 = vld [vmem:[%s3 + $0x338] sm:$0xff]
  %v4186 = vld [vmem:[%s3 + $0x340] sm:$0xff]
  %v4187 = vld [vmem:[%s3 + $0x348] sm:$0xff]
  %v4188 = vld [vmem:[%s3 + $0x350] sm:$0xff]
  %v4189 = vld [vmem:[%s3 + $0x358] sm:$0xff]
  %v4190 = vld [vmem:[%s3 + $0x360] sm:$0xff]
  %v4191 = vld [vmem:[%s3 + $0x368] sm:$0xff]
  %v4192 = vld [vmem:[%s3 + $0x370] sm:$0xff]
  %v4193 = vld [vmem:[%s3 + $0x378] sm:$0xff]
  %v4194 = vld [vmem:[%s3 + $0x380] sm:$0xff]
  %v4195 = vld [vmem:[%s3 + $0x388] sm:$0xff]
  %v4196 = vld [vmem:[%s3 + $0x390] sm:$0xff]
  %v4197 = vld [vmem:[%s3 + $0x398] sm:$0xff]
  %v4198 = vld [vmem:[%s3 + $0x3a0] sm:$0xff]
  %v4199 = vld [vmem:[%s3 + $0x3a8] sm:$0xff]
  %v4200 = vld [vmem:[%s3 + $0x3b0] sm:$0xff]
  %v4201 = vld [vmem:[%s3 + $0x3b8] sm:$0xff]
  %v4202 = vld [vmem:[%s3 + $0x3c0] sm:$0xff]
  %v4203 = vld [vmem:[%s3 + $0x3c8] sm:$0xff]
  %v4204 = vld [vmem:[%s3 + $0x3d0] sm:$0xff]
  %v4205 = vld [vmem:[%s3 + $0x3d8] sm:$0xff]
  %v4206 = vld [vmem:[%s3 + $0x3e0] sm:$0xff]
  %v4207 = vld [vmem:[%s3 + $0x3e8] sm:$0xff]
  %v4208 = vld [vmem:[%s3 + $0x3f0] sm:$0xff]
  %v4209 = vld [vmem:[%s3 + $0x3f8] sm:$0xff]
  %v4210 = vld [vmem:[%s3 + $0x400] sm:$0xff]
  %v4211 = vld [vmem:[%s3 + $0x408] sm:$0xff]
  %v4212 = vld [vmem:[%s3 + $0x410] sm:$0xff]
  %v4213 = vld [vmem:[%s3 + $0x418] sm:$0xff]
  %v4214 = vld [vmem:[%s3 + $0x420] sm:$0xff]
  %v4215 = vld [vmem:[%s3 + $0x428] sm:$0xff]
  %v4216 = vld [vmem:[%s3 + $0x430] sm:$0xff]
  %v4217 = vld [vmem:[%s3 + $0x438] sm:$0xff]
  %v4218 = vld [vmem:[%s3 + $0x440] sm:$0xff]
  %v4219 = vld [vmem:[%s3 + $0x448] sm:$0xff]
  %v4220 = vld [vmem:[%s3 + $0x450] sm:$0xff]
  %v4221 = vld [vmem:[%s3 + $0x458] sm:$0xff]
  %v4222 = vld [vmem:[%s3 + $0x460] sm:$0xff]
  %v4223 = vld [vmem:[%s3 + $0x468] sm:$0xff]
  %v4224 = vld [vmem:[%s3 + $0x470] sm:$0xff]
  %v4225 = vld [vmem:[%s3 + $0x478] sm:$0xff]
  %v4226 = vld [vmem:[%s3 + $0x480] sm:$0xff]
  %v4227 = vld [vmem:[%s3 + $0x488] sm:$0xff]
  %v4228 = vld [vmem:[%s3 + $0x490] sm:$0xff]
  %v4229 = vld [vmem:[%s3 + $0x498] sm:$0xff]
  %v4230 = vld [vmem:[%s3 + $0x4a0] sm:$0xff]
  %v4231 = vld [vmem:[%s3 + $0x4a8] sm:$0xff]
  %v4232 = vld [vmem:[%s3 + $0x4b0] sm:$0xff]
  %v4233 = vld [vmem:[%s3 + $0x4b8] sm:$0xff]
  %v4234 = vld [vmem:[%s3 + $0x4c0] sm:$0xff]
  %v4235 = vld [vmem:[%s3 + $0x4c8] sm:$0xff]
  %v4236 = vld [vmem:[%s3 + $0x4d0] sm:$0xff]
  %v4237 = vld [vmem:[%s3 + $0x4d8] sm:$0xff]
  %v4238 = vld [vmem:[%s3 + $0x4e0] sm:$0xff]
  %v4239 = vld [vmem:[%s3 + $0x4e8] sm:$0xff]
  %v4240 = vld [vmem:[%s3 + $0x4f0] sm:$0xff]
  %v4241 = vld [vmem:[%s3 + $0x4f8] sm:$0xff]
  %v4242 = vld [vmem:[%s3 + $0x500] sm:$0xff]
  %v4243 = vld [vmem:[%s3 + $0x508] sm:$0xff]
  %v4244 = vld [vmem:[%s3 + $0x510] sm:$0xff]
  %v4245 = vld [vmem:[%s3 + $0x518] sm:$0xff]
  %v4246 = vld [vmem:[%s3 + $0x520] sm:$0xff]
  %v4247 = vld [vmem:[%s3 + $0x528] sm:$0xff]
  %v4248 = vld [vmem:[%s3 + $0x530] sm:$0xff]
  %v4249 = vld [vmem:[%s3 + $0x538] sm:$0xff]
  %v4250 = vld [vmem:[%s3 + $0x540] sm:$0xff]
  %v4251 = vld [vmem:[%s3 + $0x548] sm:$0xff]
  %v4252 = vld [vmem:[%s3 + $0x550] sm:$0xff]
  %v4253 = vld [vmem:[%s3 + $0x558] sm:$0xff]
  %v4254 = vld [vmem:[%s3 + $0x560] sm:$0xff]
  %v4255 = vld [vmem:[%s3 + $0x568] sm:$0xff]
  %v4256 = vld [vmem:[%s3 + $0x570] sm:$0xff]
  %v4257 = vld [vmem:[%s3 + $0x578] sm:$0xff]
  %v4258 = vld [vmem:[%s3 + $0x580] sm:$0xff]
  %v4259 = vld [vmem:[%s3 + $0x588] sm:$0xff]
  %v4260 = vld [vmem:[%s3 + $0x590] sm:$0xff]
  %v4261 = vld [vmem:[%s3 + $0x598] sm:$0xff]
  %v4262 = vld [vmem:[%s3 + $0x5a0] sm:$0xff]
  %v4263 = vld [vmem:[%s3 + $0x5a8] sm:$0xff]
  %v4264 = vld [vmem:[%s3 + $0x5b0] sm:$0xff]
  %v4265 = vld [vmem:[%s3 + $0x5b8] sm:$0xff]
  %v4266 = vld [vmem:[%s3 + $0x5c0] sm:$0xff]
  %v4267 = vld [vmem:[%s3 + $0x5c8] sm:$0xff]
  %v4268 = vld [vmem:[%s3 + $0x5d0] sm:$0xff]
  %v4269 = vld [vmem:[%s3 + $0x5d8] sm:$0xff]
  %v4270 = vld [vmem:[%s3 + $0x5e0] sm:$0xff]
  %v4271 = vld [vmem:[%s3 + $0x5e8] sm:$0xff]
  %v4272 = vld [vmem:[%s3 + $0x5f0] sm:$0xff]
  %v4273 = vld [vmem:[%s3 + $0x5f8] sm:$0xff]
  %v4274 = vld [vmem:[%s3 + $0x600] sm:$0xff]
  %v4275 = vld [vmem:[%s3 + $0x608] sm:$0xff]
  %v4276 = vld [vmem:[%s3 + $0x610] sm:$0xff]
  %v4277 = vld [vmem:[%s3 + $0x618] sm:$0xff]
  %v4278 = vld [vmem:[%s3 + $0x620] sm:$0xff]
  %v4279 = vld [vmem:[%s3 + $0x628] sm:$0xff]
  %v4280 = vld [vmem:[%s3 + $0x630] sm:$0xff]
  %v4281 = vld [vmem:[%s3 + $0x638] sm:$0xff]
  %v4282 = vld [vmem:[%s3 + $0x640] sm:$0xff]
  %v4283 = vld [vmem:[%s3 + $0x648] sm:$0xff]
  %v4284 = vld [vmem:[%s3 + $0x650] sm:$0xff]
  %v4285 = vld [vmem:[%s3 + $0x658] sm:$0xff]
  %v4286 = vld [vmem:[%s3 + $0x660] sm:$0xff]
  %v4287 = vld [vmem:[%s3 + $0x668] sm:$0xff]
  %v4288 = vld [vmem:[%s3 + $0x670] sm:$0xff]
  %v4289 = vld [vmem:[%s3 + $0x678] sm:$0xff]
  %v4290 = vld [vmem:[%s3 + $0x680] sm:$0xff]
  %v4291 = vld [vmem:[%s3 + $0x688] sm:$0xff]
  %v4292 = vld [vmem:[%s3 + $0x690] sm:$0xff]
  %v4293 = vld [vmem:[%s3 + $0x698] sm:$0xff]
  %v4294 = vld [vmem:[%s3 + $0x6a0] sm:$0xff]
  %v4295 = vld [vmem:[%s3 + $0x6a8] sm:$0xff]
  %v4296 = vld [vmem:[%s3 + $0x6b0] sm:$0x7]
  %v4297 = vld [vmem:[%s3 + $0x6b8] sm:$0x7]
  %v4299 = vsel %vm2018, %v4081, 0
  %v4302 = vsel %vm2022, %v4296, 0
  %v4305 = vsel %vm2022, %v4297, 0
  %4307 = vmatprep.subr.mxu0 %v4083
  %4308 = vmatpush1.msra.mxu0 %v4082
  %4309 = vmatprep.subr.mxu0 %v4085
  %4310 = vmatpush1.msra.mxu0 %v4084
  %4311 = vmatprep.subr.mxu0 %v4087
  %4312 = vmatpush1.msra.mxu0 %v4086
  %4313 = vmatprep.subr.mxu0 %v4089
  %4314 = vmatpush1.msra.mxu0 %v4088
  %4315 = vmatprep.subr.mxu0 %v4091
  %4316 = vmatpush1.msra.mxu0 %v4090
  %4317 = vmatprep.subr.mxu0 %v4093
  %4318 = vmatpush1.msra.mxu0 %v4092
  %4319 = vmatprep.subr.mxu0 %v4095
  %4320 = vmatpush1.msra.mxu0 %v4094
  %4321 = vmatprep.subr.mxu0 %v4097
  %4322 = vmatpush1.msra.mxu0 %v4096
  %4323 = vmatprep.subr.mxu0 %v4099
  %4324 = vmatpush1.msra.mxu0 %v4098
  %4325 = vmatprep.subr.mxu0 %v4101
  %4326 = vmatpush1.msra.mxu0 %v4100
  %4327 = vmatprep.subr.mxu0 %v4103
  %4328 = vmatpush1.msra.mxu0 %v4102
  %4329 = vmatprep.subr.mxu0 %v4105
  %4330 = vmatpush1.msra.mxu0 %v4104
  %4331 = vmatprep.subr.mxu0 %v4107
  %4332 = vmatpush1.msra.mxu0 %v4106
  %4333 = vmatprep.subr.mxu0 %v4109
  %4334 = vmatpush1.msra.mxu0 %v4108
  %4335 = vmatprep.subr.mxu0 %v4111
  %4336 = vmatpush1.msra.mxu0 %v4110
  %4337 = vmatprep.subr.mxu0 %v4113
  %4338 = vmatpush1.msra.mxu0 %v4112
  %4339 = vmatprep.subr.mxu0 %v4115
  %4340 = vmatpush1.msra.mxu0 %v4114
  %4341 = vmatprep.subr.mxu0 %v4117
  %4342 = vmatpush1.msra.mxu0 %v4116
  %4343 = vmatprep.subr.mxu0 %v4119
  %4344 = vmatpush1.msra.mxu0 %v4118
  %4345 = vmatprep.subr.mxu0 %v4121
  %4346 = vmatpush1.msra.mxu0 %v4120
  %4347 = vmatprep.subr.mxu0 %v4123
  %4348 = vmatpush1.msra.mxu0 %v4122
  %4349 = vmatprep.subr.mxu0 %v4125
  %4350 = vmatpush1.msra.mxu0 %v4124
  %4351 = vmatprep.subr.mxu0 %v4127
  %4352 = vmatpush1.msra.mxu0 %v4126
  %4353 = vmatprep.subr.mxu0 %v4129
  %4354 = vmatpush1.msra.mxu0 %v4128
  %4355 = vmatprep.subr.mxu0 %v4131
  %4356 = vmatpush1.msra.mxu0 %v4130
  %4357 = vmatprep.subr.mxu0 %v4133
  %4358 = vmatpush1.msra.mxu0 %v4132
  %4359 = vmatprep.subr.mxu0 %v4135
  %4360 = vmatpush1.msra.mxu0 %v4134
  %4361 = vmatprep.subr.mxu0 %v4137
  %4362 = vmatpush1.msra.mxu0 %v4136
  %4363 = vmatprep.subr.mxu0 %v4139
  %4364 = vmatpush1.msra.mxu0 %v4138
  %4365 = vmatprep.subr.mxu0 %v4141
  %4366 = vmatpush1.msra.mxu0 %v4140
  %4367 = vmatprep.subr.mxu0 %v4143
  %4368 = vmatpush1.msra.mxu0 %v4142
  %4369 = vmatprep.subr.mxu0 %v4145
  %4370 = vmatpush1.msra.mxu0 %v4144
  %4371 = vmatprep.mubr.f32.mxu0 %v4076
  %4372 = vmatmul.mubr.f32.gmra.mrb[0].mxu0 %v4075
  %v4373 = vpop.f32.mrb[0].mxu0
  %v4374 = vadd.f32 0.0, %v4373
  %v4375 = vpop.f32.mrb[0].mxu0
  %v4376 = vadd.f32 0.0, %v4375
  %4377 = vdwg.mxu0
  %4378 = vmatprep.subr.mxu0 %v4147
  %4379 = vmatpush1.msra.mxu0 %v4146
  %4380 = vmatprep.subr.mxu0 %v4149
  %4381 = vmatpush1.msra.mxu0 %v4148
  %4382 = vmatprep.subr.mxu0 %v4151
  %4383 = vmatpush1.msra.mxu0 %v4150
  %4384 = vmatprep.subr.mxu0 %v4153
  %4385 = vmatpush1.msra.mxu0 %v4152
  %4386 = vmatprep.subr.mxu0 %v4155
  %4387 = vmatpush1.msra.mxu0 %v4154
  %4388 = vmatprep.subr.mxu0 %v4157
  %4389 = vmatpush1.msra.mxu0 %v4156
  %4390 = vmatprep.subr.mxu0 %v4159
  %4391 = vmatpush1.msra.mxu0 %v4158
  %4392 = vmatprep.subr.mxu0 %v4161
  %4393 = vmatpush1.msra.mxu0 %v4160
  %4394 = vmatprep.subr.mxu0 %v4163
  %4395 = vmatpush1.msra.mxu0 %v4162
  %4396 = vmatprep.subr.mxu0 %v4165
  %4397 = vmatpush1.msra.mxu0 %v4164
  %4398 = vmatprep.subr.mxu0 %v4167
  %4399 = vmatpush1.msra.mxu0 %v4166
  %4400 = vmatprep.subr.mxu0 %v4169
  %4401 = vmatpush1.msra.mxu0 %v4168
  %4402 = vmatprep.subr.mxu0 %v4171
  %4403 = vmatpush1.msra.mxu0 %v4170
  %4404 = vmatprep.subr.mxu0 %v4173
  %4405 = vmatpush1.msra.mxu0 %v4172
  %4406 = vmatprep.subr.mxu0 %v4175
  %4407 = vmatpush1.msra.mxu0 %v4174
  %4408 = vmatprep.subr.mxu0 %v4177
  %4409 = vmatpush1.msra.mxu0 %v4176
  %4410 = vmatprep.subr.mxu0 %v4179
  %4411 = vmatpush1.msra.mxu0 %v4178
  %4412 = vmatprep.subr.mxu0 %v4181
  %4413 = vmatpush1.msra.mxu0 %v4180
  %4414 = vmatprep.subr.mxu0 %v4183
  %4415 = vmatpush1.msra.mxu0 %v4182
  %4416 = vmatprep.subr.mxu0 %v4185
  %4417 = vmatpush1.msra.mxu0 %v4184
  %4418 = vmatprep.subr.mxu0 %v4187
  %4419 = vmatpush1.msra.mxu0 %v4186
  %4420 = vmatprep.subr.mxu0 %v4189
  %4421 = vmatpush1.msra.mxu0 %v4188
  %4422 = vmatprep.subr.mxu0 %v4191
  %4423 = vmatpush1.msra.mxu0 %v4190
  %4424 = vmatprep.subr.mxu0 %v4193
  %4425 = vmatpush1.msra.mxu0 %v4192
  %4426 = vmatprep.subr.mxu0 %v4195
  %4427 = vmatpush1.msra.mxu0 %v4194
  %4428 = vmatprep.subr.mxu0 %v4197
  %4429 = vmatpush1.msra.mxu0 %v4196
  %4430 = vmatprep.subr.mxu0 %v4199
  %4431 = vmatpush1.msra.mxu0 %v4198
  %4432 = vmatprep.subr.mxu0 %v4201
  %4433 = vmatpush1.msra.mxu0 %v4200
  %4434 = vmatprep.subr.mxu0 %v4203
  %4435 = vmatpush1.msra.mxu0 %v4202
  %4436 = vmatprep.subr.mxu0 %v4205
  %4437 = vmatpush1.msra.mxu0 %v4204
  %4438 = vmatprep.subr.mxu0 %v4207
  %4439 = vmatpush1.msra.mxu0 %v4206
  %4440 = vmatprep.subr.mxu0 %v4209
  %4441 = vmatpush1.msra.mxu0 %v4208
  %4442 = vmatprep.mubr.f32.mxu0 %v4078
  %4443 = vmatmul.mubr.f32.gmra.mrb[0].mxu0 %v4077
  %v4444 = vpop.f32.mrb[0].mxu0
  %v4445 = vadd.f32 %v4374, %v4444
  %v4446 = vpop.f32.mrb[0].mxu0
  %v4447 = vadd.f32 %v4376, %v4446
  %4448 = vdwg.mxu0
  %4449 = vmatprep.subr.mxu0 %v4211
  %4450 = vmatpush1.msra.mxu0 %v4210
  %4451 = vmatprep.subr.mxu0 %v4213
  %4452 = vmatpush1.msra.mxu0 %v4212
  %4453 = vmatprep.subr.mxu0 %v4215
  %4454 = vmatpush1.msra.mxu0 %v4214
  %4455 = vmatprep.subr.mxu0 %v4217
  %4456 = vmatpush1.msra.mxu0 %v4216
  %4457 = vmatprep.subr.mxu0 %v4219
  %4458 = vmatpush1.msra.mxu0 %v4218
  %4459 = vmatprep.subr.mxu0 %v4221
  %4460 = vmatpush1.msra.mxu0 %v4220
  %4461 = vmatprep.subr.mxu0 %v4223
  %4462 = vmatpush1.msra.mxu0 %v4222
  %4463 = vmatprep.subr.mxu0 %v4225
  %4464 = vmatpush1.msra.mxu0 %v4224
  %4465 = vmatprep.subr.mxu0 %v4227
  %4466 = vmatpush1.msra.mxu0 %v4226
  %4467 = vmatprep.subr.mxu0 %v4229
  %4468 = vmatpush1.msra.mxu0 %v4228
  %4469 = vmatprep.subr.mxu0 %v4231
  %4470 = vmatpush1.msra.mxu0 %v4230
  %4471 = vmatprep.subr.mxu0 %v4233
  %4472 = vmatpush1.msra.mxu0 %v4232
  %4473 = vmatprep.subr.mxu0 %v4235
  %4474 = vmatpush1.msra.mxu0 %v4234
  %4475 = vmatprep.subr.mxu0 %v4237
  %4476 = vmatpush1.msra.mxu0 %v4236
  %4477 = vmatprep.subr.mxu0 %v4239
  %4478 = vmatpush1.msra.mxu0 %v4238
  %4479 = vmatprep.subr.mxu0 %v4241
  %4480 = vmatpush1.msra.mxu0 %v4240
  %4481 = vmatprep.subr.mxu0 %v4243
  %4482 = vmatpush1.msra.mxu0 %v4242
  %4483 = vmatprep.subr.mxu0 %v4245
  %4484 = vmatpush1.msra.mxu0 %v4244
  %4485 = vmatprep.subr.mxu0 %v4247
  %4486 = vmatpush1.msra.mxu0 %v4246
  %4487 = vmatprep.subr.mxu0 %v4249
  %4488 = vmatpush1.msra.mxu0 %v4248
  %4489 = vmatprep.subr.mxu0 %v4251
  %4490 = vmatpush1.msra.mxu0 %v4250
  %4491 = vmatprep.subr.mxu0 %v4253
  %4492 = vmatpush1.msra.mxu0 %v4252
  %4493 = vmatprep.subr.mxu0 %v4255
  %4494 = vmatpush1.msra.mxu0 %v4254
  %4495 = vmatprep.subr.mxu0 %v4257
  %4496 = vmatpush1.msra.mxu0 %v4256
  %4497 = vmatprep.subr.mxu0 %v4259
  %4498 = vmatpush1.msra.mxu0 %v4258
  %4499 = vmatprep.subr.mxu0 %v4261
  %4500 = vmatpush1.msra.mxu0 %v4260
  %4501 = vmatprep.subr.mxu0 %v4263
  %4502 = vmatpush1.msra.mxu0 %v4262
  %4503 = vmatprep.subr.mxu0 %v4265
  %4504 = vmatpush1.msra.mxu0 %v4264
  %4505 = vmatprep.subr.mxu0 %v4267
  %4506 = vmatpush1.msra.mxu0 %v4266
  %4507 = vmatprep.subr.mxu0 %v4269
  %4508 = vmatpush1.msra.mxu0 %v4268
  %4509 = vmatprep.subr.mxu0 %v4271
  %4510 = vmatpush1.msra.mxu0 %v4270
  %4511 = vmatprep.subr.mxu0 %v4273
  %4512 = vmatpush1.msra.mxu0 %v4272
  %4513 = vmatprep.mubr.f32.mxu0 %v4080
  %4514 = vmatmul.mubr.f32.gmra.mrb[0].mxu0 %v4079
  %v4515 = vpop.f32.mrb[0].mxu0
  %v4516 = vadd.f32 %v4445, %v4515
  %v4517 = vpop.f32.mrb[0].mxu0
  %v4518 = vadd.f32 %v4447, %v4517
  %4519 = vdwg.mxu0
  %4520 = vmatprep.subr.mxu0 %v4275
  %4521 = vmatpush1.msra.mxu0 %v4274
  %4522 = vmatprep.subr.mxu0 %v4277
  %4523 = vmatpush1.msra.mxu0 %v4276
  %4524 = vmatprep.subr.mxu0 %v4279
  %4525 = vmatpush1.msra.mxu0 %v4278
  %4526 = vmatprep.subr.mxu0 %v4281
  %4527 = vmatpush1.msra.mxu0 %v4280
  %4528 = vmatprep.subr.mxu0 %v4283
  %4529 = vmatpush1.msra.mxu0 %v4282
  %4530 = vmatprep.subr.mxu0 %v4285
  %4531 = vmatpush1.msra.mxu0 %v4284
  %4532 = vmatprep.subr.mxu0 %v4287
  %4533 = vmatpush1.msra.mxu0 %v4286
  %4534 = vmatprep.subr.mxu0 %v4289
  %4535 = vmatpush1.msra.mxu0 %v4288
  %4536 = vmatprep.subr.mxu0 %v4291
  %4537 = vmatpush1.msra.mxu0 %v4290
  %4538 = vmatprep.subr.mxu0 %v4293
  %4539 = vmatpush1.msra.mxu0 %v4292
  %4540 = vmatprep.subr.mxu0 %v4295
  %4541 = vmatpush1.msra.mxu0 %v4294
  %4542 = vmatprep.subr.mxu0 %v4305
  %4543 = vmatpush1.msra.mxu0 %v4302
  %4544 = vmatprep.subr.mxu0 0.0
  %4545 = vmatpush1.msra.mxu0 0.0
  %4546 = vmatprep.subr.mxu0 0.0
  %4547 = vmatpush1.msra.mxu0 0.0
  %4548 = vmatprep.subr.mxu0 0.0
  %4549 = vmatpush1.msra.mxu0 0.0
  %4550 = vmatprep.subr.mxu0 0.0
  %4551 = vmatpush1.msra.mxu0 0.0
  %4552 = vmatprep.subr.mxu0 0.0
  %4553 = vmatpush1.msra.mxu0 0.0
  %4554 = vmatprep.subr.mxu0 0.0
  %4555 = vmatpush1.msra.mxu0 0.0
  %4556 = vmatprep.subr.mxu0 0.0
  %4557 = vmatpush1.msra.mxu0 0.0
  %4558 = vmatprep.subr.mxu0 0.0
  %4559 = vmatpush1.msra.mxu0 0.0
  %4560 = vmatprep.subr.mxu0 0.0
  %4561 = vmatpush1.msra.mxu0 0.0
  %4562 = vmatprep.subr.mxu0 0.0
  %4563 = vmatpush1.msra.mxu0 0.0
  %4564 = vmatprep.subr.mxu0 0.0
  %4565 = vmatpush1.msra.mxu0 0.0
  %4566 = vmatprep.subr.mxu0 0.0
  %4567 = vmatpush1.msra.mxu0 0.0
  %4568 = vmatprep.subr.mxu0 0.0
  %4569 = vmatpush1.msra.mxu0 0.0
  %4570 = vmatprep.subr.mxu0 0.0
  %4571 = vmatpush1.msra.mxu0 0.0
  %4572 = vmatprep.subr.mxu0 0.0
  %4573 = vmatpush1.msra.mxu0 0.0
  %4574 = vmatprep.subr.mxu0 0.0
  %4575 = vmatpush1.msra.mxu0 0.0
  %4576 = vmatprep.subr.mxu0 0.0
  %4577 = vmatpush1.msra.mxu0 0.0
  %4578 = vmatprep.subr.mxu0 0.0
  %4579 = vmatpush1.msra.mxu0 0.0
  %4580 = vmatprep.subr.mxu0 0.0
  %4581 = vmatpush1.msra.mxu0 0.0
  %4582 = vmatprep.subr.mxu0 0.0
  %4583 = vmatpush1.msra.mxu0 0.0
  %4584 = vmatprep.mubr.f32.mxu0 0.0
  %4585 = vmatmul.mubr.f32.gmra.mrb[0].mxu0 %v4299
  %v4586 = vpop.f32.mrb[0].mxu0
  %v4587 = vadd.f32 %v4516, %v4586
  %v4588 = vpop.f32.mrb[0].mxu0
  %v4589 = vadd.f32 %v4518, %v4588
  %4590 = vdwg.mxu0
  %s4591 = scalar_lea.vmem %s4, 16
  %4592 = vst [vmem:[%s4591] sm:$0xff] %v4587
  %4593 = vst.msk [vmem:[%s4591 + $0x8] sm:$0xff] %vm2314, %v4589
  // Predicated region
  $region18: #{lenet_forward.3} parent=0 // pred_check
    _
  $region19: #{lenet_forward.3} parent=0 // pred_check_branch
    %4595 = sbr.rel (0) target = $region21
  $region20: #{lenet_forward.3} parent=0 // pred_region
    _
  $region21: #{lenet_forward.3} parent=0 // pred_fallthru
    _
  // Predicated region
  $region22: #{lenet_forward.3} parent=0 // pred_check
    _
  $region23: #{lenet_forward.3} parent=0 // pred_check_branch
    %4597 = sbr.rel (0) target = $region25
  $region24: #{lenet_forward.3} parent=0 // pred_region
    _
  $region25: #{lenet_forward.3} parent=0 // pred_fallthru
    _

</llo_original>
